<compile_context>
chip_gen: v7x
topology: tpu7x:2x2x1
jax: 0.10.0
libtpu: 0.0.40
codegen_flags: <defaults>
</compile_context>

<pallas_src>
import functools

import jax
import jax.numpy as jnp
import numpy as np
from jax.experimental import pallas as pl
from jax.experimental.pallas import tpu as pltpu


# ---------------------------------------------------------------------------
# Pallas kernels
# ---------------------------------------------------------------------------

def _conv_pool_relu_kernel(nwin, p_ref, w_ref, b_ref, o_ref, acc_ref):
    """Fused conv(im2col matmul) + bias + maxpool + ReLU for one image.

    p_ref : (1, nwin*ncell, K) bf16   patch rows, ordered row = wpos*ncell + cell
    w_ref : (K, 128) bf16             conv weight (channels zero-padded to 128)
    b_ref : (1, 128) f32              bias (zero-padded)
    o_ref : (1, ncell, 128) f32       relu(max over window positions)
    acc_ref: (ncell, 128) f32 VMEM    running max accumulator
    """
    w = w_ref[...]
    b = b_ref[...]
    ncell = acc_ref.shape[0]
    for wpos in range(nwin):                      # unrolled, nwin = 9 or 16
        c = jnp.dot(p_ref[0, wpos * ncell:(wpos + 1) * ncell, :], w,
                    preferred_element_type=jnp.float32) + b
        if wpos == 0:
            acc_ref[...] = c
        else:
            acc_ref[...] = jnp.maximum(acc_ref[...], c)
    o_ref[0] = jnp.maximum(acc_ref[...], 0.0).astype(o_ref.dtype)


def _fc_kernel(x_ref, w1_ref, b1_ref, w2_ref, b2_ref, o_ref):
    """Fused Linear(500,100) -> Linear(100,15), outputs padded to 128 lanes."""
    h = jnp.dot(x_ref[...], w1_ref[...],
                preferred_element_type=jnp.float32) + b1_ref[...]
    o_ref[...] = (jnp.dot(h.astype(jnp.bfloat16), w2_ref[...],
                          preferred_element_type=jnp.float32) + b2_ref[...])


# ---------------------------------------------------------------------------
# Pallas wrappers
# ---------------------------------------------------------------------------

def conv_pool_relu(p, w, b, *, nwin, ncell):
    """p: (N, nwin*ncell, K) bf16 -> (N, ncell, 128) f32 fused conv+pool+relu."""
    N, R, K = p.shape
    Kw, C = w.shape
    assert R == nwin * ncell and Kw == K
    return pl.pallas_call(
        functools.partial(_conv_pool_relu_kernel, nwin),
        out_shape=jax.ShapeDtypeStruct((N, ncell, C), jnp.float32),
        grid_spec=pltpu.PrefetchScalarGridSpec(
            num_scalar_prefetch=0,
            grid=(N,),
            in_specs=[
                pl.BlockSpec((1, R, K), lambda n: (n, 0, 0)),
                pl.BlockSpec((K, C), lambda n: (0, 0)),
                pl.BlockSpec((1, C), lambda n: (0, 0)),
            ],
            out_specs=pl.BlockSpec((1, ncell, C), lambda n: (n, 0, 0)),
            scratch_shapes=[pltpu.VMEM((ncell, C), jnp.float32)],
        ),
        compiler_params=pltpu.CompilerParams(
            dimension_semantics=("parallel",)),   # one image per TC on v7x
    )(p, w, b)


def fc_forward(x, w1, b1, w2, b2):
    """Fused fc1+fc2: (N,500) bf16 -> (N,128) f32 (first 15 cols are the logits)."""
    N = x.shape[0]
    C = w2.shape[1]
    return pl.pallas_call(
        _fc_kernel,
        out_shape=jax.ShapeDtypeStruct((N, C), jnp.float32),
    )(x, w1, b1, w2, b2)


# ---------------------------------------------------------------------------
# One-time parameter preprocessing (hoisted out of the forward pass)
# ---------------------------------------------------------------------------

def prepare_params(params):
    f32, bf16 = jnp.float32, jnp.bfloat16
    # conv1: (10,1,5,5) -> (Kh,Kw,Cin,Cout)=(5,5,1,10) -> (25,10) -> pad (32,128)
    w1 = jnp.transpose(params["conv1_w"], (2, 3, 1, 0)).reshape(25, 10)
    w1 = jnp.pad(w1, ((0, 7), (0, 118))).astype(bf16)
    b1 = jnp.pad(params["conv1_b"], (0, 118)).reshape(1, 128).astype(f32)
    # conv2: (20,10,5,5) -> (5,5,10,20) -> (250,20) -> pad (256,128)
    w2 = jnp.transpose(params["conv2_w"], (2, 3, 1, 0)).reshape(250, 20)
    w2 = jnp.pad(w2, ((0, 6), (0, 108))).astype(bf16)
    b2 = jnp.pad(params["conv2_b"], (0, 108)).reshape(1, 128).astype(f32)
    # fc1: (100,500) -> (500,100) -> pad (500,128)
    fw1 = jnp.pad(params["fc1_w"].T, ((0, 0), (0, 28))).astype(bf16)
    fb1 = jnp.pad(params["fc1_b"], (0, 28)).reshape(1, 128).astype(f32)
    # fc2: (15,100) -> (100,15) -> pad (128,128)
    fw2 = jnp.pad(params["fc2_w"].T, ((0, 28), (0, 113))).astype(bf16)
    fb2 = jnp.pad(params["fc2_b"], (0, 113)).reshape(1, 128).astype(f32)
    return {"w1": w1, "b1": b1, "w2": w2, "b2": b2,
            "fw1": fw1, "fb1": fb1, "fw2": fw2, "fb2": fb2}


# ---------------------------------------------------------------------------
# Forward pass (glue builds window-major im2col patches; kernels do all compute)
# ---------------------------------------------------------------------------

def simple_net_forward(x_nchw, prep):
    """Forward pass equivalent to SimpleNet.forward. Returns (N, 15) scores."""
    N = x_nchw.shape[0]
    x = x_nchw[:, 0, :, :]                                    # (N, 64, 64), Cin=1

    # --- stage 1: conv1(1->10,k5) + maxpool(3,3) + ReLU, fused ---------------
    # Patch rows ordered window-major: row = (dh*3+dw)*400 + (ph*20+pw)
    cols = [x[:, kh:kh + 60, kw:kw + 60] for kh in range(5) for kw in range(5)]
    pat1 = jnp.stack(cols, axis=-1)                           # (N, 60, 60, 25)
    wins = [pat1[:, dh::3, dw::3, :] for dh in range(3) for dw in range(3)]
    p1 = jnp.stack(wins, axis=1).reshape(N, 9 * 400, 25)      # (N, 3600, 25)
    p1 = jnp.pad(p1, ((0, 0), (0, 0), (0, 7))).astype(jnp.bfloat16)   # K 25->32

    r1 = conv_pool_relu(p1, prep["w1"], prep["b1"], nwin=9, ncell=400)
    r1 = r1[:, :, :10].reshape(N, 20, 20, 10)                 # (N, 20, 20, 10)

    # --- stage 2: conv2(10->20,k5) + maxpool(4,3) + ReLU, fused ---------------
    # Patch rows ordered row = (eh*4+ew)*32 + (qh*5+qw); pool cells padded 25->32
    cols2 = [r1[:, kh:kh + 16, kw:kw + 16, :] for kh in range(5) for kw in range(5)]
    pat2 = jnp.concatenate(cols2, axis=-1)                    # (N, 16, 16, 250)
    wins2 = [pat2[:, eh:eh + 13:3, ew:ew + 13:3, :]
             for eh in range(4) for ew in range(4)]
    p2 = jnp.stack(wins2, axis=1).reshape(N, 16, 25, 250)     # (N, 16, 25, 250)
    p2 = jnp.pad(p2, ((0, 0), (0, 0), (0, 7), (0, 6)))        # cells->32, K->256
    p2 = p2.reshape(N, 16 * 32, 256).astype(jnp.bfloat16)

    r2 = conv_pool_relu(p2, prep["w2"], prep["b2"], nwin=16, ncell=32)

    # --- flatten in PyTorch NCHW order -> (N, 500) ----------------------------
    pooled = r2[:, :25, :20]                                  # (N, cell=25, ch=20)
    flat = jnp.transpose(pooled, (0, 2, 1)).reshape(N, 500).astype(jnp.bfloat16)

    # --- fused fc1 + fc2 -------------------------------------------------------
    y = fc_forward(flat, prep["fw1"], prep["fb1"], prep["fw2"], prep["fb2"])
    # TODO(synk): nn.CrossEntropyLoss (self.loss_criterion) is unused in forward; not implemented.
    return y[:, :15]


# ---------------------------------------------------------------------------
# Pure-JAX reference (silent correctness check)
# ---------------------------------------------------------------------------

def reference_forward(x, params):
    dn1 = jax.lax.conv_dimension_numbers(
        x.shape, params["conv1_w"].shape, ("NCHW", "OIHW", "NCHW"))
    c1 = jax.lax.conv_general_dilated(
        x, params["conv1_w"], (1, 1), "VALID", dimension_numbers=dn1)
    c1 = c1 + params["conv1_b"][None, :, None, None]
    p1 = jax.lax.reduce_window(c1, -jnp.inf, jax.lax.max,
                               (1, 1, 3, 3), (1, 1, 3, 3), "VALID")
    r1 = jnp.maximum(p1, 0.0)
    dn2 = jax.lax.conv_dimension_numbers(
        r1.shape, params["conv2_w"].shape, ("NCHW", "OIHW", "NCHW"))
    c2 = jax.lax.conv_general_dilated(
        r1, params["conv2_w"], (1, 1), "VALID", dimension_numbers=dn2)
    c2 = c2 + params["conv2_b"][None, :, None, None]
    p2 = jax.lax.reduce_window(c2, -jnp.inf, jax.lax.max,
                               (1, 1, 4, 4), (1, 1, 3, 3), "VALID")
    r2 = jnp.maximum(p2, 0.0)
    flat = r2.reshape(r2.shape[0], -1)
    h = flat @ params["fc1_w"].T + params["fc1_b"]
    return h @ params["fc2_w"].T + params["fc2_b"]


# ---------------------------------------------------------------------------
# Main
# ---------------------------------------------------------------------------

def init_params(key):
    ks = jax.random.split(key, 8)
    s = 0.05
    return {
        "conv1_w": s * jax.random.normal(ks[0], (10, 1, 5, 5), jnp.float32),
        "conv1_b": s * jax.random.normal(ks[1], (10,), jnp.float32),
        "conv2_w": s * jax.random.normal(ks[2], (20, 10, 5, 5), jnp.float32),
        "conv2_b": s * jax.random.normal(ks[3], (20,), jnp.float32),
        "fc1_w": s * jax.random.normal(ks[4], (100, 500), jnp.float32),
        "fc1_b": s * jax.random.normal(ks[5], (100,), jnp.float32),
        "fc2_w": s * jax.random.normal(ks[6], (15, 100), jnp.float32),
        "fc2_b": s * jax.random.normal(ks[7], (15,), jnp.float32),
    }


if __name__ == "__main__":
    key = jax.random.PRNGKey(0)
    pkey, xkey = jax.random.split(key)
    params = init_params(pkey)
    prep = prepare_params(params)          # one-time weight transpose/pad/cast

    # Input implied by the module: grayscale 64x64 (Linear(500, ...) forces it).
    x = jax.random.normal(xkey, (2, 1, 64, 64), jnp.float32)

    fwd = jax.jit(simple_net_forward)
    y = jax.block_until_ready(fwd(x, prep))
    assert y.shape == (2, 15), y.shape

    y_ref = jax.block_until_ready(reference_forward(x, params))
    if not np.allclose(np.asarray(y), np.asarray(y_ref), rtol=1e-2, atol=1e-2):
        raise AssertionError("Pallas SimpleNet output mismatch vs JAX reference")

    print("KERNEL_OK")
</pallas_src>

<mosaic_0001>
module attributes {stable_mosaic.version = 11 : i64} {
  func.func @_conv_pool_relu_kernel(%arg0: i32, %arg1: memref<1x3600x32xbf16, #tpu.memory_space<vmem>>, %arg2: memref<32x128xbf16, #tpu.memory_space<vmem>>, %arg3: memref<1x128xf32, #tpu.memory_space<vmem>>, %arg4: memref<1x400x128xf32, #tpu.memory_space<vmem>>, %arg5: memref<400x128xf32, #tpu.memory_space<vmem>>) attributes {dimension_semantics = [#tpu.dimension_semantics<parallel>], iteration_bounds = array<i64: 2>, scalar_prefetch = 0 : i64, scratch_operands = 1 : i64, tpu.core_type = #tpu.core_type<tc>, window_params = [{transform_indices = @transform_0, window_bounds = array<i64: 1, 3600, 32>}, {pipeline_mode = #tpu.pipeline_mode<synchronous>, transform_indices = @transform_1, window_bounds = array<i64: 32, 128>}, {pipeline_mode = #tpu.pipeline_mode<synchronous>, transform_indices = @transform_2, window_bounds = array<i64: 1, 128>}, {transform_indices = @transform_3, window_bounds = array<i64: 1, 400, 128>}]} {
    %c0 = arith.constant 0 : index
    %c0_0 = arith.constant 0 : index
    %0 = vector.load %arg2[%c0, %c0_0] : memref<32x128xbf16, #tpu.memory_space<vmem>>, vector<32x128xbf16>
    %c0_1 = arith.constant 0 : index
    %c0_2 = arith.constant 0 : index
    %1 = vector.load %arg3[%c0_1, %c0_2] : memref<1x128xf32, #tpu.memory_space<vmem>>, vector<1x128xf32>
    %c0_3 = arith.constant 0 : index
    %c0_4 = arith.constant 0 : index
    %c0_5 = arith.constant 0 : index
    %2 = vector.load %arg1[%c0_3, %c0_4, %c0_5] : memref<1x3600x32xbf16, #tpu.memory_space<vmem>>, vector<1x400x32xbf16>
    %3 = vector.shape_cast %2 : vector<1x400x32xbf16> to vector<400x32xbf16>
    %cst = arith.constant dense<0.000000e+00> : vector<400x128xf32>
    %4 = tpu.matmul %3, %0, %cst {dimension_numbers = #tpu.dot_dimension_numbers<[1], [0], [0], [1], [0, 0, 1, 1], [], []>} : vector<400x32xbf16>, vector<32x128xbf16>, vector<400x128xf32> -> vector<400x128xf32>
    %5 = vector.broadcast %1 : vector<1x128xf32> to vector<400x128xf32>
    %6 = arith.addf %4, %5 : vector<400x128xf32>
    %c0_6 = arith.constant 0 : index
    %c0_7 = arith.constant 0 : index
    %7 = vector.load %arg5[%c0_6, %c0_7] : memref<400x128xf32, #tpu.memory_space<vmem>>, vector<400x128xf32>
    tpu.vector_store %arg5[%c0_6, %c0_7], %6 {strides = array<i32>} : memref<400x128xf32, #tpu.memory_space<vmem>>, vector<400x128xf32>,
    %c0_8 = arith.constant 0 : index
    %c400 = arith.constant 400 : index
    %c0_9 = arith.constant 0 : index
    %8 = vector.load %arg1[%c0_8, %c400, %c0_9] : memref<1x3600x32xbf16, #tpu.memory_space<vmem>>, vector<1x400x32xbf16>
    %9 = vector.shape_cast %8 : vector<1x400x32xbf16> to vector<400x32xbf16>
    %cst_10 = arith.constant dense<0.000000e+00> : vector<400x128xf32>
    %10 = tpu.matmul %9, %0, %cst_10 {dimension_numbers = #tpu.dot_dimension_numbers<[1], [0], [0], [1], [0, 0, 1, 1], [], []>} : vector<400x32xbf16>, vector<32x128xbf16>, vector<400x128xf32> -> vector<400x128xf32>
    %11 = vector.broadcast %1 : vector<1x128xf32> to vector<400x128xf32>
    %12 = arith.addf %10, %11 : vector<400x128xf32>
    %c0_11 = arith.constant 0 : index
    %c0_12 = arith.constant 0 : index
    %13 = vector.load %arg5[%c0_11, %c0_12] : memref<400x128xf32, #tpu.memory_space<vmem>>, vector<400x128xf32>
    %14 = arith.maximumf %13, %12 : vector<400x128xf32>
    %c0_13 = arith.constant 0 : index
    %c0_14 = arith.constant 0 : index
    %15 = vector.load %arg5[%c0_13, %c0_14] : memref<400x128xf32, #tpu.memory_space<vmem>>, vector<400x128xf32>
    tpu.vector_store %arg5[%c0_13, %c0_14], %14 {strides = array<i32>} : memref<400x128xf32, #tpu.memory_space<vmem>>, vector<400x128xf32>,
    %c0_15 = arith.constant 0 : index
    %c800 = arith.constant 800 : index
    %c0_16 = arith.constant 0 : index
    %16 = vector.load %arg1[%c0_15, %c800, %c0_16] : memref<1x3600x32xbf16, #tpu.memory_space<vmem>>, vector<1x400x32xbf16>
    %17 = vector.shape_cast %16 : vector<1x400x32xbf16> to vector<400x32xbf16>
    %cst_17 = arith.constant dense<0.000000e+00> : vector<400x128xf32>
    %18 = tpu.matmul %17, %0, %cst_17 {dimension_numbers = #tpu.dot_dimension_numbers<[1], [0], [0], [1], [0, 0, 1, 1], [], []>} : vector<400x32xbf16>, vector<32x128xbf16>, vector<400x128xf32> -> vector<400x128xf32>
    %19 = vector.broadcast %1 : vector<1x128xf32> to vector<400x128xf32>
    %20 = arith.addf %18, %19 : vector<400x128xf32>
    %c0_18 = arith.constant 0 : index
    %c0_19 = arith.constant 0 : index
    %21 = vector.load %arg5[%c0_18, %c0_19] : memref<400x128xf32, #tpu.memory_space<vmem>>, vector<400x128xf32>
    %22 = arith.maximumf %21, %20 : vector<400x128xf32>
    %c0_20 = arith.constant 0 : index
    %c0_21 = arith.constant 0 : index
    %23 = vector.load %arg5[%c0_20, %c0_21] : memref<400x128xf32, #tpu.memory_space<vmem>>, vector<400x128xf32>
    tpu.vector_store %arg5[%c0_20, %c0_21], %22 {strides = array<i32>} : memref<400x128xf32, #tpu.memory_space<vmem>>, vector<400x128xf32>,
    %c0_22 = arith.constant 0 : index
    %c1200 = arith.constant 1200 : index
    %c0_23 = arith.constant 0 : index
    %24 = vector.load %arg1[%c0_22, %c1200, %c0_23] : memref<1x3600x32xbf16, #tpu.memory_space<vmem>>, vector<1x400x32xbf16>
    %25 = vector.shape_cast %24 : vector<1x400x32xbf16> to vector<400x32xbf16>
    %cst_24 = arith.constant dense<0.000000e+00> : vector<400x128xf32>
    %26 = tpu.matmul %25, %0, %cst_24 {dimension_numbers = #tpu.dot_dimension_numbers<[1], [0], [0], [1], [0, 0, 1, 1], [], []>} : vector<400x32xbf16>, vector<32x128xbf16>, vector<400x128xf32> -> vector<400x128xf32>
    %27 = vector.broadcast %1 : vector<1x128xf32> to vector<400x128xf32>
    %28 = arith.addf %26, %27 : vector<400x128xf32>
    %c0_25 = arith.constant 0 : index
    %c0_26 = arith.constant 0 : index
    %29 = vector.load %arg5[%c0_25, %c0_26] : memref<400x128xf32, #tpu.memory_space<vmem>>, vector<400x128xf32>
    %30 = arith.maximumf %29, %28 : vector<400x128xf32>
    %c0_27 = arith.constant 0 : index
    %c0_28 = arith.constant 0 : index
    %31 = vector.load %arg5[%c0_27, %c0_28] : memref<400x128xf32, #tpu.memory_space<vmem>>, vector<400x128xf32>
    tpu.vector_store %arg5[%c0_27, %c0_28], %30 {strides = array<i32>} : memref<400x128xf32, #tpu.memory_space<vmem>>, vector<400x128xf32>,
    %c0_29 = arith.constant 0 : index
    %c1600 = arith.constant 1600 : index
    %c0_30 = arith.constant 0 : index
    %32 = vector.load %arg1[%c0_29, %c1600, %c0_30] : memref<1x3600x32xbf16, #tpu.memory_space<vmem>>, vector<1x400x32xbf16>
    %33 = vector.shape_cast %32 : vector<1x400x32xbf16> to vector<400x32xbf16>
    %cst_31 = arith.constant dense<0.000000e+00> : vector<400x128xf32>
    %34 = tpu.matmul %33, %0, %cst_31 {dimension_numbers = #tpu.dot_dimension_numbers<[1], [0], [0], [1], [0, 0, 1, 1], [], []>} : vector<400x32xbf16>, vector<32x128xbf16>, vector<400x128xf32> -> vector<400x128xf32>
    %35 = vector.broadcast %1 : vector<1x128xf32> to vector<400x128xf32>
    %36 = arith.addf %34, %35 : vector<400x128xf32>
    %c0_32 = arith.constant 0 : index
    %c0_33 = arith.constant 0 : index
    %37 = vector.load %arg5[%c0_32, %c0_33] : memref<400x128xf32, #tpu.memory_space<vmem>>, vector<400x128xf32>
    %38 = arith.maximumf %37, %36 : vector<400x128xf32>
    %c0_34 = arith.constant 0 : index
    %c0_35 = arith.constant 0 : index
    %39 = vector.load %arg5[%c0_34, %c0_35] : memref<400x128xf32, #tpu.memory_space<vmem>>, vector<400x128xf32>
    tpu.vector_store %arg5[%c0_34, %c0_35], %38 {strides = array<i32>} : memref<400x128xf32, #tpu.memory_space<vmem>>, vector<400x128xf32>,
    %c0_36 = arith.constant 0 : index
    %c2000 = arith.constant 2000 : index
    %c0_37 = arith.constant 0 : index
    %40 = vector.load %arg1[%c0_36, %c2000, %c0_37] : memref<1x3600x32xbf16, #tpu.memory_space<vmem>>, vector<1x400x32xbf16>
    %41 = vector.shape_cast %40 : vector<1x400x32xbf16> to vector<400x32xbf16>
    %cst_38 = arith.constant dense<0.000000e+00> : vector<400x128xf32>
    %42 = tpu.matmul %41, %0, %cst_38 {dimension_numbers = #tpu.dot_dimension_numbers<[1], [0], [0], [1], [0, 0, 1, 1], [], []>} : vector<400x32xbf16>, vector<32x128xbf16>, vector<400x128xf32> -> vector<400x128xf32>
    %43 = vector.broadcast %1 : vector<1x128xf32> to vector<400x128xf32>
    %44 = arith.addf %42, %43 : vector<400x128xf32>
    %c0_39 = arith.constant 0 : index
    %c0_40 = arith.constant 0 : index
    %45 = vector.load %arg5[%c0_39, %c0_40] : memref<400x128xf32, #tpu.memory_space<vmem>>, vector<400x128xf32>
    %46 = arith.maximumf %45, %44 : vector<400x128xf32>
    %c0_41 = arith.constant 0 : index
    %c0_42 = arith.constant 0 : index
    %47 = vector.load %arg5[%c0_41, %c0_42] : memref<400x128xf32, #tpu.memory_space<vmem>>, vector<400x128xf32>
    tpu.vector_store %arg5[%c0_41, %c0_42], %46 {strides = array<i32>} : memref<400x128xf32, #tpu.memory_space<vmem>>, vector<400x128xf32>,
    %c0_43 = arith.constant 0 : index
    %c2400 = arith.constant 2400 : index
    %c0_44 = arith.constant 0 : index
    %48 = vector.load %arg1[%c0_43, %c2400, %c0_44] : memref<1x3600x32xbf16, #tpu.memory_space<vmem>>, vector<1x400x32xbf16>
    %49 = vector.shape_cast %48 : vector<1x400x32xbf16> to vector<400x32xbf16>
    %cst_45 = arith.constant dense<0.000000e+00> : vector<400x128xf32>
    %50 = tpu.matmul %49, %0, %cst_45 {dimension_numbers = #tpu.dot_dimension_numbers<[1], [0], [0], [1], [0, 0, 1, 1], [], []>} : vector<400x32xbf16>, vector<32x128xbf16>, vector<400x128xf32> -> vector<400x128xf32>
    %51 = vector.broadcast %1 : vector<1x128xf32> to vector<400x128xf32>
    %52 = arith.addf %50, %51 : vector<400x128xf32>
    %c0_46 = arith.constant 0 : index
    %c0_47 = arith.constant 0 : index
    %53 = vector.load %arg5[%c0_46, %c0_47] : memref<400x128xf32, #tpu.memory_space<vmem>>, vector<400x128xf32>
    %54 = arith.maximumf %53, %52 : vector<400x128xf32>
    %c0_48 = arith.constant 0 : index
    %c0_49 = arith.constant 0 : index
    %55 = vector.load %arg5[%c0_48, %c0_49] : memref<400x128xf32, #tpu.memory_space<vmem>>, vector<400x128xf32>
    tpu.vector_store %arg5[%c0_48, %c0_49], %54 {strides = array<i32>} : memref<400x128xf32, #tpu.memory_space<vmem>>, vector<400x128xf32>,
    %c0_50 = arith.constant 0 : index
    %c2800 = arith.constant 2800 : index
    %c0_51 = arith.constant 0 : index
    %56 = vector.load %arg1[%c0_50, %c2800, %c0_51] : memref<1x3600x32xbf16, #tpu.memory_space<vmem>>, vector<1x400x32xbf16>
    %57 = vector.shape_cast %56 : vector<1x400x32xbf16> to vector<400x32xbf16>
    %cst_52 = arith.constant dense<0.000000e+00> : vector<400x128xf32>
    %58 = tpu.matmul %57, %0, %cst_52 {dimension_numbers = #tpu.dot_dimension_numbers<[1], [0], [0], [1], [0, 0, 1, 1], [], []>} : vector<400x32xbf16>, vector<32x128xbf16>, vector<400x128xf32> -> vector<400x128xf32>
    %59 = vector.broadcast %1 : vector<1x128xf32> to vector<400x128xf32>
    %60 = arith.addf %58, %59 : vector<400x128xf32>
    %c0_53 = arith.constant 0 : index
    %c0_54 = arith.constant 0 : index
    %61 = vector.load %arg5[%c0_53, %c0_54] : memref<400x128xf32, #tpu.memory_space<vmem>>, vector<400x128xf32>
    %62 = arith.maximumf %61, %60 : vector<400x128xf32>
    %c0_55 = arith.constant 0 : index
    %c0_56 = arith.constant 0 : index
    %63 = vector.load %arg5[%c0_55, %c0_56] : memref<400x128xf32, #tpu.memory_space<vmem>>, vector<400x128xf32>
    tpu.vector_store %arg5[%c0_55, %c0_56], %62 {strides = array<i32>} : memref<400x128xf32, #tpu.memory_space<vmem>>, vector<400x128xf32>,
    %c0_57 = arith.constant 0 : index
    %c3200 = arith.constant 3200 : index
    %c0_58 = arith.constant 0 : index
    %64 = vector.load %arg1[%c0_57, %c3200, %c0_58] : memref<1x3600x32xbf16, #tpu.memory_space<vmem>>, vector<1x400x32xbf16>
    %65 = vector.shape_cast %64 : vector<1x400x32xbf16> to vector<400x32xbf16>
    %cst_59 = arith.constant dense<0.000000e+00> : vector<400x128xf32>
    %66 = tpu.matmul %65, %0, %cst_59 {dimension_numbers = #tpu.dot_dimension_numbers<[1], [0], [0], [1], [0, 0, 1, 1], [], []>} : vector<400x32xbf16>, vector<32x128xbf16>, vector<400x128xf32> -> vector<400x128xf32>
    %67 = vector.broadcast %1 : vector<1x128xf32> to vector<400x128xf32>
    %68 = arith.addf %66, %67 : vector<400x128xf32>
    %c0_60 = arith.constant 0 : index
    %c0_61 = arith.constant 0 : index
    %69 = vector.load %arg5[%c0_60, %c0_61] : memref<400x128xf32, #tpu.memory_space<vmem>>, vector<400x128xf32>
    %70 = arith.maximumf %69, %68 : vector<400x128xf32>
    %c0_62 = arith.constant 0 : index
    %c0_63 = arith.constant 0 : index
    %71 = vector.load %arg5[%c0_62, %c0_63] : memref<400x128xf32, #tpu.memory_space<vmem>>, vector<400x128xf32>
    tpu.vector_store %arg5[%c0_62, %c0_63], %70 {strides = array<i32>} : memref<400x128xf32, #tpu.memory_space<vmem>>, vector<400x128xf32>,
    %c0_64 = arith.constant 0 : index
    %c0_65 = arith.constant 0 : index
    %72 = vector.load %arg5[%c0_64, %c0_65] : memref<400x128xf32, #tpu.memory_space<vmem>>, vector<400x128xf32>
    %cst_66 = arith.constant 0.000000e+00 : f32
    %73 = vector.broadcast %cst_66 : f32 to vector<400x128xf32>
    %74 = arith.maximumf %72, %73 : vector<400x128xf32>
    %c0_67 = arith.constant 0 : index
    %c0_68 = arith.constant 0 : index
    %c0_69 = arith.constant 0 : index
    %75 = vector.load %arg4[%c0_67, %c0_68, %c0_69] : memref<1x400x128xf32, #tpu.memory_space<vmem>>, vector<1x400x128xf32>
    %76 = vector.shape_cast %75 : vector<1x400x128xf32> to vector<400x128xf32>
    %77 = vector.shape_cast %74 : vector<400x128xf32> to vector<1x400x128xf32>
    tpu.vector_store %arg4[%c0_67, %c0_68, %c0_69], %77 {strides = array<i32>} : memref<1x400x128xf32, #tpu.memory_space<vmem>>, vector<1x400x128xf32>,
    return
  }
  func.func @transform_0(%arg0: i32) -> (i32, i32, i32) {
    %c0_i32 = arith.constant 0 : i32
    %c0_i32_0 = arith.constant 0 : i32
    %c0_i32_1 = arith.constant 0 : i32
    return %arg0, %c0_i32, %c0_i32_0 : i32, i32, i32
  }
  func.func @transform_1(%arg0: i32) -> (i32, i32) {
    %c0_i32 = arith.constant 0 : i32
    %c0_i32_0 = arith.constant 0 : i32
    %c0_i32_1 = arith.constant 0 : i32
    return %c0_i32, %c0_i32_0 : i32, i32
  }
  func.func @transform_2(%arg0: i32) -> (i32, i32) {
    %c0_i32 = arith.constant 0 : i32
    %c0_i32_0 = arith.constant 0 : i32
    %c0_i32_1 = arith.constant 0 : i32
    return %c0_i32, %c0_i32_0 : i32, i32
  }
  func.func @transform_3(%arg0: i32) -> (i32, i32, i32) {
    %c0_i32 = arith.constant 0 : i32
    %c0_i32_0 = arith.constant 0 : i32
    %c0_i32_1 = arith.constant 0 : i32
    return %arg0, %c0_i32, %c0_i32_0 : i32, i32, i32
  }
}

module attributes {stable_mosaic.version = 11 : i64} {
  func.func @_conv_pool_relu_kernel(%arg0: i32, %arg1: memref<1x512x256xbf16, #tpu.memory_space<vmem>>, %arg2: memref<256x128xbf16, #tpu.memory_space<vmem>>, %arg3: memref<1x128xf32, #tpu.memory_space<vmem>>, %arg4: memref<1x32x128xf32, #tpu.memory_space<vmem>>, %arg5: memref<32x128xf32, #tpu.memory_space<vmem>>) attributes {dimension_semantics = [#tpu.dimension_semantics<parallel>], iteration_bounds = array<i64: 2>, scalar_prefetch = 0 : i64, scratch_operands = 1 : i64, tpu.core_type = #tpu.core_type<tc>, window_params = [{transform_indices = @transform_0, window_bounds = array<i64: 1, 512, 256>}, {pipeline_mode = #tpu.pipeline_mode<synchronous>, transform_indices = @transform_1, window_bounds = array<i64: 256, 128>}, {pipeline_mode = #tpu.pipeline_mode<synchronous>, transform_indices = @transform_2, window_bounds = array<i64: 1, 128>}, {transform_indices = @transform_3, window_bounds = array<i64: 1, 32, 128>}]} {
    %c0 = arith.constant 0 : index
    %c0_0 = arith.constant 0 : index
    %0 = vector.load %arg2[%c0, %c0_0] : memref<256x128xbf16, #tpu.memory_space<vmem>>, vector<256x128xbf16>
    %c0_1 = arith.constant 0 : index
    %c0_2 = arith.constant 0 : index
    %1 = vector.load %arg3[%c0_1, %c0_2] : memref<1x128xf32, #tpu.memory_space<vmem>>, vector<1x128xf32>
    %c0_3 = arith.constant 0 : index
    %c0_4 = arith.constant 0 : index
    %c0_5 = arith.constant 0 : index
    %2 = vector.load %arg1[%c0_3, %c0_4, %c0_5] : memref<1x512x256xbf16, #tpu.memory_space<vmem>>, vector<1x32x256xbf16>
    %3 = vector.shape_cast %2 : vector<1x32x256xbf16> to vector<32x256xbf16>
    %cst = arith.constant dense<0.000000e+00> : vector<32x128xf32>
    %4 = tpu.matmul %3, %0, %cst {dimension_numbers = #tpu.dot_dimension_numbers<[1], [0], [0], [1], [0, 0, 1, 1], [], []>} : vector<32x256xbf16>, vector<256x128xbf16>, vector<32x128xf32> -> vector<32x128xf32>
    %5 = vector.broadcast %1 : vector<1x128xf32> to vector<32x128xf32>
    %6 = arith.addf %4, %5 : vector<32x128xf32>
    %c0_6 = arith.constant 0 : index
    %c0_7 = arith.constant 0 : index
    %7 = vector.load %arg5[%c0_6, %c0_7] : memref<32x128xf32, #tpu.memory_space<vmem>>, vector<32x128xf32>
    tpu.vector_store %arg5[%c0_6, %c0_7], %6 {strides = array<i32>} : memref<32x128xf32, #tpu.memory_space<vmem>>, vector<32x128xf32>,
    %c0_8 = arith.constant 0 : index
    %c32 = arith.constant 32 : index
    %c0_9 = arith.constant 0 : index
    %8 = vector.load %arg1[%c0_8, %c32, %c0_9] : memref<1x512x256xbf16, #tpu.memory_space<vmem>>, vector<1x32x256xbf16>
    %9 = vector.shape_cast %8 : vector<1x32x256xbf16> to vector<32x256xbf16>
    %cst_10 = arith.constant dense<0.000000e+00> : vector<32x128xf32>
    %10 = tpu.matmul %9, %0, %cst_10 {dimension_numbers = #tpu.dot_dimension_numbers<[1], [0], [0], [1], [0, 0, 1, 1], [], []>} : vector<32x256xbf16>, vector<256x128xbf16>, vector<32x128xf32> -> vector<32x128xf32>
    %11 = vector.broadcast %1 : vector<1x128xf32> to vector<32x128xf32>
    %12 = arith.addf %10, %11 : vector<32x128xf32>
    %c0_11 = arith.constant 0 : index
    %c0_12 = arith.constant 0 : index
    %13 = vector.load %arg5[%c0_11, %c0_12] : memref<32x128xf32, #tpu.memory_space<vmem>>, vector<32x128xf32>
    %14 = arith.maximumf %13, %12 : vector<32x128xf32>
    %c0_13 = arith.constant 0 : index
    %c0_14 = arith.constant 0 : index
    %15 = vector.load %arg5[%c0_13, %c0_14] : memref<32x128xf32, #tpu.memory_space<vmem>>, vector<32x128xf32>
    tpu.vector_store %arg5[%c0_13, %c0_14], %14 {strides = array<i32>} : memref<32x128xf32, #tpu.memory_space<vmem>>, vector<32x128xf32>,
    %c0_15 = arith.constant 0 : index
    %c64 = arith.constant 64 : index
    %c0_16 = arith.constant 0 : index
    %16 = vector.load %arg1[%c0_15, %c64, %c0_16] : memref<1x512x256xbf16, #tpu.memory_space<vmem>>, vector<1x32x256xbf16>
    %17 = vector.shape_cast %16 : vector<1x32x256xbf16> to vector<32x256xbf16>
    %cst_17 = arith.constant dense<0.000000e+00> : vector<32x128xf32>
    %18 = tpu.matmul %17, %0, %cst_17 {dimension_numbers = #tpu.dot_dimension_numbers<[1], [0], [0], [1], [0, 0, 1, 1], [], []>} : vector<32x256xbf16>, vector<256x128xbf16>, vector<32x128xf32> -> vector<32x128xf32>
    %19 = vector.broadcast %1 : vector<1x128xf32> to vector<32x128xf32>
    %20 = arith.addf %18, %19 : vector<32x128xf32>
    %c0_18 = arith.constant 0 : index
    %c0_19 = arith.constant 0 : index
    %21 = vector.load %arg5[%c0_18, %c0_19] : memref<32x128xf32, #tpu.memory_space<vmem>>, vector<32x128xf32>
    %22 = arith.maximumf %21, %20 : vector<32x128xf32>
    %c0_20 = arith.constant 0 : index
    %c0_21 = arith.constant 0 : index
    %23 = vector.load %arg5[%c0_20, %c0_21] : memref<32x128xf32, #tpu.memory_space<vmem>>, vector<32x128xf32>
    tpu.vector_store %arg5[%c0_20, %c0_21], %22 {strides = array<i32>} : memref<32x128xf32, #tpu.memory_space<vmem>>, vector<32x128xf32>,
    %c0_22 = arith.constant 0 : index
    %c96 = arith.constant 96 : index
    %c0_23 = arith.constant 0 : index
    %24 = vector.load %arg1[%c0_22, %c96, %c0_23] : memref<1x512x256xbf16, #tpu.memory_space<vmem>>, vector<1x32x256xbf16>
    %25 = vector.shape_cast %24 : vector<1x32x256xbf16> to vector<32x256xbf16>
    %cst_24 = arith.constant dense<0.000000e+00> : vector<32x128xf32>
    %26 = tpu.matmul %25, %0, %cst_24 {dimension_numbers = #tpu.dot_dimension_numbers<[1], [0], [0], [1], [0, 0, 1, 1], [], []>} : vector<32x256xbf16>, vector<256x128xbf16>, vector<32x128xf32> -> vector<32x128xf32>
    %27 = vector.broadcast %1 : vector<1x128xf32> to vector<32x128xf32>
    %28 = arith.addf %26, %27 : vector<32x128xf32>
    %c0_25 = arith.constant 0 : index
    %c0_26 = arith.constant 0 : index
    %29 = vector.load %arg5[%c0_25, %c0_26] : memref<32x128xf32, #tpu.memory_space<vmem>>, vector<32x128xf32>
    %30 = arith.maximumf %29, %28 : vector<32x128xf32>
    %c0_27 = arith.constant 0 : index
    %c0_28 = arith.constant 0 : index
    %31 = vector.load %arg5[%c0_27, %c0_28] : memref<32x128xf32, #tpu.memory_space<vmem>>, vector<32x128xf32>
    tpu.vector_store %arg5[%c0_27, %c0_28], %30 {strides = array<i32>} : memref<32x128xf32, #tpu.memory_space<vmem>>, vector<32x128xf32>,
    %c0_29 = arith.constant 0 : index
    %c128 = arith.constant 128 : index
    %c0_30 = arith.constant 0 : index
    %32 = vector.load %arg1[%c0_29, %c128, %c0_30] : memref<1x512x256xbf16, #tpu.memory_space<vmem>>, vector<1x32x256xbf16>
    %33 = vector.shape_cast %32 : vector<1x32x256xbf16> to vector<32x256xbf16>
    %cst_31 = arith.constant dense<0.000000e+00> : vector<32x128xf32>
    %34 = tpu.matmul %33, %0, %cst_31 {dimension_numbers = #tpu.dot_dimension_numbers<[1], [0], [0], [1], [0, 0, 1, 1], [], []>} : vector<32x256xbf16>, vector<256x128xbf16>, vector<32x128xf32> -> vector<32x128xf32>
    %35 = vector.broadcast %1 : vector<1x128xf32> to vector<32x128xf32>
    %36 = arith.addf %34, %35 : vector<32x128xf32>
    %c0_32 = arith.constant 0 : index
    %c0_33 = arith.constant 0 : index
    %37 = vector.load %arg5[%c0_32, %c0_33] : memref<32x128xf32, #tpu.memory_space<vmem>>, vector<32x128xf32>
    %38 = arith.maximumf %37, %36 : vector<32x128xf32>
    %c0_34 = arith.constant 0 : index
    %c0_35 = arith.constant 0 : index
    %39 = vector.load %arg5[%c0_34, %c0_35] : memref<32x128xf32, #tpu.memory_space<vmem>>, vector<32x128xf32>
    tpu.vector_store %arg5[%c0_34, %c0_35], %38 {strides = array<i32>} : memref<32x128xf32, #tpu.memory_space<vmem>>, vector<32x128xf32>,
    %c0_36 = arith.constant 0 : index
    %c160 = arith.constant 160 : index
    %c0_37 = arith.constant 0 : index
    %40 = vector.load %arg1[%c0_36, %c160, %c0_37] : memref<1x512x256xbf16, #tpu.memory_space<vmem>>, vector<1x32x256xbf16>
    %41 = vector.shape_cast %40 : vector<1x32x256xbf16> to vector<32x256xbf16>
    %cst_38 = arith.constant dense<0.000000e+00> : vector<32x128xf32>
    %42 = tpu.matmul %41, %0, %cst_38 {dimension_numbers = #tpu.dot_dimension_numbers<[1], [0], [0], [1], [0, 0, 1, 1], [], []>} : vector<32x256xbf16>, vector<256x128xbf16>, vector<32x128xf32> -> vector<32x128xf32>
    %43 = vector.broadcast %1 : vector<1x128xf32> to vector<32x128xf32>
    %44 = arith.addf %42, %43 : vector<32x128xf32>
    %c0_39 = arith.constant 0 : index
    %c0_40 = arith.constant 0 : index
    %45 = vector.load %arg5[%c0_39, %c0_40] : memref<32x128xf32, #tpu.memory_space<vmem>>, vector<32x128xf32>
    %46 = arith.maximumf %45, %44 : vector<32x128xf32>
    %c0_41 = arith.constant 0 : index
    %c0_42 = arith.constant 0 : index
    %47 = vector.load %arg5[%c0_41, %c0_42] : memref<32x128xf32, #tpu.memory_space<vmem>>, vector<32x128xf32>
    tpu.vector_store %arg5[%c0_41, %c0_42], %46 {strides = array<i32>} : memref<32x128xf32, #tpu.memory_space<vmem>>, vector<32x128xf32>,
    %c0_43 = arith.constant 0 : index
    %c192 = arith.constant 192 : index
    %c0_44 = arith.constant 0 : index
    %48 = vector.load %arg1[%c0_43, %c192, %c0_44] : memref<1x512x256xbf16, #tpu.memory_space<vmem>>, vector<1x32x256xbf16>
    %49 = vector.shape_cast %48 : vector<1x32x256xbf16> to vector<32x256xbf16>
    %cst_45 = arith.constant dense<0.000000e+00> : vector<32x128xf32>
    %50 = tpu.matmul %49, %0, %cst_45 {dimension_numbers = #tpu.dot_dimension_numbers<[1], [0], [0], [1], [0, 0, 1, 1], [], []>} : vector<32x256xbf16>, vector<256x128xbf16>, vector<32x128xf32> -> vector<32x128xf32>
    %51 = vector.broadcast %1 : vector<1x128xf32> to vector<32x128xf32>
    %52 = arith.addf %50, %51 : vector<32x128xf32>
    %c0_46 = arith.constant 0 : index
    %c0_47 = arith.constant 0 : index
    %53 = vector.load %arg5[%c0_46, %c0_47] : memref<32x128xf32, #tpu.memory_space<vmem>>, vector<32x128xf32>
    %54 = arith.maximumf %53, %52 : vector<32x128xf32>
    %c0_48 = arith.constant 0 : index
    %c0_49 = arith.constant 0 : index
    %55 = vector.load %arg5[%c0_48, %c0_49] : memref<32x128xf32, #tpu.memory_space<vmem>>, vector<32x128xf32>
    tpu.vector_store %arg5[%c0_48, %c0_49], %54 {strides = array<i32>} : memref<32x128xf32, #tpu.memory_space<vmem>>, vector<32x128xf32>,
    %c0_50 = arith.constant 0 : index
    %c224 = arith.constant 224 : index
    %c0_51 = arith.constant 0 : index
    %56 = vector.load %arg1[%c0_50, %c224, %c0_51] : memref<1x512x256xbf16, #tpu.memory_space<vmem>>, vector<1x32x256xbf16>
    %57 = vector.shape_cast %56 : vector<1x32x256xbf16> to vector<32x256xbf16>
    %cst_52 = arith.constant dense<0.000000e+00> : vector<32x128xf32>
    %58 = tpu.matmul %57, %0, %cst_52 {dimension_numbers = #tpu.dot_dimension_numbers<[1], [0], [0], [1], [0, 0, 1, 1], [], []>} : vector<32x256xbf16>, vector<256x128xbf16>, vector<32x128xf32> -> vector<32x128xf32>
    %59 = vector.broadcast %1 : vector<1x128xf32> to vector<32x128xf32>
    %60 = arith.addf %58, %59 : vector<32x128xf32>
    %c0_53 = arith.constant 0 : index
    %c0_54 = arith.constant 0 : index
    %61 = vector.load %arg5[%c0_53, %c0_54] : memref<32x128xf32, #tpu.memory_space<vmem>>, vector<32x128xf32>
    %62 = arith.maximumf %61, %60 : vector<32x128xf32>
    %c0_55 = arith.constant 0 : index
    %c0_56 = arith.constant 0 : index
    %63 = vector.load %arg5[%c0_55, %c0_56] : memref<32x128xf32, #tpu.memory_space<vmem>>, vector<32x128xf32>
    tpu.vector_store %arg5[%c0_55, %c0_56], %62 {strides = array<i32>} : memref<32x128xf32, #tpu.memory_space<vmem>>, vector<32x128xf32>,
    %c0_57 = arith.constant 0 : index
    %c256 = arith.constant 256 : index
    %c0_58 = arith.constant 0 : index
    %64 = vector.load %arg1[%c0_57, %c256, %c0_58] : memref<1x512x256xbf16, #tpu.memory_space<vmem>>, vector<1x32x256xbf16>
    %65 = vector.shape_cast %64 : vector<1x32x256xbf16> to vector<32x256xbf16>
    %cst_59 = arith.constant dense<0.000000e+00> : vector<32x128xf32>
    %66 = tpu.matmul %65, %0, %cst_59 {dimension_numbers = #tpu.dot_dimension_numbers<[1], [0], [0], [1], [0, 0, 1, 1], [], []>} : vector<32x256xbf16>, vector<256x128xbf16>, vector<32x128xf32> -> vector<32x128xf32>
    %67 = vector.broadcast %1 : vector<1x128xf32> to vector<32x128xf32>
    %68 = arith.addf %66, %67 : vector<32x128xf32>
    %c0_60 = arith.constant 0 : index
    %c0_61 = arith.constant 0 : index
    %69 = vector.load %arg5[%c0_60, %c0_61] : memref<32x128xf32, #tpu.memory_space<vmem>>, vector<32x128xf32>
    %70 = arith.maximumf %69, %68 : vector<32x128xf32>
    %c0_62 = arith.constant 0 : index
    %c0_63 = arith.constant 0 : index
    %71 = vector.load %arg5[%c0_62, %c0_63] : memref<32x128xf32, #tpu.memory_space<vmem>>, vector<32x128xf32>
    tpu.vector_store %arg5[%c0_62, %c0_63], %70 {strides = array<i32>} : memref<32x128xf32, #tpu.memory_space<vmem>>, vector<32x128xf32>,
    %c0_64 = arith.constant 0 : index
    %c288 = arith.constant 288 : index
    %c0_65 = arith.constant 0 : index
    %72 = vector.load %arg1[%c0_64, %c288, %c0_65] : memref<1x512x256xbf16, #tpu.memory_space<vmem>>, vector<1x32x256xbf16>
    %73 = vector.shape_cast %72 : vector<1x32x256xbf16> to vector<32x256xbf16>
    %cst_66 = arith.constant dense<0.000000e+00> : vector<32x128xf32>
    %74 = tpu.matmul %73, %0, %cst_66 {dimension_numbers = #tpu.dot_dimension_numbers<[1], [0], [0], [1], [0, 0, 1, 1], [], []>} : vector<32x256xbf16>, vector<256x128xbf16>, vector<32x128xf32> -> vector<32x128xf32>
    %75 = vector.broadcast %1 : vector<1x128xf32> to vector<32x128xf32>
    %76 = arith.addf %74, %75 : vector<32x128xf32>
    %c0_67 = arith.constant 0 : index
    %c0_68 = arith.constant 0 : index
    %77 = vector.load %arg5[%c0_67, %c0_68] : memref<32x128xf32, #tpu.memory_space<vmem>>, vector<32x128xf32>
    %78 = arith.maximumf %77, %76 : vector<32x128xf32>
    %c0_69 = arith.constant 0 : index
    %c0_70 = arith.constant 0 : index
    %79 = vector.load %arg5[%c0_69, %c0_70] : memref<32x128xf32, #tpu.memory_space<vmem>>, vector<32x128xf32>
    tpu.vector_store %arg5[%c0_69, %c0_70], %78 {strides = array<i32>} : memref<32x128xf32, #tpu.memory_space<vmem>>, vector<32x128xf32>,
    %c0_71 = arith.constant 0 : index
    %c320 = arith.constant 320 : index
    %c0_72 = arith.constant 0 : index
    %80 = vector.load %arg1[%c0_71, %c320, %c0_72] : memref<1x512x256xbf16, #tpu.memory_space<vmem>>, vector<1x32x256xbf16>
    %81 = vector.shape_cast %80 : vector<1x32x256xbf16> to vector<32x256xbf16>
    %cst_73 = arith.constant dense<0.000000e+00> : vector<32x128xf32>
    %82 = tpu.matmul %81, %0, %cst_73 {dimension_numbers = #tpu.dot_dimension_numbers<[1], [0], [0], [1], [0, 0, 1, 1], [], []>} : vector<32x256xbf16>, vector<256x128xbf16>, vector<32x128xf32> -> vector<32x128xf32>
    %83 = vector.broadcast %1 : vector<1x128xf32> to vector<32x128xf32>
    %84 = arith.addf %82, %83 : vector<32x128xf32>
    %c0_74 = arith.constant 0 : index
    %c0_75 = arith.constant 0 : index
    %85 = vector.load %arg5[%c0_74, %c0_75] : memref<32x128xf32, #tpu.memory_space<vmem>>, vector<32x128xf32>
    %86 = arith.maximumf %85, %84 : vector<32x128xf32>
    %c0_76 = arith.constant 0 : index
    %c0_77 = arith.constant 0 : index
    %87 = vector.load %arg5[%c0_76, %c0_77] : memref<32x128xf32, #tpu.memory_space<vmem>>, vector<32x128xf32>
    tpu.vector_store %arg5[%c0_76, %c0_77], %86 {strides = array<i32>} : memref<32x128xf32, #tpu.memory_space<vmem>>, vector<32x128xf32>,
    %c0_78 = arith.constant 0 : index
    %c352 = arith.constant 352 : index
    %c0_79 = arith.constant 0 : index
    %88 = vector.load %arg1[%c0_78, %c352, %c0_79] : memref<1x512x256xbf16, #tpu.memory_space<vmem>>, vector<1x32x256xbf16>
    %89 = vector.shape_cast %88 : vector<1x32x256xbf16> to vector<32x256xbf16>
    %cst_80 = arith.constant dense<0.000000e+00> : vector<32x128xf32>
    %90 = tpu.matmul %89, %0, %cst_80 {dimension_numbers = #tpu.dot_dimension_numbers<[1], [0], [0], [1], [0, 0, 1, 1], [], []>} : vector<32x256xbf16>, vector<256x128xbf16>, vector<32x128xf32> -> vector<32x128xf32>
    %91 = vector.broadcast %1 : vector<1x128xf32> to vector<32x128xf32>
    %92 = arith.addf %90, %91 : vector<32x128xf32>
    %c0_81 = arith.constant 0 : index
    %c0_82 = arith.constant 0 : index
    %93 = vector.load %arg5[%c0_81, %c0_82] : memref<32x128xf32, #tpu.memory_space<vmem>>, vector<32x128xf32>
    %94 = arith.maximumf %93, %92 : vector<32x128xf32>
    %c0_83 = arith.constant 0 : index
    %c0_84 = arith.constant 0 : index
    %95 = vector.load %arg5[%c0_83, %c0_84] : memref<32x128xf32, #tpu.memory_space<vmem>>, vector<32x128xf32>
    tpu.vector_store %arg5[%c0_83, %c0_84], %94 {strides = array<i32>} : memref<32x128xf32, #tpu.memory_space<vmem>>, vector<32x128xf32>,
    %c0_85 = arith.constant 0 : index
    %c384 = arith.constant 384 : index
    %c0_86 = arith.constant 0 : index
    %96 = vector.load %arg1[%c0_85, %c384, %c0_86] : memref<1x512x256xbf16, #tpu.memory_space<vmem>>, vector<1x32x256xbf16>
    %97 = vector.shape_cast %96 : vector<1x32x256xbf16> to vector<32x256xbf16>
    %cst_87 = arith.constant dense<0.000000e+00> : vector<32x128xf32>
    %98 = tpu.matmul %97, %0, %cst_87 {dimension_numbers = #tpu.dot_dimension_numbers<[1], [0], [0], [1], [0, 0, 1, 1], [], []>} : vector<32x256xbf16>, vector<256x128xbf16>, vector<32x128xf32> -> vector<32x128xf32>
    %99 = vector.broadcast %1 : vector<1x128xf32> to vector<32x128xf32>
    %100 = arith.addf %98, %99 : vector<32x128xf32>
    %c0_88 = arith.constant 0 : index
    %c0_89 = arith.constant 0 : index
    %101 = vector.load %arg5[%c0_88, %c0_89] : memref<32x128xf32, #tpu.memory_space<vmem>>, vector<32x128xf32>
    %102 = arith.maximumf %101, %100 : vector<32x128xf32>
    %c0_90 = arith.constant 0 : index
    %c0_91 = arith.constant 0 : index
    %103 = vector.load %arg5[%c0_90, %c0_91] : memref<32x128xf32, #tpu.memory_space<vmem>>, vector<32x128xf32>
    tpu.vector_store %arg5[%c0_90, %c0_91], %102 {strides = array<i32>} : memref<32x128xf32, #tpu.memory_space<vmem>>, vector<32x128xf32>,
    %c0_92 = arith.constant 0 : index
    %c416 = arith.constant 416 : index
    %c0_93 = arith.constant 0 : index
    %104 = vector.load %arg1[%c0_92, %c416, %c0_93] : memref<1x512x256xbf16, #tpu.memory_space<vmem>>, vector<1x32x256xbf16>
    %105 = vector.shape_cast %104 : vector<1x32x256xbf16> to vector<32x256xbf16>
    %cst_94 = arith.constant dense<0.000000e+00> : vector<32x128xf32>
    %106 = tpu.matmul %105, %0, %cst_94 {dimension_numbers = #tpu.dot_dimension_numbers<[1], [0], [0], [1], [0, 0, 1, 1], [], []>} : vector<32x256xbf16>, vector<256x128xbf16>, vector<32x128xf32> -> vector<32x128xf32>
    %107 = vector.broadcast %1 : vector<1x128xf32> to vector<32x128xf32>
    %108 = arith.addf %106, %107 : vector<32x128xf32>
    %c0_95 = arith.constant 0 : index
    %c0_96 = arith.constant 0 : index
    %109 = vector.load %arg5[%c0_95, %c0_96] : memref<32x128xf32, #tpu.memory_space<vmem>>, vector<32x128xf32>
    %110 = arith.maximumf %109, %108 : vector<32x128xf32>
    %c0_97 = arith.constant 0 : index
    %c0_98 = arith.constant 0 : index
    %111 = vector.load %arg5[%c0_97, %c0_98] : memref<32x128xf32, #tpu.memory_space<vmem>>, vector<32x128xf32>
    tpu.vector_store %arg5[%c0_97, %c0_98], %110 {strides = array<i32>} : memref<32x128xf32, #tpu.memory_space<vmem>>, vector<32x128xf32>,
    %c0_99 = arith.constant 0 : index
    %c448 = arith.constant 448 : index
    %c0_100 = arith.constant 0 : index
    %112 = vector.load %arg1[%c0_99, %c448, %c0_100] : memref<1x512x256xbf16, #tpu.memory_space<vmem>>, vector<1x32x256xbf16>
    %113 = vector.shape_cast %112 : vector<1x32x256xbf16> to vector<32x256xbf16>
    %cst_101 = arith.constant dense<0.000000e+00> : vector<32x128xf32>
    %114 = tpu.matmul %113, %0, %cst_101 {dimension_numbers = #tpu.dot_dimension_numbers<[1], [0], [0], [1], [0, 0, 1, 1], [], []>} : vector<32x256xbf16>, vector<256x128xbf16>, vector<32x128xf32> -> vector<32x128xf32>
    %115 = vector.broadcast %1 : vector<1x128xf32> to vector<32x128xf32>
    %116 = arith.addf %114, %115 : vector<32x128xf32>
    %c0_102 = arith.constant 0 : index
    %c0_103 = arith.constant 0 : index
    %117 = vector.load %arg5[%c0_102, %c0_103] : memref<32x128xf32, #tpu.memory_space<vmem>>, vector<32x128xf32>
    %118 = arith.maximumf %117, %116 : vector<32x128xf32>
    %c0_104 = arith.constant 0 : index
    %c0_105 = arith.constant 0 : index
    %119 = vector.load %arg5[%c0_104, %c0_105] : memref<32x128xf32, #tpu.memory_space<vmem>>, vector<32x128xf32>
    tpu.vector_store %arg5[%c0_104, %c0_105], %118 {strides = array<i32>} : memref<32x128xf32, #tpu.memory_space<vmem>>, vector<32x128xf32>,
    %c0_106 = arith.constant 0 : index
    %c480 = arith.constant 480 : index
    %c0_107 = arith.constant 0 : index
    %120 = vector.load %arg1[%c0_106, %c480, %c0_107] : memref<1x512x256xbf16, #tpu.memory_space<vmem>>, vector<1x32x256xbf16>
    %121 = vector.shape_cast %120 : vector<1x32x256xbf16> to vector<32x256xbf16>
    %cst_108 = arith.constant dense<0.000000e+00> : vector<32x128xf32>
    %122 = tpu.matmul %121, %0, %cst_108 {dimension_numbers = #tpu.dot_dimension_numbers<[1], [0], [0], [1], [0, 0, 1, 1], [], []>} : vector<32x256xbf16>, vector<256x128xbf16>, vector<32x128xf32> -> vector<32x128xf32>
    %123 = vector.broadcast %1 : vector<1x128xf32> to vector<32x128xf32>
    %124 = arith.addf %122, %123 : vector<32x128xf32>
    %c0_109 = arith.constant 0 : index
    %c0_110 = arith.constant 0 : index
    %125 = vector.load %arg5[%c0_109, %c0_110] : memref<32x128xf32, #tpu.memory_space<vmem>>, vector<32x128xf32>
    %126 = arith.maximumf %125, %124 : vector<32x128xf32>
    %c0_111 = arith.constant 0 : index
    %c0_112 = arith.constant 0 : index
    %127 = vector.load %arg5[%c0_111, %c0_112] : memref<32x128xf32, #tpu.memory_space<vmem>>, vector<32x128xf32>
    tpu.vector_store %arg5[%c0_111, %c0_112], %126 {strides = array<i32>} : memref<32x128xf32, #tpu.memory_space<vmem>>, vector<32x128xf32>,
    %c0_113 = arith.constant 0 : index
    %c0_114 = arith.constant 0 : index
    %128 = vector.load %arg5[%c0_113, %c0_114] : memref<32x128xf32, #tpu.memory_space<vmem>>, vector<32x128xf32>
    %cst_115 = arith.constant 0.000000e+00 : f32
    %129 = vector.broadcast %cst_115 : f32 to vector<32x128xf32>
    %130 = arith.maximumf %128, %129 : vector<32x128xf32>
    %c0_116 = arith.constant 0 : index
    %c0_117 = arith.constant 0 : index
    %c0_118 = arith.constant 0 : index
    %131 = vector.load %arg4[%c0_116, %c0_117, %c0_118] : memref<1x32x128xf32, #tpu.memory_space<vmem>>, vector<1x32x128xf32>
    %132 = vector.shape_cast %131 : vector<1x32x128xf32> to vector<32x128xf32>
    %133 = vector.shape_cast %130 : vector<32x128xf32> to vector<1x32x128xf32>
    tpu.vector_store %arg4[%c0_116, %c0_117, %c0_118], %133 {strides = array<i32>} : memref<1x32x128xf32, #tpu.memory_space<vmem>>, vector<1x32x128xf32>,
    return
  }
  func.func @transform_0(%arg0: i32) -> (i32, i32, i32) {
    %c0_i32 = arith.constant 0 : i32
    %c0_i32_0 = arith.constant 0 : i32
    %c0_i32_1 = arith.constant 0 : i32
    return %arg0, %c0_i32, %c0_i32_0 : i32, i32, i32
  }
  func.func @transform_1(%arg0: i32) -> (i32, i32) {
    %c0_i32 = arith.constant 0 : i32
    %c0_i32_0 = arith.constant 0 : i32
    %c0_i32_1 = arith.constant 0 : i32
    return %c0_i32, %c0_i32_0 : i32, i32
  }
  func.func @transform_2(%arg0: i32) -> (i32, i32) {
    %c0_i32 = arith.constant 0 : i32
    %c0_i32_0 = arith.constant 0 : i32
    %c0_i32_1 = arith.constant 0 : i32
    return %c0_i32, %c0_i32_0 : i32, i32
  }
  func.func @transform_3(%arg0: i32) -> (i32, i32, i32) {
    %c0_i32 = arith.constant 0 : i32
    %c0_i32_0 = arith.constant 0 : i32
    %c0_i32_1 = arith.constant 0 : i32
    return %arg0, %c0_i32, %c0_i32_0 : i32, i32, i32
  }
}

module attributes {stable_mosaic.version = 11 : i64} {
  func.func @_fc_kernel(%arg0: memref<2x500xbf16, #tpu.memory_space<vmem>>, %arg1: memref<500x128xbf16, #tpu.memory_space<vmem>>, %arg2: memref<1x128xf32, #tpu.memory_space<vmem>>, %arg3: memref<128x128xbf16, #tpu.memory_space<vmem>>, %arg4: memref<1x128xf32, #tpu.memory_space<vmem>>, %arg5: memref<2x128xf32, #tpu.memory_space<vmem>>) attributes {dimension_semantics = [], scalar_prefetch = 0 : i64, scratch_operands = 0 : i64, tpu.core_type = #tpu.core_type<tc>} {
    %c0 = arith.constant 0 : index
    %c0_0 = arith.constant 0 : index
    %0 = vector.load %arg0[%c0, %c0_0] : memref<2x500xbf16, #tpu.memory_space<vmem>>, vector<2x500xbf16>
    %c0_1 = arith.constant 0 : index
    %c0_2 = arith.constant 0 : index
    %1 = vector.load %arg1[%c0_1, %c0_2] : memref<500x128xbf16, #tpu.memory_space<vmem>>, vector<500x128xbf16>
    %cst = arith.constant dense<0.000000e+00> : vector<2x128xf32>
    %2 = tpu.matmul %0, %1, %cst {dimension_numbers = #tpu.dot_dimension_numbers<[1], [0], [0], [1], [0, 0, 1, 1], [], []>} : vector<2x500xbf16>, vector<500x128xbf16>, vector<2x128xf32> -> vector<2x128xf32>
    %c0_3 = arith.constant 0 : index
    %c0_4 = arith.constant 0 : index
    %3 = vector.load %arg2[%c0_3, %c0_4] : memref<1x128xf32, #tpu.memory_space<vmem>>, vector<1x128xf32>
    %4 = vector.broadcast %3 : vector<1x128xf32> to vector<2x128xf32>
    %5 = arith.addf %2, %4 : vector<2x128xf32>
    %6 = arith.truncf %5 : vector<2x128xf32> to vector<2x128xbf16>
    %c0_5 = arith.constant 0 : index
    %c0_6 = arith.constant 0 : index
    %7 = vector.load %arg3[%c0_5, %c0_6] : memref<128x128xbf16, #tpu.memory_space<vmem>>, vector<128x128xbf16>
    %cst_7 = arith.constant dense<0.000000e+00> : vector<2x128xf32>
    %8 = tpu.matmul %6, %7, %cst_7 {dimension_numbers = #tpu.dot_dimension_numbers<[1], [0], [0], [1], [0, 0, 1, 1], [], []>} : vector<2x128xbf16>, vector<128x128xbf16>, vector<2x128xf32> -> vector<2x128xf32>
    %c0_8 = arith.constant 0 : index
    %c0_9 = arith.constant 0 : index
    %9 = vector.load %arg4[%c0_8, %c0_9] : memref<1x128xf32, #tpu.memory_space<vmem>>, vector<1x128xf32>
    %10 = vector.broadcast %9 : vector<1x128xf32> to vector<2x128xf32>
    %11 = arith.addf %8, %10 : vector<2x128xf32>
    %c0_10 = arith.constant 0 : index
    %c0_11 = arith.constant 0 : index
    %12 = vector.load %arg5[%c0_10, %c0_11] : memref<2x128xf32, #tpu.memory_space<vmem>>, vector<2x128xf32>
    tpu.vector_store %arg5[%c0_10, %c0_11], %11 {strides = array<i32>} : memref<2x128xf32, #tpu.memory_space<vmem>>, vector<2x128xf32>,
    return
  }
}

</mosaic_0001>

<llo_original>
// kernel: simple_net_forward.3
$region0: #{simple_net_forward.3}
  #allocation0 [shape = 'u32[]', space=smem, size = 0x4, offset = 0x4, fixed_abs, tag = 'smem constant byte address 0x4 - core index']
  #allocation1 [shape = 'u32[144,128]{1,0:T(1,128)}', space=vmem, size = 0x12000, scoped, tag = 'internal scratch']
  #allocation2 [shape = 'f32[400,128]{1,0:T(8,128)}', space=vmem, size = 0x32000, scoped, tag = 'scratch operand']
  %s0 = inlined_call_operand.vmem [shape: bf16[2,3600,32], index: 0, kind: input, shape index: {}]
  %s1 = inlined_call_operand.vmem [shape: bf16[32,128], index: 1, kind: input, shape index: {}]
  %s2 = inlined_call_operand.vmem [shape: f32[1,128], index: 2, kind: input, shape index: {}]
  %s3 = inlined_call_operand.vmem [shape: f32[2,400,128], index: 3, kind: output, shape index: {}]
  %s4 = sld [smem:[#allocation0]]
  $region45: #{simple_net_forward.3} parent=0
    _
  %s6 = ssub.s32 1, %s4
  %s7 = scalar_select 0, %s6, %s4
  loop: start=0, step=1, limit=4
  $region2: #{simple_net_forward.3} parent=0 // loop_pre_header
    _
  $region3: #{simple_net_forward.3} parent=0 // loop_header
    %s9 = sphi 0, %s13
    %p10 = scmp.ge.s32.totalorder %s9, 4
    %s19 = sphi 0, %s21
    %s22 = sphi 0, %s19
    %s23 = sphi 0, %s22
    %s39 = sphi 0, %s23
    %s43 = sphi 0, %s43
    %s45 = sphi 0, %s43
    %s46 = sphi 0, %s45
    %s60 = sphi 0, %s46
    %s64 = sphi 0, %s64
    %s66 = sphi 0, %s64
    %s67 = sphi 0, %s66
    %s81 = sphi 0, %s67
    %s87 = sphi 0, %s89
    %s90 = sphi 0, %s87
    %s91 = sphi 0, %s90
    %s107 = sphi 0, %s91
  $region4: #{simple_net_forward.3} parent=0 // loop_header_branch
    %12 = sbr.rel (%p10) target = $region8
  $region5: #{simple_net_forward.3} parent=0 // loop_body
    %s14 = ssub.s32 %s9, 1
    %s15 = ssub.s32 %s9, 2
    %s16 = sadd.s32 %s9, 1
    %s17 = ssub.s32 %s9, %s16
    %p18 = scmp.eq.s32.totalorder %s17, 0
    %s20 = sadd.s32 %s19, 1
    %s21 = scalar_select %p18, %s19, %s20
    %p24 = pneg %p18
    %p25 = scmp.eq.s32.totalorder %s9, 1
    %p26 = por %p24, %p25
    %p27 = scmp.ne.s32.totalorder %s19, %s22
    %p28 = scmp.eq.s32.totalorder %s9, 0
    %p29 = por %p27, %p28
    %p30 = scmp.ne.s32.totalorder %s19, %s22
    %p31 = scmp.eq.s32.totalorder %s14, 1
    %p32 = por %p30, %p31
    %p33 = scmp.ne.s32.totalorder %s22, %s23
    %p34 = scmp.eq.s32.totalorder %s14, 0
    %p35 = por %p33, %p34
    %p36 = scmp.ne.s32.totalorder %s22, %s23
    %p37 = scmp.eq.s32.totalorder %s15, 1
    %p38 = por %p36, %p37
    %p40 = scmp.ne.s32.totalorder %s23, %s39
    %p41 = scmp.eq.s32.totalorder %s15, 0
    %p42 = por %p40, %p41
    %s44 = sadd.s32 %s43, 1
    %p47 = scmp.eq.s32.totalorder %s9, 1
    %p48 = scmp.ne.s32.totalorder %s43, %s45
    %p49 = scmp.eq.s32.totalorder %s9, 0
    %p50 = por %p48, %p49
    %p51 = scmp.ne.s32.totalorder %s43, %s45
    %p52 = scmp.eq.s32.totalorder %s14, 1
    %p53 = por %p51, %p52
    %p54 = scmp.ne.s32.totalorder %s45, %s46
    %p55 = scmp.eq.s32.totalorder %s14, 0
    %p56 = por %p54, %p55
    %p57 = scmp.ne.s32.totalorder %s45, %s46
    %p58 = scmp.eq.s32.totalorder %s15, 1
    %p59 = por %p57, %p58
    %p61 = scmp.ne.s32.totalorder %s46, %s60
    %p62 = scmp.eq.s32.totalorder %s15, 0
    %p63 = por %p61, %p62
    %s65 = sadd.s32 %s64, 1
    %p68 = scmp.eq.s32.totalorder %s9, 1
    %p69 = scmp.ne.s32.totalorder %s64, %s66
    %p70 = scmp.eq.s32.totalorder %s9, 0
    %p71 = por %p69, %p70
    %p72 = scmp.ne.s32.totalorder %s64, %s66
    %p73 = scmp.eq.s32.totalorder %s14, 1
    %p74 = por %p72, %p73
    %p75 = scmp.ne.s32.totalorder %s66, %s67
    %p76 = scmp.eq.s32.totalorder %s14, 0
    %p77 = por %p75, %p76
    %p78 = scmp.ne.s32.totalorder %s66, %s67
    %p79 = scmp.eq.s32.totalorder %s15, 1
    %p80 = por %p78, %p79
    %p82 = scmp.ne.s32.totalorder %s67, %s81
    %p83 = scmp.eq.s32.totalorder %s15, 0
    %p84 = por %p82, %p83
    %s85 = ssub.s32 %s9, %s16
    %p86 = scmp.eq.s32.totalorder %s85, 0
    %s88 = sadd.s32 %s87, 1
    %s89 = scalar_select %p86, %s87, %s88
    %p92 = pneg %p86
    %p93 = scmp.eq.s32.totalorder %s9, 1
    %p94 = por %p92, %p93
    %p95 = scmp.ne.s32.totalorder %s87, %s90
    %p96 = scmp.eq.s32.totalorder %s9, 0
    %p97 = por %p95, %p96
    %p98 = scmp.ne.s32.totalorder %s87, %s90
    %p99 = scmp.eq.s32.totalorder %s14, 1
    %p100 = por %p98, %p99
    %p101 = scmp.ne.s32.totalorder %s90, %s91
    %p102 = scmp.eq.s32.totalorder %s14, 0
    %p103 = por %p101, %p102
    %p104 = scmp.ne.s32.totalorder %s90, %s91
    %p105 = scmp.eq.s32.totalorder %s15, 1
    %p106 = por %p104, %p105
    %p108 = scmp.ne.s32.totalorder %s91, %s107
    %p109 = scmp.eq.s32.totalorder %s15, 0
    %p110 = por %p108, %p109
    %p111 = scmp.le.s32.totalorder 1, %s9
    %p112 = scmp.lt.s32.totalorder %s9, 3
    %p113 = pnand %p111, %p112
    %p114 = pneg %p113
    // Predicated region
    $region9: #{simple_net_forward.3} parent=5 // pred_check
      _
    $region10: #{simple_net_forward.3} parent=5 // pred_check_branch
      %116 = sbr.rel (%p113) target = $region12
    $region11: #{simple_net_forward.3} parent=5 // pred_region
      %s117 = ssub.s32 %s9, 1
      // Predicated region
      $region13: #{simple_net_forward.3} parent=11 // pred_check
        %p118 = pneg %p56
      $region14: #{simple_net_forward.3} parent=11 // pred_check_branch
        %120 = sbr.rel (%p118) target = $region16
      $region15: #{simple_net_forward.3} parent=11 // pred_region
        _
      $region16: #{simple_net_forward.3} parent=11 // pred_fallthru
        _
      // Predicated region
      $region17: #{simple_net_forward.3} parent=11 // pred_check
        %p121 = pneg %p77
      $region18: #{simple_net_forward.3} parent=11 // pred_check_branch
        %123 = sbr.rel (%p121) target = $region20
      $region19: #{simple_net_forward.3} parent=11 // pred_region
        _
      $region20: #{simple_net_forward.3} parent=11 // pred_fallthru
        _
    $region12: #{simple_net_forward.3} parent=5 // pred_fallthru
      _
    %p124 = scmp.lt.s32.totalorder %s9, 2
    // Predicated region
    $region21: #{simple_net_forward.3} parent=5 // pred_check
      %p125 = pneg %p124
    $region22: #{simple_net_forward.3} parent=5 // pred_check_branch
      %127 = sbr.rel (%p125) target = $region24
    $region23: #{simple_net_forward.3} parent=5 // pred_region
      // Predicated region
      $region25: #{simple_net_forward.3} parent=23 // pred_check
        %p128 = pneg %p29
      $region26: #{simple_net_forward.3} parent=23 // pred_check_branch
        %130 = sbr.rel (%p128) target = $region28
      $region27: #{simple_net_forward.3} parent=23 // pred_region
        %p131 = scmp.lt.s32.totalorder %s9, 1
        %s132 = scalar_select %p131, %s9, 1
        %s133 = smul.addr %s132, 450
        %s134 = smul.addr %s133, 4
        %s135 = scalar_lea.vmem %s0, %s134
      $region28: #{simple_net_forward.3} parent=23 // pred_fallthru
        _
    $region24: #{simple_net_forward.3} parent=5 // pred_fallthru
      _
    %p136 = scmp.le.s32.totalorder 1, %s9
    %p137 = scmp.lt.s32.totalorder %s9, 3
    %p138 = pnand %p136, %p137
    %p139 = pneg %p138
    // Predicated region
    $region29: #{simple_net_forward.3} parent=5 // pred_check
      _
    $region30: #{simple_net_forward.3} parent=5 // pred_check_branch
      %141 = sbr.rel (%p138) target = $region32
    $region31: #{simple_net_forward.3} parent=5 // pred_region
      %s142 = ssub.s32 %s9, 1
      %p143 = scmp.lt.s32.totalorder %s14, 1
      %s144 = scalar_select %p143, %s14, 1
      %s145 = smul.addr %s144, 450
      %s146 = smul.addr %s145, 4
      %s147 = scalar_lea.vmem %s0, %s146
      %p148 = pneg %p35
      %p149 = pneg %p32
      %p150 = pneg %p56
      %p151 = pneg %p53
      %p152 = pneg %p77
      %p153 = pneg %p74
      %p154 = pneg %p103
      %p155 = pneg %p100
      %p156 = scmp.lt.s32.totalorder %s14, 1
      %s157 = scalar_select %p156, %s14, 1
      %s158 = smul.addr %s157, 50
      %s159 = smul.addr %s158, 8
      %s160 = scalar_lea.vmem %s3, %s159
      %p161 = scmp.lt.s32.totalorder %s14, 1
      %s162 = scalar_select %p161, %s14, 1
      %s163 = smul.addr %s162, 450
      %s164 = smul.addr %s163, 4
      %s165 = scalar_lea.vmem %s0, %s164
      %p166 = scmp.lt.s32.totalorder %s14, 1
      %s167 = scalar_select %p166, %s14, 1
      %s168 = smul.addr %s167, 50
      %s169 = smul.addr %s168, 8
      %s170 = scalar_lea.vmem %s3, %s169
      %v172 = vld [vmem:[%s1] sm:$0xf]
      %v173 = vld [vmem:[%s1 + $0x4] sm:$0xf]
      %v174 = vld [vmem:[%s1 + $0x8] sm:$0xf]
      %v175 = vld [vmem:[%s1 + $0xc] sm:$0xf]
      %v176 = vld [vmem:[%s2] sm:$0x1]
      %v177 = vld [vmem:[%s165] sm:$0xf]
      %v178 = vld [vmem:[%s165 + $0x4] sm:$0xf]
      %v179 = vld [vmem:[%s165 + $0x8] sm:$0xf]
      %v180 = vld [vmem:[%s165 + $0xc] sm:$0xf]
      %v181 = vld [vmem:[%s165 + $0x10] sm:$0xf]
      %v182 = vld [vmem:[%s165 + $0x14] sm:$0xf]
      %v183 = vld [vmem:[%s165 + $0x18] sm:$0xf]
      %v184 = vld [vmem:[%s165 + $0x1c] sm:$0xf]
      %v185 = vld [vmem:[%s165 + $0x20] sm:$0xf]
      %v186 = vld [vmem:[%s165 + $0x24] sm:$0xf]
      %v187 = vld [vmem:[%s165 + $0x28] sm:$0xf]
      %v188 = vld [vmem:[%s165 + $0x2c] sm:$0xf]
      %v189 = vld [vmem:[%s165 + $0x30] sm:$0xf]
      %v190 = vld [vmem:[%s165 + $0x34] sm:$0xf]
      %v191 = vld [vmem:[%s165 + $0x38] sm:$0xf]
      %v192 = vld [vmem:[%s165 + $0x3c] sm:$0xf]
      %v193 = vld [vmem:[%s165 + $0x40] sm:$0xf]
      %v194 = vld [vmem:[%s165 + $0x44] sm:$0xf]
      %v195 = vld [vmem:[%s165 + $0x48] sm:$0xf]
      %v196 = vld [vmem:[%s165 + $0x4c] sm:$0xf]
      %v197 = vld [vmem:[%s165 + $0x50] sm:$0xf]
      %v198 = vld [vmem:[%s165 + $0x54] sm:$0xf]
      %v199 = vld [vmem:[%s165 + $0x58] sm:$0xf]
      %v200 = vld [vmem:[%s165 + $0x5c] sm:$0xf]
      %v201 = vld [vmem:[%s165 + $0x60] sm:$0xf]
      %v202 = vld [vmem:[%s165 + $0x64] sm:$0xf]
      %v203 = vld [vmem:[%s165 + $0x68] sm:$0xf]
      %v204 = vld [vmem:[%s165 + $0x6c] sm:$0xf]
      %v205 = vld [vmem:[%s165 + $0x70] sm:$0xf]
      %v206 = vld [vmem:[%s165 + $0x74] sm:$0xf]
      %v207 = vld [vmem:[%s165 + $0x78] sm:$0xf]
      %v208 = vld [vmem:[%s165 + $0x7c] sm:$0xf]
      %v209 = vld [vmem:[%s165 + $0x80] sm:$0xf]
      %v210 = vld [vmem:[%s165 + $0x84] sm:$0xf]
      %v211 = vld [vmem:[%s165 + $0x88] sm:$0xf]
      %v212 = vld [vmem:[%s165 + $0x8c] sm:$0xf]
      %v213 = vld [vmem:[%s165 + $0x90] sm:$0xf]
      %v214 = vld [vmem:[%s165 + $0x94] sm:$0xf]
      %v215 = vld [vmem:[%s165 + $0x98] sm:$0xf]
      %v216 = vld [vmem:[%s165 + $0x9c] sm:$0xf]
      %v217 = vld [vmem:[%s165 + $0xa0] sm:$0xf]
      %v218 = vld [vmem:[%s165 + $0xa4] sm:$0xf]
      %v219 = vld [vmem:[%s165 + $0xa8] sm:$0xf]
      %v220 = vld [vmem:[%s165 + $0xac] sm:$0xf]
      %v221 = vld [vmem:[%s165 + $0xb0] sm:$0xf]
      %v222 = vld [vmem:[%s165 + $0xb4] sm:$0xf]
      %v223 = vld [vmem:[%s165 + $0xb8] sm:$0xf]
      %v224 = vld [vmem:[%s165 + $0xbc] sm:$0xf]
      %v225 = vld [vmem:[%s165 + $0xc0] sm:$0xf]
      %v226 = vld [vmem:[%s165 + $0xc4] sm:$0xf]
      %v228 = vlaneseq
      %v229 = vshrl.u32 %v228, 7
      %v230 = vsub.s32 0, %v229
      %v231 = vrot.slane %v176, %v230
      %v283 = vunpack.c.l.b16 %v177
      %v284 = vunpack.c.l.b16 %v178
      %v285 = vunpack.c.l.b16 %v179
      %v286 = vunpack.c.l.b16 %v180
      %v287 = vunpack.c.l.b16 %v181
      %v288 = vunpack.c.l.b16 %v182
      %v289 = vunpack.c.l.b16 %v183
      %v290 = vunpack.c.l.b16 %v184
      %v291 = vunpack.c.l.b16 %v185
      %v292 = vunpack.c.l.b16 %v186
      %v293 = vunpack.c.l.b16 %v187
      %v294 = vunpack.c.l.b16 %v188
      %v295 = vunpack.c.l.b16 %v189
      %v296 = vunpack.c.l.b16 %v190
      %v297 = vunpack.c.l.b16 %v191
      %v298 = vunpack.c.l.b16 %v192
      %v299 = vunpack.c.l.b16 %v193
      %v300 = vunpack.c.l.b16 %v194
      %v301 = vunpack.c.l.b16 %v195
      %v302 = vunpack.c.l.b16 %v196
      %v303 = vunpack.c.l.b16 %v197
      %v304 = vunpack.c.l.b16 %v198
      %v305 = vunpack.c.l.b16 %v199
      %v306 = vunpack.c.l.b16 %v200
      %v307 = vunpack.c.l.b16 %v201
      %v308 = vunpack.c.l.b16 %v202
      %v309 = vunpack.c.l.b16 %v203
      %v310 = vunpack.c.l.b16 %v204
      %v311 = vunpack.c.l.b16 %v205
      %v312 = vunpack.c.l.b16 %v206
      %v313 = vunpack.c.l.b16 %v207
      %v314 = vunpack.c.l.b16 %v208
      %v315 = vunpack.c.l.b16 %v209
      %v316 = vunpack.c.l.b16 %v210
      %v317 = vunpack.c.l.b16 %v211
      %v318 = vunpack.c.l.b16 %v212
      %v319 = vunpack.c.l.b16 %v213
      %v320 = vunpack.c.l.b16 %v214
      %v321 = vunpack.c.l.b16 %v215
      %v322 = vunpack.c.l.b16 %v216
      %v323 = vunpack.c.l.b16 %v217
      %v324 = vunpack.c.l.b16 %v218
      %v325 = vunpack.c.l.b16 %v219
      %v326 = vunpack.c.l.b16 %v220
      %v327 = vunpack.c.l.b16 %v221
      %v328 = vunpack.c.l.b16 %v222
      %v329 = vunpack.c.l.b16 %v223
      %v330 = vunpack.c.l.b16 %v224
      %v331 = vunpack.c.l.b16 %v225
      %v332 = vunpack.c.l.b16 %v226
      %v333 = vpack.c.b16 %v284, %v283
      %v334 = vpack.c.b16 %v286, %v285
      %v335 = vpack.c.b16 %v288, %v287
      %v336 = vpack.c.b16 %v290, %v289
      %v337 = vpack.c.b16 %v292, %v291
      %v338 = vpack.c.b16 %v294, %v293
      %v339 = vpack.c.b16 %v296, %v295
      %v340 = vpack.c.b16 %v298, %v297
      %v341 = vpack.c.b16 %v300, %v299
      %v342 = vpack.c.b16 %v302, %v301
      %v343 = vpack.c.b16 %v304, %v303
      %v344 = vpack.c.b16 %v306, %v305
      %v345 = vpack.c.b16 %v308, %v307
      %v346 = vpack.c.b16 %v310, %v309
      %v347 = vpack.c.b16 %v312, %v311
      %v348 = vpack.c.b16 %v314, %v313
      %v349 = vpack.c.b16 %v316, %v315
      %v350 = vpack.c.b16 %v318, %v317
      %v351 = vpack.c.b16 %v320, %v319
      %v352 = vpack.c.b16 %v322, %v321
      %v353 = vpack.c.b16 %v324, %v323
      %v354 = vpack.c.b16 %v326, %v325
      %v355 = vpack.c.b16 %v328, %v327
      %v356 = vpack.c.b16 %v330, %v329
      %v357 = vpack.c.b16 %v332, %v331
      %v362 = vunpack.c.l.b16 %v172
      %v363 = vunpack.c.l.b16 %v173
      %v364 = vunpack.c.l.b16 %v174
      %v365 = vunpack.c.l.b16 %v175
      %v366 = vpack.c.b16 %v363, %v362
      %v367 = vpack.c.b16 %v365, %v364
      %vm370 = vcmask 261120
      %v372 = vsel %vm370, %v333, 0
      %v375 = vsel %vm370, %v334, 0
      %v378 = vsel %vm370, %v335, 0
      %v381 = vsel %vm370, %v336, 0
      %v384 = vsel %vm370, %v337, 0
      %v387 = vsel %vm370, %v338, 0
      %v390 = vsel %vm370, %v339, 0
      %v393 = vsel %vm370, %v340, 0
      %v396 = vsel %vm370, %v341, 0
      %v399 = vsel %vm370, %v342, 0
      %v402 = vsel %vm370, %v343, 0
      %v405 = vsel %vm370, %v344, 0
      %v408 = vsel %vm370, %v345, 0
      %v411 = vsel %vm370, %v346, 0
      %v414 = vsel %vm370, %v347, 0
      %v417 = vsel %vm370, %v348, 0
      %v420 = vsel %vm370, %v349, 0
      %v423 = vsel %vm370, %v350, 0
      %v426 = vsel %vm370, %v351, 0
      %v429 = vsel %vm370, %v352, 0
      %v432 = vsel %vm370, %v353, 0
      %v435 = vsel %vm370, %v354, 0
      %v438 = vsel %vm370, %v355, 0
      %v441 = vsel %vm370, %v356, 0
      %v444 = vsel %vm370, %v357, 0
      %446 = vmatprep.subr.bf16.mxu0 0
      %447 = vmatpush1.bf16.msra.mxu0 %v366
      %448 = vmatprep.subr.bf16.mxu0 0
      %449 = vmatpush1.bf16.msra.mxu0 %v367
      %450 = vmatprep.subr.bf16.mxu0 0
      %451 = vmatpush1.bf16.msra.mxu0 0
      %452 = vmatprep.subr.bf16.mxu0 0
      %453 = vmatpush1.bf16.msra.mxu0 0
      %454 = vmatprep.subr.bf16.mxu0 0
      %455 = vmatpush1.bf16.msra.mxu0 0
      %456 = vmatprep.subr.bf16.mxu0 0
      %457 = vmatpush1.bf16.msra.mxu0 0
      %458 = vmatprep.subr.bf16.mxu0 0
      %459 = vmatpush1.bf16.msra.mxu0 0
      %460 = vmatprep.subr.bf16.mxu0 0
      %461 = vmatpush1.bf16.msra.mxu0 0
      %462 = vmatprep.subr.bf16.mxu0 0
      %463 = vmatpush1.bf16.msra.mxu0 0
      %464 = vmatprep.subr.bf16.mxu0 0
      %465 = vmatpush1.bf16.msra.mxu0 0
      %466 = vmatprep.subr.bf16.mxu0 0
      %467 = vmatpush1.bf16.msra.mxu0 0
      %468 = vmatprep.subr.bf16.mxu0 0
      %469 = vmatpush1.bf16.msra.mxu0 0
      %470 = vmatprep.subr.bf16.mxu0 0
      %471 = vmatpush1.bf16.msra.mxu0 0
      %472 = vmatprep.subr.bf16.mxu0 0
      %473 = vmatpush1.bf16.msra.mxu0 0
      %474 = vmatprep.subr.bf16.mxu0 0
      %475 = vmatpush1.bf16.msra.mxu0 0
      %476 = vmatprep.subr.bf16.mxu0 0
      %477 = vmatpush1.bf16.msra.mxu0 0
      %478 = vmatprep.mubr.bf16.mxu0 0
      %479 = vmatmul.mubr.bf16.gmra.mrb[0].mxu0 %v372
      %v480 = vpop.f32.mrb[0].mxu0
      %v481 = vadd.f32 %v231, %v480
      %v482 = vpop.f32.mrb[0].mxu0
      %v483 = vpop.f32.mrb[0].mxu0
      %v484 = vadd.f32 %v231, %v483
      %v485 = vpop.f32.mrb[0].mxu0
      %486 = vmatprep.mubr.bf16.mxu0 0
      %487 = vmatmul.mubr.bf16.gmra.mrb[0].mxu0 %v375
      %v488 = vpop.f32.mrb[0].mxu0
      %v489 = vadd.f32 %v231, %v488
      %v490 = vpop.f32.mrb[0].mxu0
      %v491 = vpop.f32.mrb[0].mxu0
      %v492 = vadd.f32 %v231, %v491
      %v493 = vpop.f32.mrb[0].mxu0
      %494 = vmatprep.mubr.bf16.mxu0 0
      %495 = vmatmul.mubr.bf16.gmra.mrb[0].mxu0 %v378
      %v496 = vpop.f32.mrb[0].mxu0
      %v497 = vadd.f32 %v231, %v496
      %v498 = vpop.f32.mrb[0].mxu0
      %v499 = vpop.f32.mrb[0].mxu0
      %v500 = vadd.f32 %v231, %v499
      %v501 = vpop.f32.mrb[0].mxu0
      %502 = vmatprep.mubr.bf16.mxu0 0
      %503 = vmatmul.mubr.bf16.gmra.mrb[0].mxu0 %v381
      %v504 = vpop.f32.mrb[0].mxu0
      %v505 = vadd.f32 %v231, %v504
      %v506 = vpop.f32.mrb[0].mxu0
      %v507 = vpop.f32.mrb[0].mxu0
      %v508 = vadd.f32 %v231, %v507
      %v509 = vpop.f32.mrb[0].mxu0
      %510 = vmatprep.mubr.bf16.mxu0 0
      %511 = vmatmul.mubr.bf16.gmra.mrb[0].mxu0 %v384
      %v512 = vpop.f32.mrb[0].mxu0
      %v513 = vadd.f32 %v231, %v512
      %v514 = vpop.f32.mrb[0].mxu0
      %v515 = vpop.f32.mrb[0].mxu0
      %v516 = vadd.f32 %v231, %v515
      %v517 = vpop.f32.mrb[0].mxu0
      %518 = vmatprep.mubr.bf16.mxu0 0
      %519 = vmatmul.mubr.bf16.gmra.mrb[0].mxu0 %v387
      %v520 = vpop.f32.mrb[0].mxu0
      %v521 = vadd.f32 %v231, %v520
      %v522 = vpop.f32.mrb[0].mxu0
      %v523 = vpop.f32.mrb[0].mxu0
      %v524 = vadd.f32 %v231, %v523
      %v525 = vpop.f32.mrb[0].mxu0
      %526 = vmatprep.mubr.bf16.mxu0 0
      %527 = vmatmul.mubr.bf16.gmra.mrb[0].mxu0 %v390
      %v528 = vpop.f32.mrb[0].mxu0
      %v529 = vadd.f32 %v231, %v528
      %v530 = vpop.f32.mrb[0].mxu0
      %v531 = vpop.f32.mrb[0].mxu0
      %v532 = vadd.f32 %v231, %v531
      %v533 = vpop.f32.mrb[0].mxu0
      %534 = vmatprep.mubr.bf16.mxu0 0
      %535 = vmatmul.mubr.bf16.gmra.mrb[0].mxu0 %v393
      %v536 = vpop.f32.mrb[0].mxu0
      %v537 = vadd.f32 %v231, %v536
      %v538 = vpop.f32.mrb[0].mxu0
      %v539 = vpop.f32.mrb[0].mxu0
      %v540 = vadd.f32 %v231, %v539
      %v541 = vpop.f32.mrb[0].mxu0
      %542 = vmatprep.mubr.bf16.mxu0 0
      %543 = vmatmul.mubr.bf16.gmra.mrb[0].mxu0 %v396
      %v544 = vpop.f32.mrb[0].mxu0
      %v545 = vadd.f32 %v231, %v544
      %v546 = vpop.f32.mrb[0].mxu0
      %v547 = vpop.f32.mrb[0].mxu0
      %v548 = vadd.f32 %v231, %v547
      %v549 = vpop.f32.mrb[0].mxu0
      %550 = vmatprep.mubr.bf16.mxu0 0
      %551 = vmatmul.mubr.bf16.gmra.mrb[0].mxu0 %v399
      %v552 = vpop.f32.mrb[0].mxu0
      %v553 = vadd.f32 %v231, %v552
      %v554 = vpop.f32.mrb[0].mxu0
      %v555 = vpop.f32.mrb[0].mxu0
      %v556 = vadd.f32 %v231, %v555
      %v557 = vpop.f32.mrb[0].mxu0
      %558 = vmatprep.mubr.bf16.mxu0 0
      %559 = vmatmul.mubr.bf16.gmra.mrb[0].mxu0 %v402
      %v560 = vpop.f32.mrb[0].mxu0
      %v561 = vadd.f32 %v231, %v560
      %v562 = vpop.f32.mrb[0].mxu0
      %v563 = vpop.f32.mrb[0].mxu0
      %v564 = vadd.f32 %v231, %v563
      %v565 = vpop.f32.mrb[0].mxu0
      %566 = vmatprep.mubr.bf16.mxu0 0
      %567 = vmatmul.mubr.bf16.gmra.mrb[0].mxu0 %v405
      %v568 = vpop.f32.mrb[0].mxu0
      %v569 = vadd.f32 %v231, %v568
      %v570 = vpop.f32.mrb[0].mxu0
      %v571 = vpop.f32.mrb[0].mxu0
      %v572 = vadd.f32 %v231, %v571
      %v573 = vpop.f32.mrb[0].mxu0
      %574 = vmatprep.mubr.bf16.mxu0 0
      %575 = vmatmul.mubr.bf16.gmra.mrb[0].mxu0 %v408
      %v576 = vpop.f32.mrb[0].mxu0
      %v577 = vadd.f32 %v231, %v576
      %v578 = vpop.f32.mrb[0].mxu0
      %v579 = vpop.f32.mrb[0].mxu0
      %v580 = vadd.f32 %v231, %v579
      %v581 = vpop.f32.mrb[0].mxu0
      %582 = vmatprep.mubr.bf16.mxu0 0
      %583 = vmatmul.mubr.bf16.gmra.mrb[0].mxu0 %v411
      %v584 = vpop.f32.mrb[0].mxu0
      %v585 = vadd.f32 %v231, %v584
      %v586 = vpop.f32.mrb[0].mxu0
      %v587 = vpop.f32.mrb[0].mxu0
      %v588 = vadd.f32 %v231, %v587
      %v589 = vpop.f32.mrb[0].mxu0
      %590 = vmatprep.mubr.bf16.mxu0 0
      %591 = vmatmul.mubr.bf16.gmra.mrb[0].mxu0 %v414
      %v592 = vpop.f32.mrb[0].mxu0
      %v593 = vadd.f32 %v231, %v592
      %v594 = vpop.f32.mrb[0].mxu0
      %v595 = vpop.f32.mrb[0].mxu0
      %v596 = vadd.f32 %v231, %v595
      %v597 = vpop.f32.mrb[0].mxu0
      %598 = vmatprep.mubr.bf16.mxu0 0
      %599 = vmatmul.mubr.bf16.gmra.mrb[0].mxu0 %v417
      %v600 = vpop.f32.mrb[0].mxu0
      %v601 = vadd.f32 %v231, %v600
      %v602 = vpop.f32.mrb[0].mxu0
      %v603 = vpop.f32.mrb[0].mxu0
      %v604 = vadd.f32 %v231, %v603
      %v605 = vpop.f32.mrb[0].mxu0
      %606 = vmatprep.mubr.bf16.mxu0 0
      %607 = vmatmul.mubr.bf16.gmra.mrb[0].mxu0 %v420
      %v608 = vpop.f32.mrb[0].mxu0
      %v609 = vadd.f32 %v231, %v608
      %v610 = vpop.f32.mrb[0].mxu0
      %v611 = vpop.f32.mrb[0].mxu0
      %v612 = vadd.f32 %v231, %v611
      %v613 = vpop.f32.mrb[0].mxu0
      %614 = vmatprep.mubr.bf16.mxu0 0
      %615 = vmatmul.mubr.bf16.gmra.mrb[0].mxu0 %v423
      %v616 = vpop.f32.mrb[0].mxu0
      %v617 = vadd.f32 %v231, %v616
      %v618 = vpop.f32.mrb[0].mxu0
      %v619 = vpop.f32.mrb[0].mxu0
      %v620 = vadd.f32 %v231, %v619
      %v621 = vpop.f32.mrb[0].mxu0
      %622 = vmatprep.mubr.bf16.mxu0 0
      %623 = vmatmul.mubr.bf16.gmra.mrb[0].mxu0 %v426
      %v624 = vpop.f32.mrb[0].mxu0
      %v625 = vadd.f32 %v231, %v624
      %v626 = vpop.f32.mrb[0].mxu0
      %v627 = vpop.f32.mrb[0].mxu0
      %v628 = vadd.f32 %v231, %v627
      %v629 = vpop.f32.mrb[0].mxu0
      %630 = vmatprep.mubr.bf16.mxu0 0
      %631 = vmatmul.mubr.bf16.gmra.mrb[0].mxu0 %v429
      %v632 = vpop.f32.mrb[0].mxu0
      %v633 = vadd.f32 %v231, %v632
      %v634 = vpop.f32.mrb[0].mxu0
      %v635 = vpop.f32.mrb[0].mxu0
      %v636 = vadd.f32 %v231, %v635
      %v637 = vpop.f32.mrb[0].mxu0
      %638 = vmatprep.mubr.bf16.mxu0 0
      %639 = vmatmul.mubr.bf16.gmra.mrb[0].mxu0 %v432
      %v640 = vpop.f32.mrb[0].mxu0
      %v641 = vadd.f32 %v231, %v640
      %v642 = vpop.f32.mrb[0].mxu0
      %v643 = vpop.f32.mrb[0].mxu0
      %v644 = vadd.f32 %v231, %v643
      %v645 = vpop.f32.mrb[0].mxu0
      %646 = vmatprep.mubr.bf16.mxu0 0
      %647 = vmatmul.mubr.bf16.gmra.mrb[0].mxu0 %v435
      %v648 = vpop.f32.mrb[0].mxu0
      %v649 = vadd.f32 %v231, %v648
      %v650 = vpop.f32.mrb[0].mxu0
      %v651 = vpop.f32.mrb[0].mxu0
      %v652 = vadd.f32 %v231, %v651
      %v653 = vpop.f32.mrb[0].mxu0
      %654 = vmatprep.mubr.bf16.mxu0 0
      %655 = vmatmul.mubr.bf16.gmra.mrb[0].mxu0 %v438
      %v656 = vpop.f32.mrb[0].mxu0
      %v657 = vadd.f32 %v231, %v656
      %v658 = vpop.f32.mrb[0].mxu0
      %v659 = vpop.f32.mrb[0].mxu0
      %v660 = vadd.f32 %v231, %v659
      %v661 = vpop.f32.mrb[0].mxu0
      %662 = vmatprep.mubr.bf16.mxu0 0
      %663 = vmatmul.mubr.bf16.gmra.mrb[0].mxu0 %v441
      %v664 = vpop.f32.mrb[0].mxu0
      %v665 = vadd.f32 %v231, %v664
      %v666 = vpop.f32.mrb[0].mxu0
      %v667 = vpop.f32.mrb[0].mxu0
      %v668 = vadd.f32 %v231, %v667
      %v669 = vpop.f32.mrb[0].mxu0
      %670 = vmatprep.mubr.bf16.mxu0 0
      %671 = vmatmul.mubr.bf16.gmra.mrb[0].mxu0 %v444
      %v672 = vpop.f32.mrb[0].mxu0
      %v673 = vadd.f32 %v231, %v672
      %v674 = vpop.f32.mrb[0].mxu0
      %v675 = vpop.f32.mrb[0].mxu0
      %v676 = vadd.f32 %v231, %v675
      %v677 = vpop.f32.mrb[0].mxu0
      %678 = vdwg.mxu0
      %679 = vst [vmem:[#allocation2] sm:$0xff] %v481
      %680 = vst [vmem:[#allocation2 + $0x8] sm:$0xff] %v484
      %681 = vst [vmem:[#allocation2 + $0x10] sm:$0xff] %v489
      %682 = vst [vmem:[#allocation2 + $0x18] sm:$0xff] %v492
      %683 = vst [vmem:[#allocation2 + $0x20] sm:$0xff] %v497
      %684 = vst [vmem:[#allocation2 + $0x28] sm:$0xff] %v500
      %685 = vst [vmem:[#allocation2 + $0x30] sm:$0xff] %v505
      %686 = vst [vmem:[#allocation2 + $0x38] sm:$0xff] %v508
      %687 = vst [vmem:[#allocation2 + $0x40] sm:$0xff] %v513
      %688 = vst [vmem:[#allocation2 + $0x48] sm:$0xff] %v516
      %689 = vst [vmem:[#allocation2 + $0x50] sm:$0xff] %v521
      %690 = vst [vmem:[#allocation2 + $0x58] sm:$0xff] %v524
      %691 = vst [vmem:[#allocation2 + $0x60] sm:$0xff] %v529
      %692 = vst [vmem:[#allocation2 + $0x68] sm:$0xff] %v532
      %693 = vst [vmem:[#allocation2 + $0x70] sm:$0xff] %v537
      %694 = vst [vmem:[#allocation2 + $0x78] sm:$0xff] %v540
      %695 = vst [vmem:[#allocation2 + $0x80] sm:$0xff] %v545
      %696 = vst [vmem:[#allocation2 + $0x88] sm:$0xff] %v548
      %697 = vst [vmem:[#allocation2 + $0x90] sm:$0xff] %v553
      %698 = vst [vmem:[#allocation2 + $0x98] sm:$0xff] %v556
      %699 = vst [vmem:[#allocation2 + $0xa0] sm:$0xff] %v561
      %700 = vst [vmem:[#allocation2 + $0xa8] sm:$0xff] %v564
      %701 = vst [vmem:[#allocation2 + $0xb0] sm:$0xff] %v569
      %702 = vst [vmem:[#allocation2 + $0xb8] sm:$0xff] %v572
      %703 = vst [vmem:[#allocation2 + $0xc0] sm:$0xff] %v577
      %704 = vst [vmem:[#allocation2 + $0xc8] sm:$0xff] %v580
      %705 = vst [vmem:[#allocation2 + $0xd0] sm:$0xff] %v585
      %706 = vst [vmem:[#allocation2 + $0xd8] sm:$0xff] %v588
      %707 = vst [vmem:[#allocation2 + $0xe0] sm:$0xff] %v593
      %708 = vst [vmem:[#allocation2 + $0xe8] sm:$0xff] %v596
      %709 = vst [vmem:[#allocation2 + $0xf0] sm:$0xff] %v601
      %710 = vst [vmem:[#allocation2 + $0xf8] sm:$0xff] %v604
      %711 = vst [vmem:[#allocation2 + $0x100] sm:$0xff] %v609
      %712 = vst [vmem:[#allocation2 + $0x108] sm:$0xff] %v612
      %713 = vst [vmem:[#allocation2 + $0x110] sm:$0xff] %v617
      %714 = vst [vmem:[#allocation2 + $0x118] sm:$0xff] %v620
      %715 = vst [vmem:[#allocation2 + $0x120] sm:$0xff] %v625
      %716 = vst [vmem:[#allocation2 + $0x128] sm:$0xff] %v628
      %717 = vst [vmem:[#allocation2 + $0x130] sm:$0xff] %v633
      %718 = vst [vmem:[#allocation2 + $0x138] sm:$0xff] %v636
      %719 = vst [vmem:[#allocation2 + $0x140] sm:$0xff] %v641
      %720 = vst [vmem:[#allocation2 + $0x148] sm:$0xff] %v644
      %721 = vst [vmem:[#allocation2 + $0x150] sm:$0xff] %v649
      %722 = vst [vmem:[#allocation2 + $0x158] sm:$0xff] %v652
      %723 = vst [vmem:[#allocation2 + $0x160] sm:$0xff] %v657
      %724 = vst [vmem:[#allocation2 + $0x168] sm:$0xff] %v660
      %725 = vst [vmem:[#allocation2 + $0x170] sm:$0xff] %v665
      %726 = vst [vmem:[#allocation2 + $0x178] sm:$0xff] %v668
      %727 = vst [vmem:[#allocation2 + $0x180] sm:$0xff] %v673
      %728 = vst [vmem:[#allocation2 + $0x188] sm:$0xff] %v676
      %v729 = vld [vmem:[%s165 + $0xc8] sm:$0xf]
      %v730 = vld [vmem:[%s165 + $0xcc] sm:$0xf]
      %v731 = vld [vmem:[%s165 + $0xd0] sm:$0xf]
      %v732 = vld [vmem:[%s165 + $0xd4] sm:$0xf]
      %v733 = vld [vmem:[%s165 + $0xd8] sm:$0xf]
      %v734 = vld [vmem:[%s165 + $0xdc] sm:$0xf]
      %v735 = vld [vmem:[%s165 + $0xe0] sm:$0xf]
      %v736 = vld [vmem:[%s165 + $0xe4] sm:$0xf]
      %v737 = vld [vmem:[%s165 + $0xe8] sm:$0xf]
      %v738 = vld [vmem:[%s165 + $0xec] sm:$0xf]
      %v739 = vld [vmem:[%s165 + $0xf0] sm:$0xf]
      %v740 = vld [vmem:[%s165 + $0xf4] sm:$0xf]
      %v741 = vld [vmem:[%s165 + $0xf8] sm:$0xf]
      %v742 = vld [vmem:[%s165 + $0xfc] sm:$0xf]
      %v743 = vld [vmem:[%s165 + $0x100] sm:$0xf]
      %v744 = vld [vmem:[%s165 + $0x104] sm:$0xf]
      %v745 = vld [vmem:[%s165 + $0x108] sm:$0xf]
      %v746 = vld [vmem:[%s165 + $0x10c] sm:$0xf]
      %v747 = vld [vmem:[%s165 + $0x110] sm:$0xf]
      %v748 = vld [vmem:[%s165 + $0x114] sm:$0xf]
      %v749 = vld [vmem:[%s165 + $0x118] sm:$0xf]
      %v750 = vld [vmem:[%s165 + $0x11c] sm:$0xf]
      %v751 = vld [vmem:[%s165 + $0x120] sm:$0xf]
      %v752 = vld [vmem:[%s165 + $0x124] sm:$0xf]
      %v753 = vld [vmem:[%s165 + $0x128] sm:$0xf]
      %v754 = vld [vmem:[%s165 + $0x12c] sm:$0xf]
      %v755 = vld [vmem:[%s165 + $0x130] sm:$0xf]
      %v756 = vld [vmem:[%s165 + $0x134] sm:$0xf]
      %v757 = vld [vmem:[%s165 + $0x138] sm:$0xf]
      %v758 = vld [vmem:[%s165 + $0x13c] sm:$0xf]
      %v759 = vld [vmem:[%s165 + $0x140] sm:$0xf]
      %v760 = vld [vmem:[%s165 + $0x144] sm:$0xf]
      %v761 = vld [vmem:[%s165 + $0x148] sm:$0xf]
      %v762 = vld [vmem:[%s165 + $0x14c] sm:$0xf]
      %v763 = vld [vmem:[%s165 + $0x150] sm:$0xf]
      %v764 = vld [vmem:[%s165 + $0x154] sm:$0xf]
      %v765 = vld [vmem:[%s165 + $0x158] sm:$0xf]
      %v766 = vld [vmem:[%s165 + $0x15c] sm:$0xf]
      %v767 = vld [vmem:[%s165 + $0x160] sm:$0xf]
      %v768 = vld [vmem:[%s165 + $0x164] sm:$0xf]
      %v769 = vld [vmem:[%s165 + $0x168] sm:$0xf]
      %v770 = vld [vmem:[%s165 + $0x16c] sm:$0xf]
      %v771 = vld [vmem:[%s165 + $0x170] sm:$0xf]
      %v772 = vld [vmem:[%s165 + $0x174] sm:$0xf]
      %v773 = vld [vmem:[%s165 + $0x178] sm:$0xf]
      %v774 = vld [vmem:[%s165 + $0x17c] sm:$0xf]
      %v775 = vld [vmem:[%s165 + $0x180] sm:$0xf]
      %v776 = vld [vmem:[%s165 + $0x184] sm:$0xf]
      %v777 = vld [vmem:[%s165 + $0x188] sm:$0xf]
      %v778 = vld [vmem:[%s165 + $0x18c] sm:$0xf]
      %v829 = vunpack.c.l.b16 %v729
      %v830 = vunpack.c.l.b16 %v730
      %v831 = vunpack.c.l.b16 %v731
      %v832 = vunpack.c.l.b16 %v732
      %v833 = vunpack.c.l.b16 %v733
      %v834 = vunpack.c.l.b16 %v734
      %v835 = vunpack.c.l.b16 %v735
      %v836 = vunpack.c.l.b16 %v736
      %v837 = vunpack.c.l.b16 %v737
      %v838 = vunpack.c.l.b16 %v738
      %v839 = vunpack.c.l.b16 %v739
      %v840 = vunpack.c.l.b16 %v740
      %v841 = vunpack.c.l.b16 %v741
      %v842 = vunpack.c.l.b16 %v742
      %v843 = vunpack.c.l.b16 %v743
      %v844 = vunpack.c.l.b16 %v744
      %v845 = vunpack.c.l.b16 %v745
      %v846 = vunpack.c.l.b16 %v746
      %v847 = vunpack.c.l.b16 %v747
      %v848 = vunpack.c.l.b16 %v748
      %v849 = vunpack.c.l.b16 %v749
      %v850 = vunpack.c.l.b16 %v750
      %v851 = vunpack.c.l.b16 %v751
      %v852 = vunpack.c.l.b16 %v752
      %v853 = vunpack.c.l.b16 %v753
      %v854 = vunpack.c.l.b16 %v754
      %v855 = vunpack.c.l.b16 %v755
      %v856 = vunpack.c.l.b16 %v756
      %v857 = vunpack.c.l.b16 %v757
      %v858 = vunpack.c.l.b16 %v758
      %v859 = vunpack.c.l.b16 %v759
      %v860 = vunpack.c.l.b16 %v760
      %v861 = vunpack.c.l.b16 %v761
      %v862 = vunpack.c.l.b16 %v762
      %v863 = vunpack.c.l.b16 %v763
      %v864 = vunpack.c.l.b16 %v764
      %v865 = vunpack.c.l.b16 %v765
      %v866 = vunpack.c.l.b16 %v766
      %v867 = vunpack.c.l.b16 %v767
      %v868 = vunpack.c.l.b16 %v768
      %v869 = vunpack.c.l.b16 %v769
      %v870 = vunpack.c.l.b16 %v770
      %v871 = vunpack.c.l.b16 %v771
      %v872 = vunpack.c.l.b16 %v772
      %v873 = vunpack.c.l.b16 %v773
      %v874 = vunpack.c.l.b16 %v774
      %v875 = vunpack.c.l.b16 %v775
      %v876 = vunpack.c.l.b16 %v776
      %v877 = vunpack.c.l.b16 %v777
      %v878 = vunpack.c.l.b16 %v778
      %v879 = vpack.c.b16 %v830, %v829
      %v880 = vpack.c.b16 %v832, %v831
      %v881 = vpack.c.b16 %v834, %v833
      %v882 = vpack.c.b16 %v836, %v835
      %v883 = vpack.c.b16 %v838, %v837
      %v884 = vpack.c.b16 %v840, %v839
      %v885 = vpack.c.b16 %v842, %v841
      %v886 = vpack.c.b16 %v844, %v843
      %v887 = vpack.c.b16 %v846, %v845
      %v888 = vpack.c.b16 %v848, %v847
      %v889 = vpack.c.b16 %v850, %v849
      %v890 = vpack.c.b16 %v852, %v851
      %v891 = vpack.c.b16 %v854, %v853
      %v892 = vpack.c.b16 %v856, %v855
      %v893 = vpack.c.b16 %v858, %v857
      %v894 = vpack.c.b16 %v860, %v859
      %v895 = vpack.c.b16 %v862, %v861
      %v896 = vpack.c.b16 %v864, %v863
      %v897 = vpack.c.b16 %v866, %v865
      %v898 = vpack.c.b16 %v868, %v867
      %v899 = vpack.c.b16 %v870, %v869
      %v900 = vpack.c.b16 %v872, %v871
      %v901 = vpack.c.b16 %v874, %v873
      %v902 = vpack.c.b16 %v876, %v875
      %v903 = vpack.c.b16 %v878, %v877
      %v905 = vsel %vm370, %v879, 0
      %v908 = vsel %vm370, %v880, 0
      %v911 = vsel %vm370, %v881, 0
      %v914 = vsel %vm370, %v882, 0
      %v917 = vsel %vm370, %v883, 0
      %v920 = vsel %vm370, %v884, 0
      %v923 = vsel %vm370, %v885, 0
      %v926 = vsel %vm370, %v886, 0
      %v929 = vsel %vm370, %v887, 0
      %v932 = vsel %vm370, %v888, 0
      %v935 = vsel %vm370, %v889, 0
      %v938 = vsel %vm370, %v890, 0
      %v941 = vsel %vm370, %v891, 0
      %v944 = vsel %vm370, %v892, 0
      %v947 = vsel %vm370, %v893, 0
      %v950 = vsel %vm370, %v894, 0
      %v953 = vsel %vm370, %v895, 0
      %v956 = vsel %vm370, %v896, 0
      %v959 = vsel %vm370, %v897, 0
      %v962 = vsel %vm370, %v898, 0
      %v965 = vsel %vm370, %v899, 0
      %v968 = vsel %vm370, %v900, 0
      %v971 = vsel %vm370, %v901, 0
      %v974 = vsel %vm370, %v902, 0
      %v977 = vsel %vm370, %v903, 0
      %979 = vmatprep.subr.bf16.mxu0 0
      %980 = vmatpush1.bf16.msra.mxu0 %v366
      %981 = vmatprep.subr.bf16.mxu0 0
      %982 = vmatpush1.bf16.msra.mxu0 %v367
      %983 = vmatprep.subr.bf16.mxu0 0
      %984 = vmatpush1.bf16.msra.mxu0 0
      %985 = vmatprep.subr.bf16.mxu0 0
      %986 = vmatpush1.bf16.msra.mxu0 0
      %987 = vmatprep.subr.bf16.mxu0 0
      %988 = vmatpush1.bf16.msra.mxu0 0
      %989 = vmatprep.subr.bf16.mxu0 0
      %990 = vmatpush1.bf16.msra.mxu0 0
      %991 = vmatprep.subr.bf16.mxu0 0
      %992 = vmatpush1.bf16.msra.mxu0 0
      %993 = vmatprep.subr.bf16.mxu0 0
      %994 = vmatpush1.bf16.msra.mxu0 0
      %995 = vmatprep.subr.bf16.mxu0 0
      %996 = vmatpush1.bf16.msra.mxu0 0
      %997 = vmatprep.subr.bf16.mxu0 0
      %998 = vmatpush1.bf16.msra.mxu0 0
      %999 = vmatprep.subr.bf16.mxu0 0
      %1000 = vmatpush1.bf16.msra.mxu0 0
      %1001 = vmatprep.subr.bf16.mxu0 0
      %1002 = vmatpush1.bf16.msra.mxu0 0
      %1003 = vmatprep.subr.bf16.mxu0 0
      %1004 = vmatpush1.bf16.msra.mxu0 0
      %1005 = vmatprep.subr.bf16.mxu0 0
      %1006 = vmatpush1.bf16.msra.mxu0 0
      %1007 = vmatprep.subr.bf16.mxu0 0
      %1008 = vmatpush1.bf16.msra.mxu0 0
      %1009 = vmatprep.subr.bf16.mxu0 0
      %1010 = vmatpush1.bf16.msra.mxu0 0
      %1011 = vmatprep.mubr.bf16.mxu0 0
      %1012 = vmatmul.mubr.bf16.gmra.mrb[0].mxu0 %v905
      %v1013 = vpop.f32.mrb[0].mxu0
      %v1014 = vadd.f32 %v231, %v1013
      %v1015 = vpop.f32.mrb[0].mxu0
      %v1016 = vpop.f32.mrb[0].mxu0
      %v1017 = vadd.f32 %v231, %v1016
      %v1018 = vpop.f32.mrb[0].mxu0
      %1019 = vmatprep.mubr.bf16.mxu0 0
      %1020 = vmatmul.mubr.bf16.gmra.mrb[0].mxu0 %v908
      %v1021 = vpop.f32.mrb[0].mxu0
      %v1022 = vadd.f32 %v231, %v1021
      %v1023 = vpop.f32.mrb[0].mxu0
      %v1024 = vpop.f32.mrb[0].mxu0
      %v1025 = vadd.f32 %v231, %v1024
      %v1026 = vpop.f32.mrb[0].mxu0
      %1027 = vmatprep.mubr.bf16.mxu0 0
      %1028 = vmatmul.mubr.bf16.gmra.mrb[0].mxu0 %v911
      %v1029 = vpop.f32.mrb[0].mxu0
      %v1030 = vadd.f32 %v231, %v1029
      %v1031 = vpop.f32.mrb[0].mxu0
      %v1032 = vpop.f32.mrb[0].mxu0
      %v1033 = vadd.f32 %v231, %v1032
      %v1034 = vpop.f32.mrb[0].mxu0
      %1035 = vmatprep.mubr.bf16.mxu0 0
      %1036 = vmatmul.mubr.bf16.gmra.mrb[0].mxu0 %v914
      %v1037 = vpop.f32.mrb[0].mxu0
      %v1038 = vadd.f32 %v231, %v1037
      %v1039 = vpop.f32.mrb[0].mxu0
      %v1040 = vpop.f32.mrb[0].mxu0
      %v1041 = vadd.f32 %v231, %v1040
      %v1042 = vpop.f32.mrb[0].mxu0
      %1043 = vmatprep.mubr.bf16.mxu0 0
      %1044 = vmatmul.mubr.bf16.gmra.mrb[0].mxu0 %v917
      %v1045 = vpop.f32.mrb[0].mxu0
      %v1046 = vadd.f32 %v231, %v1045
      %v1047 = vpop.f32.mrb[0].mxu0
      %v1048 = vpop.f32.mrb[0].mxu0
      %v1049 = vadd.f32 %v231, %v1048
      %v1050 = vpop.f32.mrb[0].mxu0
      %1051 = vmatprep.mubr.bf16.mxu0 0
      %1052 = vmatmul.mubr.bf16.gmra.mrb[0].mxu0 %v920
      %v1053 = vpop.f32.mrb[0].mxu0
      %v1054 = vadd.f32 %v231, %v1053
      %v1055 = vpop.f32.mrb[0].mxu0
      %v1056 = vpop.f32.mrb[0].mxu0
      %v1057 = vadd.f32 %v231, %v1056
      %v1058 = vpop.f32.mrb[0].mxu0
      %1059 = vmatprep.mubr.bf16.mxu0 0
      %1060 = vmatmul.mubr.bf16.gmra.mrb[0].mxu0 %v923
      %v1061 = vpop.f32.mrb[0].mxu0
      %v1062 = vadd.f32 %v231, %v1061
      %v1063 = vpop.f32.mrb[0].mxu0
      %v1064 = vpop.f32.mrb[0].mxu0
      %v1065 = vadd.f32 %v231, %v1064
      %v1066 = vpop.f32.mrb[0].mxu0
      %1067 = vmatprep.mubr.bf16.mxu0 0
      %1068 = vmatmul.mubr.bf16.gmra.mrb[0].mxu0 %v926
      %v1069 = vpop.f32.mrb[0].mxu0
      %v1070 = vadd.f32 %v231, %v1069
      %v1071 = vpop.f32.mrb[0].mxu0
      %v1072 = vpop.f32.mrb[0].mxu0
      %v1073 = vadd.f32 %v231, %v1072
      %v1074 = vpop.f32.mrb[0].mxu0
      %1075 = vmatprep.mubr.bf16.mxu0 0
      %1076 = vmatmul.mubr.bf16.gmra.mrb[0].mxu0 %v929
      %v1077 = vpop.f32.mrb[0].mxu0
      %v1078 = vadd.f32 %v231, %v1077
      %v1079 = vpop.f32.mrb[0].mxu0
      %v1080 = vpop.f32.mrb[0].mxu0
      %v1081 = vadd.f32 %v231, %v1080
      %v1082 = vpop.f32.mrb[0].mxu0
      %1083 = vmatprep.mubr.bf16.mxu0 0
      %1084 = vmatmul.mubr.bf16.gmra.mrb[0].mxu0 %v932
      %v1085 = vpop.f32.mrb[0].mxu0
      %v1086 = vadd.f32 %v231, %v1085
      %v1087 = vpop.f32.mrb[0].mxu0
      %v1088 = vpop.f32.mrb[0].mxu0
      %v1089 = vadd.f32 %v231, %v1088
      %v1090 = vpop.f32.mrb[0].mxu0
      %1091 = vmatprep.mubr.bf16.mxu0 0
      %1092 = vmatmul.mubr.bf16.gmra.mrb[0].mxu0 %v935
      %v1093 = vpop.f32.mrb[0].mxu0
      %v1094 = vadd.f32 %v231, %v1093
      %v1095 = vpop.f32.mrb[0].mxu0
      %v1096 = vpop.f32.mrb[0].mxu0
      %v1097 = vadd.f32 %v231, %v1096
      %v1098 = vpop.f32.mrb[0].mxu0
      %1099 = vmatprep.mubr.bf16.mxu0 0
      %1100 = vmatmul.mubr.bf16.gmra.mrb[0].mxu0 %v938
      %v1101 = vpop.f32.mrb[0].mxu0
      %v1102 = vadd.f32 %v231, %v1101
      %v1103 = vpop.f32.mrb[0].mxu0
      %v1104 = vpop.f32.mrb[0].mxu0
      %v1105 = vadd.f32 %v231, %v1104
      %v1106 = vpop.f32.mrb[0].mxu0
      %1107 = vmatprep.mubr.bf16.mxu0 0
      %1108 = vmatmul.mubr.bf16.gmra.mrb[0].mxu0 %v941
      %v1109 = vpop.f32.mrb[0].mxu0
      %v1110 = vadd.f32 %v231, %v1109
      %v1111 = vpop.f32.mrb[0].mxu0
      %v1112 = vpop.f32.mrb[0].mxu0
      %v1113 = vadd.f32 %v231, %v1112
      %v1114 = vpop.f32.mrb[0].mxu0
      %1115 = vmatprep.mubr.bf16.mxu0 0
      %1116 = vmatmul.mubr.bf16.gmra.mrb[0].mxu0 %v944
      %v1117 = vpop.f32.mrb[0].mxu0
      %v1118 = vadd.f32 %v231, %v1117
      %v1119 = vpop.f32.mrb[0].mxu0
      %v1120 = vpop.f32.mrb[0].mxu0
      %v1121 = vadd.f32 %v231, %v1120
      %v1122 = vpop.f32.mrb[0].mxu0
      %1123 = vmatprep.mubr.bf16.mxu0 0
      %1124 = vmatmul.mubr.bf16.gmra.mrb[0].mxu0 %v947
      %v1125 = vpop.f32.mrb[0].mxu0
      %v1126 = vadd.f32 %v231, %v1125
      %v1127 = vpop.f32.mrb[0].mxu0
      %v1128 = vpop.f32.mrb[0].mxu0
      %v1129 = vadd.f32 %v231, %v1128
      %v1130 = vpop.f32.mrb[0].mxu0
      %1131 = vmatprep.mubr.bf16.mxu0 0
      %1132 = vmatmul.mubr.bf16.gmra.mrb[0].mxu0 %v950
      %v1133 = vpop.f32.mrb[0].mxu0
      %v1134 = vadd.f32 %v231, %v1133
      %v1135 = vpop.f32.mrb[0].mxu0
      %v1136 = vpop.f32.mrb[0].mxu0
      %v1137 = vadd.f32 %v231, %v1136
      %v1138 = vpop.f32.mrb[0].mxu0
      %1139 = vmatprep.mubr.bf16.mxu0 0
      %1140 = vmatmul.mubr.bf16.gmra.mrb[0].mxu0 %v953
      %v1141 = vpop.f32.mrb[0].mxu0
      %v1142 = vadd.f32 %v231, %v1141
      %v1143 = vpop.f32.mrb[0].mxu0
      %v1144 = vpop.f32.mrb[0].mxu0
      %v1145 = vadd.f32 %v231, %v1144
      %v1146 = vpop.f32.mrb[0].mxu0
      %1147 = vmatprep.mubr.bf16.mxu0 0
      %1148 = vmatmul.mubr.bf16.gmra.mrb[0].mxu0 %v956
      %v1149 = vpop.f32.mrb[0].mxu0
      %v1150 = vadd.f32 %v231, %v1149
      %v1151 = vpop.f32.mrb[0].mxu0
      %v1152 = vpop.f32.mrb[0].mxu0
      %v1153 = vadd.f32 %v231, %v1152
      %v1154 = vpop.f32.mrb[0].mxu0
      %1155 = vmatprep.mubr.bf16.mxu0 0
      %1156 = vmatmul.mubr.bf16.gmra.mrb[0].mxu0 %v959
      %v1157 = vpop.f32.mrb[0].mxu0
      %v1158 = vadd.f32 %v231, %v1157
      %v1159 = vpop.f32.mrb[0].mxu0
      %v1160 = vpop.f32.mrb[0].mxu0
      %v1161 = vadd.f32 %v231, %v1160
      %v1162 = vpop.f32.mrb[0].mxu0
      %1163 = vmatprep.mubr.bf16.mxu0 0
      %1164 = vmatmul.mubr.bf16.gmra.mrb[0].mxu0 %v962
      %v1165 = vpop.f32.mrb[0].mxu0
      %v1166 = vadd.f32 %v231, %v1165
      %v1167 = vpop.f32.mrb[0].mxu0
      %v1168 = vpop.f32.mrb[0].mxu0
      %v1169 = vadd.f32 %v231, %v1168
      %v1170 = vpop.f32.mrb[0].mxu0
      %1171 = vmatprep.mubr.bf16.mxu0 0
      %1172 = vmatmul.mubr.bf16.gmra.mrb[0].mxu0 %v965
      %v1173 = vpop.f32.mrb[0].mxu0
      %v1174 = vadd.f32 %v231, %v1173
      %v1175 = vpop.f32.mrb[0].mxu0
      %v1176 = vpop.f32.mrb[0].mxu0
      %v1177 = vadd.f32 %v231, %v1176
      %v1178 = vpop.f32.mrb[0].mxu0
      %1179 = vmatprep.mubr.bf16.mxu0 0
      %1180 = vmatmul.mubr.bf16.gmra.mrb[0].mxu0 %v968
      %v1181 = vpop.f32.mrb[0].mxu0
      %v1182 = vadd.f32 %v231, %v1181
      %v1183 = vpop.f32.mrb[0].mxu0
      %v1184 = vpop.f32.mrb[0].mxu0
      %v1185 = vadd.f32 %v231, %v1184
      %v1186 = vpop.f32.mrb[0].mxu0
      %1187 = vmatprep.mubr.bf16.mxu0 0
      %1188 = vmatmul.mubr.bf16.gmra.mrb[0].mxu0 %v971
      %v1189 = vpop.f32.mrb[0].mxu0
      %v1190 = vadd.f32 %v231, %v1189
      %v1191 = vpop.f32.mrb[0].mxu0
      %v1192 = vpop.f32.mrb[0].mxu0
      %v1193 = vadd.f32 %v231, %v1192
      %v1194 = vpop.f32.mrb[0].mxu0
      %1195 = vmatprep.mubr.bf16.mxu0 0
      %1196 = vmatmul.mubr.bf16.gmra.mrb[0].mxu0 %v974
      %v1197 = vpop.f32.mrb[0].mxu0
      %v1198 = vadd.f32 %v231, %v1197
      %v1199 = vpop.f32.mrb[0].mxu0
      %v1200 = vpop.f32.mrb[0].mxu0
      %v1201 = vadd.f32 %v231, %v1200
      %v1202 = vpop.f32.mrb[0].mxu0
      %1203 = vmatprep.mubr.bf16.mxu0 0
      %1204 = vmatmul.mubr.bf16.gmra.mrb[0].mxu0 %v977
      %v1205 = vpop.f32.mrb[0].mxu0
      %v1206 = vadd.f32 %v231, %v1205
      %v1207 = vpop.f32.mrb[0].mxu0
      %v1208 = vpop.f32.mrb[0].mxu0
      %v1209 = vadd.f32 %v231, %v1208
      %v1210 = vpop.f32.mrb[0].mxu0
      %1211 = vdwg.mxu0
      %v1212 = vld [vmem:[#allocation2] sm:$0xff]
      %v1213 = vld [vmem:[#allocation2 + $0x8] sm:$0xff]
      %v1214 = vld [vmem:[#allocation2 + $0x10] sm:$0xff]
      %v1215 = vld [vmem:[#allocation2 + $0x18] sm:$0xff]
      %v1216 = vld [vmem:[#allocation2 + $0x20] sm:$0xff]
      %v1217 = vld [vmem:[#allocation2 + $0x28] sm:$0xff]
      %v1218 = vld [vmem:[#allocation2 + $0x30] sm:$0xff]
      %v1219 = vld [vmem:[#allocation2 + $0x38] sm:$0xff]
      %v1220 = vld [vmem:[#allocation2 + $0x40] sm:$0xff]
      %v1221 = vld [vmem:[#allocation2 + $0x48] sm:$0xff]
      %v1222 = vld [vmem:[#allocation2 + $0x50] sm:$0xff]
      %v1223 = vld [vmem:[#allocation2 + $0x58] sm:$0xff]
      %v1224 = vld [vmem:[#allocation2 + $0x60] sm:$0xff]
      %v1225 = vld [vmem:[#allocation2 + $0x68] sm:$0xff]
      %v1226 = vld [vmem:[#allocation2 + $0x70] sm:$0xff]
      %v1227 = vld [vmem:[#allocation2 + $0x78] sm:$0xff]
      %v1228 = vld [vmem:[#allocation2 + $0x80] sm:$0xff]
      %v1229 = vld [vmem:[#allocation2 + $0x88] sm:$0xff]
      %v1230 = vld [vmem:[#allocation2 + $0x90] sm:$0xff]
      %v1231 = vld [vmem:[#allocation2 + $0x98] sm:$0xff]
      %v1232 = vld [vmem:[#allocation2 + $0xa0] sm:$0xff]
      %v1233 = vld [vmem:[#allocation2 + $0xa8] sm:$0xff]
      %v1234 = vld [vmem:[#allocation2 + $0xb0] sm:$0xff]
      %v1235 = vld [vmem:[#allocation2 + $0xb8] sm:$0xff]
      %v1236 = vld [vmem:[#allocation2 + $0xc0] sm:$0xff]
      %v1237 = vld [vmem:[#allocation2 + $0xc8] sm:$0xff]
      %v1238 = vld [vmem:[#allocation2 + $0xd0] sm:$0xff]
      %v1239 = vld [vmem:[#allocation2 + $0xd8] sm:$0xff]
      %v1240 = vld [vmem:[#allocation2 + $0xe0] sm:$0xff]
      %v1241 = vld [vmem:[#allocation2 + $0xe8] sm:$0xff]
      %v1242 = vld [vmem:[#allocation2 + $0xf0] sm:$0xff]
      %v1243 = vld [vmem:[#allocation2 + $0xf8] sm:$0xff]
      %v1244 = vld [vmem:[#allocation2 + $0x100] sm:$0xff]
      %v1245 = vld [vmem:[#allocation2 + $0x108] sm:$0xff]
      %v1246 = vld [vmem:[#allocation2 + $0x110] sm:$0xff]
      %v1247 = vld [vmem:[#allocation2 + $0x118] sm:$0xff]
      %v1248 = vld [vmem:[#allocation2 + $0x120] sm:$0xff]
      %v1249 = vld [vmem:[#allocation2 + $0x128] sm:$0xff]
      %v1250 = vld [vmem:[#allocation2 + $0x130] sm:$0xff]
      %v1251 = vld [vmem:[#allocation2 + $0x138] sm:$0xff]
      %v1252 = vld [vmem:[#allocation2 + $0x140] sm:$0xff]
      %v1253 = vld [vmem:[#allocation2 + $0x148] sm:$0xff]
      %v1254 = vld [vmem:[#allocation2 + $0x150] sm:$0xff]
      %v1255 = vld [vmem:[#allocation2 + $0x158] sm:$0xff]
      %v1256 = vld [vmem:[#allocation2 + $0x160] sm:$0xff]
      %v1257 = vld [vmem:[#allocation2 + $0x168] sm:$0xff]
      %v1258 = vld [vmem:[#allocation2 + $0x170] sm:$0xff]
      %v1259 = vld [vmem:[#allocation2 + $0x178] sm:$0xff]
      %v1260 = vld [vmem:[#allocation2 + $0x180] sm:$0xff]
      %v1261 = vld [vmem:[#allocation2 + $0x188] sm:$0xff]
      %v1262 = vmax.f32 %v1212, %v1014
      %v1263 = vmax.f32 %v1213, %v1017
      %v1264 = vmax.f32 %v1214, %v1022
      %v1265 = vmax.f32 %v1215, %v1025
      %v1266 = vmax.f32 %v1216, %v1030
      %v1267 = vmax.f32 %v1217, %v1033
      %v1268 = vmax.f32 %v1218, %v1038
      %v1269 = vmax.f32 %v1219, %v1041
      %v1270 = vmax.f32 %v1220, %v1046
      %v1271 = vmax.f32 %v1221, %v1049
      %v1272 = vmax.f32 %v1222, %v1054
      %v1273 = vmax.f32 %v1223, %v1057
      %v1274 = vmax.f32 %v1224, %v1062
      %v1275 = vmax.f32 %v1225, %v1065
      %v1276 = vmax.f32 %v1226, %v1070
      %v1277 = vmax.f32 %v1227, %v1073
      %v1278 = vmax.f32 %v1228, %v1078
      %v1279 = vmax.f32 %v1229, %v1081
      %v1280 = vmax.f32 %v1230, %v1086
      %v1281 = vmax.f32 %v1231, %v1089
      %v1282 = vmax.f32 %v1232, %v1094
      %v1283 = vmax.f32 %v1233, %v1097
      %v1284 = vmax.f32 %v1234, %v1102
      %v1285 = vmax.f32 %v1235, %v1105
      %v1286 = vmax.f32 %v1236, %v1110
      %v1287 = vmax.f32 %v1237, %v1113
      %v1288 = vmax.f32 %v1238, %v1118
      %v1289 = vmax.f32 %v1239, %v1121
      %v1290 = vmax.f32 %v1240, %v1126
      %v1291 = vmax.f32 %v1241, %v1129
      %v1292 = vmax.f32 %v1242, %v1134
      %v1293 = vmax.f32 %v1243, %v1137
      %v1294 = vmax.f32 %v1244, %v1142
      %v1295 = vmax.f32 %v1245, %v1145
      %v1296 = vmax.f32 %v1246, %v1150
      %v1297 = vmax.f32 %v1247, %v1153
      %v1298 = vmax.f32 %v1248, %v1158
      %v1299 = vmax.f32 %v1249, %v1161
      %v1300 = vmax.f32 %v1250, %v1166
      %v1301 = vmax.f32 %v1251, %v1169
      %v1302 = vmax.f32 %v1252, %v1174
      %v1303 = vmax.f32 %v1253, %v1177
      %v1304 = vmax.f32 %v1254, %v1182
      %v1305 = vmax.f32 %v1255, %v1185
      %v1306 = vmax.f32 %v1256, %v1190
      %v1307 = vmax.f32 %v1257, %v1193
      %v1308 = vmax.f32 %v1258, %v1198
      %v1309 = vmax.f32 %v1259, %v1201
      %v1310 = vmax.f32 %v1260, %v1206
      %v1311 = vmax.f32 %v1261, %v1209
      %1312 = vst [vmem:[#allocation2] sm:$0xff] %v1262
      %1313 = vst [vmem:[#allocation2 + $0x8] sm:$0xff] %v1263
      %1314 = vst [vmem:[#allocation2 + $0x10] sm:$0xff] %v1264
      %1315 = vst [vmem:[#allocation2 + $0x18] sm:$0xff] %v1265
      %1316 = vst [vmem:[#allocation2 + $0x20] sm:$0xff] %v1266
      %1317 = vst [vmem:[#allocation2 + $0x28] sm:$0xff] %v1267
      %1318 = vst [vmem:[#allocation2 + $0x30] sm:$0xff] %v1268
      %1319 = vst [vmem:[#allocation2 + $0x38] sm:$0xff] %v1269
      %1320 = vst [vmem:[#allocation2 + $0x40] sm:$0xff] %v1270
      %1321 = vst [vmem:[#allocation2 + $0x48] sm:$0xff] %v1271
      %1322 = vst [vmem:[#allocation2 + $0x50] sm:$0xff] %v1272
      %1323 = vst [vmem:[#allocation2 + $0x58] sm:$0xff] %v1273
      %1324 = vst [vmem:[#allocation2 + $0x60] sm:$0xff] %v1274
      %1325 = vst [vmem:[#allocation2 + $0x68] sm:$0xff] %v1275
      %1326 = vst [vmem:[#allocation2 + $0x70] sm:$0xff] %v1276
      %1327 = vst [vmem:[#allocation2 + $0x78] sm:$0xff] %v1277
      %1328 = vst [vmem:[#allocation2 + $0x80] sm:$0xff] %v1278
      %1329 = vst [vmem:[#allocation2 + $0x88] sm:$0xff] %v1279
      %1330 = vst [vmem:[#allocation2 + $0x90] sm:$0xff] %v1280
      %1331 = vst [vmem:[#allocation2 + $0x98] sm:$0xff] %v1281
      %1332 = vst [vmem:[#allocation2 + $0xa0] sm:$0xff] %v1282
      %1333 = vst [vmem:[#allocation2 + $0xa8] sm:$0xff] %v1283
      %1334 = vst [vmem:[#allocation2 + $0xb0] sm:$0xff] %v1284
      %1335 = vst [vmem:[#allocation2 + $0xb8] sm:$0xff] %v1285
      %1336 = vst [vmem:[#allocation2 + $0xc0] sm:$0xff] %v1286
      %1337 = vst [vmem:[#allocation2 + $0xc8] sm:$0xff] %v1287
      %1338 = vst [vmem:[#allocation2 + $0xd0] sm:$0xff] %v1288
      %1339 = vst [vmem:[#allocation2 + $0xd8] sm:$0xff] %v1289
      %1340 = vst [vmem:[#allocation2 + $0xe0] sm:$0xff] %v1290
      %1341 = vst [vmem:[#allocation2 + $0xe8] sm:$0xff] %v1291
      %1342 = vst [vmem:[#allocation2 + $0xf0] sm:$0xff] %v1292
      %1343 = vst [vmem:[#allocation2 + $0xf8] sm:$0xff] %v1293
      %1344 = vst [vmem:[#allocation2 + $0x100] sm:$0xff] %v1294
      %1345 = vst [vmem:[#allocation2 + $0x108] sm:$0xff] %v1295
      %1346 = vst [vmem:[#allocation2 + $0x110] sm:$0xff] %v1296
      %1347 = vst [vmem:[#allocation2 + $0x118] sm:$0xff] %v1297
      %1348 = vst [vmem:[#allocation2 + $0x120] sm:$0xff] %v1298
      %1349 = vst [vmem:[#allocation2 + $0x128] sm:$0xff] %v1299
      %1350 = vst [vmem:[#allocation2 + $0x130] sm:$0xff] %v1300
      %1351 = vst [vmem:[#allocation2 + $0x138] sm:$0xff] %v1301
      %1352 = vst [vmem:[#allocation2 + $0x140] sm:$0xff] %v1302
      %1353 = vst [vmem:[#allocation2 + $0x148] sm:$0xff] %v1303
      %1354 = vst [vmem:[#allocation2 + $0x150] sm:$0xff] %v1304
      %1355 = vst [vmem:[#allocation2 + $0x158] sm:$0xff] %v1305
      %1356 = vst [vmem:[#allocation2 + $0x160] sm:$0xff] %v1306
      %1357 = vst [vmem:[#allocation2 + $0x168] sm:$0xff] %v1307
      %1358 = vst [vmem:[#allocation2 + $0x170] sm:$0xff] %v1308
      %1359 = vst [vmem:[#allocation2 + $0x178] sm:$0xff] %v1309
      %1360 = vst [vmem:[#allocation2 + $0x180] sm:$0xff] %v1310
      %1361 = vst [vmem:[#allocation2 + $0x188] sm:$0xff] %v1311
      %v1362 = vld [vmem:[%s165 + $0x190] sm:$0xf]
      %v1363 = vld [vmem:[%s165 + $0x194] sm:$0xf]
      %v1364 = vld [vmem:[%s165 + $0x198] sm:$0xf]
      %v1365 = vld [vmem:[%s165 + $0x19c] sm:$0xf]
      %v1366 = vld [vmem:[%s165 + $0x1a0] sm:$0xf]
      %v1367 = vld [vmem:[%s165 + $0x1a4] sm:$0xf]
      %v1368 = vld [vmem:[%s165 + $0x1a8] sm:$0xf]
      %v1369 = vld [vmem:[%s165 + $0x1ac] sm:$0xf]
      %v1370 = vld [vmem:[%s165 + $0x1b0] sm:$0xf]
      %v1371 = vld [vmem:[%s165 + $0x1b4] sm:$0xf]
      %v1372 = vld [vmem:[%s165 + $0x1b8] sm:$0xf]
      %v1373 = vld [vmem:[%s165 + $0x1bc] sm:$0xf]
      %v1374 = vld [vmem:[%s165 + $0x1c0] sm:$0xf]
      %v1375 = vld [vmem:[%s165 + $0x1c4] sm:$0xf]
      %v1376 = vld [vmem:[%s165 + $0x1c8] sm:$0xf]
      %v1377 = vld [vmem:[%s165 + $0x1cc] sm:$0xf]
      %v1378 = vld [vmem:[%s165 + $0x1d0] sm:$0xf]
      %v1379 = vld [vmem:[%s165 + $0x1d4] sm:$0xf]
      %v1380 = vld [vmem:[%s165 + $0x1d8] sm:$0xf]
      %v1381 = vld [vmem:[%s165 + $0x1dc] sm:$0xf]
      %v1382 = vld [vmem:[%s165 + $0x1e0] sm:$0xf]
      %v1383 = vld [vmem:[%s165 + $0x1e4] sm:$0xf]
      %v1384 = vld [vmem:[%s165 + $0x1e8] sm:$0xf]
      %v1385 = vld [vmem:[%s165 + $0x1ec] sm:$0xf]
      %v1386 = vld [vmem:[%s165 + $0x1f0] sm:$0xf]
      %v1387 = vld [vmem:[%s165 + $0x1f4] sm:$0xf]
      %v1388 = vld [vmem:[%s165 + $0x1f8] sm:$0xf]
      %v1389 = vld [vmem:[%s165 + $0x1fc] sm:$0xf]
      %v1390 = vld [vmem:[%s165 + $0x200] sm:$0xf]
      %v1391 = vld [vmem:[%s165 + $0x204] sm:$0xf]
      %v1392 = vld [vmem:[%s165 + $0x208] sm:$0xf]
      %v1393 = vld [vmem:[%s165 + $0x20c] sm:$0xf]
      %v1394 = vld [vmem:[%s165 + $0x210] sm:$0xf]
      %v1395 = vld [vmem:[%s165 + $0x214] sm:$0xf]
      %v1396 = vld [vmem:[%s165 + $0x218] sm:$0xf]
      %v1397 = vld [vmem:[%s165 + $0x21c] sm:$0xf]
      %v1398 = vld [vmem:[%s165 + $0x220] sm:$0xf]
      %v1399 = vld [vmem:[%s165 + $0x224] sm:$0xf]
      %v1400 = vld [vmem:[%s165 + $0x228] sm:$0xf]
      %v1401 = vld [vmem:[%s165 + $0x22c] sm:$0xf]
      %v1402 = vld [vmem:[%s165 + $0x230] sm:$0xf]
      %v1403 = vld [vmem:[%s165 + $0x234] sm:$0xf]
      %v1404 = vld [vmem:[%s165 + $0x238] sm:$0xf]
      %v1405 = vld [vmem:[%s165 + $0x23c] sm:$0xf]
      %v1406 = vld [vmem:[%s165 + $0x240] sm:$0xf]
      %v1407 = vld [vmem:[%s165 + $0x244] sm:$0xf]
      %v1408 = vld [vmem:[%s165 + $0x248] sm:$0xf]
      %v1409 = vld [vmem:[%s165 + $0x24c] sm:$0xf]
      %v1410 = vld [vmem:[%s165 + $0x250] sm:$0xf]
      %v1411 = vld [vmem:[%s165 + $0x254] sm:$0xf]
      %v1462 = vunpack.c.l.b16 %v1362
      %v1463 = vunpack.c.l.b16 %v1363
      %v1464 = vunpack.c.l.b16 %v1364
      %v1465 = vunpack.c.l.b16 %v1365
      %v1466 = vunpack.c.l.b16 %v1366
      %v1467 = vunpack.c.l.b16 %v1367
      %v1468 = vunpack.c.l.b16 %v1368
      %v1469 = vunpack.c.l.b16 %v1369
      %v1470 = vunpack.c.l.b16 %v1370
      %v1471 = vunpack.c.l.b16 %v1371
      %v1472 = vunpack.c.l.b16 %v1372
      %v1473 = vunpack.c.l.b16 %v1373
      %v1474 = vunpack.c.l.b16 %v1374
      %v1475 = vunpack.c.l.b16 %v1375
      %v1476 = vunpack.c.l.b16 %v1376
      %v1477 = vunpack.c.l.b16 %v1377
      %v1478 = vunpack.c.l.b16 %v1378
      %v1479 = vunpack.c.l.b16 %v1379
      %v1480 = vunpack.c.l.b16 %v1380
      %v1481 = vunpack.c.l.b16 %v1381
      %v1482 = vunpack.c.l.b16 %v1382
      %v1483 = vunpack.c.l.b16 %v1383
      %v1484 = vunpack.c.l.b16 %v1384
      %v1485 = vunpack.c.l.b16 %v1385
      %v1486 = vunpack.c.l.b16 %v1386
      %v1487 = vunpack.c.l.b16 %v1387
      %v1488 = vunpack.c.l.b16 %v1388
      %v1489 = vunpack.c.l.b16 %v1389
      %v1490 = vunpack.c.l.b16 %v1390
      %v1491 = vunpack.c.l.b16 %v1391
      %v1492 = vunpack.c.l.b16 %v1392
      %v1493 = vunpack.c.l.b16 %v1393
      %v1494 = vunpack.c.l.b16 %v1394
      %v1495 = vunpack.c.l.b16 %v1395
      %v1496 = vunpack.c.l.b16 %v1396
      %v1497 = vunpack.c.l.b16 %v1397
      %v1498 = vunpack.c.l.b16 %v1398
      %v1499 = vunpack.c.l.b16 %v1399
      %v1500 = vunpack.c.l.b16 %v1400
      %v1501 = vunpack.c.l.b16 %v1401
      %v1502 = vunpack.c.l.b16 %v1402
      %v1503 = vunpack.c.l.b16 %v1403
      %v1504 = vunpack.c.l.b16 %v1404
      %v1505 = vunpack.c.l.b16 %v1405
      %v1506 = vunpack.c.l.b16 %v1406
      %v1507 = vunpack.c.l.b16 %v1407
      %v1508 = vunpack.c.l.b16 %v1408
      %v1509 = vunpack.c.l.b16 %v1409
      %v1510 = vunpack.c.l.b16 %v1410
      %v1511 = vunpack.c.l.b16 %v1411
      %v1512 = vpack.c.b16 %v1463, %v1462
      %v1513 = vpack.c.b16 %v1465, %v1464
      %v1514 = vpack.c.b16 %v1467, %v1466
      %v1515 = vpack.c.b16 %v1469, %v1468
      %v1516 = vpack.c.b16 %v1471, %v1470
      %v1517 = vpack.c.b16 %v1473, %v1472
      %v1518 = vpack.c.b16 %v1475, %v1474
      %v1519 = vpack.c.b16 %v1477, %v1476
      %v1520 = vpack.c.b16 %v1479, %v1478
      %v1521 = vpack.c.b16 %v1481, %v1480
      %v1522 = vpack.c.b16 %v1483, %v1482
      %v1523 = vpack.c.b16 %v1485, %v1484
      %v1524 = vpack.c.b16 %v1487, %v1486
      %v1525 = vpack.c.b16 %v1489, %v1488
      %v1526 = vpack.c.b16 %v1491, %v1490
      %v1527 = vpack.c.b16 %v1493, %v1492
      %v1528 = vpack.c.b16 %v1495, %v1494
      %v1529 = vpack.c.b16 %v1497, %v1496
      %v1530 = vpack.c.b16 %v1499, %v1498
      %v1531 = vpack.c.b16 %v1501, %v1500
      %v1532 = vpack.c.b16 %v1503, %v1502
      %v1533 = vpack.c.b16 %v1505, %v1504
      %v1534 = vpack.c.b16 %v1507, %v1506
      %v1535 = vpack.c.b16 %v1509, %v1508
      %v1536 = vpack.c.b16 %v1511, %v1510
      %v1538 = vsel %vm370, %v1512, 0
      %v1541 = vsel %vm370, %v1513, 0
      %v1544 = vsel %vm370, %v1514, 0
      %v1547 = vsel %vm370, %v1515, 0
      %v1550 = vsel %vm370, %v1516, 0
      %v1553 = vsel %vm370, %v1517, 0
      %v1556 = vsel %vm370, %v1518, 0
      %v1559 = vsel %vm370, %v1519, 0
      %v1562 = vsel %vm370, %v1520, 0
      %v1565 = vsel %vm370, %v1521, 0
      %v1568 = vsel %vm370, %v1522, 0
      %v1571 = vsel %vm370, %v1523, 0
      %v1574 = vsel %vm370, %v1524, 0
      %v1577 = vsel %vm370, %v1525, 0
      %v1580 = vsel %vm370, %v1526, 0
      %v1583 = vsel %vm370, %v1527, 0
      %v1586 = vsel %vm370, %v1528, 0
      %v1589 = vsel %vm370, %v1529, 0
      %v1592 = vsel %vm370, %v1530, 0
      %v1595 = vsel %vm370, %v1531, 0
      %v1598 = vsel %vm370, %v1532, 0
      %v1601 = vsel %vm370, %v1533, 0
      %v1604 = vsel %vm370, %v1534, 0
      %v1607 = vsel %vm370, %v1535, 0
      %v1610 = vsel %vm370, %v1536, 0
      %1612 = vmatprep.subr.bf16.mxu0 0
      %1613 = vmatpush1.bf16.msra.mxu0 %v366
      %1614 = vmatprep.subr.bf16.mxu0 0
      %1615 = vmatpush1.bf16.msra.mxu0 %v367
      %1616 = vmatprep.subr.bf16.mxu0 0
      %1617 = vmatpush1.bf16.msra.mxu0 0
      %1618 = vmatprep.subr.bf16.mxu0 0
      %1619 = vmatpush1.bf16.msra.mxu0 0
      %1620 = vmatprep.subr.bf16.mxu0 0
      %1621 = vmatpush1.bf16.msra.mxu0 0
      %1622 = vmatprep.subr.bf16.mxu0 0
      %1623 = vmatpush1.bf16.msra.mxu0 0
      %1624 = vmatprep.subr.bf16.mxu0 0
      %1625 = vmatpush1.bf16.msra.mxu0 0
      %1626 = vmatprep.subr.bf16.mxu0 0
      %1627 = vmatpush1.bf16.msra.mxu0 0
      %1628 = vmatprep.subr.bf16.mxu0 0
      %1629 = vmatpush1.bf16.msra.mxu0 0
      %1630 = vmatprep.subr.bf16.mxu0 0
      %1631 = vmatpush1.bf16.msra.mxu0 0
      %1632 = vmatprep.subr.bf16.mxu0 0
      %1633 = vmatpush1.bf16.msra.mxu0 0
      %1634 = vmatprep.subr.bf16.mxu0 0
      %1635 = vmatpush1.bf16.msra.mxu0 0
      %1636 = vmatprep.subr.bf16.mxu0 0
      %1637 = vmatpush1.bf16.msra.mxu0 0
      %1638 = vmatprep.subr.bf16.mxu0 0
      %1639 = vmatpush1.bf16.msra.mxu0 0
      %1640 = vmatprep.subr.bf16.mxu0 0
      %1641 = vmatpush1.bf16.msra.mxu0 0
      %1642 = vmatprep.subr.bf16.mxu0 0
      %1643 = vmatpush1.bf16.msra.mxu0 0
      %1644 = vmatprep.mubr.bf16.mxu0 0
      %1645 = vmatmul.mubr.bf16.gmra.mrb[0].mxu0 %v1538
      %v1646 = vpop.f32.mrb[0].mxu0
      %v1647 = vadd.f32 %v231, %v1646
      %v1648 = vpop.f32.mrb[0].mxu0
      %v1649 = vpop.f32.mrb[0].mxu0
      %v1650 = vadd.f32 %v231, %v1649
      %v1651 = vpop.f32.mrb[0].mxu0
      %1652 = vmatprep.mubr.bf16.mxu0 0
      %1653 = vmatmul.mubr.bf16.gmra.mrb[0].mxu0 %v1541
      %v1654 = vpop.f32.mrb[0].mxu0
      %v1655 = vadd.f32 %v231, %v1654
      %v1656 = vpop.f32.mrb[0].mxu0
      %v1657 = vpop.f32.mrb[0].mxu0
      %v1658 = vadd.f32 %v231, %v1657
      %v1659 = vpop.f32.mrb[0].mxu0
      %1660 = vmatprep.mubr.bf16.mxu0 0
      %1661 = vmatmul.mubr.bf16.gmra.mrb[0].mxu0 %v1544
      %v1662 = vpop.f32.mrb[0].mxu0
      %v1663 = vadd.f32 %v231, %v1662
      %v1664 = vpop.f32.mrb[0].mxu0
      %v1665 = vpop.f32.mrb[0].mxu0
      %v1666 = vadd.f32 %v231, %v1665
      %v1667 = vpop.f32.mrb[0].mxu0
      %1668 = vmatprep.mubr.bf16.mxu0 0
      %1669 = vmatmul.mubr.bf16.gmra.mrb[0].mxu0 %v1547
      %v1670 = vpop.f32.mrb[0].mxu0
      %v1671 = vadd.f32 %v231, %v1670
      %v1672 = vpop.f32.mrb[0].mxu0
      %v1673 = vpop.f32.mrb[0].mxu0
      %v1674 = vadd.f32 %v231, %v1673
      %v1675 = vpop.f32.mrb[0].mxu0
      %1676 = vmatprep.mubr.bf16.mxu0 0
      %1677 = vmatmul.mubr.bf16.gmra.mrb[0].mxu0 %v1550
      %v1678 = vpop.f32.mrb[0].mxu0
      %v1679 = vadd.f32 %v231, %v1678
      %v1680 = vpop.f32.mrb[0].mxu0
      %v1681 = vpop.f32.mrb[0].mxu0
      %v1682 = vadd.f32 %v231, %v1681
      %v1683 = vpop.f32.mrb[0].mxu0
      %1684 = vmatprep.mubr.bf16.mxu0 0
      %1685 = vmatmul.mubr.bf16.gmra.mrb[0].mxu0 %v1553
      %v1686 = vpop.f32.mrb[0].mxu0
      %v1687 = vadd.f32 %v231, %v1686
      %v1688 = vpop.f32.mrb[0].mxu0
      %v1689 = vpop.f32.mrb[0].mxu0
      %v1690 = vadd.f32 %v231, %v1689
      %v1691 = vpop.f32.mrb[0].mxu0
      %1692 = vmatprep.mubr.bf16.mxu0 0
      %1693 = vmatmul.mubr.bf16.gmra.mrb[0].mxu0 %v1556
      %v1694 = vpop.f32.mrb[0].mxu0
      %v1695 = vadd.f32 %v231, %v1694
      %v1696 = vpop.f32.mrb[0].mxu0
      %v1697 = vpop.f32.mrb[0].mxu0
      %v1698 = vadd.f32 %v231, %v1697
      %v1699 = vpop.f32.mrb[0].mxu0
      %1700 = vmatprep.mubr.bf16.mxu0 0
      %1701 = vmatmul.mubr.bf16.gmra.mrb[0].mxu0 %v1559
      %v1702 = vpop.f32.mrb[0].mxu0
      %v1703 = vadd.f32 %v231, %v1702
      %v1704 = vpop.f32.mrb[0].mxu0
      %v1705 = vpop.f32.mrb[0].mxu0
      %v1706 = vadd.f32 %v231, %v1705
      %v1707 = vpop.f32.mrb[0].mxu0
      %1708 = vmatprep.mubr.bf16.mxu0 0
      %1709 = vmatmul.mubr.bf16.gmra.mrb[0].mxu0 %v1562
      %v1710 = vpop.f32.mrb[0].mxu0
      %v1711 = vadd.f32 %v231, %v1710
      %v1712 = vpop.f32.mrb[0].mxu0
      %v1713 = vpop.f32.mrb[0].mxu0
      %v1714 = vadd.f32 %v231, %v1713
      %v1715 = vpop.f32.mrb[0].mxu0
      %1716 = vmatprep.mubr.bf16.mxu0 0
      %1717 = vmatmul.mubr.bf16.gmra.mrb[0].mxu0 %v1565
      %v1718 = vpop.f32.mrb[0].mxu0
      %v1719 = vadd.f32 %v231, %v1718
      %v1720 = vpop.f32.mrb[0].mxu0
      %v1721 = vpop.f32.mrb[0].mxu0
      %v1722 = vadd.f32 %v231, %v1721
      %v1723 = vpop.f32.mrb[0].mxu0
      %1724 = vmatprep.mubr.bf16.mxu0 0
      %1725 = vmatmul.mubr.bf16.gmra.mrb[0].mxu0 %v1568
      %v1726 = vpop.f32.mrb[0].mxu0
      %v1727 = vadd.f32 %v231, %v1726
      %v1728 = vpop.f32.mrb[0].mxu0
      %v1729 = vpop.f32.mrb[0].mxu0
      %v1730 = vadd.f32 %v231, %v1729
      %v1731 = vpop.f32.mrb[0].mxu0
      %1732 = vmatprep.mubr.bf16.mxu0 0
      %1733 = vmatmul.mubr.bf16.gmra.mrb[0].mxu0 %v1571
      %v1734 = vpop.f32.mrb[0].mxu0
      %v1735 = vadd.f32 %v231, %v1734
      %v1736 = vpop.f32.mrb[0].mxu0
      %v1737 = vpop.f32.mrb[0].mxu0
      %v1738 = vadd.f32 %v231, %v1737
      %v1739 = vpop.f32.mrb[0].mxu0
      %1740 = vmatprep.mubr.bf16.mxu0 0
      %1741 = vmatmul.mubr.bf16.gmra.mrb[0].mxu0 %v1574
      %v1742 = vpop.f32.mrb[0].mxu0
      %v1743 = vadd.f32 %v231, %v1742
      %v1744 = vpop.f32.mrb[0].mxu0
      %v1745 = vpop.f32.mrb[0].mxu0
      %v1746 = vadd.f32 %v231, %v1745
      %v1747 = vpop.f32.mrb[0].mxu0
      %1748 = vmatprep.mubr.bf16.mxu0 0
      %1749 = vmatmul.mubr.bf16.gmra.mrb[0].mxu0 %v1577
      %v1750 = vpop.f32.mrb[0].mxu0
      %v1751 = vadd.f32 %v231, %v1750
      %v1752 = vpop.f32.mrb[0].mxu0
      %v1753 = vpop.f32.mrb[0].mxu0
      %v1754 = vadd.f32 %v231, %v1753
      %v1755 = vpop.f32.mrb[0].mxu0
      %1756 = vmatprep.mubr.bf16.mxu0 0
      %1757 = vmatmul.mubr.bf16.gmra.mrb[0].mxu0 %v1580
      %v1758 = vpop.f32.mrb[0].mxu0
      %v1759 = vadd.f32 %v231, %v1758
      %v1760 = vpop.f32.mrb[0].mxu0
      %v1761 = vpop.f32.mrb[0].mxu0
      %v1762 = vadd.f32 %v231, %v1761
      %v1763 = vpop.f32.mrb[0].mxu0
      %1764 = vmatprep.mubr.bf16.mxu0 0
      %1765 = vmatmul.mubr.bf16.gmra.mrb[0].mxu0 %v1583
      %v1766 = vpop.f32.mrb[0].mxu0
      %v1767 = vadd.f32 %v231, %v1766
      %v1768 = vpop.f32.mrb[0].mxu0
      %v1769 = vpop.f32.mrb[0].mxu0
      %v1770 = vadd.f32 %v231, %v1769
      %v1771 = vpop.f32.mrb[0].mxu0
      %1772 = vmatprep.mubr.bf16.mxu0 0
      %1773 = vmatmul.mubr.bf16.gmra.mrb[0].mxu0 %v1586
      %v1774 = vpop.f32.mrb[0].mxu0
      %v1775 = vadd.f32 %v231, %v1774
      %v1776 = vpop.f32.mrb[0].mxu0
      %v1777 = vpop.f32.mrb[0].mxu0
      %v1778 = vadd.f32 %v231, %v1777
      %v1779 = vpop.f32.mrb[0].mxu0
      %1780 = vmatprep.mubr.bf16.mxu0 0
      %1781 = vmatmul.mubr.bf16.gmra.mrb[0].mxu0 %v1589
      %v1782 = vpop.f32.mrb[0].mxu0
      %v1783 = vadd.f32 %v231, %v1782
      %v1784 = vpop.f32.mrb[0].mxu0
      %v1785 = vpop.f32.mrb[0].mxu0
      %v1786 = vadd.f32 %v231, %v1785
      %v1787 = vpop.f32.mrb[0].mxu0
      %1788 = vmatprep.mubr.bf16.mxu0 0
      %1789 = vmatmul.mubr.bf16.gmra.mrb[0].mxu0 %v1592
      %v1790 = vpop.f32.mrb[0].mxu0
      %v1791 = vadd.f32 %v231, %v1790
      %v1792 = vpop.f32.mrb[0].mxu0
      %v1793 = vpop.f32.mrb[0].mxu0
      %v1794 = vadd.f32 %v231, %v1793
      %v1795 = vpop.f32.mrb[0].mxu0
      %1796 = vmatprep.mubr.bf16.mxu0 0
      %1797 = vmatmul.mubr.bf16.gmra.mrb[0].mxu0 %v1595
      %v1798 = vpop.f32.mrb[0].mxu0
      %v1799 = vadd.f32 %v231, %v1798
      %v1800 = vpop.f32.mrb[0].mxu0
      %v1801 = vpop.f32.mrb[0].mxu0
      %v1802 = vadd.f32 %v231, %v1801
      %v1803 = vpop.f32.mrb[0].mxu0
      %1804 = vmatprep.mubr.bf16.mxu0 0
      %1805 = vmatmul.mubr.bf16.gmra.mrb[0].mxu0 %v1598
      %v1806 = vpop.f32.mrb[0].mxu0
      %v1807 = vadd.f32 %v231, %v1806
      %v1808 = vpop.f32.mrb[0].mxu0
      %v1809 = vpop.f32.mrb[0].mxu0
      %v1810 = vadd.f32 %v231, %v1809
      %v1811 = vpop.f32.mrb[0].mxu0
      %1812 = vmatprep.mubr.bf16.mxu0 0
      %1813 = vmatmul.mubr.bf16.gmra.mrb[0].mxu0 %v1601
      %v1814 = vpop.f32.mrb[0].mxu0
      %v1815 = vadd.f32 %v231, %v1814
      %v1816 = vpop.f32.mrb[0].mxu0
      %v1817 = vpop.f32.mrb[0].mxu0
      %v1818 = vadd.f32 %v231, %v1817
      %v1819 = vpop.f32.mrb[0].mxu0
      %1820 = vmatprep.mubr.bf16.mxu0 0
      %1821 = vmatmul.mubr.bf16.gmra.mrb[0].mxu0 %v1604
      %v1822 = vpop.f32.mrb[0].mxu0
      %v1823 = vadd.f32 %v231, %v1822
      %v1824 = vpop.f32.mrb[0].mxu0
      %v1825 = vpop.f32.mrb[0].mxu0
      %v1826 = vadd.f32 %v231, %v1825
      %v1827 = vpop.f32.mrb[0].mxu0
      %1828 = vmatprep.mubr.bf16.mxu0 0
      %1829 = vmatmul.mubr.bf16.gmra.mrb[0].mxu0 %v1607
      %v1830 = vpop.f32.mrb[0].mxu0
      %v1831 = vadd.f32 %v231, %v1830
      %v1832 = vpop.f32.mrb[0].mxu0
      %v1833 = vpop.f32.mrb[0].mxu0
      %v1834 = vadd.f32 %v231, %v1833
      %v1835 = vpop.f32.mrb[0].mxu0
      %1836 = vmatprep.mubr.bf16.mxu0 0
      %1837 = vmatmul.mubr.bf16.gmra.mrb[0].mxu0 %v1610
      %v1838 = vpop.f32.mrb[0].mxu0
      %v1839 = vadd.f32 %v231, %v1838
      %v1840 = vpop.f32.mrb[0].mxu0
      %v1841 = vpop.f32.mrb[0].mxu0
      %v1842 = vadd.f32 %v231, %v1841
      %v1843 = vpop.f32.mrb[0].mxu0
      %1844 = vdwg.mxu0
      %v1845 = vld [vmem:[#allocation2] sm:$0xff]
      %v1846 = vld [vmem:[#allocation2 + $0x8] sm:$0xff]
      %v1847 = vld [vmem:[#allocation2 + $0x10] sm:$0xff]
      %v1848 = vld [vmem:[#allocation2 + $0x18] sm:$0xff]
      %v1849 = vld [vmem:[#allocation2 + $0x20] sm:$0xff]
      %v1850 = vld [vmem:[#allocation2 + $0x28] sm:$0xff]
      %v1851 = vld [vmem:[#allocation2 + $0x30] sm:$0xff]
      %v1852 = vld [vmem:[#allocation2 + $0x38] sm:$0xff]
      %v1853 = vld [vmem:[#allocation2 + $0x40] sm:$0xff]
      %v1854 = vld [vmem:[#allocation2 + $0x48] sm:$0xff]
      %v1855 = vld [vmem:[#allocation2 + $0x50] sm:$0xff]
      %v1856 = vld [vmem:[#allocation2 + $0x58] sm:$0xff]
      %v1857 = vld [vmem:[#allocation2 + $0x60] sm:$0xff]
      %v1858 = vld [vmem:[#allocation2 + $0x68] sm:$0xff]
      %v1859 = vld [vmem:[#allocation2 + $0x70] sm:$0xff]
      %v1860 = vld [vmem:[#allocation2 + $0x78] sm:$0xff]
      %v1861 = vld [vmem:[#allocation2 + $0x80] sm:$0xff]
      %v1862 = vld [vmem:[#allocation2 + $0x88] sm:$0xff]
      %v1863 = vld [vmem:[#allocation2 + $0x90] sm:$0xff]
      %v1864 = vld [vmem:[#allocation2 + $0x98] sm:$0xff]
      %v1865 = vld [vmem:[#allocation2 + $0xa0] sm:$0xff]
      %v1866 = vld [vmem:[#allocation2 + $0xa8] sm:$0xff]
      %v1867 = vld [vmem:[#allocation2 + $0xb0] sm:$0xff]
      %v1868 = vld [vmem:[#allocation2 + $0xb8] sm:$0xff]
      %v1869 = vld [vmem:[#allocation2 + $0xc0] sm:$0xff]
      %v1870 = vld [vmem:[#allocation2 + $0xc8] sm:$0xff]
      %v1871 = vld [vmem:[#allocation2 + $0xd0] sm:$0xff]
      %v1872 = vld [vmem:[#allocation2 + $0xd8] sm:$0xff]
      %v1873 = vld [vmem:[#allocation2 + $0xe0] sm:$0xff]
      %v1874 = vld [vmem:[#allocation2 + $0xe8] sm:$0xff]
      %v1875 = vld [vmem:[#allocation2 + $0xf0] sm:$0xff]
      %v1876 = vld [vmem:[#allocation2 + $0xf8] sm:$0xff]
      %v1877 = vld [vmem:[#allocation2 + $0x100] sm:$0xff]
      %v1878 = vld [vmem:[#allocation2 + $0x108] sm:$0xff]
      %v1879 = vld [vmem:[#allocation2 + $0x110] sm:$0xff]
      %v1880 = vld [vmem:[#allocation2 + $0x118] sm:$0xff]
      %v1881 = vld [vmem:[#allocation2 + $0x120] sm:$0xff]
      %v1882 = vld [vmem:[#allocation2 + $0x128] sm:$0xff]
      %v1883 = vld [vmem:[#allocation2 + $0x130] sm:$0xff]
      %v1884 = vld [vmem:[#allocation2 + $0x138] sm:$0xff]
      %v1885 = vld [vmem:[#allocation2 + $0x140] sm:$0xff]
      %v1886 = vld [vmem:[#allocation2 + $0x148] sm:$0xff]
      %v1887 = vld [vmem:[#allocation2 + $0x150] sm:$0xff]
      %v1888 = vld [vmem:[#allocation2 + $0x158] sm:$0xff]
      %v1889 = vld [vmem:[#allocation2 + $0x160] sm:$0xff]
      %v1890 = vld [vmem:[#allocation2 + $0x168] sm:$0xff]
      %v1891 = vld [vmem:[#allocation2 + $0x170] sm:$0xff]
      %v1892 = vld [vmem:[#allocation2 + $0x178] sm:$0xff]
      %v1893 = vld [vmem:[#allocation2 + $0x180] sm:$0xff]
      %v1894 = vld [vmem:[#allocation2 + $0x188] sm:$0xff]
      %v1895 = vmax.f32 %v1845, %v1647
      %v1896 = vmax.f32 %v1846, %v1650
      %v1897 = vmax.f32 %v1847, %v1655
      %v1898 = vmax.f32 %v1848, %v1658
      %v1899 = vmax.f32 %v1849, %v1663
      %v1900 = vmax.f32 %v1850, %v1666
      %v1901 = vmax.f32 %v1851, %v1671
      %v1902 = vmax.f32 %v1852, %v1674
      %v1903 = vmax.f32 %v1853, %v1679
      %v1904 = vmax.f32 %v1854, %v1682
      %v1905 = vmax.f32 %v1855, %v1687
      %v1906 = vmax.f32 %v1856, %v1690
      %v1907 = vmax.f32 %v1857, %v1695
      %v1908 = vmax.f32 %v1858, %v1698
      %v1909 = vmax.f32 %v1859, %v1703
      %v1910 = vmax.f32 %v1860, %v1706
      %v1911 = vmax.f32 %v1861, %v1711
      %v1912 = vmax.f32 %v1862, %v1714
      %v1913 = vmax.f32 %v1863, %v1719
      %v1914 = vmax.f32 %v1864, %v1722
      %v1915 = vmax.f32 %v1865, %v1727
      %v1916 = vmax.f32 %v1866, %v1730
      %v1917 = vmax.f32 %v1867, %v1735
      %v1918 = vmax.f32 %v1868, %v1738
      %v1919 = vmax.f32 %v1869, %v1743
      %v1920 = vmax.f32 %v1870, %v1746
      %v1921 = vmax.f32 %v1871, %v1751
      %v1922 = vmax.f32 %v1872, %v1754
      %v1923 = vmax.f32 %v1873, %v1759
      %v1924 = vmax.f32 %v1874, %v1762
      %v1925 = vmax.f32 %v1875, %v1767
      %v1926 = vmax.f32 %v1876, %v1770
      %v1927 = vmax.f32 %v1877, %v1775
      %v1928 = vmax.f32 %v1878, %v1778
      %v1929 = vmax.f32 %v1879, %v1783
      %v1930 = vmax.f32 %v1880, %v1786
      %v1931 = vmax.f32 %v1881, %v1791
      %v1932 = vmax.f32 %v1882, %v1794
      %v1933 = vmax.f32 %v1883, %v1799
      %v1934 = vmax.f32 %v1884, %v1802
      %v1935 = vmax.f32 %v1885, %v1807
      %v1936 = vmax.f32 %v1886, %v1810
      %v1937 = vmax.f32 %v1887, %v1815
      %v1938 = vmax.f32 %v1888, %v1818
      %v1939 = vmax.f32 %v1889, %v1823
      %v1940 = vmax.f32 %v1890, %v1826
      %v1941 = vmax.f32 %v1891, %v1831
      %v1942 = vmax.f32 %v1892, %v1834
      %v1943 = vmax.f32 %v1893, %v1839
      %v1944 = vmax.f32 %v1894, %v1842
      %1945 = vst [vmem:[#allocation2] sm:$0xff] %v1895
      %1946 = vst [vmem:[#allocation2 + $0x8] sm:$0xff] %v1896
      %1947 = vst [vmem:[#allocation2 + $0x10] sm:$0xff] %v1897
      %1948 = vst [vmem:[#allocation2 + $0x18] sm:$0xff] %v1898
      %1949 = vst [vmem:[#allocation2 + $0x20] sm:$0xff] %v1899
      %1950 = vst [vmem:[#allocation2 + $0x28] sm:$0xff] %v1900
      %1951 = vst [vmem:[#allocation2 + $0x30] sm:$0xff] %v1901
      %1952 = vst [vmem:[#allocation2 + $0x38] sm:$0xff] %v1902
      %1953 = vst [vmem:[#allocation2 + $0x40] sm:$0xff] %v1903
      %1954 = vst [vmem:[#allocation2 + $0x48] sm:$0xff] %v1904
      %1955 = vst [vmem:[#allocation2 + $0x50] sm:$0xff] %v1905
      %1956 = vst [vmem:[#allocation2 + $0x58] sm:$0xff] %v1906
      %1957 = vst [vmem:[#allocation2 + $0x60] sm:$0xff] %v1907
      %1958 = vst [vmem:[#allocation2 + $0x68] sm:$0xff] %v1908
      %1959 = vst [vmem:[#allocation2 + $0x70] sm:$0xff] %v1909
      %1960 = vst [vmem:[#allocation2 + $0x78] sm:$0xff] %v1910
      %1961 = vst [vmem:[#allocation2 + $0x80] sm:$0xff] %v1911
      %1962 = vst [vmem:[#allocation2 + $0x88] sm:$0xff] %v1912
      %1963 = vst [vmem:[#allocation2 + $0x90] sm:$0xff] %v1913
      %1964 = vst [vmem:[#allocation2 + $0x98] sm:$0xff] %v1914
      %1965 = vst [vmem:[#allocation2 + $0xa0] sm:$0xff] %v1915
      %1966 = vst [vmem:[#allocation2 + $0xa8] sm:$0xff] %v1916
      %1967 = vst [vmem:[#allocation2 + $0xb0] sm:$0xff] %v1917
      %1968 = vst [vmem:[#allocation2 + $0xb8] sm:$0xff] %v1918
      %1969 = vst [vmem:[#allocation2 + $0xc0] sm:$0xff] %v1919
      %1970 = vst [vmem:[#allocation2 + $0xc8] sm:$0xff] %v1920
      %1971 = vst [vmem:[#allocation2 + $0xd0] sm:$0xff] %v1921
      %1972 = vst [vmem:[#allocation2 + $0xd8] sm:$0xff] %v1922
      %1973 = vst [vmem:[#allocation2 + $0xe0] sm:$0xff] %v1923
      %1974 = vst [vmem:[#allocation2 + $0xe8] sm:$0xff] %v1924
      %1975 = vst [vmem:[#allocation2 + $0xf0] sm:$0xff] %v1925
      %1976 = vst [vmem:[#allocation2 + $0xf8] sm:$0xff] %v1926
      %1977 = vst [vmem:[#allocation2 + $0x100] sm:$0xff] %v1927
      %1978 = vst [vmem:[#allocation2 + $0x108] sm:$0xff] %v1928
      %1979 = vst [vmem:[#allocation2 + $0x110] sm:$0xff] %v1929
      %1980 = vst [vmem:[#allocation2 + $0x118] sm:$0xff] %v1930
      %1981 = vst [vmem:[#allocation2 + $0x120] sm:$0xff] %v1931
      %1982 = vst [vmem:[#allocation2 + $0x128] sm:$0xff] %v1932
      %1983 = vst [vmem:[#allocation2 + $0x130] sm:$0xff] %v1933
      %1984 = vst [vmem:[#allocation2 + $0x138] sm:$0xff] %v1934
      %1985 = vst [vmem:[#allocation2 + $0x140] sm:$0xff] %v1935
      %1986 = vst [vmem:[#allocation2 + $0x148] sm:$0xff] %v1936
      %1987 = vst [vmem:[#allocation2 + $0x150] sm:$0xff] %v1937
      %1988 = vst [vmem:[#allocation2 + $0x158] sm:$0xff] %v1938
      %1989 = vst [vmem:[#allocation2 + $0x160] sm:$0xff] %v1939
      %1990 = vst [vmem:[#allocation2 + $0x168] sm:$0xff] %v1940
      %1991 = vst [vmem:[#allocation2 + $0x170] sm:$0xff] %v1941
      %1992 = vst [vmem:[#allocation2 + $0x178] sm:$0xff] %v1942
      %1993 = vst [vmem:[#allocation2 + $0x180] sm:$0xff] %v1943
      %1994 = vst [vmem:[#allocation2 + $0x188] sm:$0xff] %v1944
      %v1995 = vld [vmem:[%s165 + $0x258] sm:$0xf]
      %v1996 = vld [vmem:[%s165 + $0x25c] sm:$0xf]
      %v1997 = vld [vmem:[%s165 + $0x260] sm:$0xf]
      %v1998 = vld [vmem:[%s165 + $0x264] sm:$0xf]
      %v1999 = vld [vmem:[%s165 + $0x268] sm:$0xf]
      %v2000 = vld [vmem:[%s165 + $0x26c] sm:$0xf]
      %v2001 = vld [vmem:[%s165 + $0x270] sm:$0xf]
      %v2002 = vld [vmem:[%s165 + $0x274] sm:$0xf]
      %v2003 = vld [vmem:[%s165 + $0x278] sm:$0xf]
      %v2004 = vld [vmem:[%s165 + $0x27c] sm:$0xf]
      %v2005 = vld [vmem:[%s165 + $0x280] sm:$0xf]
      %v2006 = vld [vmem:[%s165 + $0x284] sm:$0xf]
      %v2007 = vld [vmem:[%s165 + $0x288] sm:$0xf]
      %v2008 = vld [vmem:[%s165 + $0x28c] sm:$0xf]
      %v2009 = vld [vmem:[%s165 + $0x290] sm:$0xf]
      %v2010 = vld [vmem:[%s165 + $0x294] sm:$0xf]
      %v2011 = vld [vmem:[%s165 + $0x298] sm:$0xf]
      %v2012 = vld [vmem:[%s165 + $0x29c] sm:$0xf]
      %v2013 = vld [vmem:[%s165 + $0x2a0] sm:$0xf]
      %v2014 = vld [vmem:[%s165 + $0x2a4] sm:$0xf]
      %v2015 = vld [vmem:[%s165 + $0x2a8] sm:$0xf]
      %v2016 = vld [vmem:[%s165 + $0x2ac] sm:$0xf]
      %v2017 = vld [vmem:[%s165 + $0x2b0] sm:$0xf]
      %v2018 = vld [vmem:[%s165 + $0x2b4] sm:$0xf]
      %v2019 = vld [vmem:[%s165 + $0x2b8] sm:$0xf]
      %v2020 = vld [vmem:[%s165 + $0x2bc] sm:$0xf]
      %v2021 = vld [vmem:[%s165 + $0x2c0] sm:$0xf]
      %v2022 = vld [vmem:[%s165 + $0x2c4] sm:$0xf]
      %v2023 = vld [vmem:[%s165 + $0x2c8] sm:$0xf]
      %v2024 = vld [vmem:[%s165 + $0x2cc] sm:$0xf]
      %v2025 = vld [vmem:[%s165 + $0x2d0] sm:$0xf]
      %v2026 = vld [vmem:[%s165 + $0x2d4] sm:$0xf]
      %v2027 = vld [vmem:[%s165 + $0x2d8] sm:$0xf]
      %v2028 = vld [vmem:[%s165 + $0x2dc] sm:$0xf]
      %v2029 = vld [vmem:[%s165 + $0x2e0] sm:$0xf]
      %v2030 = vld [vmem:[%s165 + $0x2e4] sm:$0xf]
      %v2031 = vld [vmem:[%s165 + $0x2e8] sm:$0xf]
      %v2032 = vld [vmem:[%s165 + $0x2ec] sm:$0xf]
      %v2033 = vld [vmem:[%s165 + $0x2f0] sm:$0xf]
      %v2034 = vld [vmem:[%s165 + $0x2f4] sm:$0xf]
      %v2035 = vld [vmem:[%s165 + $0x2f8] sm:$0xf]
      %v2036 = vld [vmem:[%s165 + $0x2fc] sm:$0xf]
      %v2037 = vld [vmem:[%s165 + $0x300] sm:$0xf]
      %v2038 = vld [vmem:[%s165 + $0x304] sm:$0xf]
      %v2039 = vld [vmem:[%s165 + $0x308] sm:$0xf]
      %v2040 = vld [vmem:[%s165 + $0x30c] sm:$0xf]
      %v2041 = vld [vmem:[%s165 + $0x310] sm:$0xf]
      %v2042 = vld [vmem:[%s165 + $0x314] sm:$0xf]
      %v2043 = vld [vmem:[%s165 + $0x318] sm:$0xf]
      %v2044 = vld [vmem:[%s165 + $0x31c] sm:$0xf]
      %v2095 = vunpack.c.l.b16 %v1995
      %v2096 = vunpack.c.l.b16 %v1996
      %v2097 = vunpack.c.l.b16 %v1997
      %v2098 = vunpack.c.l.b16 %v1998
      %v2099 = vunpack.c.l.b16 %v1999
      %v2100 = vunpack.c.l.b16 %v2000
      %v2101 = vunpack.c.l.b16 %v2001
      %v2102 = vunpack.c.l.b16 %v2002
      %v2103 = vunpack.c.l.b16 %v2003
      %v2104 = vunpack.c.l.b16 %v2004
      %v2105 = vunpack.c.l.b16 %v2005
      %v2106 = vunpack.c.l.b16 %v2006
      %v2107 = vunpack.c.l.b16 %v2007
      %v2108 = vunpack.c.l.b16 %v2008
      %v2109 = vunpack.c.l.b16 %v2009
      %v2110 = vunpack.c.l.b16 %v2010
      %v2111 = vunpack.c.l.b16 %v2011
      %v2112 = vunpack.c.l.b16 %v2012
      %v2113 = vunpack.c.l.b16 %v2013
      %v2114 = vunpack.c.l.b16 %v2014
      %v2115 = vunpack.c.l.b16 %v2015
      %v2116 = vunpack.c.l.b16 %v2016
      %v2117 = vunpack.c.l.b16 %v2017
      %v2118 = vunpack.c.l.b16 %v2018
      %v2119 = vunpack.c.l.b16 %v2019
      %v2120 = vunpack.c.l.b16 %v2020
      %v2121 = vunpack.c.l.b16 %v2021
      %v2122 = vunpack.c.l.b16 %v2022
      %v2123 = vunpack.c.l.b16 %v2023
      %v2124 = vunpack.c.l.b16 %v2024
      %v2125 = vunpack.c.l.b16 %v2025
      %v2126 = vunpack.c.l.b16 %v2026
      %v2127 = vunpack.c.l.b16 %v2027
      %v2128 = vunpack.c.l.b16 %v2028
      %v2129 = vunpack.c.l.b16 %v2029
      %v2130 = vunpack.c.l.b16 %v2030
      %v2131 = vunpack.c.l.b16 %v2031
      %v2132 = vunpack.c.l.b16 %v2032
      %v2133 = vunpack.c.l.b16 %v2033
      %v2134 = vunpack.c.l.b16 %v2034
      %v2135 = vunpack.c.l.b16 %v2035
      %v2136 = vunpack.c.l.b16 %v2036
      %v2137 = vunpack.c.l.b16 %v2037
      %v2138 = vunpack.c.l.b16 %v2038
      %v2139 = vunpack.c.l.b16 %v2039
      %v2140 = vunpack.c.l.b16 %v2040
      %v2141 = vunpack.c.l.b16 %v2041
      %v2142 = vunpack.c.l.b16 %v2042
      %v2143 = vunpack.c.l.b16 %v2043
      %v2144 = vunpack.c.l.b16 %v2044
      %v2145 = vpack.c.b16 %v2096, %v2095
      %v2146 = vpack.c.b16 %v2098, %v2097
      %v2147 = vpack.c.b16 %v2100, %v2099
      %v2148 = vpack.c.b16 %v2102, %v2101
      %v2149 = vpack.c.b16 %v2104, %v2103
      %v2150 = vpack.c.b16 %v2106, %v2105
      %v2151 = vpack.c.b16 %v2108, %v2107
      %v2152 = vpack.c.b16 %v2110, %v2109
      %v2153 = vpack.c.b16 %v2112, %v2111
      %v2154 = vpack.c.b16 %v2114, %v2113
      %v2155 = vpack.c.b16 %v2116, %v2115
      %v2156 = vpack.c.b16 %v2118, %v2117
      %v2157 = vpack.c.b16 %v2120, %v2119
      %v2158 = vpack.c.b16 %v2122, %v2121
      %v2159 = vpack.c.b16 %v2124, %v2123
      %v2160 = vpack.c.b16 %v2126, %v2125
      %v2161 = vpack.c.b16 %v2128, %v2127
      %v2162 = vpack.c.b16 %v2130, %v2129
      %v2163 = vpack.c.b16 %v2132, %v2131
      %v2164 = vpack.c.b16 %v2134, %v2133
      %v2165 = vpack.c.b16 %v2136, %v2135
      %v2166 = vpack.c.b16 %v2138, %v2137
      %v2167 = vpack.c.b16 %v2140, %v2139
      %v2168 = vpack.c.b16 %v2142, %v2141
      %v2169 = vpack.c.b16 %v2144, %v2143
      %v2171 = vsel %vm370, %v2145, 0
      %v2174 = vsel %vm370, %v2146, 0
      %v2177 = vsel %vm370, %v2147, 0
      %v2180 = vsel %vm370, %v2148, 0
      %v2183 = vsel %vm370, %v2149, 0
      %v2186 = vsel %vm370, %v2150, 0
      %v2189 = vsel %vm370, %v2151, 0
      %v2192 = vsel %vm370, %v2152, 0
      %v2195 = vsel %vm370, %v2153, 0
      %v2198 = vsel %vm370, %v2154, 0
      %v2201 = vsel %vm370, %v2155, 0
      %v2204 = vsel %vm370, %v2156, 0
      %v2207 = vsel %vm370, %v2157, 0
      %v2210 = vsel %vm370, %v2158, 0
      %v2213 = vsel %vm370, %v2159, 0
      %v2216 = vsel %vm370, %v2160, 0
      %v2219 = vsel %vm370, %v2161, 0
      %v2222 = vsel %vm370, %v2162, 0
      %v2225 = vsel %vm370, %v2163, 0
      %v2228 = vsel %vm370, %v2164, 0
      %v2231 = vsel %vm370, %v2165, 0
      %v2234 = vsel %vm370, %v2166, 0
      %v2237 = vsel %vm370, %v2167, 0
      %v2240 = vsel %vm370, %v2168, 0
      %v2243 = vsel %vm370, %v2169, 0
      %2245 = vmatprep.subr.bf16.mxu0 0
      %2246 = vmatpush1.bf16.msra.mxu0 %v366
      %2247 = vmatprep.subr.bf16.mxu0 0
      %2248 = vmatpush1.bf16.msra.mxu0 %v367
      %2249 = vmatprep.subr.bf16.mxu0 0
      %2250 = vmatpush1.bf16.msra.mxu0 0
      %2251 = vmatprep.subr.bf16.mxu0 0
      %2252 = vmatpush1.bf16.msra.mxu0 0
      %2253 = vmatprep.subr.bf16.mxu0 0
      %2254 = vmatpush1.bf16.msra.mxu0 0
      %2255 = vmatprep.subr.bf16.mxu0 0
      %2256 = vmatpush1.bf16.msra.mxu0 0
      %2257 = vmatprep.subr.bf16.mxu0 0
      %2258 = vmatpush1.bf16.msra.mxu0 0
      %2259 = vmatprep.subr.bf16.mxu0 0
      %2260 = vmatpush1.bf16.msra.mxu0 0
      %2261 = vmatprep.subr.bf16.mxu0 0
      %2262 = vmatpush1.bf16.msra.mxu0 0
      %2263 = vmatprep.subr.bf16.mxu0 0
      %2264 = vmatpush1.bf16.msra.mxu0 0
      %2265 = vmatprep.subr.bf16.mxu0 0
      %2266 = vmatpush1.bf16.msra.mxu0 0
      %2267 = vmatprep.subr.bf16.mxu0 0
      %2268 = vmatpush1.bf16.msra.mxu0 0
      %2269 = vmatprep.subr.bf16.mxu0 0
      %2270 = vmatpush1.bf16.msra.mxu0 0
      %2271 = vmatprep.subr.bf16.mxu0 0
      %2272 = vmatpush1.bf16.msra.mxu0 0
      %2273 = vmatprep.subr.bf16.mxu0 0
      %2274 = vmatpush1.bf16.msra.mxu0 0
      %2275 = vmatprep.subr.bf16.mxu0 0
      %2276 = vmatpush1.bf16.msra.mxu0 0
      %2277 = vmatprep.mubr.bf16.mxu0 0
      %2278 = vmatmul.mubr.bf16.gmra.mrb[0].mxu0 %v2171
      %v2279 = vpop.f32.mrb[0].mxu0
      %v2280 = vadd.f32 %v231, %v2279
      %v2281 = vpop.f32.mrb[0].mxu0
      %v2282 = vpop.f32.mrb[0].mxu0
      %v2283 = vadd.f32 %v231, %v2282
      %v2284 = vpop.f32.mrb[0].mxu0
      %2285 = vmatprep.mubr.bf16.mxu0 0
      %2286 = vmatmul.mubr.bf16.gmra.mrb[0].mxu0 %v2174
      %v2287 = vpop.f32.mrb[0].mxu0
      %v2288 = vadd.f32 %v231, %v2287
      %v2289 = vpop.f32.mrb[0].mxu0
      %v2290 = vpop.f32.mrb[0].mxu0
      %v2291 = vadd.f32 %v231, %v2290
      %v2292 = vpop.f32.mrb[0].mxu0
      %2293 = vmatprep.mubr.bf16.mxu0 0
      %2294 = vmatmul.mubr.bf16.gmra.mrb[0].mxu0 %v2177
      %v2295 = vpop.f32.mrb[0].mxu0
      %v2296 = vadd.f32 %v231, %v2295
      %v2297 = vpop.f32.mrb[0].mxu0
      %v2298 = vpop.f32.mrb[0].mxu0
      %v2299 = vadd.f32 %v231, %v2298
      %v2300 = vpop.f32.mrb[0].mxu0
      %2301 = vmatprep.mubr.bf16.mxu0 0
      %2302 = vmatmul.mubr.bf16.gmra.mrb[0].mxu0 %v2180
      %v2303 = vpop.f32.mrb[0].mxu0
      %v2304 = vadd.f32 %v231, %v2303
      %v2305 = vpop.f32.mrb[0].mxu0
      %v2306 = vpop.f32.mrb[0].mxu0
      %v2307 = vadd.f32 %v231, %v2306
      %v2308 = vpop.f32.mrb[0].mxu0
      %2309 = vmatprep.mubr.bf16.mxu0 0
      %2310 = vmatmul.mubr.bf16.gmra.mrb[0].mxu0 %v2183
      %v2311 = vpop.f32.mrb[0].mxu0
      %v2312 = vadd.f32 %v231, %v2311
      %v2313 = vpop.f32.mrb[0].mxu0
      %v2314 = vpop.f32.mrb[0].mxu0
      %v2315 = vadd.f32 %v231, %v2314
      %v2316 = vpop.f32.mrb[0].mxu0
      %2317 = vmatprep.mubr.bf16.mxu0 0
      %2318 = vmatmul.mubr.bf16.gmra.mrb[0].mxu0 %v2186
      %v2319 = vpop.f32.mrb[0].mxu0
      %v2320 = vadd.f32 %v231, %v2319
      %v2321 = vpop.f32.mrb[0].mxu0
      %v2322 = vpop.f32.mrb[0].mxu0
      %v2323 = vadd.f32 %v231, %v2322
      %v2324 = vpop.f32.mrb[0].mxu0
      %2325 = vmatprep.mubr.bf16.mxu0 0
      %2326 = vmatmul.mubr.bf16.gmra.mrb[0].mxu0 %v2189
      %v2327 = vpop.f32.mrb[0].mxu0
      %v2328 = vadd.f32 %v231, %v2327
      %v2329 = vpop.f32.mrb[0].mxu0
      %v2330 = vpop.f32.mrb[0].mxu0
      %v2331 = vadd.f32 %v231, %v2330
      %v2332 = vpop.f32.mrb[0].mxu0
      %2333 = vmatprep.mubr.bf16.mxu0 0
      %2334 = vmatmul.mubr.bf16.gmra.mrb[0].mxu0 %v2192
      %v2335 = vpop.f32.mrb[0].mxu0
      %v2336 = vadd.f32 %v231, %v2335
      %v2337 = vpop.f32.mrb[0].mxu0
      %v2338 = vpop.f32.mrb[0].mxu0
      %v2339 = vadd.f32 %v231, %v2338
      %v2340 = vpop.f32.mrb[0].mxu0
      %2341 = vmatprep.mubr.bf16.mxu0 0
      %2342 = vmatmul.mubr.bf16.gmra.mrb[0].mxu0 %v2195
      %v2343 = vpop.f32.mrb[0].mxu0
      %v2344 = vadd.f32 %v231, %v2343
      %v2345 = vpop.f32.mrb[0].mxu0
      %v2346 = vpop.f32.mrb[0].mxu0
      %v2347 = vadd.f32 %v231, %v2346
      %v2348 = vpop.f32.mrb[0].mxu0
      %2349 = vmatprep.mubr.bf16.mxu0 0
      %2350 = vmatmul.mubr.bf16.gmra.mrb[0].mxu0 %v2198
      %v2351 = vpop.f32.mrb[0].mxu0
      %v2352 = vadd.f32 %v231, %v2351
      %v2353 = vpop.f32.mrb[0].mxu0
      %v2354 = vpop.f32.mrb[0].mxu0
      %v2355 = vadd.f32 %v231, %v2354
      %v2356 = vpop.f32.mrb[0].mxu0
      %2357 = vmatprep.mubr.bf16.mxu0 0
      %2358 = vmatmul.mubr.bf16.gmra.mrb[0].mxu0 %v2201
      %v2359 = vpop.f32.mrb[0].mxu0
      %v2360 = vadd.f32 %v231, %v2359
      %v2361 = vpop.f32.mrb[0].mxu0
      %v2362 = vpop.f32.mrb[0].mxu0
      %v2363 = vadd.f32 %v231, %v2362
      %v2364 = vpop.f32.mrb[0].mxu0
      %2365 = vmatprep.mubr.bf16.mxu0 0
      %2366 = vmatmul.mubr.bf16.gmra.mrb[0].mxu0 %v2204
      %v2367 = vpop.f32.mrb[0].mxu0
      %v2368 = vadd.f32 %v231, %v2367
      %v2369 = vpop.f32.mrb[0].mxu0
      %v2370 = vpop.f32.mrb[0].mxu0
      %v2371 = vadd.f32 %v231, %v2370
      %v2372 = vpop.f32.mrb[0].mxu0
      %2373 = vmatprep.mubr.bf16.mxu0 0
      %2374 = vmatmul.mubr.bf16.gmra.mrb[0].mxu0 %v2207
      %v2375 = vpop.f32.mrb[0].mxu0
      %v2376 = vadd.f32 %v231, %v2375
      %v2377 = vpop.f32.mrb[0].mxu0
      %v2378 = vpop.f32.mrb[0].mxu0
      %v2379 = vadd.f32 %v231, %v2378
      %v2380 = vpop.f32.mrb[0].mxu0
      %2381 = vmatprep.mubr.bf16.mxu0 0
      %2382 = vmatmul.mubr.bf16.gmra.mrb[0].mxu0 %v2210
      %v2383 = vpop.f32.mrb[0].mxu0
      %v2384 = vadd.f32 %v231, %v2383
      %v2385 = vpop.f32.mrb[0].mxu0
      %v2386 = vpop.f32.mrb[0].mxu0
      %v2387 = vadd.f32 %v231, %v2386
      %v2388 = vpop.f32.mrb[0].mxu0
      %2389 = vmatprep.mubr.bf16.mxu0 0
      %2390 = vmatmul.mubr.bf16.gmra.mrb[0].mxu0 %v2213
      %v2391 = vpop.f32.mrb[0].mxu0
      %v2392 = vadd.f32 %v231, %v2391
      %v2393 = vpop.f32.mrb[0].mxu0
      %v2394 = vpop.f32.mrb[0].mxu0
      %v2395 = vadd.f32 %v231, %v2394
      %v2396 = vpop.f32.mrb[0].mxu0
      %2397 = vmatprep.mubr.bf16.mxu0 0
      %2398 = vmatmul.mubr.bf16.gmra.mrb[0].mxu0 %v2216
      %v2399 = vpop.f32.mrb[0].mxu0
      %v2400 = vadd.f32 %v231, %v2399
      %v2401 = vpop.f32.mrb[0].mxu0
      %v2402 = vpop.f32.mrb[0].mxu0
      %v2403 = vadd.f32 %v231, %v2402
      %v2404 = vpop.f32.mrb[0].mxu0
      %2405 = vmatprep.mubr.bf16.mxu0 0
      %2406 = vmatmul.mubr.bf16.gmra.mrb[0].mxu0 %v2219
      %v2407 = vpop.f32.mrb[0].mxu0
      %v2408 = vadd.f32 %v231, %v2407
      %v2409 = vpop.f32.mrb[0].mxu0
      %v2410 = vpop.f32.mrb[0].mxu0
      %v2411 = vadd.f32 %v231, %v2410
      %v2412 = vpop.f32.mrb[0].mxu0
      %2413 = vmatprep.mubr.bf16.mxu0 0
      %2414 = vmatmul.mubr.bf16.gmra.mrb[0].mxu0 %v2222
      %v2415 = vpop.f32.mrb[0].mxu0
      %v2416 = vadd.f32 %v231, %v2415
      %v2417 = vpop.f32.mrb[0].mxu0
      %v2418 = vpop.f32.mrb[0].mxu0
      %v2419 = vadd.f32 %v231, %v2418
      %v2420 = vpop.f32.mrb[0].mxu0
      %2421 = vmatprep.mubr.bf16.mxu0 0
      %2422 = vmatmul.mubr.bf16.gmra.mrb[0].mxu0 %v2225
      %v2423 = vpop.f32.mrb[0].mxu0
      %v2424 = vadd.f32 %v231, %v2423
      %v2425 = vpop.f32.mrb[0].mxu0
      %v2426 = vpop.f32.mrb[0].mxu0
      %v2427 = vadd.f32 %v231, %v2426
      %v2428 = vpop.f32.mrb[0].mxu0
      %2429 = vmatprep.mubr.bf16.mxu0 0
      %2430 = vmatmul.mubr.bf16.gmra.mrb[0].mxu0 %v2228
      %v2431 = vpop.f32.mrb[0].mxu0
      %v2432 = vadd.f32 %v231, %v2431
      %v2433 = vpop.f32.mrb[0].mxu0
      %v2434 = vpop.f32.mrb[0].mxu0
      %v2435 = vadd.f32 %v231, %v2434
      %v2436 = vpop.f32.mrb[0].mxu0
      %2437 = vmatprep.mubr.bf16.mxu0 0
      %2438 = vmatmul.mubr.bf16.gmra.mrb[0].mxu0 %v2231
      %v2439 = vpop.f32.mrb[0].mxu0
      %v2440 = vadd.f32 %v231, %v2439
      %v2441 = vpop.f32.mrb[0].mxu0
      %v2442 = vpop.f32.mrb[0].mxu0
      %v2443 = vadd.f32 %v231, %v2442
      %v2444 = vpop.f32.mrb[0].mxu0
      %2445 = vmatprep.mubr.bf16.mxu0 0
      %2446 = vmatmul.mubr.bf16.gmra.mrb[0].mxu0 %v2234
      %v2447 = vpop.f32.mrb[0].mxu0
      %v2448 = vadd.f32 %v231, %v2447
      %v2449 = vpop.f32.mrb[0].mxu0
      %v2450 = vpop.f32.mrb[0].mxu0
      %v2451 = vadd.f32 %v231, %v2450
      %v2452 = vpop.f32.mrb[0].mxu0
      %2453 = vmatprep.mubr.bf16.mxu0 0
      %2454 = vmatmul.mubr.bf16.gmra.mrb[0].mxu0 %v2237
      %v2455 = vpop.f32.mrb[0].mxu0
      %v2456 = vadd.f32 %v231, %v2455
      %v2457 = vpop.f32.mrb[0].mxu0
      %v2458 = vpop.f32.mrb[0].mxu0
      %v2459 = vadd.f32 %v231, %v2458
      %v2460 = vpop.f32.mrb[0].mxu0
      %2461 = vmatprep.mubr.bf16.mxu0 0
      %2462 = vmatmul.mubr.bf16.gmra.mrb[0].mxu0 %v2240
      %v2463 = vpop.f32.mrb[0].mxu0
      %v2464 = vadd.f32 %v231, %v2463
      %v2465 = vpop.f32.mrb[0].mxu0
      %v2466 = vpop.f32.mrb[0].mxu0
      %v2467 = vadd.f32 %v231, %v2466
      %v2468 = vpop.f32.mrb[0].mxu0
      %2469 = vmatprep.mubr.bf16.mxu0 0
      %2470 = vmatmul.mubr.bf16.gmra.mrb[0].mxu0 %v2243
      %v2471 = vpop.f32.mrb[0].mxu0
      %v2472 = vadd.f32 %v231, %v2471
      %v2473 = vpop.f32.mrb[0].mxu0
      %v2474 = vpop.f32.mrb[0].mxu0
      %v2475 = vadd.f32 %v231, %v2474
      %v2476 = vpop.f32.mrb[0].mxu0
      %2477 = vdwg.mxu0
      %v2478 = vld [vmem:[#allocation2] sm:$0xff]
      %v2479 = vld [vmem:[#allocation2 + $0x8] sm:$0xff]
      %v2480 = vld [vmem:[#allocation2 + $0x10] sm:$0xff]
      %v2481 = vld [vmem:[#allocation2 + $0x18] sm:$0xff]
      %v2482 = vld [vmem:[#allocation2 + $0x20] sm:$0xff]
      %v2483 = vld [vmem:[#allocation2 + $0x28] sm:$0xff]
      %v2484 = vld [vmem:[#allocation2 + $0x30] sm:$0xff]
      %v2485 = vld [vmem:[#allocation2 + $0x38] sm:$0xff]
      %v2486 = vld [vmem:[#allocation2 + $0x40] sm:$0xff]
      %v2487 = vld [vmem:[#allocation2 + $0x48] sm:$0xff]
      %v2488 = vld [vmem:[#allocation2 + $0x50] sm:$0xff]
      %v2489 = vld [vmem:[#allocation2 + $0x58] sm:$0xff]
      %v2490 = vld [vmem:[#allocation2 + $0x60] sm:$0xff]
      %v2491 = vld [vmem:[#allocation2 + $0x68] sm:$0xff]
      %v2492 = vld [vmem:[#allocation2 + $0x70] sm:$0xff]
      %v2493 = vld [vmem:[#allocation2 + $0x78] sm:$0xff]
      %v2494 = vld [vmem:[#allocation2 + $0x80] sm:$0xff]
      %v2495 = vld [vmem:[#allocation2 + $0x88] sm:$0xff]
      %v2496 = vld [vmem:[#allocation2 + $0x90] sm:$0xff]
      %v2497 = vld [vmem:[#allocation2 + $0x98] sm:$0xff]
      %v2498 = vld [vmem:[#allocation2 + $0xa0] sm:$0xff]
      %v2499 = vld [vmem:[#allocation2 + $0xa8] sm:$0xff]
      %v2500 = vld [vmem:[#allocation2 + $0xb0] sm:$0xff]
      %v2501 = vld [vmem:[#allocation2 + $0xb8] sm:$0xff]
      %v2502 = vld [vmem:[#allocation2 + $0xc0] sm:$0xff]
      %v2503 = vld [vmem:[#allocation2 + $0xc8] sm:$0xff]
      %v2504 = vld [vmem:[#allocation2 + $0xd0] sm:$0xff]
      %v2505 = vld [vmem:[#allocation2 + $0xd8] sm:$0xff]
      %v2506 = vld [vmem:[#allocation2 + $0xe0] sm:$0xff]
      %v2507 = vld [vmem:[#allocation2 + $0xe8] sm:$0xff]
      %v2508 = vld [vmem:[#allocation2 + $0xf0] sm:$0xff]
      %v2509 = vld [vmem:[#allocation2 + $0xf8] sm:$0xff]
      %v2510 = vld [vmem:[#allocation2 + $0x100] sm:$0xff]
      %v2511 = vld [vmem:[#allocation2 + $0x108] sm:$0xff]
      %v2512 = vld [vmem:[#allocation2 + $0x110] sm:$0xff]
      %v2513 = vld [vmem:[#allocation2 + $0x118] sm:$0xff]
      %v2514 = vld [vmem:[#allocation2 + $0x120] sm:$0xff]
      %v2515 = vld [vmem:[#allocation2 + $0x128] sm:$0xff]
      %v2516 = vld [vmem:[#allocation2 + $0x130] sm:$0xff]
      %v2517 = vld [vmem:[#allocation2 + $0x138] sm:$0xff]
      %v2518 = vld [vmem:[#allocation2 + $0x140] sm:$0xff]
      %v2519 = vld [vmem:[#allocation2 + $0x148] sm:$0xff]
      %v2520 = vld [vmem:[#allocation2 + $0x150] sm:$0xff]
      %v2521 = vld [vmem:[#allocation2 + $0x158] sm:$0xff]
      %v2522 = vld [vmem:[#allocation2 + $0x160] sm:$0xff]
      %v2523 = vld [vmem:[#allocation2 + $0x168] sm:$0xff]
      %v2524 = vld [vmem:[#allocation2 + $0x170] sm:$0xff]
      %v2525 = vld [vmem:[#allocation2 + $0x178] sm:$0xff]
      %v2526 = vld [vmem:[#allocation2 + $0x180] sm:$0xff]
      %v2527 = vld [vmem:[#allocation2 + $0x188] sm:$0xff]
      %v2528 = vmax.f32 %v2478, %v2280
      %v2529 = vmax.f32 %v2479, %v2283
      %v2530 = vmax.f32 %v2480, %v2288
      %v2531 = vmax.f32 %v2481, %v2291
      %v2532 = vmax.f32 %v2482, %v2296
      %v2533 = vmax.f32 %v2483, %v2299
      %v2534 = vmax.f32 %v2484, %v2304
      %v2535 = vmax.f32 %v2485, %v2307
      %v2536 = vmax.f32 %v2486, %v2312
      %v2537 = vmax.f32 %v2487, %v2315
      %v2538 = vmax.f32 %v2488, %v2320
      %v2539 = vmax.f32 %v2489, %v2323
      %v2540 = vmax.f32 %v2490, %v2328
      %v2541 = vmax.f32 %v2491, %v2331
      %v2542 = vmax.f32 %v2492, %v2336
      %v2543 = vmax.f32 %v2493, %v2339
      %v2544 = vmax.f32 %v2494, %v2344
      %v2545 = vmax.f32 %v2495, %v2347
      %v2546 = vmax.f32 %v2496, %v2352
      %v2547 = vmax.f32 %v2497, %v2355
      %v2548 = vmax.f32 %v2498, %v2360
      %v2549 = vmax.f32 %v2499, %v2363
      %v2550 = vmax.f32 %v2500, %v2368
      %v2551 = vmax.f32 %v2501, %v2371
      %v2552 = vmax.f32 %v2502, %v2376
      %v2553 = vmax.f32 %v2503, %v2379
      %v2554 = vmax.f32 %v2504, %v2384
      %v2555 = vmax.f32 %v2505, %v2387
      %v2556 = vmax.f32 %v2506, %v2392
      %v2557 = vmax.f32 %v2507, %v2395
      %v2558 = vmax.f32 %v2508, %v2400
      %v2559 = vmax.f32 %v2509, %v2403
      %v2560 = vmax.f32 %v2510, %v2408
      %v2561 = vmax.f32 %v2511, %v2411
      %v2562 = vmax.f32 %v2512, %v2416
      %v2563 = vmax.f32 %v2513, %v2419
      %v2564 = vmax.f32 %v2514, %v2424
      %v2565 = vmax.f32 %v2515, %v2427
      %v2566 = vmax.f32 %v2516, %v2432
      %v2567 = vmax.f32 %v2517, %v2435
      %v2568 = vmax.f32 %v2518, %v2440
      %v2569 = vmax.f32 %v2519, %v2443
      %v2570 = vmax.f32 %v2520, %v2448
      %v2571 = vmax.f32 %v2521, %v2451
      %v2572 = vmax.f32 %v2522, %v2456
      %v2573 = vmax.f32 %v2523, %v2459
      %v2574 = vmax.f32 %v2524, %v2464
      %v2575 = vmax.f32 %v2525, %v2467
      %v2576 = vmax.f32 %v2526, %v2472
      %v2577 = vmax.f32 %v2527, %v2475
      %2578 = vst [vmem:[#allocation2] sm:$0xff] %v2528
      %2579 = vst [vmem:[#allocation2 + $0x8] sm:$0xff] %v2529
      %2580 = vst [vmem:[#allocation2 + $0x10] sm:$0xff] %v2530
      %2581 = vst [vmem:[#allocation2 + $0x18] sm:$0xff] %v2531
      %2582 = vst [vmem:[#allocation2 + $0x20] sm:$0xff] %v2532
      %2583 = vst [vmem:[#allocation2 + $0x28] sm:$0xff] %v2533
      %2584 = vst [vmem:[#allocation2 + $0x30] sm:$0xff] %v2534
      %2585 = vst [vmem:[#allocation2 + $0x38] sm:$0xff] %v2535
      %2586 = vst [vmem:[#allocation2 + $0x40] sm:$0xff] %v2536
      %2587 = vst [vmem:[#allocation2 + $0x48] sm:$0xff] %v2537
      %2588 = vst [vmem:[#allocation2 + $0x50] sm:$0xff] %v2538
      %2589 = vst [vmem:[#allocation2 + $0x58] sm:$0xff] %v2539
      %2590 = vst [vmem:[#allocation2 + $0x60] sm:$0xff] %v2540
      %2591 = vst [vmem:[#allocation2 + $0x68] sm:$0xff] %v2541
      %2592 = vst [vmem:[#allocation2 + $0x70] sm:$0xff] %v2542
      %2593 = vst [vmem:[#allocation2 + $0x78] sm:$0xff] %v2543
      %2594 = vst [vmem:[#allocation2 + $0x80] sm:$0xff] %v2544
      %2595 = vst [vmem:[#allocation2 + $0x88] sm:$0xff] %v2545
      %2596 = vst [vmem:[#allocation2 + $0x90] sm:$0xff] %v2546
      %2597 = vst [vmem:[#allocation2 + $0x98] sm:$0xff] %v2547
      %2598 = vst [vmem:[#allocation2 + $0xa0] sm:$0xff] %v2548
      %2599 = vst [vmem:[#allocation2 + $0xa8] sm:$0xff] %v2549
      %2600 = vst [vmem:[#allocation2 + $0xb0] sm:$0xff] %v2550
      %2601 = vst [vmem:[#allocation2 + $0xb8] sm:$0xff] %v2551
      %2602 = vst [vmem:[#allocation2 + $0xc0] sm:$0xff] %v2552
      %2603 = vst [vmem:[#allocation2 + $0xc8] sm:$0xff] %v2553
      %2604 = vst [vmem:[#allocation2 + $0xd0] sm:$0xff] %v2554
      %2605 = vst [vmem:[#allocation2 + $0xd8] sm:$0xff] %v2555
      %2606 = vst [vmem:[#allocation2 + $0xe0] sm:$0xff] %v2556
      %2607 = vst [vmem:[#allocation2 + $0xe8] sm:$0xff] %v2557
      %2608 = vst [vmem:[#allocation2 + $0xf0] sm:$0xff] %v2558
      %2609 = vst [vmem:[#allocation2 + $0xf8] sm:$0xff] %v2559
      %2610 = vst [vmem:[#allocation2 + $0x100] sm:$0xff] %v2560
      %2611 = vst [vmem:[#allocation2 + $0x108] sm:$0xff] %v2561
      %2612 = vst [vmem:[#allocation2 + $0x110] sm:$0xff] %v2562
      %2613 = vst [vmem:[#allocation2 + $0x118] sm:$0xff] %v2563
      %2614 = vst [vmem:[#allocation2 + $0x120] sm:$0xff] %v2564
      %2615 = vst [vmem:[#allocation2 + $0x128] sm:$0xff] %v2565
      %2616 = vst [vmem:[#allocation2 + $0x130] sm:$0xff] %v2566
      %2617 = vst [vmem:[#allocation2 + $0x138] sm:$0xff] %v2567
      %2618 = vst [vmem:[#allocation2 + $0x140] sm:$0xff] %v2568
      %2619 = vst [vmem:[#allocation2 + $0x148] sm:$0xff] %v2569
      %2620 = vst [vmem:[#allocation2 + $0x150] sm:$0xff] %v2570
      %2621 = vst [vmem:[#allocation2 + $0x158] sm:$0xff] %v2571
      %2622 = vst [vmem:[#allocation2 + $0x160] sm:$0xff] %v2572
      %2623 = vst [vmem:[#allocation2 + $0x168] sm:$0xff] %v2573
      %2624 = vst [vmem:[#allocation2 + $0x170] sm:$0xff] %v2574
      %2625 = vst [vmem:[#allocation2 + $0x178] sm:$0xff] %v2575
      %2626 = vst [vmem:[#allocation2 + $0x180] sm:$0xff] %v2576
      %2627 = vst [vmem:[#allocation2 + $0x188] sm:$0xff] %v2577
      %v2628 = vld [vmem:[%s165 + $0x320] sm:$0xf]
      %v2629 = vld [vmem:[%s165 + $0x324] sm:$0xf]
      %v2630 = vld [vmem:[%s165 + $0x328] sm:$0xf]
      %v2631 = vld [vmem:[%s165 + $0x32c] sm:$0xf]
      %v2632 = vld [vmem:[%s165 + $0x330] sm:$0xf]
      %v2633 = vld [vmem:[%s165 + $0x334] sm:$0xf]
      %v2634 = vld [vmem:[%s165 + $0x338] sm:$0xf]
      %v2635 = vld [vmem:[%s165 + $0x33c] sm:$0xf]
      %v2636 = vld [vmem:[%s165 + $0x340] sm:$0xf]
      %v2637 = vld [vmem:[%s165 + $0x344] sm:$0xf]
      %v2638 = vld [vmem:[%s165 + $0x348] sm:$0xf]
      %v2639 = vld [vmem:[%s165 + $0x34c] sm:$0xf]
      %v2640 = vld [vmem:[%s165 + $0x350] sm:$0xf]
      %v2641 = vld [vmem:[%s165 + $0x354] sm:$0xf]
      %v2642 = vld [vmem:[%s165 + $0x358] sm:$0xf]
      %v2643 = vld [vmem:[%s165 + $0x35c] sm:$0xf]
      %v2644 = vld [vmem:[%s165 + $0x360] sm:$0xf]
      %v2645 = vld [vmem:[%s165 + $0x364] sm:$0xf]
      %v2646 = vld [vmem:[%s165 + $0x368] sm:$0xf]
      %v2647 = vld [vmem:[%s165 + $0x36c] sm:$0xf]
      %v2648 = vld [vmem:[%s165 + $0x370] sm:$0xf]
      %v2649 = vld [vmem:[%s165 + $0x374] sm:$0xf]
      %v2650 = vld [vmem:[%s165 + $0x378] sm:$0xf]
      %v2651 = vld [vmem:[%s165 + $0x37c] sm:$0xf]
      %v2652 = vld [vmem:[%s165 + $0x380] sm:$0xf]
      %v2653 = vld [vmem:[%s165 + $0x384] sm:$0xf]
      %v2654 = vld [vmem:[%s165 + $0x388] sm:$0xf]
      %v2655 = vld [vmem:[%s165 + $0x38c] sm:$0xf]
      %v2656 = vld [vmem:[%s165 + $0x390] sm:$0xf]
      %v2657 = vld [vmem:[%s165 + $0x394] sm:$0xf]
      %v2658 = vld [vmem:[%s165 + $0x398] sm:$0xf]
      %v2659 = vld [vmem:[%s165 + $0x39c] sm:$0xf]
      %v2660 = vld [vmem:[%s165 + $0x3a0] sm:$0xf]
      %v2661 = vld [vmem:[%s165 + $0x3a4] sm:$0xf]
      %v2662 = vld [vmem:[%s165 + $0x3a8] sm:$0xf]
      %v2663 = vld [vmem:[%s165 + $0x3ac] sm:$0xf]
      %v2664 = vld [vmem:[%s165 + $0x3b0] sm:$0xf]
      %v2665 = vld [vmem:[%s165 + $0x3b4] sm:$0xf]
      %v2666 = vld [vmem:[%s165 + $0x3b8] sm:$0xf]
      %v2667 = vld [vmem:[%s165 + $0x3bc] sm:$0xf]
      %v2668 = vld [vmem:[%s165 + $0x3c0] sm:$0xf]
      %v2669 = vld [vmem:[%s165 + $0x3c4] sm:$0xf]
      %v2670 = vld [vmem:[%s165 + $0x3c8] sm:$0xf]
      %v2671 = vld [vmem:[%s165 + $0x3cc] sm:$0xf]
      %v2672 = vld [vmem:[%s165 + $0x3d0] sm:$0xf]
      %v2673 = vld [vmem:[%s165 + $0x3d4] sm:$0xf]
      %v2674 = vld [vmem:[%s165 + $0x3d8] sm:$0xf]
      %v2675 = vld [vmem:[%s165 + $0x3dc] sm:$0xf]
      %v2676 = vld [vmem:[%s165 + $0x3e0] sm:$0xf]
      %v2677 = vld [vmem:[%s165 + $0x3e4] sm:$0xf]
      %v2728 = vunpack.c.l.b16 %v2628
      %v2729 = vunpack.c.l.b16 %v2629
      %v2730 = vunpack.c.l.b16 %v2630
      %v2731 = vunpack.c.l.b16 %v2631
      %v2732 = vunpack.c.l.b16 %v2632
      %v2733 = vunpack.c.l.b16 %v2633
      %v2734 = vunpack.c.l.b16 %v2634
      %v2735 = vunpack.c.l.b16 %v2635
      %v2736 = vunpack.c.l.b16 %v2636
      %v2737 = vunpack.c.l.b16 %v2637
      %v2738 = vunpack.c.l.b16 %v2638
      %v2739 = vunpack.c.l.b16 %v2639
      %v2740 = vunpack.c.l.b16 %v2640
      %v2741 = vunpack.c.l.b16 %v2641
      %v2742 = vunpack.c.l.b16 %v2642
      %v2743 = vunpack.c.l.b16 %v2643
      %v2744 = vunpack.c.l.b16 %v2644
      %v2745 = vunpack.c.l.b16 %v2645
      %v2746 = vunpack.c.l.b16 %v2646
      %v2747 = vunpack.c.l.b16 %v2647
      %v2748 = vunpack.c.l.b16 %v2648
      %v2749 = vunpack.c.l.b16 %v2649
      %v2750 = vunpack.c.l.b16 %v2650
      %v2751 = vunpack.c.l.b16 %v2651
      %v2752 = vunpack.c.l.b16 %v2652
      %v2753 = vunpack.c.l.b16 %v2653
      %v2754 = vunpack.c.l.b16 %v2654
      %v2755 = vunpack.c.l.b16 %v2655
      %v2756 = vunpack.c.l.b16 %v2656
      %v2757 = vunpack.c.l.b16 %v2657
      %v2758 = vunpack.c.l.b16 %v2658
      %v2759 = vunpack.c.l.b16 %v2659
      %v2760 = vunpack.c.l.b16 %v2660
      %v2761 = vunpack.c.l.b16 %v2661
      %v2762 = vunpack.c.l.b16 %v2662
      %v2763 = vunpack.c.l.b16 %v2663
      %v2764 = vunpack.c.l.b16 %v2664
      %v2765 = vunpack.c.l.b16 %v2665
      %v2766 = vunpack.c.l.b16 %v2666
      %v2767 = vunpack.c.l.b16 %v2667
      %v2768 = vunpack.c.l.b16 %v2668
      %v2769 = vunpack.c.l.b16 %v2669
      %v2770 = vunpack.c.l.b16 %v2670
      %v2771 = vunpack.c.l.b16 %v2671
      %v2772 = vunpack.c.l.b16 %v2672
      %v2773 = vunpack.c.l.b16 %v2673
      %v2774 = vunpack.c.l.b16 %v2674
      %v2775 = vunpack.c.l.b16 %v2675
      %v2776 = vunpack.c.l.b16 %v2676
      %v2777 = vunpack.c.l.b16 %v2677
      %v2778 = vpack.c.b16 %v2729, %v2728
      %v2779 = vpack.c.b16 %v2731, %v2730
      %v2780 = vpack.c.b16 %v2733, %v2732
      %v2781 = vpack.c.b16 %v2735, %v2734
      %v2782 = vpack.c.b16 %v2737, %v2736
      %v2783 = vpack.c.b16 %v2739, %v2738
      %v2784 = vpack.c.b16 %v2741, %v2740
      %v2785 = vpack.c.b16 %v2743, %v2742
      %v2786 = vpack.c.b16 %v2745, %v2744
      %v2787 = vpack.c.b16 %v2747, %v2746
      %v2788 = vpack.c.b16 %v2749, %v2748
      %v2789 = vpack.c.b16 %v2751, %v2750
      %v2790 = vpack.c.b16 %v2753, %v2752
      %v2791 = vpack.c.b16 %v2755, %v2754
      %v2792 = vpack.c.b16 %v2757, %v2756
      %v2793 = vpack.c.b16 %v2759, %v2758
      %v2794 = vpack.c.b16 %v2761, %v2760
      %v2795 = vpack.c.b16 %v2763, %v2762
      %v2796 = vpack.c.b16 %v2765, %v2764
      %v2797 = vpack.c.b16 %v2767, %v2766
      %v2798 = vpack.c.b16 %v2769, %v2768
      %v2799 = vpack.c.b16 %v2771, %v2770
      %v2800 = vpack.c.b16 %v2773, %v2772
      %v2801 = vpack.c.b16 %v2775, %v2774
      %v2802 = vpack.c.b16 %v2777, %v2776
      %v2804 = vsel %vm370, %v2778, 0
      %v2807 = vsel %vm370, %v2779, 0
      %v2810 = vsel %vm370, %v2780, 0
      %v2813 = vsel %vm370, %v2781, 0
      %v2816 = vsel %vm370, %v2782, 0
      %v2819 = vsel %vm370, %v2783, 0
      %v2822 = vsel %vm370, %v2784, 0
      %v2825 = vsel %vm370, %v2785, 0
      %v2828 = vsel %vm370, %v2786, 0
      %v2831 = vsel %vm370, %v2787, 0
      %v2834 = vsel %vm370, %v2788, 0
      %v2837 = vsel %vm370, %v2789, 0
      %v2840 = vsel %vm370, %v2790, 0
      %v2843 = vsel %vm370, %v2791, 0
      %v2846 = vsel %vm370, %v2792, 0
      %v2849 = vsel %vm370, %v2793, 0
      %v2852 = vsel %vm370, %v2794, 0
      %v2855 = vsel %vm370, %v2795, 0
      %v2858 = vsel %vm370, %v2796, 0
      %v2861 = vsel %vm370, %v2797, 0
      %v2864 = vsel %vm370, %v2798, 0
      %v2867 = vsel %vm370, %v2799, 0
      %v2870 = vsel %vm370, %v2800, 0
      %v2873 = vsel %vm370, %v2801, 0
      %v2876 = vsel %vm370, %v2802, 0
      %2878 = vmatprep.subr.bf16.mxu0 0
      %2879 = vmatpush1.bf16.msra.mxu0 %v366
      %2880 = vmatprep.subr.bf16.mxu0 0
      %2881 = vmatpush1.bf16.msra.mxu0 %v367
      %2882 = vmatprep.subr.bf16.mxu0 0
      %2883 = vmatpush1.bf16.msra.mxu0 0
      %2884 = vmatprep.subr.bf16.mxu0 0
      %2885 = vmatpush1.bf16.msra.mxu0 0
      %2886 = vmatprep.subr.bf16.mxu0 0
      %2887 = vmatpush1.bf16.msra.mxu0 0
      %2888 = vmatprep.subr.bf16.mxu0 0
      %2889 = vmatpush1.bf16.msra.mxu0 0
      %2890 = vmatprep.subr.bf16.mxu0 0
      %2891 = vmatpush1.bf16.msra.mxu0 0
      %2892 = vmatprep.subr.bf16.mxu0 0
      %2893 = vmatpush1.bf16.msra.mxu0 0
      %2894 = vmatprep.subr.bf16.mxu0 0
      %2895 = vmatpush1.bf16.msra.mxu0 0
      %2896 = vmatprep.subr.bf16.mxu0 0
      %2897 = vmatpush1.bf16.msra.mxu0 0
      %2898 = vmatprep.subr.bf16.mxu0 0
      %2899 = vmatpush1.bf16.msra.mxu0 0
      %2900 = vmatprep.subr.bf16.mxu0 0
      %2901 = vmatpush1.bf16.msra.mxu0 0
      %2902 = vmatprep.subr.bf16.mxu0 0
      %2903 = vmatpush1.bf16.msra.mxu0 0
      %2904 = vmatprep.subr.bf16.mxu0 0
      %2905 = vmatpush1.bf16.msra.mxu0 0
      %2906 = vmatprep.subr.bf16.mxu0 0
      %2907 = vmatpush1.bf16.msra.mxu0 0
      %2908 = vmatprep.subr.bf16.mxu0 0
      %2909 = vmatpush1.bf16.msra.mxu0 0
      %2910 = vmatprep.mubr.bf16.mxu0 0
      %2911 = vmatmul.mubr.bf16.gmra.mrb[0].mxu0 %v2804
      %v2912 = vpop.f32.mrb[0].mxu0
      %v2913 = vadd.f32 %v231, %v2912
      %v2914 = vpop.f32.mrb[0].mxu0
      %v2915 = vpop.f32.mrb[0].mxu0
      %v2916 = vadd.f32 %v231, %v2915
      %v2917 = vpop.f32.mrb[0].mxu0
      %2918 = vmatprep.mubr.bf16.mxu0 0
      %2919 = vmatmul.mubr.bf16.gmra.mrb[0].mxu0 %v2807
      %v2920 = vpop.f32.mrb[0].mxu0
      %v2921 = vadd.f32 %v231, %v2920
      %v2922 = vpop.f32.mrb[0].mxu0
      %v2923 = vpop.f32.mrb[0].mxu0
      %v2924 = vadd.f32 %v231, %v2923
      %v2925 = vpop.f32.mrb[0].mxu0
      %2926 = vmatprep.mubr.bf16.mxu0 0
      %2927 = vmatmul.mubr.bf16.gmra.mrb[0].mxu0 %v2810
      %v2928 = vpop.f32.mrb[0].mxu0
      %v2929 = vadd.f32 %v231, %v2928
      %v2930 = vpop.f32.mrb[0].mxu0
      %v2931 = vpop.f32.mrb[0].mxu0
      %v2932 = vadd.f32 %v231, %v2931
      %v2933 = vpop.f32.mrb[0].mxu0
      %2934 = vmatprep.mubr.bf16.mxu0 0
      %2935 = vmatmul.mubr.bf16.gmra.mrb[0].mxu0 %v2813
      %v2936 = vpop.f32.mrb[0].mxu0
      %v2937 = vadd.f32 %v231, %v2936
      %v2938 = vpop.f32.mrb[0].mxu0
      %v2939 = vpop.f32.mrb[0].mxu0
      %v2940 = vadd.f32 %v231, %v2939
      %v2941 = vpop.f32.mrb[0].mxu0
      %2942 = vmatprep.mubr.bf16.mxu0 0
      %2943 = vmatmul.mubr.bf16.gmra.mrb[0].mxu0 %v2816
      %v2944 = vpop.f32.mrb[0].mxu0
      %v2945 = vadd.f32 %v231, %v2944
      %v2946 = vpop.f32.mrb[0].mxu0
      %v2947 = vpop.f32.mrb[0].mxu0
      %v2948 = vadd.f32 %v231, %v2947
      %v2949 = vpop.f32.mrb[0].mxu0
      %2950 = vmatprep.mubr.bf16.mxu0 0
      %2951 = vmatmul.mubr.bf16.gmra.mrb[0].mxu0 %v2819
      %v2952 = vpop.f32.mrb[0].mxu0
      %v2953 = vadd.f32 %v231, %v2952
      %v2954 = vpop.f32.mrb[0].mxu0
      %v2955 = vpop.f32.mrb[0].mxu0
      %v2956 = vadd.f32 %v231, %v2955
      %v2957 = vpop.f32.mrb[0].mxu0
      %2958 = vmatprep.mubr.bf16.mxu0 0
      %2959 = vmatmul.mubr.bf16.gmra.mrb[0].mxu0 %v2822
      %v2960 = vpop.f32.mrb[0].mxu0
      %v2961 = vadd.f32 %v231, %v2960
      %v2962 = vpop.f32.mrb[0].mxu0
      %v2963 = vpop.f32.mrb[0].mxu0
      %v2964 = vadd.f32 %v231, %v2963
      %v2965 = vpop.f32.mrb[0].mxu0
      %2966 = vmatprep.mubr.bf16.mxu0 0
      %2967 = vmatmul.mubr.bf16.gmra.mrb[0].mxu0 %v2825
      %v2968 = vpop.f32.mrb[0].mxu0
      %v2969 = vadd.f32 %v231, %v2968
      %v2970 = vpop.f32.mrb[0].mxu0
      %v2971 = vpop.f32.mrb[0].mxu0
      %v2972 = vadd.f32 %v231, %v2971
      %v2973 = vpop.f32.mrb[0].mxu0
      %2974 = vmatprep.mubr.bf16.mxu0 0
      %2975 = vmatmul.mubr.bf16.gmra.mrb[0].mxu0 %v2828
      %v2976 = vpop.f32.mrb[0].mxu0
      %v2977 = vadd.f32 %v231, %v2976
      %v2978 = vpop.f32.mrb[0].mxu0
      %v2979 = vpop.f32.mrb[0].mxu0
      %v2980 = vadd.f32 %v231, %v2979
      %v2981 = vpop.f32.mrb[0].mxu0
      %2982 = vmatprep.mubr.bf16.mxu0 0
      %2983 = vmatmul.mubr.bf16.gmra.mrb[0].mxu0 %v2831
      %v2984 = vpop.f32.mrb[0].mxu0
      %v2985 = vadd.f32 %v231, %v2984
      %v2986 = vpop.f32.mrb[0].mxu0
      %v2987 = vpop.f32.mrb[0].mxu0
      %v2988 = vadd.f32 %v231, %v2987
      %v2989 = vpop.f32.mrb[0].mxu0
      %2990 = vmatprep.mubr.bf16.mxu0 0
      %2991 = vmatmul.mubr.bf16.gmra.mrb[0].mxu0 %v2834
      %v2992 = vpop.f32.mrb[0].mxu0
      %v2993 = vadd.f32 %v231, %v2992
      %v2994 = vpop.f32.mrb[0].mxu0
      %v2995 = vpop.f32.mrb[0].mxu0
      %v2996 = vadd.f32 %v231, %v2995
      %v2997 = vpop.f32.mrb[0].mxu0
      %2998 = vmatprep.mubr.bf16.mxu0 0
      %2999 = vmatmul.mubr.bf16.gmra.mrb[0].mxu0 %v2837
      %v3000 = vpop.f32.mrb[0].mxu0
      %v3001 = vadd.f32 %v231, %v3000
      %v3002 = vpop.f32.mrb[0].mxu0
      %v3003 = vpop.f32.mrb[0].mxu0
      %v3004 = vadd.f32 %v231, %v3003
      %v3005 = vpop.f32.mrb[0].mxu0
      %3006 = vmatprep.mubr.bf16.mxu0 0
      %3007 = vmatmul.mubr.bf16.gmra.mrb[0].mxu0 %v2840
      %v3008 = vpop.f32.mrb[0].mxu0
      %v3009 = vadd.f32 %v231, %v3008
      %v3010 = vpop.f32.mrb[0].mxu0
      %v3011 = vpop.f32.mrb[0].mxu0
      %v3012 = vadd.f32 %v231, %v3011
      %v3013 = vpop.f32.mrb[0].mxu0
      %3014 = vmatprep.mubr.bf16.mxu0 0
      %3015 = vmatmul.mubr.bf16.gmra.mrb[0].mxu0 %v2843
      %v3016 = vpop.f32.mrb[0].mxu0
      %v3017 = vadd.f32 %v231, %v3016
      %v3018 = vpop.f32.mrb[0].mxu0
      %v3019 = vpop.f32.mrb[0].mxu0
      %v3020 = vadd.f32 %v231, %v3019
      %v3021 = vpop.f32.mrb[0].mxu0
      %3022 = vmatprep.mubr.bf16.mxu0 0
      %3023 = vmatmul.mubr.bf16.gmra.mrb[0].mxu0 %v2846
      %v3024 = vpop.f32.mrb[0].mxu0
      %v3025 = vadd.f32 %v231, %v3024
      %v3026 = vpop.f32.mrb[0].mxu0
      %v3027 = vpop.f32.mrb[0].mxu0
      %v3028 = vadd.f32 %v231, %v3027
      %v3029 = vpop.f32.mrb[0].mxu0
      %3030 = vmatprep.mubr.bf16.mxu0 0
      %3031 = vmatmul.mubr.bf16.gmra.mrb[0].mxu0 %v2849
      %v3032 = vpop.f32.mrb[0].mxu0
      %v3033 = vadd.f32 %v231, %v3032
      %v3034 = vpop.f32.mrb[0].mxu0
      %v3035 = vpop.f32.mrb[0].mxu0
      %v3036 = vadd.f32 %v231, %v3035
      %v3037 = vpop.f32.mrb[0].mxu0
      %3038 = vmatprep.mubr.bf16.mxu0 0
      %3039 = vmatmul.mubr.bf16.gmra.mrb[0].mxu0 %v2852
      %v3040 = vpop.f32.mrb[0].mxu0
      %v3041 = vadd.f32 %v231, %v3040
      %v3042 = vpop.f32.mrb[0].mxu0
      %v3043 = vpop.f32.mrb[0].mxu0
      %v3044 = vadd.f32 %v231, %v3043
      %v3045 = vpop.f32.mrb[0].mxu0
      %3046 = vmatprep.mubr.bf16.mxu0 0
      %3047 = vmatmul.mubr.bf16.gmra.mrb[0].mxu0 %v2855
      %v3048 = vpop.f32.mrb[0].mxu0
      %v3049 = vadd.f32 %v231, %v3048
      %v3050 = vpop.f32.mrb[0].mxu0
      %v3051 = vpop.f32.mrb[0].mxu0
      %v3052 = vadd.f32 %v231, %v3051
      %v3053 = vpop.f32.mrb[0].mxu0
      %3054 = vmatprep.mubr.bf16.mxu0 0
      %3055 = vmatmul.mubr.bf16.gmra.mrb[0].mxu0 %v2858
      %v3056 = vpop.f32.mrb[0].mxu0
      %v3057 = vadd.f32 %v231, %v3056
      %v3058 = vpop.f32.mrb[0].mxu0
      %v3059 = vpop.f32.mrb[0].mxu0
      %v3060 = vadd.f32 %v231, %v3059
      %v3061 = vpop.f32.mrb[0].mxu0
      %3062 = vmatprep.mubr.bf16.mxu0 0
      %3063 = vmatmul.mubr.bf16.gmra.mrb[0].mxu0 %v2861
      %v3064 = vpop.f32.mrb[0].mxu0
      %v3065 = vadd.f32 %v231, %v3064
      %v3066 = vpop.f32.mrb[0].mxu0
      %v3067 = vpop.f32.mrb[0].mxu0
      %v3068 = vadd.f32 %v231, %v3067
      %v3069 = vpop.f32.mrb[0].mxu0
      %3070 = vmatprep.mubr.bf16.mxu0 0
      %3071 = vmatmul.mubr.bf16.gmra.mrb[0].mxu0 %v2864
      %v3072 = vpop.f32.mrb[0].mxu0
      %v3073 = vadd.f32 %v231, %v3072
      %v3074 = vpop.f32.mrb[0].mxu0
      %v3075 = vpop.f32.mrb[0].mxu0
      %v3076 = vadd.f32 %v231, %v3075
      %v3077 = vpop.f32.mrb[0].mxu0
      %3078 = vmatprep.mubr.bf16.mxu0 0
      %3079 = vmatmul.mubr.bf16.gmra.mrb[0].mxu0 %v2867
      %v3080 = vpop.f32.mrb[0].mxu0
      %v3081 = vadd.f32 %v231, %v3080
      %v3082 = vpop.f32.mrb[0].mxu0
      %v3083 = vpop.f32.mrb[0].mxu0
      %v3084 = vadd.f32 %v231, %v3083
      %v3085 = vpop.f32.mrb[0].mxu0
      %3086 = vmatprep.mubr.bf16.mxu0 0
      %3087 = vmatmul.mubr.bf16.gmra.mrb[0].mxu0 %v2870
      %v3088 = vpop.f32.mrb[0].mxu0
      %v3089 = vadd.f32 %v231, %v3088
      %v3090 = vpop.f32.mrb[0].mxu0
      %v3091 = vpop.f32.mrb[0].mxu0
      %v3092 = vadd.f32 %v231, %v3091
      %v3093 = vpop.f32.mrb[0].mxu0
      %3094 = vmatprep.mubr.bf16.mxu0 0
      %3095 = vmatmul.mubr.bf16.gmra.mrb[0].mxu0 %v2873
      %v3096 = vpop.f32.mrb[0].mxu0
      %v3097 = vadd.f32 %v231, %v3096
      %v3098 = vpop.f32.mrb[0].mxu0
      %v3099 = vpop.f32.mrb[0].mxu0
      %v3100 = vadd.f32 %v231, %v3099
      %v3101 = vpop.f32.mrb[0].mxu0
      %3102 = vmatprep.mubr.bf16.mxu0 0
      %3103 = vmatmul.mubr.bf16.gmra.mrb[0].mxu0 %v2876
      %v3104 = vpop.f32.mrb[0].mxu0
      %v3105 = vadd.f32 %v231, %v3104
      %v3106 = vpop.f32.mrb[0].mxu0
      %v3107 = vpop.f32.mrb[0].mxu0
      %v3108 = vadd.f32 %v231, %v3107
      %v3109 = vpop.f32.mrb[0].mxu0
      %3110 = vdwg.mxu0
      %v3111 = vld [vmem:[#allocation2] sm:$0xff]
      %v3112 = vld [vmem:[#allocation2 + $0x8] sm:$0xff]
      %v3113 = vld [vmem:[#allocation2 + $0x10] sm:$0xff]
      %v3114 = vld [vmem:[#allocation2 + $0x18] sm:$0xff]
      %v3115 = vld [vmem:[#allocation2 + $0x20] sm:$0xff]
      %v3116 = vld [vmem:[#allocation2 + $0x28] sm:$0xff]
      %v3117 = vld [vmem:[#allocation2 + $0x30] sm:$0xff]
      %v3118 = vld [vmem:[#allocation2 + $0x38] sm:$0xff]
      %v3119 = vld [vmem:[#allocation2 + $0x40] sm:$0xff]
      %v3120 = vld [vmem:[#allocation2 + $0x48] sm:$0xff]
      %v3121 = vld [vmem:[#allocation2 + $0x50] sm:$0xff]
      %v3122 = vld [vmem:[#allocation2 + $0x58] sm:$0xff]
      %v3123 = vld [vmem:[#allocation2 + $0x60] sm:$0xff]
      %v3124 = vld [vmem:[#allocation2 + $0x68] sm:$0xff]
      %v3125 = vld [vmem:[#allocation2 + $0x70] sm:$0xff]
      %v3126 = vld [vmem:[#allocation2 + $0x78] sm:$0xff]
      %v3127 = vld [vmem:[#allocation2 + $0x80] sm:$0xff]
      %v3128 = vld [vmem:[#allocation2 + $0x88] sm:$0xff]
      %v3129 = vld [vmem:[#allocation2 + $0x90] sm:$0xff]
      %v3130 = vld [vmem:[#allocation2 + $0x98] sm:$0xff]
      %v3131 = vld [vmem:[#allocation2 + $0xa0] sm:$0xff]
      %v3132 = vld [vmem:[#allocation2 + $0xa8] sm:$0xff]
      %v3133 = vld [vmem:[#allocation2 + $0xb0] sm:$0xff]
      %v3134 = vld [vmem:[#allocation2 + $0xb8] sm:$0xff]
      %v3135 = vld [vmem:[#allocation2 + $0xc0] sm:$0xff]
      %v3136 = vld [vmem:[#allocation2 + $0xc8] sm:$0xff]
      %v3137 = vld [vmem:[#allocation2 + $0xd0] sm:$0xff]
      %v3138 = vld [vmem:[#allocation2 + $0xd8] sm:$0xff]
      %v3139 = vld [vmem:[#allocation2 + $0xe0] sm:$0xff]
      %v3140 = vld [vmem:[#allocation2 + $0xe8] sm:$0xff]
      %v3141 = vld [vmem:[#allocation2 + $0xf0] sm:$0xff]
      %v3142 = vld [vmem:[#allocation2 + $0xf8] sm:$0xff]
      %v3143 = vld [vmem:[#allocation2 + $0x100] sm:$0xff]
      %v3144 = vld [vmem:[#allocation2 + $0x108] sm:$0xff]
      %v3145 = vld [vmem:[#allocation2 + $0x110] sm:$0xff]
      %v3146 = vld [vmem:[#allocation2 + $0x118] sm:$0xff]
      %v3147 = vld [vmem:[#allocation2 + $0x120] sm:$0xff]
      %v3148 = vld [vmem:[#allocation2 + $0x128] sm:$0xff]
      %v3149 = vld [vmem:[#allocation2 + $0x130] sm:$0xff]
      %v3150 = vld [vmem:[#allocation2 + $0x138] sm:$0xff]
      %v3151 = vld [vmem:[#allocation2 + $0x140] sm:$0xff]
      %v3152 = vld [vmem:[#allocation2 + $0x148] sm:$0xff]
      %v3153 = vld [vmem:[#allocation2 + $0x150] sm:$0xff]
      %v3154 = vld [vmem:[#allocation2 + $0x158] sm:$0xff]
      %v3155 = vld [vmem:[#allocation2 + $0x160] sm:$0xff]
      %v3156 = vld [vmem:[#allocation2 + $0x168] sm:$0xff]
      %v3157 = vld [vmem:[#allocation2 + $0x170] sm:$0xff]
      %v3158 = vld [vmem:[#allocation2 + $0x178] sm:$0xff]
      %v3159 = vld [vmem:[#allocation2 + $0x180] sm:$0xff]
      %v3160 = vld [vmem:[#allocation2 + $0x188] sm:$0xff]
      %v3161 = vmax.f32 %v3111, %v2913
      %v3162 = vmax.f32 %v3112, %v2916
      %v3163 = vmax.f32 %v3113, %v2921
      %v3164 = vmax.f32 %v3114, %v2924
      %v3165 = vmax.f32 %v3115, %v2929
      %v3166 = vmax.f32 %v3116, %v2932
      %v3167 = vmax.f32 %v3117, %v2937
      %v3168 = vmax.f32 %v3118, %v2940
      %v3169 = vmax.f32 %v3119, %v2945
      %v3170 = vmax.f32 %v3120, %v2948
      %v3171 = vmax.f32 %v3121, %v2953
      %v3172 = vmax.f32 %v3122, %v2956
      %v3173 = vmax.f32 %v3123, %v2961
      %v3174 = vmax.f32 %v3124, %v2964
      %v3175 = vmax.f32 %v3125, %v2969
      %v3176 = vmax.f32 %v3126, %v2972
      %v3177 = vmax.f32 %v3127, %v2977
      %v3178 = vmax.f32 %v3128, %v2980
      %v3179 = vmax.f32 %v3129, %v2985
      %v3180 = vmax.f32 %v3130, %v2988
      %v3181 = vmax.f32 %v3131, %v2993
      %v3182 = vmax.f32 %v3132, %v2996
      %v3183 = vmax.f32 %v3133, %v3001
      %v3184 = vmax.f32 %v3134, %v3004
      %v3185 = vmax.f32 %v3135, %v3009
      %v3186 = vmax.f32 %v3136, %v3012
      %v3187 = vmax.f32 %v3137, %v3017
      %v3188 = vmax.f32 %v3138, %v3020
      %v3189 = vmax.f32 %v3139, %v3025
      %v3190 = vmax.f32 %v3140, %v3028
      %v3191 = vmax.f32 %v3141, %v3033
      %v3192 = vmax.f32 %v3142, %v3036
      %v3193 = vmax.f32 %v3143, %v3041
      %v3194 = vmax.f32 %v3144, %v3044
      %v3195 = vmax.f32 %v3145, %v3049
      %v3196 = vmax.f32 %v3146, %v3052
      %v3197 = vmax.f32 %v3147, %v3057
      %v3198 = vmax.f32 %v3148, %v3060
      %v3199 = vmax.f32 %v3149, %v3065
      %v3200 = vmax.f32 %v3150, %v3068
      %v3201 = vmax.f32 %v3151, %v3073
      %v3202 = vmax.f32 %v3152, %v3076
      %v3203 = vmax.f32 %v3153, %v3081
      %v3204 = vmax.f32 %v3154, %v3084
      %v3205 = vmax.f32 %v3155, %v3089
      %v3206 = vmax.f32 %v3156, %v3092
      %v3207 = vmax.f32 %v3157, %v3097
      %v3208 = vmax.f32 %v3158, %v3100
      %v3209 = vmax.f32 %v3159, %v3105
      %v3210 = vmax.f32 %v3160, %v3108
      %3211 = vst [vmem:[#allocation2] sm:$0xff] %v3161
      %3212 = vst [vmem:[#allocation2 + $0x8] sm:$0xff] %v3162
      %3213 = vst [vmem:[#allocation2 + $0x10] sm:$0xff] %v3163
      %3214 = vst [vmem:[#allocation2 + $0x18] sm:$0xff] %v3164
      %3215 = vst [vmem:[#allocation2 + $0x20] sm:$0xff] %v3165
      %3216 = vst [vmem:[#allocation2 + $0x28] sm:$0xff] %v3166
      %3217 = vst [vmem:[#allocation2 + $0x30] sm:$0xff] %v3167
      %3218 = vst [vmem:[#allocation2 + $0x38] sm:$0xff] %v3168
      %3219 = vst [vmem:[#allocation2 + $0x40] sm:$0xff] %v3169
      %3220 = vst [vmem:[#allocation2 + $0x48] sm:$0xff] %v3170
      %3221 = vst [vmem:[#allocation2 + $0x50] sm:$0xff] %v3171
      %3222 = vst [vmem:[#allocation2 + $0x58] sm:$0xff] %v3172
      %3223 = vst [vmem:[#allocation2 + $0x60] sm:$0xff] %v3173
      %3224 = vst [vmem:[#allocation2 + $0x68] sm:$0xff] %v3174
      %3225 = vst [vmem:[#allocation2 + $0x70] sm:$0xff] %v3175
      %3226 = vst [vmem:[#allocation2 + $0x78] sm:$0xff] %v3176
      %3227 = vst [vmem:[#allocation2 + $0x80] sm:$0xff] %v3177
      %3228 = vst [vmem:[#allocation2 + $0x88] sm:$0xff] %v3178
      %3229 = vst [vmem:[#allocation2 + $0x90] sm:$0xff] %v3179
      %3230 = vst [vmem:[#allocation2 + $0x98] sm:$0xff] %v3180
      %3231 = vst [vmem:[#allocation2 + $0xa0] sm:$0xff] %v3181
      %3232 = vst [vmem:[#allocation2 + $0xa8] sm:$0xff] %v3182
      %3233 = vst [vmem:[#allocation2 + $0xb0] sm:$0xff] %v3183
      %3234 = vst [vmem:[#allocation2 + $0xb8] sm:$0xff] %v3184
      %3235 = vst [vmem:[#allocation2 + $0xc0] sm:$0xff] %v3185
      %3236 = vst [vmem:[#allocation2 + $0xc8] sm:$0xff] %v3186
      %3237 = vst [vmem:[#allocation2 + $0xd0] sm:$0xff] %v3187
      %3238 = vst [vmem:[#allocation2 + $0xd8] sm:$0xff] %v3188
      %3239 = vst [vmem:[#allocation2 + $0xe0] sm:$0xff] %v3189
      %3240 = vst [vmem:[#allocation2 + $0xe8] sm:$0xff] %v3190
      %3241 = vst [vmem:[#allocation2 + $0xf0] sm:$0xff] %v3191
      %3242 = vst [vmem:[#allocation2 + $0xf8] sm:$0xff] %v3192
      %3243 = vst [vmem:[#allocation2 + $0x100] sm:$0xff] %v3193
      %3244 = vst [vmem:[#allocation2 + $0x108] sm:$0xff] %v3194
      %3245 = vst [vmem:[#allocation2 + $0x110] sm:$0xff] %v3195
      %3246 = vst [vmem:[#allocation2 + $0x118] sm:$0xff] %v3196
      %3247 = vst [vmem:[#allocation2 + $0x120] sm:$0xff] %v3197
      %3248 = vst [vmem:[#allocation2 + $0x128] sm:$0xff] %v3198
      %3249 = vst [vmem:[#allocation2 + $0x130] sm:$0xff] %v3199
      %3250 = vst [vmem:[#allocation2 + $0x138] sm:$0xff] %v3200
      %3251 = vst [vmem:[#allocation2 + $0x140] sm:$0xff] %v3201
      %3252 = vst [vmem:[#allocation2 + $0x148] sm:$0xff] %v3202
      %3253 = vst [vmem:[#allocation2 + $0x150] sm:$0xff] %v3203
      %3254 = vst [vmem:[#allocation2 + $0x158] sm:$0xff] %v3204
      %3255 = vst [vmem:[#allocation2 + $0x160] sm:$0xff] %v3205
      %3256 = vst [vmem:[#allocation2 + $0x168] sm:$0xff] %v3206
      %3257 = vst [vmem:[#allocation2 + $0x170] sm:$0xff] %v3207
      %3258 = vst [vmem:[#allocation2 + $0x178] sm:$0xff] %v3208
      %3259 = vst [vmem:[#allocation2 + $0x180] sm:$0xff] %v3209
      %3260 = vst [vmem:[#allocation2 + $0x188] sm:$0xff] %v3210
      %v3261 = vld [vmem:[%s165 + $0x3e8] sm:$0xf]
      %v3262 = vld [vmem:[%s165 + $0x3ec] sm:$0xf]
      %v3263 = vld [vmem:[%s165 + $0x3f0] sm:$0xf]
      %v3264 = vld [vmem:[%s165 + $0x3f4] sm:$0xf]
      %v3265 = vld [vmem:[%s165 + $0x3f8] sm:$0xf]
      %v3266 = vld [vmem:[%s165 + $0x3fc] sm:$0xf]
      %v3267 = vld [vmem:[%s165 + $0x400] sm:$0xf]
      %v3268 = vld [vmem:[%s165 + $0x404] sm:$0xf]
      %v3269 = vld [vmem:[%s165 + $0x408] sm:$0xf]
      %v3270 = vld [vmem:[%s165 + $0x40c] sm:$0xf]
      %v3271 = vld [vmem:[%s165 + $0x410] sm:$0xf]
      %v3272 = vld [vmem:[%s165 + $0x414] sm:$0xf]
      %v3273 = vld [vmem:[%s165 + $0x418] sm:$0xf]
      %v3274 = vld [vmem:[%s165 + $0x41c] sm:$0xf]
      %v3275 = vld [vmem:[%s165 + $0x420] sm:$0xf]
      %v3276 = vld [vmem:[%s165 + $0x424] sm:$0xf]
      %v3277 = vld [vmem:[%s165 + $0x428] sm:$0xf]
      %v3278 = vld [vmem:[%s165 + $0x42c] sm:$0xf]
      %v3279 = vld [vmem:[%s165 + $0x430] sm:$0xf]
      %v3280 = vld [vmem:[%s165 + $0x434] sm:$0xf]
      %v3281 = vld [vmem:[%s165 + $0x438] sm:$0xf]
      %v3282 = vld [vmem:[%s165 + $0x43c] sm:$0xf]
      %v3283 = vld [vmem:[%s165 + $0x440] sm:$0xf]
      %v3284 = vld [vmem:[%s165 + $0x444] sm:$0xf]
      %v3285 = vld [vmem:[%s165 + $0x448] sm:$0xf]
      %v3286 = vld [vmem:[%s165 + $0x44c] sm:$0xf]
      %v3287 = vld [vmem:[%s165 + $0x450] sm:$0xf]
      %v3288 = vld [vmem:[%s165 + $0x454] sm:$0xf]
      %v3289 = vld [vmem:[%s165 + $0x458] sm:$0xf]
      %v3290 = vld [vmem:[%s165 + $0x45c] sm:$0xf]
      %v3291 = vld [vmem:[%s165 + $0x460] sm:$0xf]
      %v3292 = vld [vmem:[%s165 + $0x464] sm:$0xf]
      %v3293 = vld [vmem:[%s165 + $0x468] sm:$0xf]
      %v3294 = vld [vmem:[%s165 + $0x46c] sm:$0xf]
      %v3295 = vld [vmem:[%s165 + $0x470] sm:$0xf]
      %v3296 = vld [vmem:[%s165 + $0x474] sm:$0xf]
      %v3297 = vld [vmem:[%s165 + $0x478] sm:$0xf]
      %v3298 = vld [vmem:[%s165 + $0x47c] sm:$0xf]
      %v3299 = vld [vmem:[%s165 + $0x480] sm:$0xf]
      %v3300 = vld [vmem:[%s165 + $0x484] sm:$0xf]
      %v3301 = vld [vmem:[%s165 + $0x488] sm:$0xf]
      %v3302 = vld [vmem:[%s165 + $0x48c] sm:$0xf]
      %v3303 = vld [vmem:[%s165 + $0x490] sm:$0xf]
      %v3304 = vld [vmem:[%s165 + $0x494] sm:$0xf]
      %v3305 = vld [vmem:[%s165 + $0x498] sm:$0xf]
      %v3306 = vld [vmem:[%s165 + $0x49c] sm:$0xf]
      %v3307 = vld [vmem:[%s165 + $0x4a0] sm:$0xf]
      %v3308 = vld [vmem:[%s165 + $0x4a4] sm:$0xf]
      %v3309 = vld [vmem:[%s165 + $0x4a8] sm:$0xf]
      %v3310 = vld [vmem:[%s165 + $0x4ac] sm:$0xf]
      %v3361 = vunpack.c.l.b16 %v3261
      %v3362 = vunpack.c.l.b16 %v3262
      %v3363 = vunpack.c.l.b16 %v3263
      %v3364 = vunpack.c.l.b16 %v3264
      %v3365 = vunpack.c.l.b16 %v3265
      %v3366 = vunpack.c.l.b16 %v3266
      %v3367 = vunpack.c.l.b16 %v3267
      %v3368 = vunpack.c.l.b16 %v3268
      %v3369 = vunpack.c.l.b16 %v3269
      %v3370 = vunpack.c.l.b16 %v3270
      %v3371 = vunpack.c.l.b16 %v3271
      %v3372 = vunpack.c.l.b16 %v3272
      %v3373 = vunpack.c.l.b16 %v3273
      %v3374 = vunpack.c.l.b16 %v3274
      %v3375 = vunpack.c.l.b16 %v3275
      %v3376 = vunpack.c.l.b16 %v3276
      %v3377 = vunpack.c.l.b16 %v3277
      %v3378 = vunpack.c.l.b16 %v3278
      %v3379 = vunpack.c.l.b16 %v3279
      %v3380 = vunpack.c.l.b16 %v3280
      %v3381 = vunpack.c.l.b16 %v3281
      %v3382 = vunpack.c.l.b16 %v3282
      %v3383 = vunpack.c.l.b16 %v3283
      %v3384 = vunpack.c.l.b16 %v3284
      %v3385 = vunpack.c.l.b16 %v3285
      %v3386 = vunpack.c.l.b16 %v3286
      %v3387 = vunpack.c.l.b16 %v3287
      %v3388 = vunpack.c.l.b16 %v3288
      %v3389 = vunpack.c.l.b16 %v3289
      %v3390 = vunpack.c.l.b16 %v3290
      %v3391 = vunpack.c.l.b16 %v3291
      %v3392 = vunpack.c.l.b16 %v3292
      %v3393 = vunpack.c.l.b16 %v3293
      %v3394 = vunpack.c.l.b16 %v3294
      %v3395 = vunpack.c.l.b16 %v3295
      %v3396 = vunpack.c.l.b16 %v3296
      %v3397 = vunpack.c.l.b16 %v3297
      %v3398 = vunpack.c.l.b16 %v3298
      %v3399 = vunpack.c.l.b16 %v3299
      %v3400 = vunpack.c.l.b16 %v3300
      %v3401 = vunpack.c.l.b16 %v3301
      %v3402 = vunpack.c.l.b16 %v3302
      %v3403 = vunpack.c.l.b16 %v3303
      %v3404 = vunpack.c.l.b16 %v3304
      %v3405 = vunpack.c.l.b16 %v3305
      %v3406 = vunpack.c.l.b16 %v3306
      %v3407 = vunpack.c.l.b16 %v3307
      %v3408 = vunpack.c.l.b16 %v3308
      %v3409 = vunpack.c.l.b16 %v3309
      %v3410 = vunpack.c.l.b16 %v3310
      %v3411 = vpack.c.b16 %v3362, %v3361
      %v3412 = vpack.c.b16 %v3364, %v3363
      %v3413 = vpack.c.b16 %v3366, %v3365
      %v3414 = vpack.c.b16 %v3368, %v3367
      %v3415 = vpack.c.b16 %v3370, %v3369
      %v3416 = vpack.c.b16 %v3372, %v3371
      %v3417 = vpack.c.b16 %v3374, %v3373
      %v3418 = vpack.c.b16 %v3376, %v3375
      %v3419 = vpack.c.b16 %v3378, %v3377
      %v3420 = vpack.c.b16 %v3380, %v3379
      %v3421 = vpack.c.b16 %v3382, %v3381
      %v3422 = vpack.c.b16 %v3384, %v3383
      %v3423 = vpack.c.b16 %v3386, %v3385
      %v3424 = vpack.c.b16 %v3388, %v3387
      %v3425 = vpack.c.b16 %v3390, %v3389
      %v3426 = vpack.c.b16 %v3392, %v3391
      %v3427 = vpack.c.b16 %v3394, %v3393
      %v3428 = vpack.c.b16 %v3396, %v3395
      %v3429 = vpack.c.b16 %v3398, %v3397
      %v3430 = vpack.c.b16 %v3400, %v3399
      %v3431 = vpack.c.b16 %v3402, %v3401
      %v3432 = vpack.c.b16 %v3404, %v3403
      %v3433 = vpack.c.b16 %v3406, %v3405
      %v3434 = vpack.c.b16 %v3408, %v3407
      %v3435 = vpack.c.b16 %v3410, %v3409
      %v3437 = vsel %vm370, %v3411, 0
      %v3440 = vsel %vm370, %v3412, 0
      %v3443 = vsel %vm370, %v3413, 0
      %v3446 = vsel %vm370, %v3414, 0
      %v3449 = vsel %vm370, %v3415, 0
      %v3452 = vsel %vm370, %v3416, 0
      %v3455 = vsel %vm370, %v3417, 0
      %v3458 = vsel %vm370, %v3418, 0
      %v3461 = vsel %vm370, %v3419, 0
      %v3464 = vsel %vm370, %v3420, 0
      %v3467 = vsel %vm370, %v3421, 0
      %v3470 = vsel %vm370, %v3422, 0
      %v3473 = vsel %vm370, %v3423, 0
      %v3476 = vsel %vm370, %v3424, 0
      %v3479 = vsel %vm370, %v3425, 0
      %v3482 = vsel %vm370, %v3426, 0
      %v3485 = vsel %vm370, %v3427, 0
      %v3488 = vsel %vm370, %v3428, 0
      %v3491 = vsel %vm370, %v3429, 0
      %v3494 = vsel %vm370, %v3430, 0
      %v3497 = vsel %vm370, %v3431, 0
      %v3500 = vsel %vm370, %v3432, 0
      %v3503 = vsel %vm370, %v3433, 0
      %v3506 = vsel %vm370, %v3434, 0
      %v3509 = vsel %vm370, %v3435, 0
      %3511 = vmatprep.subr.bf16.mxu0 0
      %3512 = vmatpush1.bf16.msra.mxu0 %v366
      %3513 = vmatprep.subr.bf16.mxu0 0
      %3514 = vmatpush1.bf16.msra.mxu0 %v367
      %3515 = vmatprep.subr.bf16.mxu0 0
      %3516 = vmatpush1.bf16.msra.mxu0 0
      %3517 = vmatprep.subr.bf16.mxu0 0
      %3518 = vmatpush1.bf16.msra.mxu0 0
      %3519 = vmatprep.subr.bf16.mxu0 0
      %3520 = vmatpush1.bf16.msra.mxu0 0
      %3521 = vmatprep.subr.bf16.mxu0 0
      %3522 = vmatpush1.bf16.msra.mxu0 0
      %3523 = vmatprep.subr.bf16.mxu0 0
      %3524 = vmatpush1.bf16.msra.mxu0 0
      %3525 = vmatprep.subr.bf16.mxu0 0
      %3526 = vmatpush1.bf16.msra.mxu0 0
      %3527 = vmatprep.subr.bf16.mxu0 0
      %3528 = vmatpush1.bf16.msra.mxu0 0
      %3529 = vmatprep.subr.bf16.mxu0 0
      %3530 = vmatpush1.bf16.msra.mxu0 0
      %3531 = vmatprep.subr.bf16.mxu0 0
      %3532 = vmatpush1.bf16.msra.mxu0 0
      %3533 = vmatprep.subr.bf16.mxu0 0
      %3534 = vmatpush1.bf16.msra.mxu0 0
      %3535 = vmatprep.subr.bf16.mxu0 0
      %3536 = vmatpush1.bf16.msra.mxu0 0
      %3537 = vmatprep.subr.bf16.mxu0 0
      %3538 = vmatpush1.bf16.msra.mxu0 0
      %3539 = vmatprep.subr.bf16.mxu0 0
      %3540 = vmatpush1.bf16.msra.mxu0 0
      %3541 = vmatprep.subr.bf16.mxu0 0
      %3542 = vmatpush1.bf16.msra.mxu0 0
      %3543 = vmatprep.mubr.bf16.mxu0 0
      %3544 = vmatmul.mubr.bf16.gmra.mrb[0].mxu0 %v3437
      %v3545 = vpop.f32.mrb[0].mxu0
      %v3546 = vadd.f32 %v231, %v3545
      %v3547 = vpop.f32.mrb[0].mxu0
      %v3548 = vpop.f32.mrb[0].mxu0
      %v3549 = vadd.f32 %v231, %v3548
      %v3550 = vpop.f32.mrb[0].mxu0
      %3551 = vmatprep.mubr.bf16.mxu0 0
      %3552 = vmatmul.mubr.bf16.gmra.mrb[0].mxu0 %v3440
      %v3553 = vpop.f32.mrb[0].mxu0
      %v3554 = vadd.f32 %v231, %v3553
      %v3555 = vpop.f32.mrb[0].mxu0
      %v3556 = vpop.f32.mrb[0].mxu0
      %v3557 = vadd.f32 %v231, %v3556
      %v3558 = vpop.f32.mrb[0].mxu0
      %3559 = vmatprep.mubr.bf16.mxu0 0
      %3560 = vmatmul.mubr.bf16.gmra.mrb[0].mxu0 %v3443
      %v3561 = vpop.f32.mrb[0].mxu0
      %v3562 = vadd.f32 %v231, %v3561
      %v3563 = vpop.f32.mrb[0].mxu0
      %v3564 = vpop.f32.mrb[0].mxu0
      %v3565 = vadd.f32 %v231, %v3564
      %v3566 = vpop.f32.mrb[0].mxu0
      %3567 = vmatprep.mubr.bf16.mxu0 0
      %3568 = vmatmul.mubr.bf16.gmra.mrb[0].mxu0 %v3446
      %v3569 = vpop.f32.mrb[0].mxu0
      %v3570 = vadd.f32 %v231, %v3569
      %v3571 = vpop.f32.mrb[0].mxu0
      %v3572 = vpop.f32.mrb[0].mxu0
      %v3573 = vadd.f32 %v231, %v3572
      %v3574 = vpop.f32.mrb[0].mxu0
      %3575 = vmatprep.mubr.bf16.mxu0 0
      %3576 = vmatmul.mubr.bf16.gmra.mrb[0].mxu0 %v3449
      %v3577 = vpop.f32.mrb[0].mxu0
      %v3578 = vadd.f32 %v231, %v3577
      %v3579 = vpop.f32.mrb[0].mxu0
      %v3580 = vpop.f32.mrb[0].mxu0
      %v3581 = vadd.f32 %v231, %v3580
      %v3582 = vpop.f32.mrb[0].mxu0
      %3583 = vmatprep.mubr.bf16.mxu0 0
      %3584 = vmatmul.mubr.bf16.gmra.mrb[0].mxu0 %v3452
      %v3585 = vpop.f32.mrb[0].mxu0
      %v3586 = vadd.f32 %v231, %v3585
      %v3587 = vpop.f32.mrb[0].mxu0
      %v3588 = vpop.f32.mrb[0].mxu0
      %v3589 = vadd.f32 %v231, %v3588
      %v3590 = vpop.f32.mrb[0].mxu0
      %3591 = vmatprep.mubr.bf16.mxu0 0
      %3592 = vmatmul.mubr.bf16.gmra.mrb[0].mxu0 %v3455
      %v3593 = vpop.f32.mrb[0].mxu0
      %v3594 = vadd.f32 %v231, %v3593
      %v3595 = vpop.f32.mrb[0].mxu0
      %v3596 = vpop.f32.mrb[0].mxu0
      %v3597 = vadd.f32 %v231, %v3596
      %v3598 = vpop.f32.mrb[0].mxu0
      %3599 = vmatprep.mubr.bf16.mxu0 0
      %3600 = vmatmul.mubr.bf16.gmra.mrb[0].mxu0 %v3458
      %v3601 = vpop.f32.mrb[0].mxu0
      %v3602 = vadd.f32 %v231, %v3601
      %v3603 = vpop.f32.mrb[0].mxu0
      %v3604 = vpop.f32.mrb[0].mxu0
      %v3605 = vadd.f32 %v231, %v3604
      %v3606 = vpop.f32.mrb[0].mxu0
      %3607 = vmatprep.mubr.bf16.mxu0 0
      %3608 = vmatmul.mubr.bf16.gmra.mrb[0].mxu0 %v3461
      %v3609 = vpop.f32.mrb[0].mxu0
      %v3610 = vadd.f32 %v231, %v3609
      %v3611 = vpop.f32.mrb[0].mxu0
      %v3612 = vpop.f32.mrb[0].mxu0
      %v3613 = vadd.f32 %v231, %v3612
      %v3614 = vpop.f32.mrb[0].mxu0
      %3615 = vmatprep.mubr.bf16.mxu0 0
      %3616 = vmatmul.mubr.bf16.gmra.mrb[0].mxu0 %v3464
      %v3617 = vpop.f32.mrb[0].mxu0
      %v3618 = vadd.f32 %v231, %v3617
      %v3619 = vpop.f32.mrb[0].mxu0
      %v3620 = vpop.f32.mrb[0].mxu0
      %v3621 = vadd.f32 %v231, %v3620
      %v3622 = vpop.f32.mrb[0].mxu0
      %3623 = vmatprep.mubr.bf16.mxu0 0
      %3624 = vmatmul.mubr.bf16.gmra.mrb[0].mxu0 %v3467
      %v3625 = vpop.f32.mrb[0].mxu0
      %v3626 = vadd.f32 %v231, %v3625
      %v3627 = vpop.f32.mrb[0].mxu0
      %v3628 = vpop.f32.mrb[0].mxu0
      %v3629 = vadd.f32 %v231, %v3628
      %v3630 = vpop.f32.mrb[0].mxu0
      %3631 = vmatprep.mubr.bf16.mxu0 0
      %3632 = vmatmul.mubr.bf16.gmra.mrb[0].mxu0 %v3470
      %v3633 = vpop.f32.mrb[0].mxu0
      %v3634 = vadd.f32 %v231, %v3633
      %v3635 = vpop.f32.mrb[0].mxu0
      %v3636 = vpop.f32.mrb[0].mxu0
      %v3637 = vadd.f32 %v231, %v3636
      %v3638 = vpop.f32.mrb[0].mxu0
      %3639 = vmatprep.mubr.bf16.mxu0 0
      %3640 = vmatmul.mubr.bf16.gmra.mrb[0].mxu0 %v3473
      %v3641 = vpop.f32.mrb[0].mxu0
      %v3642 = vadd.f32 %v231, %v3641
      %v3643 = vpop.f32.mrb[0].mxu0
      %v3644 = vpop.f32.mrb[0].mxu0
      %v3645 = vadd.f32 %v231, %v3644
      %v3646 = vpop.f32.mrb[0].mxu0
      %3647 = vmatprep.mubr.bf16.mxu0 0
      %3648 = vmatmul.mubr.bf16.gmra.mrb[0].mxu0 %v3476
      %v3649 = vpop.f32.mrb[0].mxu0
      %v3650 = vadd.f32 %v231, %v3649
      %v3651 = vpop.f32.mrb[0].mxu0
      %v3652 = vpop.f32.mrb[0].mxu0
      %v3653 = vadd.f32 %v231, %v3652
      %v3654 = vpop.f32.mrb[0].mxu0
      %3655 = vmatprep.mubr.bf16.mxu0 0
      %3656 = vmatmul.mubr.bf16.gmra.mrb[0].mxu0 %v3479
      %v3657 = vpop.f32.mrb[0].mxu0
      %v3658 = vadd.f32 %v231, %v3657
      %v3659 = vpop.f32.mrb[0].mxu0
      %v3660 = vpop.f32.mrb[0].mxu0
      %v3661 = vadd.f32 %v231, %v3660
      %v3662 = vpop.f32.mrb[0].mxu0
      %3663 = vmatprep.mubr.bf16.mxu0 0
      %3664 = vmatmul.mubr.bf16.gmra.mrb[0].mxu0 %v3482
      %v3665 = vpop.f32.mrb[0].mxu0
      %v3666 = vadd.f32 %v231, %v3665
      %v3667 = vpop.f32.mrb[0].mxu0
      %v3668 = vpop.f32.mrb[0].mxu0
      %v3669 = vadd.f32 %v231, %v3668
      %v3670 = vpop.f32.mrb[0].mxu0
      %3671 = vmatprep.mubr.bf16.mxu0 0
      %3672 = vmatmul.mubr.bf16.gmra.mrb[0].mxu0 %v3485
      %v3673 = vpop.f32.mrb[0].mxu0
      %v3674 = vadd.f32 %v231, %v3673
      %v3675 = vpop.f32.mrb[0].mxu0
      %v3676 = vpop.f32.mrb[0].mxu0
      %v3677 = vadd.f32 %v231, %v3676
      %v3678 = vpop.f32.mrb[0].mxu0
      %3679 = vmatprep.mubr.bf16.mxu0 0
      %3680 = vmatmul.mubr.bf16.gmra.mrb[0].mxu0 %v3488
      %v3681 = vpop.f32.mrb[0].mxu0
      %v3682 = vadd.f32 %v231, %v3681
      %v3683 = vpop.f32.mrb[0].mxu0
      %v3684 = vpop.f32.mrb[0].mxu0
      %v3685 = vadd.f32 %v231, %v3684
      %v3686 = vpop.f32.mrb[0].mxu0
      %3687 = vmatprep.mubr.bf16.mxu0 0
      %3688 = vmatmul.mubr.bf16.gmra.mrb[0].mxu0 %v3491
      %v3689 = vpop.f32.mrb[0].mxu0
      %v3690 = vadd.f32 %v231, %v3689
      %v3691 = vpop.f32.mrb[0].mxu0
      %v3692 = vpop.f32.mrb[0].mxu0
      %v3693 = vadd.f32 %v231, %v3692
      %v3694 = vpop.f32.mrb[0].mxu0
      %3695 = vmatprep.mubr.bf16.mxu0 0
      %3696 = vmatmul.mubr.bf16.gmra.mrb[0].mxu0 %v3494
      %v3697 = vpop.f32.mrb[0].mxu0
      %v3698 = vadd.f32 %v231, %v3697
      %v3699 = vpop.f32.mrb[0].mxu0
      %v3700 = vpop.f32.mrb[0].mxu0
      %v3701 = vadd.f32 %v231, %v3700
      %v3702 = vpop.f32.mrb[0].mxu0
      %3703 = vmatprep.mubr.bf16.mxu0 0
      %3704 = vmatmul.mubr.bf16.gmra.mrb[0].mxu0 %v3497
      %v3705 = vpop.f32.mrb[0].mxu0
      %v3706 = vadd.f32 %v231, %v3705
      %v3707 = vpop.f32.mrb[0].mxu0
      %v3708 = vpop.f32.mrb[0].mxu0
      %v3709 = vadd.f32 %v231, %v3708
      %v3710 = vpop.f32.mrb[0].mxu0
      %3711 = vmatprep.mubr.bf16.mxu0 0
      %3712 = vmatmul.mubr.bf16.gmra.mrb[0].mxu0 %v3500
      %v3713 = vpop.f32.mrb[0].mxu0
      %v3714 = vadd.f32 %v231, %v3713
      %v3715 = vpop.f32.mrb[0].mxu0
      %v3716 = vpop.f32.mrb[0].mxu0
      %v3717 = vadd.f32 %v231, %v3716
      %v3718 = vpop.f32.mrb[0].mxu0
      %3719 = vmatprep.mubr.bf16.mxu0 0
      %3720 = vmatmul.mubr.bf16.gmra.mrb[0].mxu0 %v3503
      %v3721 = vpop.f32.mrb[0].mxu0
      %v3722 = vadd.f32 %v231, %v3721
      %v3723 = vpop.f32.mrb[0].mxu0
      %v3724 = vpop.f32.mrb[0].mxu0
      %v3725 = vadd.f32 %v231, %v3724
      %v3726 = vpop.f32.mrb[0].mxu0
      %3727 = vmatprep.mubr.bf16.mxu0 0
      %3728 = vmatmul.mubr.bf16.gmra.mrb[0].mxu0 %v3506
      %v3729 = vpop.f32.mrb[0].mxu0
      %v3730 = vadd.f32 %v231, %v3729
      %v3731 = vpop.f32.mrb[0].mxu0
      %v3732 = vpop.f32.mrb[0].mxu0
      %v3733 = vadd.f32 %v231, %v3732
      %v3734 = vpop.f32.mrb[0].mxu0
      %3735 = vmatprep.mubr.bf16.mxu0 0
      %3736 = vmatmul.mubr.bf16.gmra.mrb[0].mxu0 %v3509
      %v3737 = vpop.f32.mrb[0].mxu0
      %v3738 = vadd.f32 %v231, %v3737
      %v3739 = vpop.f32.mrb[0].mxu0
      %v3740 = vpop.f32.mrb[0].mxu0
      %v3741 = vadd.f32 %v231, %v3740
      %v3742 = vpop.f32.mrb[0].mxu0
      %3743 = vdwg.mxu0
      %v3744 = vld [vmem:[#allocation2] sm:$0xff]
      %v3745 = vld [vmem:[#allocation2 + $0x8] sm:$0xff]
      %v3746 = vld [vmem:[#allocation2 + $0x10] sm:$0xff]
      %v3747 = vld [vmem:[#allocation2 + $0x18] sm:$0xff]
      %v3748 = vld [vmem:[#allocation2 + $0x20] sm:$0xff]
      %v3749 = vld [vmem:[#allocation2 + $0x28] sm:$0xff]
      %v3750 = vld [vmem:[#allocation2 + $0x30] sm:$0xff]
      %v3751 = vld [vmem:[#allocation2 + $0x38] sm:$0xff]
      %v3752 = vld [vmem:[#allocation2 + $0x40] sm:$0xff]
      %v3753 = vld [vmem:[#allocation2 + $0x48] sm:$0xff]
      %v3754 = vld [vmem:[#allocation2 + $0x50] sm:$0xff]
      %v3755 = vld [vmem:[#allocation2 + $0x58] sm:$0xff]
      %v3756 = vld [vmem:[#allocation2 + $0x60] sm:$0xff]
      %v3757 = vld [vmem:[#allocation2 + $0x68] sm:$0xff]
      %v3758 = vld [vmem:[#allocation2 + $0x70] sm:$0xff]
      %v3759 = vld [vmem:[#allocation2 + $0x78] sm:$0xff]
      %v3760 = vld [vmem:[#allocation2 + $0x80] sm:$0xff]
      %v3761 = vld [vmem:[#allocation2 + $0x88] sm:$0xff]
      %v3762 = vld [vmem:[#allocation2 + $0x90] sm:$0xff]
      %v3763 = vld [vmem:[#allocation2 + $0x98] sm:$0xff]
      %v3764 = vld [vmem:[#allocation2 + $0xa0] sm:$0xff]
      %v3765 = vld [vmem:[#allocation2 + $0xa8] sm:$0xff]
      %v3766 = vld [vmem:[#allocation2 + $0xb0] sm:$0xff]
      %v3767 = vld [vmem:[#allocation2 + $0xb8] sm:$0xff]
      %v3768 = vld [vmem:[#allocation2 + $0xc0] sm:$0xff]
      %v3769 = vld [vmem:[#allocation2 + $0xc8] sm:$0xff]
      %v3770 = vld [vmem:[#allocation2 + $0xd0] sm:$0xff]
      %v3771 = vld [vmem:[#allocation2 + $0xd8] sm:$0xff]
      %v3772 = vld [vmem:[#allocation2 + $0xe0] sm:$0xff]
      %v3773 = vld [vmem:[#allocation2 + $0xe8] sm:$0xff]
      %v3774 = vld [vmem:[#allocation2 + $0xf0] sm:$0xff]
      %v3775 = vld [vmem:[#allocation2 + $0xf8] sm:$0xff]
      %v3776 = vld [vmem:[#allocation2 + $0x100] sm:$0xff]
      %v3777 = vld [vmem:[#allocation2 + $0x108] sm:$0xff]
      %v3778 = vld [vmem:[#allocation2 + $0x110] sm:$0xff]
      %v3779 = vld [vmem:[#allocation2 + $0x118] sm:$0xff]
      %v3780 = vld [vmem:[#allocation2 + $0x120] sm:$0xff]
      %v3781 = vld [vmem:[#allocation2 + $0x128] sm:$0xff]
      %v3782 = vld [vmem:[#allocation2 + $0x130] sm:$0xff]
      %v3783 = vld [vmem:[#allocation2 + $0x138] sm:$0xff]
      %v3784 = vld [vmem:[#allocation2 + $0x140] sm:$0xff]
      %v3785 = vld [vmem:[#allocation2 + $0x148] sm:$0xff]
      %v3786 = vld [vmem:[#allocation2 + $0x150] sm:$0xff]
      %v3787 = vld [vmem:[#allocation2 + $0x158] sm:$0xff]
      %v3788 = vld [vmem:[#allocation2 + $0x160] sm:$0xff]
      %v3789 = vld [vmem:[#allocation2 + $0x168] sm:$0xff]
      %v3790 = vld [vmem:[#allocation2 + $0x170] sm:$0xff]
      %v3791 = vld [vmem:[#allocation2 + $0x178] sm:$0xff]
      %v3792 = vld [vmem:[#allocation2 + $0x180] sm:$0xff]
      %v3793 = vld [vmem:[#allocation2 + $0x188] sm:$0xff]
      %v3794 = vmax.f32 %v3744, %v3546
      %v3795 = vmax.f32 %v3745, %v3549
      %v3796 = vmax.f32 %v3746, %v3554
      %v3797 = vmax.f32 %v3747, %v3557
      %v3798 = vmax.f32 %v3748, %v3562
      %v3799 = vmax.f32 %v3749, %v3565
      %v3800 = vmax.f32 %v3750, %v3570
      %v3801 = vmax.f32 %v3751, %v3573
      %v3802 = vmax.f32 %v3752, %v3578
      %v3803 = vmax.f32 %v3753, %v3581
      %v3804 = vmax.f32 %v3754, %v3586
      %v3805 = vmax.f32 %v3755, %v3589
      %v3806 = vmax.f32 %v3756, %v3594
      %v3807 = vmax.f32 %v3757, %v3597
      %v3808 = vmax.f32 %v3758, %v3602
      %v3809 = vmax.f32 %v3759, %v3605
      %v3810 = vmax.f32 %v3760, %v3610
      %v3811 = vmax.f32 %v3761, %v3613
      %v3812 = vmax.f32 %v3762, %v3618
      %v3813 = vmax.f32 %v3763, %v3621
      %v3814 = vmax.f32 %v3764, %v3626
      %v3815 = vmax.f32 %v3765, %v3629
      %v3816 = vmax.f32 %v3766, %v3634
      %v3817 = vmax.f32 %v3767, %v3637
      %v3818 = vmax.f32 %v3768, %v3642
      %v3819 = vmax.f32 %v3769, %v3645
      %v3820 = vmax.f32 %v3770, %v3650
      %v3821 = vmax.f32 %v3771, %v3653
      %v3822 = vmax.f32 %v3772, %v3658
      %v3823 = vmax.f32 %v3773, %v3661
      %v3824 = vmax.f32 %v3774, %v3666
      %v3825 = vmax.f32 %v3775, %v3669
      %v3826 = vmax.f32 %v3776, %v3674
      %v3827 = vmax.f32 %v3777, %v3677
      %v3828 = vmax.f32 %v3778, %v3682
      %v3829 = vmax.f32 %v3779, %v3685
      %v3830 = vmax.f32 %v3780, %v3690
      %v3831 = vmax.f32 %v3781, %v3693
      %v3832 = vmax.f32 %v3782, %v3698
      %v3833 = vmax.f32 %v3783, %v3701
      %v3834 = vmax.f32 %v3784, %v3706
      %v3835 = vmax.f32 %v3785, %v3709
      %v3836 = vmax.f32 %v3786, %v3714
      %v3837 = vmax.f32 %v3787, %v3717
      %v3838 = vmax.f32 %v3788, %v3722
      %v3839 = vmax.f32 %v3789, %v3725
      %v3840 = vmax.f32 %v3790, %v3730
      %v3841 = vmax.f32 %v3791, %v3733
      %v3842 = vmax.f32 %v3792, %v3738
      %v3843 = vmax.f32 %v3793, %v3741
      %3844 = vst [vmem:[#allocation2] sm:$0xff] %v3794
      %3845 = vst [vmem:[#allocation2 + $0x8] sm:$0xff] %v3795
      %3846 = vst [vmem:[#allocation2 + $0x10] sm:$0xff] %v3796
      %3847 = vst [vmem:[#allocation2 + $0x18] sm:$0xff] %v3797
      %3848 = vst [vmem:[#allocation2 + $0x20] sm:$0xff] %v3798
      %3849 = vst [vmem:[#allocation2 + $0x28] sm:$0xff] %v3799
      %3850 = vst [vmem:[#allocation2 + $0x30] sm:$0xff] %v3800
      %3851 = vst [vmem:[#allocation2 + $0x38] sm:$0xff] %v3801
      %3852 = vst [vmem:[#allocation2 + $0x40] sm:$0xff] %v3802
      %3853 = vst [vmem:[#allocation2 + $0x48] sm:$0xff] %v3803
      %3854 = vst [vmem:[#allocation2 + $0x50] sm:$0xff] %v3804
      %3855 = vst [vmem:[#allocation2 + $0x58] sm:$0xff] %v3805
      %3856 = vst [vmem:[#allocation2 + $0x60] sm:$0xff] %v3806
      %3857 = vst [vmem:[#allocation2 + $0x68] sm:$0xff] %v3807
      %3858 = vst [vmem:[#allocation2 + $0x70] sm:$0xff] %v3808
      %3859 = vst [vmem:[#allocation2 + $0x78] sm:$0xff] %v3809
      %3860 = vst [vmem:[#allocation2 + $0x80] sm:$0xff] %v3810
      %3861 = vst [vmem:[#allocation2 + $0x88] sm:$0xff] %v3811
      %3862 = vst [vmem:[#allocation2 + $0x90] sm:$0xff] %v3812
      %3863 = vst [vmem:[#allocation2 + $0x98] sm:$0xff] %v3813
      %3864 = vst [vmem:[#allocation2 + $0xa0] sm:$0xff] %v3814
      %3865 = vst [vmem:[#allocation2 + $0xa8] sm:$0xff] %v3815
      %3866 = vst [vmem:[#allocation2 + $0xb0] sm:$0xff] %v3816
      %3867 = vst [vmem:[#allocation2 + $0xb8] sm:$0xff] %v3817
      %3868 = vst [vmem:[#allocation2 + $0xc0] sm:$0xff] %v3818
      %3869 = vst [vmem:[#allocation2 + $0xc8] sm:$0xff] %v3819
      %3870 = vst [vmem:[#allocation2 + $0xd0] sm:$0xff] %v3820
      %3871 = vst [vmem:[#allocation2 + $0xd8] sm:$0xff] %v3821
      %3872 = vst [vmem:[#allocation2 + $0xe0] sm:$0xff] %v3822
      %3873 = vst [vmem:[#allocation2 + $0xe8] sm:$0xff] %v3823
      %3874 = vst [vmem:[#allocation2 + $0xf0] sm:$0xff] %v3824
      %3875 = vst [vmem:[#allocation2 + $0xf8] sm:$0xff] %v3825
      %3876 = vst [vmem:[#allocation2 + $0x100] sm:$0xff] %v3826
      %3877 = vst [vmem:[#allocation2 + $0x108] sm:$0xff] %v3827
      %3878 = vst [vmem:[#allocation2 + $0x110] sm:$0xff] %v3828
      %3879 = vst [vmem:[#allocation2 + $0x118] sm:$0xff] %v3829
      %3880 = vst [vmem:[#allocation2 + $0x120] sm:$0xff] %v3830
      %3881 = vst [vmem:[#allocation2 + $0x128] sm:$0xff] %v3831
      %3882 = vst [vmem:[#allocation2 + $0x130] sm:$0xff] %v3832
      %3883 = vst [vmem:[#allocation2 + $0x138] sm:$0xff] %v3833
      %3884 = vst [vmem:[#allocation2 + $0x140] sm:$0xff] %v3834
      %3885 = vst [vmem:[#allocation2 + $0x148] sm:$0xff] %v3835
      %3886 = vst [vmem:[#allocation2 + $0x150] sm:$0xff] %v3836
      %3887 = vst [vmem:[#allocation2 + $0x158] sm:$0xff] %v3837
      %3888 = vst [vmem:[#allocation2 + $0x160] sm:$0xff] %v3838
      %3889 = vst [vmem:[#allocation2 + $0x168] sm:$0xff] %v3839
      %3890 = vst [vmem:[#allocation2 + $0x170] sm:$0xff] %v3840
      %3891 = vst [vmem:[#allocation2 + $0x178] sm:$0xff] %v3841
      %3892 = vst [vmem:[#allocation2 + $0x180] sm:$0xff] %v3842
      %3893 = vst [vmem:[#allocation2 + $0x188] sm:$0xff] %v3843
      %v3894 = vld [vmem:[%s165 + $0x4b0] sm:$0xf]
      %v3895 = vld [vmem:[%s165 + $0x4b4] sm:$0xf]
      %v3896 = vld [vmem:[%s165 + $0x4b8] sm:$0xf]
      %v3897 = vld [vmem:[%s165 + $0x4bc] sm:$0xf]
      %v3898 = vld [vmem:[%s165 + $0x4c0] sm:$0xf]
      %v3899 = vld [vmem:[%s165 + $0x4c4] sm:$0xf]
      %v3900 = vld [vmem:[%s165 + $0x4c8] sm:$0xf]
      %v3901 = vld [vmem:[%s165 + $0x4cc] sm:$0xf]
      %v3902 = vld [vmem:[%s165 + $0x4d0] sm:$0xf]
      %v3903 = vld [vmem:[%s165 + $0x4d4] sm:$0xf]
      %v3904 = vld [vmem:[%s165 + $0x4d8] sm:$0xf]
      %v3905 = vld [vmem:[%s165 + $0x4dc] sm:$0xf]
      %v3906 = vld [vmem:[%s165 + $0x4e0] sm:$0xf]
      %v3907 = vld [vmem:[%s165 + $0x4e4] sm:$0xf]
      %v3908 = vld [vmem:[%s165 + $0x4e8] sm:$0xf]
      %v3909 = vld [vmem:[%s165 + $0x4ec] sm:$0xf]
      %v3910 = vld [vmem:[%s165 + $0x4f0] sm:$0xf]
      %v3911 = vld [vmem:[%s165 + $0x4f4] sm:$0xf]
      %v3912 = vld [vmem:[%s165 + $0x4f8] sm:$0xf]
      %v3913 = vld [vmem:[%s165 + $0x4fc] sm:$0xf]
      %v3914 = vld [vmem:[%s165 + $0x500] sm:$0xf]
      %v3915 = vld [vmem:[%s165 + $0x504] sm:$0xf]
      %v3916 = vld [vmem:[%s165 + $0x508] sm:$0xf]
      %v3917 = vld [vmem:[%s165 + $0x50c] sm:$0xf]
      %v3918 = vld [vmem:[%s165 + $0x510] sm:$0xf]
      %v3919 = vld [vmem:[%s165 + $0x514] sm:$0xf]
      %v3920 = vld [vmem:[%s165 + $0x518] sm:$0xf]
      %v3921 = vld [vmem:[%s165 + $0x51c] sm:$0xf]
      %v3922 = vld [vmem:[%s165 + $0x520] sm:$0xf]
      %v3923 = vld [vmem:[%s165 + $0x524] sm:$0xf]
      %v3924 = vld [vmem:[%s165 + $0x528] sm:$0xf]
      %v3925 = vld [vmem:[%s165 + $0x52c] sm:$0xf]
      %v3926 = vld [vmem:[%s165 + $0x530] sm:$0xf]
      %v3927 = vld [vmem:[%s165 + $0x534] sm:$0xf]
      %v3928 = vld [vmem:[%s165 + $0x538] sm:$0xf]
      %v3929 = vld [vmem:[%s165 + $0x53c] sm:$0xf]
      %v3930 = vld [vmem:[%s165 + $0x540] sm:$0xf]
      %v3931 = vld [vmem:[%s165 + $0x544] sm:$0xf]
      %v3932 = vld [vmem:[%s165 + $0x548] sm:$0xf]
      %v3933 = vld [vmem:[%s165 + $0x54c] sm:$0xf]
      %v3934 = vld [vmem:[%s165 + $0x550] sm:$0xf]
      %v3935 = vld [vmem:[%s165 + $0x554] sm:$0xf]
      %v3936 = vld [vmem:[%s165 + $0x558] sm:$0xf]
      %v3937 = vld [vmem:[%s165 + $0x55c] sm:$0xf]
      %v3938 = vld [vmem:[%s165 + $0x560] sm:$0xf]
      %v3939 = vld [vmem:[%s165 + $0x564] sm:$0xf]
      %v3940 = vld [vmem:[%s165 + $0x568] sm:$0xf]
      %v3941 = vld [vmem:[%s165 + $0x56c] sm:$0xf]
      %v3942 = vld [vmem:[%s165 + $0x570] sm:$0xf]
      %v3943 = vld [vmem:[%s165 + $0x574] sm:$0xf]
      %v3994 = vunpack.c.l.b16 %v3894
      %v3995 = vunpack.c.l.b16 %v3895
      %v3996 = vunpack.c.l.b16 %v3896
      %v3997 = vunpack.c.l.b16 %v3897
      %v3998 = vunpack.c.l.b16 %v3898
      %v3999 = vunpack.c.l.b16 %v3899
      %v4000 = vunpack.c.l.b16 %v3900
      %v4001 = vunpack.c.l.b16 %v3901
      %v4002 = vunpack.c.l.b16 %v3902
      %v4003 = vunpack.c.l.b16 %v3903
      %v4004 = vunpack.c.l.b16 %v3904
      %v4005 = vunpack.c.l.b16 %v3905
      %v4006 = vunpack.c.l.b16 %v3906
      %v4007 = vunpack.c.l.b16 %v3907
      %v4008 = vunpack.c.l.b16 %v3908
      %v4009 = vunpack.c.l.b16 %v3909
      %v4010 = vunpack.c.l.b16 %v3910
      %v4011 = vunpack.c.l.b16 %v3911
      %v4012 = vunpack.c.l.b16 %v3912
      %v4013 = vunpack.c.l.b16 %v3913
      %v4014 = vunpack.c.l.b16 %v3914
      %v4015 = vunpack.c.l.b16 %v3915
      %v4016 = vunpack.c.l.b16 %v3916
      %v4017 = vunpack.c.l.b16 %v3917
      %v4018 = vunpack.c.l.b16 %v3918
      %v4019 = vunpack.c.l.b16 %v3919
      %v4020 = vunpack.c.l.b16 %v3920
      %v4021 = vunpack.c.l.b16 %v3921
      %v4022 = vunpack.c.l.b16 %v3922
      %v4023 = vunpack.c.l.b16 %v3923
      %v4024 = vunpack.c.l.b16 %v3924
      %v4025 = vunpack.c.l.b16 %v3925
      %v4026 = vunpack.c.l.b16 %v3926
      %v4027 = vunpack.c.l.b16 %v3927
      %v4028 = vunpack.c.l.b16 %v3928
      %v4029 = vunpack.c.l.b16 %v3929
      %v4030 = vunpack.c.l.b16 %v3930
      %v4031 = vunpack.c.l.b16 %v3931
      %v4032 = vunpack.c.l.b16 %v3932
      %v4033 = vunpack.c.l.b16 %v3933
      %v4034 = vunpack.c.l.b16 %v3934
      %v4035 = vunpack.c.l.b16 %v3935
      %v4036 = vunpack.c.l.b16 %v3936
      %v4037 = vunpack.c.l.b16 %v3937
      %v4038 = vunpack.c.l.b16 %v3938
      %v4039 = vunpack.c.l.b16 %v3939
      %v4040 = vunpack.c.l.b16 %v3940
      %v4041 = vunpack.c.l.b16 %v3941
      %v4042 = vunpack.c.l.b16 %v3942
      %v4043 = vunpack.c.l.b16 %v3943
      %v4044 = vpack.c.b16 %v3995, %v3994
      %v4045 = vpack.c.b16 %v3997, %v3996
      %v4046 = vpack.c.b16 %v3999, %v3998
      %v4047 = vpack.c.b16 %v4001, %v4000
      %v4048 = vpack.c.b16 %v4003, %v4002
      %v4049 = vpack.c.b16 %v4005, %v4004
      %v4050 = vpack.c.b16 %v4007, %v4006
      %v4051 = vpack.c.b16 %v4009, %v4008
      %v4052 = vpack.c.b16 %v4011, %v4010
      %v4053 = vpack.c.b16 %v4013, %v4012
      %v4054 = vpack.c.b16 %v4015, %v4014
      %v4055 = vpack.c.b16 %v4017, %v4016
      %v4056 = vpack.c.b16 %v4019, %v4018
      %v4057 = vpack.c.b16 %v4021, %v4020
      %v4058 = vpack.c.b16 %v4023, %v4022
      %v4059 = vpack.c.b16 %v4025, %v4024
      %v4060 = vpack.c.b16 %v4027, %v4026
      %v4061 = vpack.c.b16 %v4029, %v4028
      %v4062 = vpack.c.b16 %v4031, %v4030
      %v4063 = vpack.c.b16 %v4033, %v4032
      %v4064 = vpack.c.b16 %v4035, %v4034
      %v4065 = vpack.c.b16 %v4037, %v4036
      %v4066 = vpack.c.b16 %v4039, %v4038
      %v4067 = vpack.c.b16 %v4041, %v4040
      %v4068 = vpack.c.b16 %v4043, %v4042
      %v4070 = vsel %vm370, %v4044, 0
      %v4073 = vsel %vm370, %v4045, 0
      %v4076 = vsel %vm370, %v4046, 0
      %v4079 = vsel %vm370, %v4047, 0
      %v4082 = vsel %vm370, %v4048, 0
      %v4085 = vsel %vm370, %v4049, 0
      %v4088 = vsel %vm370, %v4050, 0
      %v4091 = vsel %vm370, %v4051, 0
      %v4094 = vsel %vm370, %v4052, 0
      %v4097 = vsel %vm370, %v4053, 0
      %v4100 = vsel %vm370, %v4054, 0
      %v4103 = vsel %vm370, %v4055, 0
      %v4106 = vsel %vm370, %v4056, 0
      %v4109 = vsel %vm370, %v4057, 0
      %v4112 = vsel %vm370, %v4058, 0
      %v4115 = vsel %vm370, %v4059, 0
      %v4118 = vsel %vm370, %v4060, 0
      %v4121 = vsel %vm370, %v4061, 0
      %v4124 = vsel %vm370, %v4062, 0
      %v4127 = vsel %vm370, %v4063, 0
      %v4130 = vsel %vm370, %v4064, 0
      %v4133 = vsel %vm370, %v4065, 0
      %v4136 = vsel %vm370, %v4066, 0
      %v4139 = vsel %vm370, %v4067, 0
      %v4142 = vsel %vm370, %v4068, 0
      %4144 = vmatprep.subr.bf16.mxu0 0
      %4145 = vmatpush1.bf16.msra.mxu0 %v366
      %4146 = vmatprep.subr.bf16.mxu0 0
      %4147 = vmatpush1.bf16.msra.mxu0 %v367
      %4148 = vmatprep.subr.bf16.mxu0 0
      %4149 = vmatpush1.bf16.msra.mxu0 0
      %4150 = vmatprep.subr.bf16.mxu0 0
      %4151 = vmatpush1.bf16.msra.mxu0 0
      %4152 = vmatprep.subr.bf16.mxu0 0
      %4153 = vmatpush1.bf16.msra.mxu0 0
      %4154 = vmatprep.subr.bf16.mxu0 0
      %4155 = vmatpush1.bf16.msra.mxu0 0
      %4156 = vmatprep.subr.bf16.mxu0 0
      %4157 = vmatpush1.bf16.msra.mxu0 0
      %4158 = vmatprep.subr.bf16.mxu0 0
      %4159 = vmatpush1.bf16.msra.mxu0 0
      %4160 = vmatprep.subr.bf16.mxu0 0
      %4161 = vmatpush1.bf16.msra.mxu0 0
      %4162 = vmatprep.subr.bf16.mxu0 0
      %4163 = vmatpush1.bf16.msra.mxu0 0
      %4164 = vmatprep.subr.bf16.mxu0 0
      %4165 = vmatpush1.bf16.msra.mxu0 0
      %4166 = vmatprep.subr.bf16.mxu0 0
      %4167 = vmatpush1.bf16.msra.mxu0 0
      %4168 = vmatprep.subr.bf16.mxu0 0
      %4169 = vmatpush1.bf16.msra.mxu0 0
      %4170 = vmatprep.subr.bf16.mxu0 0
      %4171 = vmatpush1.bf16.msra.mxu0 0
      %4172 = vmatprep.subr.bf16.mxu0 0
      %4173 = vmatpush1.bf16.msra.mxu0 0
      %4174 = vmatprep.subr.bf16.mxu0 0
      %4175 = vmatpush1.bf16.msra.mxu0 0
      %4176 = vmatprep.mubr.bf16.mxu0 0
      %4177 = vmatmul.mubr.bf16.gmra.mrb[0].mxu0 %v4070
      %v4178 = vpop.f32.mrb[0].mxu0
      %v4179 = vadd.f32 %v231, %v4178
      %v4180 = vpop.f32.mrb[0].mxu0
      %v4181 = vpop.f32.mrb[0].mxu0
      %v4182 = vadd.f32 %v231, %v4181
      %v4183 = vpop.f32.mrb[0].mxu0
      %4184 = vmatprep.mubr.bf16.mxu0 0
      %4185 = vmatmul.mubr.bf16.gmra.mrb[0].mxu0 %v4073
      %v4186 = vpop.f32.mrb[0].mxu0
      %v4187 = vadd.f32 %v231, %v4186
      %v4188 = vpop.f32.mrb[0].mxu0
      %v4189 = vpop.f32.mrb[0].mxu0
      %v4190 = vadd.f32 %v231, %v4189
      %v4191 = vpop.f32.mrb[0].mxu0
      %4192 = vmatprep.mubr.bf16.mxu0 0
      %4193 = vmatmul.mubr.bf16.gmra.mrb[0].mxu0 %v4076
      %v4194 = vpop.f32.mrb[0].mxu0
      %v4195 = vadd.f32 %v231, %v4194
      %v4196 = vpop.f32.mrb[0].mxu0
      %v4197 = vpop.f32.mrb[0].mxu0
      %v4198 = vadd.f32 %v231, %v4197
      %v4199 = vpop.f32.mrb[0].mxu0
      %4200 = vmatprep.mubr.bf16.mxu0 0
      %4201 = vmatmul.mubr.bf16.gmra.mrb[0].mxu0 %v4079
      %v4202 = vpop.f32.mrb[0].mxu0
      %v4203 = vadd.f32 %v231, %v4202
      %v4204 = vpop.f32.mrb[0].mxu0
      %v4205 = vpop.f32.mrb[0].mxu0
      %v4206 = vadd.f32 %v231, %v4205
      %v4207 = vpop.f32.mrb[0].mxu0
      %4208 = vmatprep.mubr.bf16.mxu0 0
      %4209 = vmatmul.mubr.bf16.gmra.mrb[0].mxu0 %v4082
      %v4210 = vpop.f32.mrb[0].mxu0
      %v4211 = vadd.f32 %v231, %v4210
      %v4212 = vpop.f32.mrb[0].mxu0
      %v4213 = vpop.f32.mrb[0].mxu0
      %v4214 = vadd.f32 %v231, %v4213
      %v4215 = vpop.f32.mrb[0].mxu0
      %4216 = vmatprep.mubr.bf16.mxu0 0
      %4217 = vmatmul.mubr.bf16.gmra.mrb[0].mxu0 %v4085
      %v4218 = vpop.f32.mrb[0].mxu0
      %v4219 = vadd.f32 %v231, %v4218
      %v4220 = vpop.f32.mrb[0].mxu0
      %v4221 = vpop.f32.mrb[0].mxu0
      %v4222 = vadd.f32 %v231, %v4221
      %v4223 = vpop.f32.mrb[0].mxu0
      %4224 = vmatprep.mubr.bf16.mxu0 0
      %4225 = vmatmul.mubr.bf16.gmra.mrb[0].mxu0 %v4088
      %v4226 = vpop.f32.mrb[0].mxu0
      %v4227 = vadd.f32 %v231, %v4226
      %v4228 = vpop.f32.mrb[0].mxu0
      %v4229 = vpop.f32.mrb[0].mxu0
      %v4230 = vadd.f32 %v231, %v4229
      %v4231 = vpop.f32.mrb[0].mxu0
      %4232 = vmatprep.mubr.bf16.mxu0 0
      %4233 = vmatmul.mubr.bf16.gmra.mrb[0].mxu0 %v4091
      %v4234 = vpop.f32.mrb[0].mxu0
      %v4235 = vadd.f32 %v231, %v4234
      %v4236 = vpop.f32.mrb[0].mxu0
      %v4237 = vpop.f32.mrb[0].mxu0
      %v4238 = vadd.f32 %v231, %v4237
      %v4239 = vpop.f32.mrb[0].mxu0
      %4240 = vmatprep.mubr.bf16.mxu0 0
      %4241 = vmatmul.mubr.bf16.gmra.mrb[0].mxu0 %v4094
      %v4242 = vpop.f32.mrb[0].mxu0
      %v4243 = vadd.f32 %v231, %v4242
      %v4244 = vpop.f32.mrb[0].mxu0
      %v4245 = vpop.f32.mrb[0].mxu0
      %v4246 = vadd.f32 %v231, %v4245
      %v4247 = vpop.f32.mrb[0].mxu0
      %4248 = vmatprep.mubr.bf16.mxu0 0
      %4249 = vmatmul.mubr.bf16.gmra.mrb[0].mxu0 %v4097
      %v4250 = vpop.f32.mrb[0].mxu0
      %v4251 = vadd.f32 %v231, %v4250
      %v4252 = vpop.f32.mrb[0].mxu0
      %v4253 = vpop.f32.mrb[0].mxu0
      %v4254 = vadd.f32 %v231, %v4253
      %v4255 = vpop.f32.mrb[0].mxu0
      %4256 = vmatprep.mubr.bf16.mxu0 0
      %4257 = vmatmul.mubr.bf16.gmra.mrb[0].mxu0 %v4100
      %v4258 = vpop.f32.mrb[0].mxu0
      %v4259 = vadd.f32 %v231, %v4258
      %v4260 = vpop.f32.mrb[0].mxu0
      %v4261 = vpop.f32.mrb[0].mxu0
      %v4262 = vadd.f32 %v231, %v4261
      %v4263 = vpop.f32.mrb[0].mxu0
      %4264 = vmatprep.mubr.bf16.mxu0 0
      %4265 = vmatmul.mubr.bf16.gmra.mrb[0].mxu0 %v4103
      %v4266 = vpop.f32.mrb[0].mxu0
      %v4267 = vadd.f32 %v231, %v4266
      %v4268 = vpop.f32.mrb[0].mxu0
      %v4269 = vpop.f32.mrb[0].mxu0
      %v4270 = vadd.f32 %v231, %v4269
      %v4271 = vpop.f32.mrb[0].mxu0
      %4272 = vmatprep.mubr.bf16.mxu0 0
      %4273 = vmatmul.mubr.bf16.gmra.mrb[0].mxu0 %v4106
      %v4274 = vpop.f32.mrb[0].mxu0
      %v4275 = vadd.f32 %v231, %v4274
      %v4276 = vpop.f32.mrb[0].mxu0
      %v4277 = vpop.f32.mrb[0].mxu0
      %v4278 = vadd.f32 %v231, %v4277
      %v4279 = vpop.f32.mrb[0].mxu0
      %4280 = vmatprep.mubr.bf16.mxu0 0
      %4281 = vmatmul.mubr.bf16.gmra.mrb[0].mxu0 %v4109
      %v4282 = vpop.f32.mrb[0].mxu0
      %v4283 = vadd.f32 %v231, %v4282
      %v4284 = vpop.f32.mrb[0].mxu0
      %v4285 = vpop.f32.mrb[0].mxu0
      %v4286 = vadd.f32 %v231, %v4285
      %v4287 = vpop.f32.mrb[0].mxu0
      %4288 = vmatprep.mubr.bf16.mxu0 0
      %4289 = vmatmul.mubr.bf16.gmra.mrb[0].mxu0 %v4112
      %v4290 = vpop.f32.mrb[0].mxu0
      %v4291 = vadd.f32 %v231, %v4290
      %v4292 = vpop.f32.mrb[0].mxu0
      %v4293 = vpop.f32.mrb[0].mxu0
      %v4294 = vadd.f32 %v231, %v4293
      %v4295 = vpop.f32.mrb[0].mxu0
      %4296 = vmatprep.mubr.bf16.mxu0 0
      %4297 = vmatmul.mubr.bf16.gmra.mrb[0].mxu0 %v4115
      %v4298 = vpop.f32.mrb[0].mxu0
      %v4299 = vadd.f32 %v231, %v4298
      %v4300 = vpop.f32.mrb[0].mxu0
      %v4301 = vpop.f32.mrb[0].mxu0
      %v4302 = vadd.f32 %v231, %v4301
      %v4303 = vpop.f32.mrb[0].mxu0
      %4304 = vmatprep.mubr.bf16.mxu0 0
      %4305 = vmatmul.mubr.bf16.gmra.mrb[0].mxu0 %v4118
      %v4306 = vpop.f32.mrb[0].mxu0
      %v4307 = vadd.f32 %v231, %v4306
      %v4308 = vpop.f32.mrb[0].mxu0
      %v4309 = vpop.f32.mrb[0].mxu0
      %v4310 = vadd.f32 %v231, %v4309
      %v4311 = vpop.f32.mrb[0].mxu0
      %4312 = vmatprep.mubr.bf16.mxu0 0
      %4313 = vmatmul.mubr.bf16.gmra.mrb[0].mxu0 %v4121
      %v4314 = vpop.f32.mrb[0].mxu0
      %v4315 = vadd.f32 %v231, %v4314
      %v4316 = vpop.f32.mrb[0].mxu0
      %v4317 = vpop.f32.mrb[0].mxu0
      %v4318 = vadd.f32 %v231, %v4317
      %v4319 = vpop.f32.mrb[0].mxu0
      %4320 = vmatprep.mubr.bf16.mxu0 0
      %4321 = vmatmul.mubr.bf16.gmra.mrb[0].mxu0 %v4124
      %v4322 = vpop.f32.mrb[0].mxu0
      %v4323 = vadd.f32 %v231, %v4322
      %v4324 = vpop.f32.mrb[0].mxu0
      %v4325 = vpop.f32.mrb[0].mxu0
      %v4326 = vadd.f32 %v231, %v4325
      %v4327 = vpop.f32.mrb[0].mxu0
      %4328 = vmatprep.mubr.bf16.mxu0 0
      %4329 = vmatmul.mubr.bf16.gmra.mrb[0].mxu0 %v4127
      %v4330 = vpop.f32.mrb[0].mxu0
      %v4331 = vadd.f32 %v231, %v4330
      %v4332 = vpop.f32.mrb[0].mxu0
      %v4333 = vpop.f32.mrb[0].mxu0
      %v4334 = vadd.f32 %v231, %v4333
      %v4335 = vpop.f32.mrb[0].mxu0
      %4336 = vmatprep.mubr.bf16.mxu0 0
      %4337 = vmatmul.mubr.bf16.gmra.mrb[0].mxu0 %v4130
      %v4338 = vpop.f32.mrb[0].mxu0
      %v4339 = vadd.f32 %v231, %v4338
      %v4340 = vpop.f32.mrb[0].mxu0
      %v4341 = vpop.f32.mrb[0].mxu0
      %v4342 = vadd.f32 %v231, %v4341
      %v4343 = vpop.f32.mrb[0].mxu0
      %4344 = vmatprep.mubr.bf16.mxu0 0
      %4345 = vmatmul.mubr.bf16.gmra.mrb[0].mxu0 %v4133
      %v4346 = vpop.f32.mrb[0].mxu0
      %v4347 = vadd.f32 %v231, %v4346
      %v4348 = vpop.f32.mrb[0].mxu0
      %v4349 = vpop.f32.mrb[0].mxu0
      %v4350 = vadd.f32 %v231, %v4349
      %v4351 = vpop.f32.mrb[0].mxu0
      %4352 = vmatprep.mubr.bf16.mxu0 0
      %4353 = vmatmul.mubr.bf16.gmra.mrb[0].mxu0 %v4136
      %v4354 = vpop.f32.mrb[0].mxu0
      %v4355 = vadd.f32 %v231, %v4354
      %v4356 = vpop.f32.mrb[0].mxu0
      %v4357 = vpop.f32.mrb[0].mxu0
      %v4358 = vadd.f32 %v231, %v4357
      %v4359 = vpop.f32.mrb[0].mxu0
      %4360 = vmatprep.mubr.bf16.mxu0 0
      %4361 = vmatmul.mubr.bf16.gmra.mrb[0].mxu0 %v4139
      %v4362 = vpop.f32.mrb[0].mxu0
      %v4363 = vadd.f32 %v231, %v4362
      %v4364 = vpop.f32.mrb[0].mxu0
      %v4365 = vpop.f32.mrb[0].mxu0
      %v4366 = vadd.f32 %v231, %v4365
      %v4367 = vpop.f32.mrb[0].mxu0
      %4368 = vmatprep.mubr.bf16.mxu0 0
      %4369 = vmatmul.mubr.bf16.gmra.mrb[0].mxu0 %v4142
      %v4370 = vpop.f32.mrb[0].mxu0
      %v4371 = vadd.f32 %v231, %v4370
      %v4372 = vpop.f32.mrb[0].mxu0
      %v4373 = vpop.f32.mrb[0].mxu0
      %v4374 = vadd.f32 %v231, %v4373
      %v4375 = vpop.f32.mrb[0].mxu0
      %4376 = vdwg.mxu0
      %v4377 = vld [vmem:[#allocation2] sm:$0xff]
      %v4378 = vld [vmem:[#allocation2 + $0x8] sm:$0xff]
      %v4379 = vld [vmem:[#allocation2 + $0x10] sm:$0xff]
      %v4380 = vld [vmem:[#allocation2 + $0x18] sm:$0xff]
      %v4381 = vld [vmem:[#allocation2 + $0x20] sm:$0xff]
      %v4382 = vld [vmem:[#allocation2 + $0x28] sm:$0xff]
      %v4383 = vld [vmem:[#allocation2 + $0x30] sm:$0xff]
      %v4384 = vld [vmem:[#allocation2 + $0x38] sm:$0xff]
      %v4385 = vld [vmem:[#allocation2 + $0x40] sm:$0xff]
      %v4386 = vld [vmem:[#allocation2 + $0x48] sm:$0xff]
      %v4387 = vld [vmem:[#allocation2 + $0x50] sm:$0xff]
      %v4388 = vld [vmem:[#allocation2 + $0x58] sm:$0xff]
      %v4389 = vld [vmem:[#allocation2 + $0x60] sm:$0xff]
      %v4390 = vld [vmem:[#allocation2 + $0x68] sm:$0xff]
      %v4391 = vld [vmem:[#allocation2 + $0x70] sm:$0xff]
      %v4392 = vld [vmem:[#allocation2 + $0x78] sm:$0xff]
      %v4393 = vld [vmem:[#allocation2 + $0x80] sm:$0xff]
      %v4394 = vld [vmem:[#allocation2 + $0x88] sm:$0xff]
      %v4395 = vld [vmem:[#allocation2 + $0x90] sm:$0xff]
      %v4396 = vld [vmem:[#allocation2 + $0x98] sm:$0xff]
      %v4397 = vld [vmem:[#allocation2 + $0xa0] sm:$0xff]
      %v4398 = vld [vmem:[#allocation2 + $0xa8] sm:$0xff]
      %v4399 = vld [vmem:[#allocation2 + $0xb0] sm:$0xff]
      %v4400 = vld [vmem:[#allocation2 + $0xb8] sm:$0xff]
      %v4401 = vld [vmem:[#allocation2 + $0xc0] sm:$0xff]
      %v4402 = vld [vmem:[#allocation2 + $0xc8] sm:$0xff]
      %v4403 = vld [vmem:[#allocation2 + $0xd0] sm:$0xff]
      %v4404 = vld [vmem:[#allocation2 + $0xd8] sm:$0xff]
      %v4405 = vld [vmem:[#allocation2 + $0xe0] sm:$0xff]
      %v4406 = vld [vmem:[#allocation2 + $0xe8] sm:$0xff]
      %v4407 = vld [vmem:[#allocation2 + $0xf0] sm:$0xff]
      %v4408 = vld [vmem:[#allocation2 + $0xf8] sm:$0xff]
      %v4409 = vld [vmem:[#allocation2 + $0x100] sm:$0xff]
      %v4410 = vld [vmem:[#allocation2 + $0x108] sm:$0xff]
      %v4411 = vld [vmem:[#allocation2 + $0x110] sm:$0xff]
      %v4412 = vld [vmem:[#allocation2 + $0x118] sm:$0xff]
      %v4413 = vld [vmem:[#allocation2 + $0x120] sm:$0xff]
      %v4414 = vld [vmem:[#allocation2 + $0x128] sm:$0xff]
      %v4415 = vld [vmem:[#allocation2 + $0x130] sm:$0xff]
      %v4416 = vld [vmem:[#allocation2 + $0x138] sm:$0xff]
      %v4417 = vld [vmem:[#allocation2 + $0x140] sm:$0xff]
      %v4418 = vld [vmem:[#allocation2 + $0x148] sm:$0xff]
      %v4419 = vld [vmem:[#allocation2 + $0x150] sm:$0xff]
      %v4420 = vld [vmem:[#allocation2 + $0x158] sm:$0xff]
      %v4421 = vld [vmem:[#allocation2 + $0x160] sm:$0xff]
      %v4422 = vld [vmem:[#allocation2 + $0x168] sm:$0xff]
      %v4423 = vld [vmem:[#allocation2 + $0x170] sm:$0xff]
      %v4424 = vld [vmem:[#allocation2 + $0x178] sm:$0xff]
      %v4425 = vld [vmem:[#allocation2 + $0x180] sm:$0xff]
      %v4426 = vld [vmem:[#allocation2 + $0x188] sm:$0xff]
      %v4427 = vmax.f32 %v4377, %v4179
      %v4428 = vmax.f32 %v4378, %v4182
      %v4429 = vmax.f32 %v4379, %v4187
      %v4430 = vmax.f32 %v4380, %v4190
      %v4431 = vmax.f32 %v4381, %v4195
      %v4432 = vmax.f32 %v4382, %v4198
      %v4433 = vmax.f32 %v4383, %v4203
      %v4434 = vmax.f32 %v4384, %v4206
      %v4435 = vmax.f32 %v4385, %v4211
      %v4436 = vmax.f32 %v4386, %v4214
      %v4437 = vmax.f32 %v4387, %v4219
      %v4438 = vmax.f32 %v4388, %v4222
      %v4439 = vmax.f32 %v4389, %v4227
      %v4440 = vmax.f32 %v4390, %v4230
      %v4441 = vmax.f32 %v4391, %v4235
      %v4442 = vmax.f32 %v4392, %v4238
      %v4443 = vmax.f32 %v4393, %v4243
      %v4444 = vmax.f32 %v4394, %v4246
      %v4445 = vmax.f32 %v4395, %v4251
      %v4446 = vmax.f32 %v4396, %v4254
      %v4447 = vmax.f32 %v4397, %v4259
      %v4448 = vmax.f32 %v4398, %v4262
      %v4449 = vmax.f32 %v4399, %v4267
      %v4450 = vmax.f32 %v4400, %v4270
      %v4451 = vmax.f32 %v4401, %v4275
      %v4452 = vmax.f32 %v4402, %v4278
      %v4453 = vmax.f32 %v4403, %v4283
      %v4454 = vmax.f32 %v4404, %v4286
      %v4455 = vmax.f32 %v4405, %v4291
      %v4456 = vmax.f32 %v4406, %v4294
      %v4457 = vmax.f32 %v4407, %v4299
      %v4458 = vmax.f32 %v4408, %v4302
      %v4459 = vmax.f32 %v4409, %v4307
      %v4460 = vmax.f32 %v4410, %v4310
      %v4461 = vmax.f32 %v4411, %v4315
      %v4462 = vmax.f32 %v4412, %v4318
      %v4463 = vmax.f32 %v4413, %v4323
      %v4464 = vmax.f32 %v4414, %v4326
      %v4465 = vmax.f32 %v4415, %v4331
      %v4466 = vmax.f32 %v4416, %v4334
      %v4467 = vmax.f32 %v4417, %v4339
      %v4468 = vmax.f32 %v4418, %v4342
      %v4469 = vmax.f32 %v4419, %v4347
      %v4470 = vmax.f32 %v4420, %v4350
      %v4471 = vmax.f32 %v4421, %v4355
      %v4472 = vmax.f32 %v4422, %v4358
      %v4473 = vmax.f32 %v4423, %v4363
      %v4474 = vmax.f32 %v4424, %v4366
      %v4475 = vmax.f32 %v4425, %v4371
      %v4476 = vmax.f32 %v4426, %v4374
      %4477 = vst [vmem:[#allocation2] sm:$0xff] %v4427
      %4478 = vst [vmem:[#allocation2 + $0x8] sm:$0xff] %v4428
      %4479 = vst [vmem:[#allocation2 + $0x10] sm:$0xff] %v4429
      %4480 = vst [vmem:[#allocation2 + $0x18] sm:$0xff] %v4430
      %4481 = vst [vmem:[#allocation2 + $0x20] sm:$0xff] %v4431
      %4482 = vst [vmem:[#allocation2 + $0x28] sm:$0xff] %v4432
      %4483 = vst [vmem:[#allocation2 + $0x30] sm:$0xff] %v4433
      %4484 = vst [vmem:[#allocation2 + $0x38] sm:$0xff] %v4434
      %4485 = vst [vmem:[#allocation2 + $0x40] sm:$0xff] %v4435
      %4486 = vst [vmem:[#allocation2 + $0x48] sm:$0xff] %v4436
      %4487 = vst [vmem:[#allocation2 + $0x50] sm:$0xff] %v4437
      %4488 = vst [vmem:[#allocation2 + $0x58] sm:$0xff] %v4438
      %4489 = vst [vmem:[#allocation2 + $0x60] sm:$0xff] %v4439
      %4490 = vst [vmem:[#allocation2 + $0x68] sm:$0xff] %v4440
      %4491 = vst [vmem:[#allocation2 + $0x70] sm:$0xff] %v4441
      %4492 = vst [vmem:[#allocation2 + $0x78] sm:$0xff] %v4442
      %4493 = vst [vmem:[#allocation2 + $0x80] sm:$0xff] %v4443
      %4494 = vst [vmem:[#allocation2 + $0x88] sm:$0xff] %v4444
      %4495 = vst [vmem:[#allocation2 + $0x90] sm:$0xff] %v4445
      %4496 = vst [vmem:[#allocation2 + $0x98] sm:$0xff] %v4446
      %4497 = vst [vmem:[#allocation2 + $0xa0] sm:$0xff] %v4447
      %4498 = vst [vmem:[#allocation2 + $0xa8] sm:$0xff] %v4448
      %4499 = vst [vmem:[#allocation2 + $0xb0] sm:$0xff] %v4449
      %4500 = vst [vmem:[#allocation2 + $0xb8] sm:$0xff] %v4450
      %4501 = vst [vmem:[#allocation2 + $0xc0] sm:$0xff] %v4451
      %4502 = vst [vmem:[#allocation2 + $0xc8] sm:$0xff] %v4452
      %4503 = vst [vmem:[#allocation2 + $0xd0] sm:$0xff] %v4453
      %4504 = vst [vmem:[#allocation2 + $0xd8] sm:$0xff] %v4454
      %4505 = vst [vmem:[#allocation2 + $0xe0] sm:$0xff] %v4455
      %4506 = vst [vmem:[#allocation2 + $0xe8] sm:$0xff] %v4456
      %4507 = vst [vmem:[#allocation2 + $0xf0] sm:$0xff] %v4457
      %4508 = vst [vmem:[#allocation2 + $0xf8] sm:$0xff] %v4458
      %4509 = vst [vmem:[#allocation2 + $0x100] sm:$0xff] %v4459
      %4510 = vst [vmem:[#allocation2 + $0x108] sm:$0xff] %v4460
      %4511 = vst [vmem:[#allocation2 + $0x110] sm:$0xff] %v4461
      %4512 = vst [vmem:[#allocation2 + $0x118] sm:$0xff] %v4462
      %4513 = vst [vmem:[#allocation2 + $0x120] sm:$0xff] %v4463
      %4514 = vst [vmem:[#allocation2 + $0x128] sm:$0xff] %v4464
      %4515 = vst [vmem:[#allocation2 + $0x130] sm:$0xff] %v4465
      %4516 = vst [vmem:[#allocation2 + $0x138] sm:$0xff] %v4466
      %4517 = vst [vmem:[#allocation2 + $0x140] sm:$0xff] %v4467
      %4518 = vst [vmem:[#allocation2 + $0x148] sm:$0xff] %v4468
      %4519 = vst [vmem:[#allocation2 + $0x150] sm:$0xff] %v4469
      %4520 = vst [vmem:[#allocation2 + $0x158] sm:$0xff] %v4470
      %4521 = vst [vmem:[#allocation2 + $0x160] sm:$0xff] %v4471
      %4522 = vst [vmem:[#allocation2 + $0x168] sm:$0xff] %v4472
      %4523 = vst [vmem:[#allocation2 + $0x170] sm:$0xff] %v4473
      %4524 = vst [vmem:[#allocation2 + $0x178] sm:$0xff] %v4474
      %4525 = vst [vmem:[#allocation2 + $0x180] sm:$0xff] %v4475
      %4526 = vst [vmem:[#allocation2 + $0x188] sm:$0xff] %v4476
      %v4527 = vld [vmem:[%s165 + $0x578] sm:$0xf]
      %v4528 = vld [vmem:[%s165 + $0x57c] sm:$0xf]
      %v4529 = vld [vmem:[%s165 + $0x580] sm:$0xf]
      %v4530 = vld [vmem:[%s165 + $0x584] sm:$0xf]
      %v4531 = vld [vmem:[%s165 + $0x588] sm:$0xf]
      %v4532 = vld [vmem:[%s165 + $0x58c] sm:$0xf]
      %v4533 = vld [vmem:[%s165 + $0x590] sm:$0xf]
      %v4534 = vld [vmem:[%s165 + $0x594] sm:$0xf]
      %v4535 = vld [vmem:[%s165 + $0x598] sm:$0xf]
      %v4536 = vld [vmem:[%s165 + $0x59c] sm:$0xf]
      %v4537 = vld [vmem:[%s165 + $0x5a0] sm:$0xf]
      %v4538 = vld [vmem:[%s165 + $0x5a4] sm:$0xf]
      %v4539 = vld [vmem:[%s165 + $0x5a8] sm:$0xf]
      %v4540 = vld [vmem:[%s165 + $0x5ac] sm:$0xf]
      %v4541 = vld [vmem:[%s165 + $0x5b0] sm:$0xf]
      %v4542 = vld [vmem:[%s165 + $0x5b4] sm:$0xf]
      %v4543 = vld [vmem:[%s165 + $0x5b8] sm:$0xf]
      %v4544 = vld [vmem:[%s165 + $0x5bc] sm:$0xf]
      %v4545 = vld [vmem:[%s165 + $0x5c0] sm:$0xf]
      %v4546 = vld [vmem:[%s165 + $0x5c4] sm:$0xf]
      %v4547 = vld [vmem:[%s165 + $0x5c8] sm:$0xf]
      %v4548 = vld [vmem:[%s165 + $0x5cc] sm:$0xf]
      %v4549 = vld [vmem:[%s165 + $0x5d0] sm:$0xf]
      %v4550 = vld [vmem:[%s165 + $0x5d4] sm:$0xf]
      %v4551 = vld [vmem:[%s165 + $0x5d8] sm:$0xf]
      %v4552 = vld [vmem:[%s165 + $0x5dc] sm:$0xf]
      %v4553 = vld [vmem:[%s165 + $0x5e0] sm:$0xf]
      %v4554 = vld [vmem:[%s165 + $0x5e4] sm:$0xf]
      %v4555 = vld [vmem:[%s165 + $0x5e8] sm:$0xf]
      %v4556 = vld [vmem:[%s165 + $0x5ec] sm:$0xf]
      %v4557 = vld [vmem:[%s165 + $0x5f0] sm:$0xf]
      %v4558 = vld [vmem:[%s165 + $0x5f4] sm:$0xf]
      %v4559 = vld [vmem:[%s165 + $0x5f8] sm:$0xf]
      %v4560 = vld [vmem:[%s165 + $0x5fc] sm:$0xf]
      %v4561 = vld [vmem:[%s165 + $0x600] sm:$0xf]
      %v4562 = vld [vmem:[%s165 + $0x604] sm:$0xf]
      %v4563 = vld [vmem:[%s165 + $0x608] sm:$0xf]
      %v4564 = vld [vmem:[%s165 + $0x60c] sm:$0xf]
      %v4565 = vld [vmem:[%s165 + $0x610] sm:$0xf]
      %v4566 = vld [vmem:[%s165 + $0x614] sm:$0xf]
      %v4567 = vld [vmem:[%s165 + $0x618] sm:$0xf]
      %v4568 = vld [vmem:[%s165 + $0x61c] sm:$0xf]
      %v4569 = vld [vmem:[%s165 + $0x620] sm:$0xf]
      %v4570 = vld [vmem:[%s165 + $0x624] sm:$0xf]
      %v4571 = vld [vmem:[%s165 + $0x628] sm:$0xf]
      %v4572 = vld [vmem:[%s165 + $0x62c] sm:$0xf]
      %v4573 = vld [vmem:[%s165 + $0x630] sm:$0xf]
      %v4574 = vld [vmem:[%s165 + $0x634] sm:$0xf]
      %v4575 = vld [vmem:[%s165 + $0x638] sm:$0xf]
      %v4576 = vld [vmem:[%s165 + $0x63c] sm:$0xf]
      %v4627 = vunpack.c.l.b16 %v4527
      %v4628 = vunpack.c.l.b16 %v4528
      %v4629 = vunpack.c.l.b16 %v4529
      %v4630 = vunpack.c.l.b16 %v4530
      %v4631 = vunpack.c.l.b16 %v4531
      %v4632 = vunpack.c.l.b16 %v4532
      %v4633 = vunpack.c.l.b16 %v4533
      %v4634 = vunpack.c.l.b16 %v4534
      %v4635 = vunpack.c.l.b16 %v4535
      %v4636 = vunpack.c.l.b16 %v4536
      %v4637 = vunpack.c.l.b16 %v4537
      %v4638 = vunpack.c.l.b16 %v4538
      %v4639 = vunpack.c.l.b16 %v4539
      %v4640 = vunpack.c.l.b16 %v4540
      %v4641 = vunpack.c.l.b16 %v4541
      %v4642 = vunpack.c.l.b16 %v4542
      %v4643 = vunpack.c.l.b16 %v4543
      %v4644 = vunpack.c.l.b16 %v4544
      %v4645 = vunpack.c.l.b16 %v4545
      %v4646 = vunpack.c.l.b16 %v4546
      %v4647 = vunpack.c.l.b16 %v4547
      %v4648 = vunpack.c.l.b16 %v4548
      %v4649 = vunpack.c.l.b16 %v4549
      %v4650 = vunpack.c.l.b16 %v4550
      %v4651 = vunpack.c.l.b16 %v4551
      %v4652 = vunpack.c.l.b16 %v4552
      %v4653 = vunpack.c.l.b16 %v4553
      %v4654 = vunpack.c.l.b16 %v4554
      %v4655 = vunpack.c.l.b16 %v4555
      %v4656 = vunpack.c.l.b16 %v4556
      %v4657 = vunpack.c.l.b16 %v4557
      %v4658 = vunpack.c.l.b16 %v4558
      %v4659 = vunpack.c.l.b16 %v4559
      %v4660 = vunpack.c.l.b16 %v4560
      %v4661 = vunpack.c.l.b16 %v4561
      %v4662 = vunpack.c.l.b16 %v4562
      %v4663 = vunpack.c.l.b16 %v4563
      %v4664 = vunpack.c.l.b16 %v4564
      %v4665 = vunpack.c.l.b16 %v4565
      %v4666 = vunpack.c.l.b16 %v4566
      %v4667 = vunpack.c.l.b16 %v4567
      %v4668 = vunpack.c.l.b16 %v4568
      %v4669 = vunpack.c.l.b16 %v4569
      %v4670 = vunpack.c.l.b16 %v4570
      %v4671 = vunpack.c.l.b16 %v4571
      %v4672 = vunpack.c.l.b16 %v4572
      %v4673 = vunpack.c.l.b16 %v4573
      %v4674 = vunpack.c.l.b16 %v4574
      %v4675 = vunpack.c.l.b16 %v4575
      %v4676 = vunpack.c.l.b16 %v4576
      %v4677 = vpack.c.b16 %v4628, %v4627
      %v4678 = vpack.c.b16 %v4630, %v4629
      %v4679 = vpack.c.b16 %v4632, %v4631
      %v4680 = vpack.c.b16 %v4634, %v4633
      %v4681 = vpack.c.b16 %v4636, %v4635
      %v4682 = vpack.c.b16 %v4638, %v4637
      %v4683 = vpack.c.b16 %v4640, %v4639
      %v4684 = vpack.c.b16 %v4642, %v4641
      %v4685 = vpack.c.b16 %v4644, %v4643
      %v4686 = vpack.c.b16 %v4646, %v4645
      %v4687 = vpack.c.b16 %v4648, %v4647
      %v4688 = vpack.c.b16 %v4650, %v4649
      %v4689 = vpack.c.b16 %v4652, %v4651
      %v4690 = vpack.c.b16 %v4654, %v4653
      %v4691 = vpack.c.b16 %v4656, %v4655
      %v4692 = vpack.c.b16 %v4658, %v4657
      %v4693 = vpack.c.b16 %v4660, %v4659
      %v4694 = vpack.c.b16 %v4662, %v4661
      %v4695 = vpack.c.b16 %v4664, %v4663
      %v4696 = vpack.c.b16 %v4666, %v4665
      %v4697 = vpack.c.b16 %v4668, %v4667
      %v4698 = vpack.c.b16 %v4670, %v4669
      %v4699 = vpack.c.b16 %v4672, %v4671
      %v4700 = vpack.c.b16 %v4674, %v4673
      %v4701 = vpack.c.b16 %v4676, %v4675
      %v4703 = vsel %vm370, %v4677, 0
      %v4706 = vsel %vm370, %v4678, 0
      %v4709 = vsel %vm370, %v4679, 0
      %v4712 = vsel %vm370, %v4680, 0
      %v4715 = vsel %vm370, %v4681, 0
      %v4718 = vsel %vm370, %v4682, 0
      %v4721 = vsel %vm370, %v4683, 0
      %v4724 = vsel %vm370, %v4684, 0
      %v4727 = vsel %vm370, %v4685, 0
      %v4730 = vsel %vm370, %v4686, 0
      %v4733 = vsel %vm370, %v4687, 0
      %v4736 = vsel %vm370, %v4688, 0
      %v4739 = vsel %vm370, %v4689, 0
      %v4742 = vsel %vm370, %v4690, 0
      %v4745 = vsel %vm370, %v4691, 0
      %v4748 = vsel %vm370, %v4692, 0
      %v4751 = vsel %vm370, %v4693, 0
      %v4754 = vsel %vm370, %v4694, 0
      %v4757 = vsel %vm370, %v4695, 0
      %v4760 = vsel %vm370, %v4696, 0
      %v4763 = vsel %vm370, %v4697, 0
      %v4766 = vsel %vm370, %v4698, 0
      %v4769 = vsel %vm370, %v4699, 0
      %v4772 = vsel %vm370, %v4700, 0
      %v4775 = vsel %vm370, %v4701, 0
      %4777 = vmatprep.subr.bf16.mxu0 0
      %4778 = vmatpush1.bf16.msra.mxu0 %v366
      %4779 = vmatprep.subr.bf16.mxu0 0
      %4780 = vmatpush1.bf16.msra.mxu0 %v367
      %4781 = vmatprep.subr.bf16.mxu0 0
      %4782 = vmatpush1.bf16.msra.mxu0 0
      %4783 = vmatprep.subr.bf16.mxu0 0
      %4784 = vmatpush1.bf16.msra.mxu0 0
      %4785 = vmatprep.subr.bf16.mxu0 0
      %4786 = vmatpush1.bf16.msra.mxu0 0
      %4787 = vmatprep.subr.bf16.mxu0 0
      %4788 = vmatpush1.bf16.msra.mxu0 0
      %4789 = vmatprep.subr.bf16.mxu0 0
      %4790 = vmatpush1.bf16.msra.mxu0 0
      %4791 = vmatprep.subr.bf16.mxu0 0
      %4792 = vmatpush1.bf16.msra.mxu0 0
      %4793 = vmatprep.subr.bf16.mxu0 0
      %4794 = vmatpush1.bf16.msra.mxu0 0
      %4795 = vmatprep.subr.bf16.mxu0 0
      %4796 = vmatpush1.bf16.msra.mxu0 0
      %4797 = vmatprep.subr.bf16.mxu0 0
      %4798 = vmatpush1.bf16.msra.mxu0 0
      %4799 = vmatprep.subr.bf16.mxu0 0
      %4800 = vmatpush1.bf16.msra.mxu0 0
      %4801 = vmatprep.subr.bf16.mxu0 0
      %4802 = vmatpush1.bf16.msra.mxu0 0
      %4803 = vmatprep.subr.bf16.mxu0 0
      %4804 = vmatpush1.bf16.msra.mxu0 0
      %4805 = vmatprep.subr.bf16.mxu0 0
      %4806 = vmatpush1.bf16.msra.mxu0 0
      %4807 = vmatprep.subr.bf16.mxu0 0
      %4808 = vmatpush1.bf16.msra.mxu0 0
      %4809 = vmatprep.mubr.bf16.mxu0 0
      %4810 = vmatmul.mubr.bf16.gmra.mrb[0].mxu0 %v4703
      %v4811 = vpop.f32.mrb[0].mxu0
      %v4812 = vadd.f32 %v231, %v4811
      %v4813 = vpop.f32.mrb[0].mxu0
      %v4814 = vpop.f32.mrb[0].mxu0
      %v4815 = vadd.f32 %v231, %v4814
      %v4816 = vpop.f32.mrb[0].mxu0
      %4817 = vmatprep.mubr.bf16.mxu0 0
      %4818 = vmatmul.mubr.bf16.gmra.mrb[0].mxu0 %v4706
      %v4819 = vpop.f32.mrb[0].mxu0
      %v4820 = vadd.f32 %v231, %v4819
      %v4821 = vpop.f32.mrb[0].mxu0
      %v4822 = vpop.f32.mrb[0].mxu0
      %v4823 = vadd.f32 %v231, %v4822
      %v4824 = vpop.f32.mrb[0].mxu0
      %4825 = vmatprep.mubr.bf16.mxu0 0
      %4826 = vmatmul.mubr.bf16.gmra.mrb[0].mxu0 %v4709
      %v4827 = vpop.f32.mrb[0].mxu0
      %v4828 = vadd.f32 %v231, %v4827
      %v4829 = vpop.f32.mrb[0].mxu0
      %v4830 = vpop.f32.mrb[0].mxu0
      %v4831 = vadd.f32 %v231, %v4830
      %v4832 = vpop.f32.mrb[0].mxu0
      %4833 = vmatprep.mubr.bf16.mxu0 0
      %4834 = vmatmul.mubr.bf16.gmra.mrb[0].mxu0 %v4712
      %v4835 = vpop.f32.mrb[0].mxu0
      %v4836 = vadd.f32 %v231, %v4835
      %v4837 = vpop.f32.mrb[0].mxu0
      %v4838 = vpop.f32.mrb[0].mxu0
      %v4839 = vadd.f32 %v231, %v4838
      %v4840 = vpop.f32.mrb[0].mxu0
      %4841 = vmatprep.mubr.bf16.mxu0 0
      %4842 = vmatmul.mubr.bf16.gmra.mrb[0].mxu0 %v4715
      %v4843 = vpop.f32.mrb[0].mxu0
      %v4844 = vadd.f32 %v231, %v4843
      %v4845 = vpop.f32.mrb[0].mxu0
      %v4846 = vpop.f32.mrb[0].mxu0
      %v4847 = vadd.f32 %v231, %v4846
      %v4848 = vpop.f32.mrb[0].mxu0
      %4849 = vmatprep.mubr.bf16.mxu0 0
      %4850 = vmatmul.mubr.bf16.gmra.mrb[0].mxu0 %v4718
      %v4851 = vpop.f32.mrb[0].mxu0
      %v4852 = vadd.f32 %v231, %v4851
      %v4853 = vpop.f32.mrb[0].mxu0
      %v4854 = vpop.f32.mrb[0].mxu0
      %v4855 = vadd.f32 %v231, %v4854
      %v4856 = vpop.f32.mrb[0].mxu0
      %4857 = vmatprep.mubr.bf16.mxu0 0
      %4858 = vmatmul.mubr.bf16.gmra.mrb[0].mxu0 %v4721
      %v4859 = vpop.f32.mrb[0].mxu0
      %v4860 = vadd.f32 %v231, %v4859
      %v4861 = vpop.f32.mrb[0].mxu0
      %v4862 = vpop.f32.mrb[0].mxu0
      %v4863 = vadd.f32 %v231, %v4862
      %v4864 = vpop.f32.mrb[0].mxu0
      %4865 = vmatprep.mubr.bf16.mxu0 0
      %4866 = vmatmul.mubr.bf16.gmra.mrb[0].mxu0 %v4724
      %v4867 = vpop.f32.mrb[0].mxu0
      %v4868 = vadd.f32 %v231, %v4867
      %v4869 = vpop.f32.mrb[0].mxu0
      %v4870 = vpop.f32.mrb[0].mxu0
      %v4871 = vadd.f32 %v231, %v4870
      %v4872 = vpop.f32.mrb[0].mxu0
      %4873 = vmatprep.mubr.bf16.mxu0 0
      %4874 = vmatmul.mubr.bf16.gmra.mrb[0].mxu0 %v4727
      %v4875 = vpop.f32.mrb[0].mxu0
      %v4876 = vadd.f32 %v231, %v4875
      %v4877 = vpop.f32.mrb[0].mxu0
      %v4878 = vpop.f32.mrb[0].mxu0
      %v4879 = vadd.f32 %v231, %v4878
      %v4880 = vpop.f32.mrb[0].mxu0
      %4881 = vmatprep.mubr.bf16.mxu0 0
      %4882 = vmatmul.mubr.bf16.gmra.mrb[0].mxu0 %v4730
      %v4883 = vpop.f32.mrb[0].mxu0
      %v4884 = vadd.f32 %v231, %v4883
      %v4885 = vpop.f32.mrb[0].mxu0
      %v4886 = vpop.f32.mrb[0].mxu0
      %v4887 = vadd.f32 %v231, %v4886
      %v4888 = vpop.f32.mrb[0].mxu0
      %4889 = vmatprep.mubr.bf16.mxu0 0
      %4890 = vmatmul.mubr.bf16.gmra.mrb[0].mxu0 %v4733
      %v4891 = vpop.f32.mrb[0].mxu0
      %v4892 = vadd.f32 %v231, %v4891
      %v4893 = vpop.f32.mrb[0].mxu0
      %v4894 = vpop.f32.mrb[0].mxu0
      %v4895 = vadd.f32 %v231, %v4894
      %v4896 = vpop.f32.mrb[0].mxu0
      %4897 = vmatprep.mubr.bf16.mxu0 0
      %4898 = vmatmul.mubr.bf16.gmra.mrb[0].mxu0 %v4736
      %v4899 = vpop.f32.mrb[0].mxu0
      %v4900 = vadd.f32 %v231, %v4899
      %v4901 = vpop.f32.mrb[0].mxu0
      %v4902 = vpop.f32.mrb[0].mxu0
      %v4903 = vadd.f32 %v231, %v4902
      %v4904 = vpop.f32.mrb[0].mxu0
      %4905 = vmatprep.mubr.bf16.mxu0 0
      %4906 = vmatmul.mubr.bf16.gmra.mrb[0].mxu0 %v4739
      %v4907 = vpop.f32.mrb[0].mxu0
      %v4908 = vadd.f32 %v231, %v4907
      %v4909 = vpop.f32.mrb[0].mxu0
      %v4910 = vpop.f32.mrb[0].mxu0
      %v4911 = vadd.f32 %v231, %v4910
      %v4912 = vpop.f32.mrb[0].mxu0
      %4913 = vmatprep.mubr.bf16.mxu0 0
      %4914 = vmatmul.mubr.bf16.gmra.mrb[0].mxu0 %v4742
      %v4915 = vpop.f32.mrb[0].mxu0
      %v4916 = vadd.f32 %v231, %v4915
      %v4917 = vpop.f32.mrb[0].mxu0
      %v4918 = vpop.f32.mrb[0].mxu0
      %v4919 = vadd.f32 %v231, %v4918
      %v4920 = vpop.f32.mrb[0].mxu0
      %4921 = vmatprep.mubr.bf16.mxu0 0
      %4922 = vmatmul.mubr.bf16.gmra.mrb[0].mxu0 %v4745
      %v4923 = vpop.f32.mrb[0].mxu0
      %v4924 = vadd.f32 %v231, %v4923
      %v4925 = vpop.f32.mrb[0].mxu0
      %v4926 = vpop.f32.mrb[0].mxu0
      %v4927 = vadd.f32 %v231, %v4926
      %v4928 = vpop.f32.mrb[0].mxu0
      %4929 = vmatprep.mubr.bf16.mxu0 0
      %4930 = vmatmul.mubr.bf16.gmra.mrb[0].mxu0 %v4748
      %v4931 = vpop.f32.mrb[0].mxu0
      %v4932 = vadd.f32 %v231, %v4931
      %v4933 = vpop.f32.mrb[0].mxu0
      %v4934 = vpop.f32.mrb[0].mxu0
      %v4935 = vadd.f32 %v231, %v4934
      %v4936 = vpop.f32.mrb[0].mxu0
      %4937 = vmatprep.mubr.bf16.mxu0 0
      %4938 = vmatmul.mubr.bf16.gmra.mrb[0].mxu0 %v4751
      %v4939 = vpop.f32.mrb[0].mxu0
      %v4940 = vadd.f32 %v231, %v4939
      %v4941 = vpop.f32.mrb[0].mxu0
      %v4942 = vpop.f32.mrb[0].mxu0
      %v4943 = vadd.f32 %v231, %v4942
      %v4944 = vpop.f32.mrb[0].mxu0
      %4945 = vmatprep.mubr.bf16.mxu0 0
      %4946 = vmatmul.mubr.bf16.gmra.mrb[0].mxu0 %v4754
      %v4947 = vpop.f32.mrb[0].mxu0
      %v4948 = vadd.f32 %v231, %v4947
      %v4949 = vpop.f32.mrb[0].mxu0
      %v4950 = vpop.f32.mrb[0].mxu0
      %v4951 = vadd.f32 %v231, %v4950
      %v4952 = vpop.f32.mrb[0].mxu0
      %4953 = vmatprep.mubr.bf16.mxu0 0
      %4954 = vmatmul.mubr.bf16.gmra.mrb[0].mxu0 %v4757
      %v4955 = vpop.f32.mrb[0].mxu0
      %v4956 = vadd.f32 %v231, %v4955
      %v4957 = vpop.f32.mrb[0].mxu0
      %v4958 = vpop.f32.mrb[0].mxu0
      %v4959 = vadd.f32 %v231, %v4958
      %v4960 = vpop.f32.mrb[0].mxu0
      %4961 = vmatprep.mubr.bf16.mxu0 0
      %4962 = vmatmul.mubr.bf16.gmra.mrb[0].mxu0 %v4760
      %v4963 = vpop.f32.mrb[0].mxu0
      %v4964 = vadd.f32 %v231, %v4963
      %v4965 = vpop.f32.mrb[0].mxu0
      %v4966 = vpop.f32.mrb[0].mxu0
      %v4967 = vadd.f32 %v231, %v4966
      %v4968 = vpop.f32.mrb[0].mxu0
      %4969 = vmatprep.mubr.bf16.mxu0 0
      %4970 = vmatmul.mubr.bf16.gmra.mrb[0].mxu0 %v4763
      %v4971 = vpop.f32.mrb[0].mxu0
      %v4972 = vadd.f32 %v231, %v4971
      %v4973 = vpop.f32.mrb[0].mxu0
      %v4974 = vpop.f32.mrb[0].mxu0
      %v4975 = vadd.f32 %v231, %v4974
      %v4976 = vpop.f32.mrb[0].mxu0
      %4977 = vmatprep.mubr.bf16.mxu0 0
      %4978 = vmatmul.mubr.bf16.gmra.mrb[0].mxu0 %v4766
      %v4979 = vpop.f32.mrb[0].mxu0
      %v4980 = vadd.f32 %v231, %v4979
      %v4981 = vpop.f32.mrb[0].mxu0
      %v4982 = vpop.f32.mrb[0].mxu0
      %v4983 = vadd.f32 %v231, %v4982
      %v4984 = vpop.f32.mrb[0].mxu0
      %4985 = vmatprep.mubr.bf16.mxu0 0
      %4986 = vmatmul.mubr.bf16.gmra.mrb[0].mxu0 %v4769
      %v4987 = vpop.f32.mrb[0].mxu0
      %v4988 = vadd.f32 %v231, %v4987
      %v4989 = vpop.f32.mrb[0].mxu0
      %v4990 = vpop.f32.mrb[0].mxu0
      %v4991 = vadd.f32 %v231, %v4990
      %v4992 = vpop.f32.mrb[0].mxu0
      %4993 = vmatprep.mubr.bf16.mxu0 0
      %4994 = vmatmul.mubr.bf16.gmra.mrb[0].mxu0 %v4772
      %v4995 = vpop.f32.mrb[0].mxu0
      %v4996 = vadd.f32 %v231, %v4995
      %v4997 = vpop.f32.mrb[0].mxu0
      %v4998 = vpop.f32.mrb[0].mxu0
      %v4999 = vadd.f32 %v231, %v4998
      %v5000 = vpop.f32.mrb[0].mxu0
      %5001 = vmatprep.mubr.bf16.mxu0 0
      %5002 = vmatmul.mubr.bf16.gmra.mrb[0].mxu0 %v4775
      %v5003 = vpop.f32.mrb[0].mxu0
      %v5004 = vadd.f32 %v231, %v5003
      %v5005 = vpop.f32.mrb[0].mxu0
      %v5006 = vpop.f32.mrb[0].mxu0
      %v5007 = vadd.f32 %v231, %v5006
      %v5008 = vpop.f32.mrb[0].mxu0
      %5009 = vdwg.mxu0
      %v5010 = vld [vmem:[#allocation2] sm:$0xff]
      %v5011 = vld [vmem:[#allocation2 + $0x8] sm:$0xff]
      %v5012 = vld [vmem:[#allocation2 + $0x10] sm:$0xff]
      %v5013 = vld [vmem:[#allocation2 + $0x18] sm:$0xff]
      %v5014 = vld [vmem:[#allocation2 + $0x20] sm:$0xff]
      %v5015 = vld [vmem:[#allocation2 + $0x28] sm:$0xff]
      %v5016 = vld [vmem:[#allocation2 + $0x30] sm:$0xff]
      %v5017 = vld [vmem:[#allocation2 + $0x38] sm:$0xff]
      %v5018 = vld [vmem:[#allocation2 + $0x40] sm:$0xff]
      %v5019 = vld [vmem:[#allocation2 + $0x48] sm:$0xff]
      %v5020 = vld [vmem:[#allocation2 + $0x50] sm:$0xff]
      %v5021 = vld [vmem:[#allocation2 + $0x58] sm:$0xff]
      %v5022 = vld [vmem:[#allocation2 + $0x60] sm:$0xff]
      %v5023 = vld [vmem:[#allocation2 + $0x68] sm:$0xff]
      %v5024 = vld [vmem:[#allocation2 + $0x70] sm:$0xff]
      %v5025 = vld [vmem:[#allocation2 + $0x78] sm:$0xff]
      %v5026 = vld [vmem:[#allocation2 + $0x80] sm:$0xff]
      %v5027 = vld [vmem:[#allocation2 + $0x88] sm:$0xff]
      %v5028 = vld [vmem:[#allocation2 + $0x90] sm:$0xff]
      %v5029 = vld [vmem:[#allocation2 + $0x98] sm:$0xff]
      %v5030 = vld [vmem:[#allocation2 + $0xa0] sm:$0xff]
      %v5031 = vld [vmem:[#allocation2 + $0xa8] sm:$0xff]
      %v5032 = vld [vmem:[#allocation2 + $0xb0] sm:$0xff]
      %v5033 = vld [vmem:[#allocation2 + $0xb8] sm:$0xff]
      %v5034 = vld [vmem:[#allocation2 + $0xc0] sm:$0xff]
      %v5035 = vld [vmem:[#allocation2 + $0xc8] sm:$0xff]
      %v5036 = vld [vmem:[#allocation2 + $0xd0] sm:$0xff]
      %v5037 = vld [vmem:[#allocation2 + $0xd8] sm:$0xff]
      %v5038 = vld [vmem:[#allocation2 + $0xe0] sm:$0xff]
      %v5039 = vld [vmem:[#allocation2 + $0xe8] sm:$0xff]
      %v5040 = vld [vmem:[#allocation2 + $0xf0] sm:$0xff]
      %v5041 = vld [vmem:[#allocation2 + $0xf8] sm:$0xff]
      %v5042 = vld [vmem:[#allocation2 + $0x100] sm:$0xff]
      %v5043 = vld [vmem:[#allocation2 + $0x108] sm:$0xff]
      %v5044 = vld [vmem:[#allocation2 + $0x110] sm:$0xff]
      %v5045 = vld [vmem:[#allocation2 + $0x118] sm:$0xff]
      %v5046 = vld [vmem:[#allocation2 + $0x120] sm:$0xff]
      %v5047 = vld [vmem:[#allocation2 + $0x128] sm:$0xff]
      %v5048 = vld [vmem:[#allocation2 + $0x130] sm:$0xff]
      %v5049 = vld [vmem:[#allocation2 + $0x138] sm:$0xff]
      %v5050 = vld [vmem:[#allocation2 + $0x140] sm:$0xff]
      %v5051 = vld [vmem:[#allocation2 + $0x148] sm:$0xff]
      %v5052 = vld [vmem:[#allocation2 + $0x150] sm:$0xff]
      %v5053 = vld [vmem:[#allocation2 + $0x158] sm:$0xff]
      %v5054 = vld [vmem:[#allocation2 + $0x160] sm:$0xff]
      %v5055 = vld [vmem:[#allocation2 + $0x168] sm:$0xff]
      %v5056 = vld [vmem:[#allocation2 + $0x170] sm:$0xff]
      %v5057 = vld [vmem:[#allocation2 + $0x178] sm:$0xff]
      %v5058 = vld [vmem:[#allocation2 + $0x180] sm:$0xff]
      %v5059 = vld [vmem:[#allocation2 + $0x188] sm:$0xff]
      %v5060 = vmax.f32 %v5010, %v4812
      %v5061 = vmax.f32 %v5011, %v4815
      %v5062 = vmax.f32 %v5012, %v4820
      %v5063 = vmax.f32 %v5013, %v4823
      %v5064 = vmax.f32 %v5014, %v4828
      %v5065 = vmax.f32 %v5015, %v4831
      %v5066 = vmax.f32 %v5016, %v4836
      %v5067 = vmax.f32 %v5017, %v4839
      %v5068 = vmax.f32 %v5018, %v4844
      %v5069 = vmax.f32 %v5019, %v4847
      %v5070 = vmax.f32 %v5020, %v4852
      %v5071 = vmax.f32 %v5021, %v4855
      %v5072 = vmax.f32 %v5022, %v4860
      %v5073 = vmax.f32 %v5023, %v4863
      %v5074 = vmax.f32 %v5024, %v4868
      %v5075 = vmax.f32 %v5025, %v4871
      %v5076 = vmax.f32 %v5026, %v4876
      %v5077 = vmax.f32 %v5027, %v4879
      %v5078 = vmax.f32 %v5028, %v4884
      %v5079 = vmax.f32 %v5029, %v4887
      %v5080 = vmax.f32 %v5030, %v4892
      %v5081 = vmax.f32 %v5031, %v4895
      %v5082 = vmax.f32 %v5032, %v4900
      %v5083 = vmax.f32 %v5033, %v4903
      %v5084 = vmax.f32 %v5034, %v4908
      %v5085 = vmax.f32 %v5035, %v4911
      %v5086 = vmax.f32 %v5036, %v4916
      %v5087 = vmax.f32 %v5037, %v4919
      %v5088 = vmax.f32 %v5038, %v4924
      %v5089 = vmax.f32 %v5039, %v4927
      %v5090 = vmax.f32 %v5040, %v4932
      %v5091 = vmax.f32 %v5041, %v4935
      %v5092 = vmax.f32 %v5042, %v4940
      %v5093 = vmax.f32 %v5043, %v4943
      %v5094 = vmax.f32 %v5044, %v4948
      %v5095 = vmax.f32 %v5045, %v4951
      %v5096 = vmax.f32 %v5046, %v4956
      %v5097 = vmax.f32 %v5047, %v4959
      %v5098 = vmax.f32 %v5048, %v4964
      %v5099 = vmax.f32 %v5049, %v4967
      %v5100 = vmax.f32 %v5050, %v4972
      %v5101 = vmax.f32 %v5051, %v4975
      %v5102 = vmax.f32 %v5052, %v4980
      %v5103 = vmax.f32 %v5053, %v4983
      %v5104 = vmax.f32 %v5054, %v4988
      %v5105 = vmax.f32 %v5055, %v4991
      %v5106 = vmax.f32 %v5056, %v4996
      %v5107 = vmax.f32 %v5057, %v4999
      %v5108 = vmax.f32 %v5058, %v5004
      %v5109 = vmax.f32 %v5059, %v5007
      %5110 = vst [vmem:[#allocation2] sm:$0xff] %v5060
      %5111 = vst [vmem:[#allocation2 + $0x8] sm:$0xff] %v5061
      %5112 = vst [vmem:[#allocation2 + $0x10] sm:$0xff] %v5062
      %5113 = vst [vmem:[#allocation2 + $0x18] sm:$0xff] %v5063
      %5114 = vst [vmem:[#allocation2 + $0x20] sm:$0xff] %v5064
      %5115 = vst [vmem:[#allocation2 + $0x28] sm:$0xff] %v5065
      %5116 = vst [vmem:[#allocation2 + $0x30] sm:$0xff] %v5066
      %5117 = vst [vmem:[#allocation2 + $0x38] sm:$0xff] %v5067
      %5118 = vst [vmem:[#allocation2 + $0x40] sm:$0xff] %v5068
      %5119 = vst [vmem:[#allocation2 + $0x48] sm:$0xff] %v5069
      %5120 = vst [vmem:[#allocation2 + $0x50] sm:$0xff] %v5070
      %5121 = vst [vmem:[#allocation2 + $0x58] sm:$0xff] %v5071
      %5122 = vst [vmem:[#allocation2 + $0x60] sm:$0xff] %v5072
      %5123 = vst [vmem:[#allocation2 + $0x68] sm:$0xff] %v5073
      %5124 = vst [vmem:[#allocation2 + $0x70] sm:$0xff] %v5074
      %5125 = vst [vmem:[#allocation2 + $0x78] sm:$0xff] %v5075
      %5126 = vst [vmem:[#allocation2 + $0x80] sm:$0xff] %v5076
      %5127 = vst [vmem:[#allocation2 + $0x88] sm:$0xff] %v5077
      %5128 = vst [vmem:[#allocation2 + $0x90] sm:$0xff] %v5078
      %5129 = vst [vmem:[#allocation2 + $0x98] sm:$0xff] %v5079
      %5130 = vst [vmem:[#allocation2 + $0xa0] sm:$0xff] %v5080
      %5131 = vst [vmem:[#allocation2 + $0xa8] sm:$0xff] %v5081
      %5132 = vst [vmem:[#allocation2 + $0xb0] sm:$0xff] %v5082
      %5133 = vst [vmem:[#allocation2 + $0xb8] sm:$0xff] %v5083
      %5134 = vst [vmem:[#allocation2 + $0xc0] sm:$0xff] %v5084
      %5135 = vst [vmem:[#allocation2 + $0xc8] sm:$0xff] %v5085
      %5136 = vst [vmem:[#allocation2 + $0xd0] sm:$0xff] %v5086
      %5137 = vst [vmem:[#allocation2 + $0xd8] sm:$0xff] %v5087
      %5138 = vst [vmem:[#allocation2 + $0xe0] sm:$0xff] %v5088
      %5139 = vst [vmem:[#allocation2 + $0xe8] sm:$0xff] %v5089
      %5140 = vst [vmem:[#allocation2 + $0xf0] sm:$0xff] %v5090
      %5141 = vst [vmem:[#allocation2 + $0xf8] sm:$0xff] %v5091
      %5142 = vst [vmem:[#allocation2 + $0x100] sm:$0xff] %v5092
      %5143 = vst [vmem:[#allocation2 + $0x108] sm:$0xff] %v5093
      %5144 = vst [vmem:[#allocation2 + $0x110] sm:$0xff] %v5094
      %5145 = vst [vmem:[#allocation2 + $0x118] sm:$0xff] %v5095
      %5146 = vst [vmem:[#allocation2 + $0x120] sm:$0xff] %v5096
      %5147 = vst [vmem:[#allocation2 + $0x128] sm:$0xff] %v5097
      %5148 = vst [vmem:[#allocation2 + $0x130] sm:$0xff] %v5098
      %5149 = vst [vmem:[#allocation2 + $0x138] sm:$0xff] %v5099
      %5150 = vst [vmem:[#allocation2 + $0x140] sm:$0xff] %v5100
      %5151 = vst [vmem:[#allocation2 + $0x148] sm:$0xff] %v5101
      %5152 = vst [vmem:[#allocation2 + $0x150] sm:$0xff] %v5102
      %5153 = vst [vmem:[#allocation2 + $0x158] sm:$0xff] %v5103
      %5154 = vst [vmem:[#allocation2 + $0x160] sm:$0xff] %v5104
      %5155 = vst [vmem:[#allocation2 + $0x168] sm:$0xff] %v5105
      %5156 = vst [vmem:[#allocation2 + $0x170] sm:$0xff] %v5106
      %5157 = vst [vmem:[#allocation2 + $0x178] sm:$0xff] %v5107
      %5158 = vst [vmem:[#allocation2 + $0x180] sm:$0xff] %v5108
      %5159 = vst [vmem:[#allocation2 + $0x188] sm:$0xff] %v5109
      %v5160 = vld [vmem:[%s165 + $0x640] sm:$0xf]
      %v5161 = vld [vmem:[%s165 + $0x644] sm:$0xf]
      %v5162 = vld [vmem:[%s165 + $0x648] sm:$0xf]
      %v5163 = vld [vmem:[%s165 + $0x64c] sm:$0xf]
      %v5164 = vld [vmem:[%s165 + $0x650] sm:$0xf]
      %v5165 = vld [vmem:[%s165 + $0x654] sm:$0xf]
      %v5166 = vld [vmem:[%s165 + $0x658] sm:$0xf]
      %v5167 = vld [vmem:[%s165 + $0x65c] sm:$0xf]
      %v5168 = vld [vmem:[%s165 + $0x660] sm:$0xf]
      %v5169 = vld [vmem:[%s165 + $0x664] sm:$0xf]
      %v5170 = vld [vmem:[%s165 + $0x668] sm:$0xf]
      %v5171 = vld [vmem:[%s165 + $0x66c] sm:$0xf]
      %v5172 = vld [vmem:[%s165 + $0x670] sm:$0xf]
      %v5173 = vld [vmem:[%s165 + $0x674] sm:$0xf]
      %v5174 = vld [vmem:[%s165 + $0x678] sm:$0xf]
      %v5175 = vld [vmem:[%s165 + $0x67c] sm:$0xf]
      %v5176 = vld [vmem:[%s165 + $0x680] sm:$0xf]
      %v5177 = vld [vmem:[%s165 + $0x684] sm:$0xf]
      %v5178 = vld [vmem:[%s165 + $0x688] sm:$0xf]
      %v5179 = vld [vmem:[%s165 + $0x68c] sm:$0xf]
      %v5180 = vld [vmem:[%s165 + $0x690] sm:$0xf]
      %v5181 = vld [vmem:[%s165 + $0x694] sm:$0xf]
      %v5182 = vld [vmem:[%s165 + $0x698] sm:$0xf]
      %v5183 = vld [vmem:[%s165 + $0x69c] sm:$0xf]
      %v5184 = vld [vmem:[%s165 + $0x6a0] sm:$0xf]
      %v5185 = vld [vmem:[%s165 + $0x6a4] sm:$0xf]
      %v5186 = vld [vmem:[%s165 + $0x6a8] sm:$0xf]
      %v5187 = vld [vmem:[%s165 + $0x6ac] sm:$0xf]
      %v5188 = vld [vmem:[%s165 + $0x6b0] sm:$0xf]
      %v5189 = vld [vmem:[%s165 + $0x6b4] sm:$0xf]
      %v5190 = vld [vmem:[%s165 + $0x6b8] sm:$0xf]
      %v5191 = vld [vmem:[%s165 + $0x6bc] sm:$0xf]
      %v5192 = vld [vmem:[%s165 + $0x6c0] sm:$0xf]
      %v5193 = vld [vmem:[%s165 + $0x6c4] sm:$0xf]
      %v5194 = vld [vmem:[%s165 + $0x6c8] sm:$0xf]
      %v5195 = vld [vmem:[%s165 + $0x6cc] sm:$0xf]
      %v5196 = vld [vmem:[%s165 + $0x6d0] sm:$0xf]
      %v5197 = vld [vmem:[%s165 + $0x6d4] sm:$0xf]
      %v5198 = vld [vmem:[%s165 + $0x6d8] sm:$0xf]
      %v5199 = vld [vmem:[%s165 + $0x6dc] sm:$0xf]
      %v5200 = vld [vmem:[%s165 + $0x6e0] sm:$0xf]
      %v5201 = vld [vmem:[%s165 + $0x6e4] sm:$0xf]
      %v5202 = vld [vmem:[%s165 + $0x6e8] sm:$0xf]
      %v5203 = vld [vmem:[%s165 + $0x6ec] sm:$0xf]
      %v5204 = vld [vmem:[%s165 + $0x6f0] sm:$0xf]
      %v5205 = vld [vmem:[%s165 + $0x6f4] sm:$0xf]
      %v5206 = vld [vmem:[%s165 + $0x6f8] sm:$0xf]
      %v5207 = vld [vmem:[%s165 + $0x6fc] sm:$0xf]
      %v5208 = vld [vmem:[%s165 + $0x700] sm:$0xf]
      %v5209 = vld [vmem:[%s165 + $0x704] sm:$0xf]
      %v5260 = vunpack.c.l.b16 %v5160
      %v5261 = vunpack.c.l.b16 %v5161
      %v5262 = vunpack.c.l.b16 %v5162
      %v5263 = vunpack.c.l.b16 %v5163
      %v5264 = vunpack.c.l.b16 %v5164
      %v5265 = vunpack.c.l.b16 %v5165
      %v5266 = vunpack.c.l.b16 %v5166
      %v5267 = vunpack.c.l.b16 %v5167
      %v5268 = vunpack.c.l.b16 %v5168
      %v5269 = vunpack.c.l.b16 %v5169
      %v5270 = vunpack.c.l.b16 %v5170
      %v5271 = vunpack.c.l.b16 %v5171
      %v5272 = vunpack.c.l.b16 %v5172
      %v5273 = vunpack.c.l.b16 %v5173
      %v5274 = vunpack.c.l.b16 %v5174
      %v5275 = vunpack.c.l.b16 %v5175
      %v5276 = vunpack.c.l.b16 %v5176
      %v5277 = vunpack.c.l.b16 %v5177
      %v5278 = vunpack.c.l.b16 %v5178
      %v5279 = vunpack.c.l.b16 %v5179
      %v5280 = vunpack.c.l.b16 %v5180
      %v5281 = vunpack.c.l.b16 %v5181
      %v5282 = vunpack.c.l.b16 %v5182
      %v5283 = vunpack.c.l.b16 %v5183
      %v5284 = vunpack.c.l.b16 %v5184
      %v5285 = vunpack.c.l.b16 %v5185
      %v5286 = vunpack.c.l.b16 %v5186
      %v5287 = vunpack.c.l.b16 %v5187
      %v5288 = vunpack.c.l.b16 %v5188
      %v5289 = vunpack.c.l.b16 %v5189
      %v5290 = vunpack.c.l.b16 %v5190
      %v5291 = vunpack.c.l.b16 %v5191
      %v5292 = vunpack.c.l.b16 %v5192
      %v5293 = vunpack.c.l.b16 %v5193
      %v5294 = vunpack.c.l.b16 %v5194
      %v5295 = vunpack.c.l.b16 %v5195
      %v5296 = vunpack.c.l.b16 %v5196
      %v5297 = vunpack.c.l.b16 %v5197
      %v5298 = vunpack.c.l.b16 %v5198
      %v5299 = vunpack.c.l.b16 %v5199
      %v5300 = vunpack.c.l.b16 %v5200
      %v5301 = vunpack.c.l.b16 %v5201
      %v5302 = vunpack.c.l.b16 %v5202
      %v5303 = vunpack.c.l.b16 %v5203
      %v5304 = vunpack.c.l.b16 %v5204
      %v5305 = vunpack.c.l.b16 %v5205
      %v5306 = vunpack.c.l.b16 %v5206
      %v5307 = vunpack.c.l.b16 %v5207
      %v5308 = vunpack.c.l.b16 %v5208
      %v5309 = vunpack.c.l.b16 %v5209
      %v5310 = vpack.c.b16 %v5261, %v5260
      %v5311 = vpack.c.b16 %v5263, %v5262
      %v5312 = vpack.c.b16 %v5265, %v5264
      %v5313 = vpack.c.b16 %v5267, %v5266
      %v5314 = vpack.c.b16 %v5269, %v5268
      %v5315 = vpack.c.b16 %v5271, %v5270
      %v5316 = vpack.c.b16 %v5273, %v5272
      %v5317 = vpack.c.b16 %v5275, %v5274
      %v5318 = vpack.c.b16 %v5277, %v5276
      %v5319 = vpack.c.b16 %v5279, %v5278
      %v5320 = vpack.c.b16 %v5281, %v5280
      %v5321 = vpack.c.b16 %v5283, %v5282
      %v5322 = vpack.c.b16 %v5285, %v5284
      %v5323 = vpack.c.b16 %v5287, %v5286
      %v5324 = vpack.c.b16 %v5289, %v5288
      %v5325 = vpack.c.b16 %v5291, %v5290
      %v5326 = vpack.c.b16 %v5293, %v5292
      %v5327 = vpack.c.b16 %v5295, %v5294
      %v5328 = vpack.c.b16 %v5297, %v5296
      %v5329 = vpack.c.b16 %v5299, %v5298
      %v5330 = vpack.c.b16 %v5301, %v5300
      %v5331 = vpack.c.b16 %v5303, %v5302
      %v5332 = vpack.c.b16 %v5305, %v5304
      %v5333 = vpack.c.b16 %v5307, %v5306
      %v5334 = vpack.c.b16 %v5309, %v5308
      %v5336 = vsel %vm370, %v5310, 0
      %v5339 = vsel %vm370, %v5311, 0
      %v5342 = vsel %vm370, %v5312, 0
      %v5345 = vsel %vm370, %v5313, 0
      %v5348 = vsel %vm370, %v5314, 0
      %v5351 = vsel %vm370, %v5315, 0
      %v5354 = vsel %vm370, %v5316, 0
      %v5357 = vsel %vm370, %v5317, 0
      %v5360 = vsel %vm370, %v5318, 0
      %v5363 = vsel %vm370, %v5319, 0
      %v5366 = vsel %vm370, %v5320, 0
      %v5369 = vsel %vm370, %v5321, 0
      %v5372 = vsel %vm370, %v5322, 0
      %v5375 = vsel %vm370, %v5323, 0
      %v5378 = vsel %vm370, %v5324, 0
      %v5381 = vsel %vm370, %v5325, 0
      %v5384 = vsel %vm370, %v5326, 0
      %v5387 = vsel %vm370, %v5327, 0
      %v5390 = vsel %vm370, %v5328, 0
      %v5393 = vsel %vm370, %v5329, 0
      %v5396 = vsel %vm370, %v5330, 0
      %v5399 = vsel %vm370, %v5331, 0
      %v5402 = vsel %vm370, %v5332, 0
      %v5405 = vsel %vm370, %v5333, 0
      %v5408 = vsel %vm370, %v5334, 0
      %5410 = vmatprep.subr.bf16.mxu0 0
      %5411 = vmatpush1.bf16.msra.mxu0 %v366
      %5412 = vmatprep.subr.bf16.mxu0 0
      %5413 = vmatpush1.bf16.msra.mxu0 %v367
      %5414 = vmatprep.subr.bf16.mxu0 0
      %5415 = vmatpush1.bf16.msra.mxu0 0
      %5416 = vmatprep.subr.bf16.mxu0 0
      %5417 = vmatpush1.bf16.msra.mxu0 0
      %5418 = vmatprep.subr.bf16.mxu0 0
      %5419 = vmatpush1.bf16.msra.mxu0 0
      %5420 = vmatprep.subr.bf16.mxu0 0
      %5421 = vmatpush1.bf16.msra.mxu0 0
      %5422 = vmatprep.subr.bf16.mxu0 0
      %5423 = vmatpush1.bf16.msra.mxu0 0
      %5424 = vmatprep.subr.bf16.mxu0 0
      %5425 = vmatpush1.bf16.msra.mxu0 0
      %5426 = vmatprep.subr.bf16.mxu0 0
      %5427 = vmatpush1.bf16.msra.mxu0 0
      %5428 = vmatprep.subr.bf16.mxu0 0
      %5429 = vmatpush1.bf16.msra.mxu0 0
      %5430 = vmatprep.subr.bf16.mxu0 0
      %5431 = vmatpush1.bf16.msra.mxu0 0
      %5432 = vmatprep.subr.bf16.mxu0 0
      %5433 = vmatpush1.bf16.msra.mxu0 0
      %5434 = vmatprep.subr.bf16.mxu0 0
      %5435 = vmatpush1.bf16.msra.mxu0 0
      %5436 = vmatprep.subr.bf16.mxu0 0
      %5437 = vmatpush1.bf16.msra.mxu0 0
      %5438 = vmatprep.subr.bf16.mxu0 0
      %5439 = vmatpush1.bf16.msra.mxu0 0
      %5440 = vmatprep.subr.bf16.mxu0 0
      %5441 = vmatpush1.bf16.msra.mxu0 0
      %5442 = vmatprep.mubr.bf16.mxu0 0
      %5443 = vmatmul.mubr.bf16.gmra.mrb[0].mxu0 %v5336
      %v5444 = vpop.f32.mrb[0].mxu0
      %v5445 = vadd.f32 %v231, %v5444
      %v5446 = vpop.f32.mrb[0].mxu0
      %v5447 = vpop.f32.mrb[0].mxu0
      %v5448 = vadd.f32 %v231, %v5447
      %v5449 = vpop.f32.mrb[0].mxu0
      %5450 = vmatprep.mubr.bf16.mxu0 0
      %5451 = vmatmul.mubr.bf16.gmra.mrb[0].mxu0 %v5339
      %v5452 = vpop.f32.mrb[0].mxu0
      %v5453 = vadd.f32 %v231, %v5452
      %v5454 = vpop.f32.mrb[0].mxu0
      %v5455 = vpop.f32.mrb[0].mxu0
      %v5456 = vadd.f32 %v231, %v5455
      %v5457 = vpop.f32.mrb[0].mxu0
      %5458 = vmatprep.mubr.bf16.mxu0 0
      %5459 = vmatmul.mubr.bf16.gmra.mrb[0].mxu0 %v5342
      %v5460 = vpop.f32.mrb[0].mxu0
      %v5461 = vadd.f32 %v231, %v5460
      %v5462 = vpop.f32.mrb[0].mxu0
      %v5463 = vpop.f32.mrb[0].mxu0
      %v5464 = vadd.f32 %v231, %v5463
      %v5465 = vpop.f32.mrb[0].mxu0
      %5466 = vmatprep.mubr.bf16.mxu0 0
      %5467 = vmatmul.mubr.bf16.gmra.mrb[0].mxu0 %v5345
      %v5468 = vpop.f32.mrb[0].mxu0
      %v5469 = vadd.f32 %v231, %v5468
      %v5470 = vpop.f32.mrb[0].mxu0
      %v5471 = vpop.f32.mrb[0].mxu0
      %v5472 = vadd.f32 %v231, %v5471
      %v5473 = vpop.f32.mrb[0].mxu0
      %5474 = vmatprep.mubr.bf16.mxu0 0
      %5475 = vmatmul.mubr.bf16.gmra.mrb[0].mxu0 %v5348
      %v5476 = vpop.f32.mrb[0].mxu0
      %v5477 = vadd.f32 %v231, %v5476
      %v5478 = vpop.f32.mrb[0].mxu0
      %v5479 = vpop.f32.mrb[0].mxu0
      %v5480 = vadd.f32 %v231, %v5479
      %v5481 = vpop.f32.mrb[0].mxu0
      %5482 = vmatprep.mubr.bf16.mxu0 0
      %5483 = vmatmul.mubr.bf16.gmra.mrb[0].mxu0 %v5351
      %v5484 = vpop.f32.mrb[0].mxu0
      %v5485 = vadd.f32 %v231, %v5484
      %v5486 = vpop.f32.mrb[0].mxu0
      %v5487 = vpop.f32.mrb[0].mxu0
      %v5488 = vadd.f32 %v231, %v5487
      %v5489 = vpop.f32.mrb[0].mxu0
      %5490 = vmatprep.mubr.bf16.mxu0 0
      %5491 = vmatmul.mubr.bf16.gmra.mrb[0].mxu0 %v5354
      %v5492 = vpop.f32.mrb[0].mxu0
      %v5493 = vadd.f32 %v231, %v5492
      %v5494 = vpop.f32.mrb[0].mxu0
      %v5495 = vpop.f32.mrb[0].mxu0
      %v5496 = vadd.f32 %v231, %v5495
      %v5497 = vpop.f32.mrb[0].mxu0
      %5498 = vmatprep.mubr.bf16.mxu0 0
      %5499 = vmatmul.mubr.bf16.gmra.mrb[0].mxu0 %v5357
      %v5500 = vpop.f32.mrb[0].mxu0
      %v5501 = vadd.f32 %v231, %v5500
      %v5502 = vpop.f32.mrb[0].mxu0
      %v5503 = vpop.f32.mrb[0].mxu0
      %v5504 = vadd.f32 %v231, %v5503
      %v5505 = vpop.f32.mrb[0].mxu0
      %5506 = vmatprep.mubr.bf16.mxu0 0
      %5507 = vmatmul.mubr.bf16.gmra.mrb[0].mxu0 %v5360
      %v5508 = vpop.f32.mrb[0].mxu0
      %v5509 = vadd.f32 %v231, %v5508
      %v5510 = vpop.f32.mrb[0].mxu0
      %v5511 = vpop.f32.mrb[0].mxu0
      %v5512 = vadd.f32 %v231, %v5511
      %v5513 = vpop.f32.mrb[0].mxu0
      %5514 = vmatprep.mubr.bf16.mxu0 0
      %5515 = vmatmul.mubr.bf16.gmra.mrb[0].mxu0 %v5363
      %v5516 = vpop.f32.mrb[0].mxu0
      %v5517 = vadd.f32 %v231, %v5516
      %v5518 = vpop.f32.mrb[0].mxu0
      %v5519 = vpop.f32.mrb[0].mxu0
      %v5520 = vadd.f32 %v231, %v5519
      %v5521 = vpop.f32.mrb[0].mxu0
      %5522 = vmatprep.mubr.bf16.mxu0 0
      %5523 = vmatmul.mubr.bf16.gmra.mrb[0].mxu0 %v5366
      %v5524 = vpop.f32.mrb[0].mxu0
      %v5525 = vadd.f32 %v231, %v5524
      %v5526 = vpop.f32.mrb[0].mxu0
      %v5527 = vpop.f32.mrb[0].mxu0
      %v5528 = vadd.f32 %v231, %v5527
      %v5529 = vpop.f32.mrb[0].mxu0
      %5530 = vmatprep.mubr.bf16.mxu0 0
      %5531 = vmatmul.mubr.bf16.gmra.mrb[0].mxu0 %v5369
      %v5532 = vpop.f32.mrb[0].mxu0
      %v5533 = vadd.f32 %v231, %v5532
      %v5534 = vpop.f32.mrb[0].mxu0
      %v5535 = vpop.f32.mrb[0].mxu0
      %v5536 = vadd.f32 %v231, %v5535
      %v5537 = vpop.f32.mrb[0].mxu0
      %5538 = vmatprep.mubr.bf16.mxu0 0
      %5539 = vmatmul.mubr.bf16.gmra.mrb[0].mxu0 %v5372
      %v5540 = vpop.f32.mrb[0].mxu0
      %v5541 = vadd.f32 %v231, %v5540
      %v5542 = vpop.f32.mrb[0].mxu0
      %v5543 = vpop.f32.mrb[0].mxu0
      %v5544 = vadd.f32 %v231, %v5543
      %v5545 = vpop.f32.mrb[0].mxu0
      %5546 = vmatprep.mubr.bf16.mxu0 0
      %5547 = vmatmul.mubr.bf16.gmra.mrb[0].mxu0 %v5375
      %v5548 = vpop.f32.mrb[0].mxu0
      %v5549 = vadd.f32 %v231, %v5548
      %v5550 = vpop.f32.mrb[0].mxu0
      %v5551 = vpop.f32.mrb[0].mxu0
      %v5552 = vadd.f32 %v231, %v5551
      %v5553 = vpop.f32.mrb[0].mxu0
      %5554 = vmatprep.mubr.bf16.mxu0 0
      %5555 = vmatmul.mubr.bf16.gmra.mrb[0].mxu0 %v5378
      %v5556 = vpop.f32.mrb[0].mxu0
      %v5557 = vadd.f32 %v231, %v5556
      %v5558 = vpop.f32.mrb[0].mxu0
      %v5559 = vpop.f32.mrb[0].mxu0
      %v5560 = vadd.f32 %v231, %v5559
      %v5561 = vpop.f32.mrb[0].mxu0
      %5562 = vmatprep.mubr.bf16.mxu0 0
      %5563 = vmatmul.mubr.bf16.gmra.mrb[0].mxu0 %v5381
      %v5564 = vpop.f32.mrb[0].mxu0
      %v5565 = vadd.f32 %v231, %v5564
      %v5566 = vpop.f32.mrb[0].mxu0
      %v5567 = vpop.f32.mrb[0].mxu0
      %v5568 = vadd.f32 %v231, %v5567
      %v5569 = vpop.f32.mrb[0].mxu0
      %5570 = vmatprep.mubr.bf16.mxu0 0
      %5571 = vmatmul.mubr.bf16.gmra.mrb[0].mxu0 %v5384
      %v5572 = vpop.f32.mrb[0].mxu0
      %v5573 = vadd.f32 %v231, %v5572
      %v5574 = vpop.f32.mrb[0].mxu0
      %v5575 = vpop.f32.mrb[0].mxu0
      %v5576 = vadd.f32 %v231, %v5575
      %v5577 = vpop.f32.mrb[0].mxu0
      %5578 = vmatprep.mubr.bf16.mxu0 0
      %5579 = vmatmul.mubr.bf16.gmra.mrb[0].mxu0 %v5387
      %v5580 = vpop.f32.mrb[0].mxu0
      %v5581 = vadd.f32 %v231, %v5580
      %v5582 = vpop.f32.mrb[0].mxu0
      %v5583 = vpop.f32.mrb[0].mxu0
      %v5584 = vadd.f32 %v231, %v5583
      %v5585 = vpop.f32.mrb[0].mxu0
      %5586 = vmatprep.mubr.bf16.mxu0 0
      %5587 = vmatmul.mubr.bf16.gmra.mrb[0].mxu0 %v5390
      %v5588 = vpop.f32.mrb[0].mxu0
      %v5589 = vadd.f32 %v231, %v5588
      %v5590 = vpop.f32.mrb[0].mxu0
      %v5591 = vpop.f32.mrb[0].mxu0
      %v5592 = vadd.f32 %v231, %v5591
      %v5593 = vpop.f32.mrb[0].mxu0
      %5594 = vmatprep.mubr.bf16.mxu0 0
      %5595 = vmatmul.mubr.bf16.gmra.mrb[0].mxu0 %v5393
      %v5596 = vpop.f32.mrb[0].mxu0
      %v5597 = vadd.f32 %v231, %v5596
      %v5598 = vpop.f32.mrb[0].mxu0
      %v5599 = vpop.f32.mrb[0].mxu0
      %v5600 = vadd.f32 %v231, %v5599
      %v5601 = vpop.f32.mrb[0].mxu0
      %5602 = vmatprep.mubr.bf16.mxu0 0
      %5603 = vmatmul.mubr.bf16.gmra.mrb[0].mxu0 %v5396
      %v5604 = vpop.f32.mrb[0].mxu0
      %v5605 = vadd.f32 %v231, %v5604
      %v5606 = vpop.f32.mrb[0].mxu0
      %v5607 = vpop.f32.mrb[0].mxu0
      %v5608 = vadd.f32 %v231, %v5607
      %v5609 = vpop.f32.mrb[0].mxu0
      %5610 = vmatprep.mubr.bf16.mxu0 0
      %5611 = vmatmul.mubr.bf16.gmra.mrb[0].mxu0 %v5399
      %v5612 = vpop.f32.mrb[0].mxu0
      %v5613 = vadd.f32 %v231, %v5612
      %v5614 = vpop.f32.mrb[0].mxu0
      %v5615 = vpop.f32.mrb[0].mxu0
      %v5616 = vadd.f32 %v231, %v5615
      %v5617 = vpop.f32.mrb[0].mxu0
      %5618 = vmatprep.mubr.bf16.mxu0 0
      %5619 = vmatmul.mubr.bf16.gmra.mrb[0].mxu0 %v5402
      %v5620 = vpop.f32.mrb[0].mxu0
      %v5621 = vadd.f32 %v231, %v5620
      %v5622 = vpop.f32.mrb[0].mxu0
      %v5623 = vpop.f32.mrb[0].mxu0
      %v5624 = vadd.f32 %v231, %v5623
      %v5625 = vpop.f32.mrb[0].mxu0
      %5626 = vmatprep.mubr.bf16.mxu0 0
      %5627 = vmatmul.mubr.bf16.gmra.mrb[0].mxu0 %v5405
      %v5628 = vpop.f32.mrb[0].mxu0
      %v5629 = vadd.f32 %v231, %v5628
      %v5630 = vpop.f32.mrb[0].mxu0
      %v5631 = vpop.f32.mrb[0].mxu0
      %v5632 = vadd.f32 %v231, %v5631
      %v5633 = vpop.f32.mrb[0].mxu0
      %5634 = vmatprep.mubr.bf16.mxu0 0
      %5635 = vmatmul.mubr.bf16.gmra.mrb[0].mxu0 %v5408
      %v5636 = vpop.f32.mrb[0].mxu0
      %v5637 = vadd.f32 %v231, %v5636
      %v5638 = vpop.f32.mrb[0].mxu0
      %v5639 = vpop.f32.mrb[0].mxu0
      %v5640 = vadd.f32 %v231, %v5639
      %v5641 = vpop.f32.mrb[0].mxu0
      %5642 = vdwg.mxu0
      %v5643 = vld [vmem:[#allocation2] sm:$0xff]
      %v5644 = vld [vmem:[#allocation2 + $0x8] sm:$0xff]
      %v5645 = vld [vmem:[#allocation2 + $0x10] sm:$0xff]
      %v5646 = vld [vmem:[#allocation2 + $0x18] sm:$0xff]
      %v5647 = vld [vmem:[#allocation2 + $0x20] sm:$0xff]
      %v5648 = vld [vmem:[#allocation2 + $0x28] sm:$0xff]
      %v5649 = vld [vmem:[#allocation2 + $0x30] sm:$0xff]
      %v5650 = vld [vmem:[#allocation2 + $0x38] sm:$0xff]
      %v5651 = vld [vmem:[#allocation2 + $0x40] sm:$0xff]
      %v5652 = vld [vmem:[#allocation2 + $0x48] sm:$0xff]
      %v5653 = vld [vmem:[#allocation2 + $0x50] sm:$0xff]
      %v5654 = vld [vmem:[#allocation2 + $0x58] sm:$0xff]
      %v5655 = vld [vmem:[#allocation2 + $0x60] sm:$0xff]
      %v5656 = vld [vmem:[#allocation2 + $0x68] sm:$0xff]
      %v5657 = vld [vmem:[#allocation2 + $0x70] sm:$0xff]
      %v5658 = vld [vmem:[#allocation2 + $0x78] sm:$0xff]
      %v5659 = vld [vmem:[#allocation2 + $0x80] sm:$0xff]
      %v5660 = vld [vmem:[#allocation2 + $0x88] sm:$0xff]
      %v5661 = vld [vmem:[#allocation2 + $0x90] sm:$0xff]
      %v5662 = vld [vmem:[#allocation2 + $0x98] sm:$0xff]
      %v5663 = vld [vmem:[#allocation2 + $0xa0] sm:$0xff]
      %v5664 = vld [vmem:[#allocation2 + $0xa8] sm:$0xff]
      %v5665 = vld [vmem:[#allocation2 + $0xb0] sm:$0xff]
      %v5666 = vld [vmem:[#allocation2 + $0xb8] sm:$0xff]
      %v5667 = vld [vmem:[#allocation2 + $0xc0] sm:$0xff]
      %v5668 = vld [vmem:[#allocation2 + $0xc8] sm:$0xff]
      %v5669 = vld [vmem:[#allocation2 + $0xd0] sm:$0xff]
      %v5670 = vld [vmem:[#allocation2 + $0xd8] sm:$0xff]
      %v5671 = vld [vmem:[#allocation2 + $0xe0] sm:$0xff]
      %v5672 = vld [vmem:[#allocation2 + $0xe8] sm:$0xff]
      %v5673 = vld [vmem:[#allocation2 + $0xf0] sm:$0xff]
      %v5674 = vld [vmem:[#allocation2 + $0xf8] sm:$0xff]
      %v5675 = vld [vmem:[#allocation2 + $0x100] sm:$0xff]
      %v5676 = vld [vmem:[#allocation2 + $0x108] sm:$0xff]
      %v5677 = vld [vmem:[#allocation2 + $0x110] sm:$0xff]
      %v5678 = vld [vmem:[#allocation2 + $0x118] sm:$0xff]
      %v5679 = vld [vmem:[#allocation2 + $0x120] sm:$0xff]
      %v5680 = vld [vmem:[#allocation2 + $0x128] sm:$0xff]
      %v5681 = vld [vmem:[#allocation2 + $0x130] sm:$0xff]
      %v5682 = vld [vmem:[#allocation2 + $0x138] sm:$0xff]
      %v5683 = vld [vmem:[#allocation2 + $0x140] sm:$0xff]
      %v5684 = vld [vmem:[#allocation2 + $0x148] sm:$0xff]
      %v5685 = vld [vmem:[#allocation2 + $0x150] sm:$0xff]
      %v5686 = vld [vmem:[#allocation2 + $0x158] sm:$0xff]
      %v5687 = vld [vmem:[#allocation2 + $0x160] sm:$0xff]
      %v5688 = vld [vmem:[#allocation2 + $0x168] sm:$0xff]
      %v5689 = vld [vmem:[#allocation2 + $0x170] sm:$0xff]
      %v5690 = vld [vmem:[#allocation2 + $0x178] sm:$0xff]
      %v5691 = vld [vmem:[#allocation2 + $0x180] sm:$0xff]
      %v5692 = vld [vmem:[#allocation2 + $0x188] sm:$0xff]
      %v5693 = vmax.f32 %v5643, %v5445
      %v5694 = vmax.f32 %v5644, %v5448
      %v5695 = vmax.f32 %v5645, %v5453
      %v5696 = vmax.f32 %v5646, %v5456
      %v5697 = vmax.f32 %v5647, %v5461
      %v5698 = vmax.f32 %v5648, %v5464
      %v5699 = vmax.f32 %v5649, %v5469
      %v5700 = vmax.f32 %v5650, %v5472
      %v5701 = vmax.f32 %v5651, %v5477
      %v5702 = vmax.f32 %v5652, %v5480
      %v5703 = vmax.f32 %v5653, %v5485
      %v5704 = vmax.f32 %v5654, %v5488
      %v5705 = vmax.f32 %v5655, %v5493
      %v5706 = vmax.f32 %v5656, %v5496
      %v5707 = vmax.f32 %v5657, %v5501
      %v5708 = vmax.f32 %v5658, %v5504
      %v5709 = vmax.f32 %v5659, %v5509
      %v5710 = vmax.f32 %v5660, %v5512
      %v5711 = vmax.f32 %v5661, %v5517
      %v5712 = vmax.f32 %v5662, %v5520
      %v5713 = vmax.f32 %v5663, %v5525
      %v5714 = vmax.f32 %v5664, %v5528
      %v5715 = vmax.f32 %v5665, %v5533
      %v5716 = vmax.f32 %v5666, %v5536
      %v5717 = vmax.f32 %v5667, %v5541
      %v5718 = vmax.f32 %v5668, %v5544
      %v5719 = vmax.f32 %v5669, %v5549
      %v5720 = vmax.f32 %v5670, %v5552
      %v5721 = vmax.f32 %v5671, %v5557
      %v5722 = vmax.f32 %v5672, %v5560
      %v5723 = vmax.f32 %v5673, %v5565
      %v5724 = vmax.f32 %v5674, %v5568
      %v5725 = vmax.f32 %v5675, %v5573
      %v5726 = vmax.f32 %v5676, %v5576
      %v5727 = vmax.f32 %v5677, %v5581
      %v5728 = vmax.f32 %v5678, %v5584
      %v5729 = vmax.f32 %v5679, %v5589
      %v5730 = vmax.f32 %v5680, %v5592
      %v5731 = vmax.f32 %v5681, %v5597
      %v5732 = vmax.f32 %v5682, %v5600
      %v5733 = vmax.f32 %v5683, %v5605
      %v5734 = vmax.f32 %v5684, %v5608
      %v5735 = vmax.f32 %v5685, %v5613
      %v5736 = vmax.f32 %v5686, %v5616
      %v5737 = vmax.f32 %v5687, %v5621
      %v5738 = vmax.f32 %v5688, %v5624
      %v5739 = vmax.f32 %v5689, %v5629
      %v5740 = vmax.f32 %v5690, %v5632
      %v5741 = vmax.f32 %v5691, %v5637
      %v5742 = vmax.f32 %v5692, %v5640
      %5743 = vst [vmem:[#allocation2] sm:$0xff] %v5693
      %5744 = vst [vmem:[#allocation2 + $0x8] sm:$0xff] %v5694
      %5745 = vst [vmem:[#allocation2 + $0x10] sm:$0xff] %v5695
      %5746 = vst [vmem:[#allocation2 + $0x18] sm:$0xff] %v5696
      %5747 = vst [vmem:[#allocation2 + $0x20] sm:$0xff] %v5697
      %5748 = vst [vmem:[#allocation2 + $0x28] sm:$0xff] %v5698
      %5749 = vst [vmem:[#allocation2 + $0x30] sm:$0xff] %v5699
      %5750 = vst [vmem:[#allocation2 + $0x38] sm:$0xff] %v5700
      %5751 = vst [vmem:[#allocation2 + $0x40] sm:$0xff] %v5701
      %5752 = vst [vmem:[#allocation2 + $0x48] sm:$0xff] %v5702
      %5753 = vst [vmem:[#allocation2 + $0x50] sm:$0xff] %v5703
      %5754 = vst [vmem:[#allocation2 + $0x58] sm:$0xff] %v5704
      %5755 = vst [vmem:[#allocation2 + $0x60] sm:$0xff] %v5705
      %5756 = vst [vmem:[#allocation2 + $0x68] sm:$0xff] %v5706
      %5757 = vst [vmem:[#allocation2 + $0x70] sm:$0xff] %v5707
      %5758 = vst [vmem:[#allocation2 + $0x78] sm:$0xff] %v5708
      %5759 = vst [vmem:[#allocation2 + $0x80] sm:$0xff] %v5709
      %5760 = vst [vmem:[#allocation2 + $0x88] sm:$0xff] %v5710
      %5761 = vst [vmem:[#allocation2 + $0x90] sm:$0xff] %v5711
      %5762 = vst [vmem:[#allocation2 + $0x98] sm:$0xff] %v5712
      %5763 = vst [vmem:[#allocation2 + $0xa0] sm:$0xff] %v5713
      %5764 = vst [vmem:[#allocation2 + $0xa8] sm:$0xff] %v5714
      %5765 = vst [vmem:[#allocation2 + $0xb0] sm:$0xff] %v5715
      %5766 = vst [vmem:[#allocation2 + $0xb8] sm:$0xff] %v5716
      %5767 = vst [vmem:[#allocation2 + $0xc0] sm:$0xff] %v5717
      %5768 = vst [vmem:[#allocation2 + $0xc8] sm:$0xff] %v5718
      %5769 = vst [vmem:[#allocation2 + $0xd0] sm:$0xff] %v5719
      %5770 = vst [vmem:[#allocation2 + $0xd8] sm:$0xff] %v5720
      %5771 = vst [vmem:[#allocation2 + $0xe0] sm:$0xff] %v5721
      %5772 = vst [vmem:[#allocation2 + $0xe8] sm:$0xff] %v5722
      %5773 = vst [vmem:[#allocation2 + $0xf0] sm:$0xff] %v5723
      %5774 = vst [vmem:[#allocation2 + $0xf8] sm:$0xff] %v5724
      %5775 = vst [vmem:[#allocation2 + $0x100] sm:$0xff] %v5725
      %5776 = vst [vmem:[#allocation2 + $0x108] sm:$0xff] %v5726
      %5777 = vst [vmem:[#allocation2 + $0x110] sm:$0xff] %v5727
      %5778 = vst [vmem:[#allocation2 + $0x118] sm:$0xff] %v5728
      %5779 = vst [vmem:[#allocation2 + $0x120] sm:$0xff] %v5729
      %5780 = vst [vmem:[#allocation2 + $0x128] sm:$0xff] %v5730
      %5781 = vst [vmem:[#allocation2 + $0x130] sm:$0xff] %v5731
      %5782 = vst [vmem:[#allocation2 + $0x138] sm:$0xff] %v5732
      %5783 = vst [vmem:[#allocation2 + $0x140] sm:$0xff] %v5733
      %5784 = vst [vmem:[#allocation2 + $0x148] sm:$0xff] %v5734
      %5785 = vst [vmem:[#allocation2 + $0x150] sm:$0xff] %v5735
      %5786 = vst [vmem:[#allocation2 + $0x158] sm:$0xff] %v5736
      %5787 = vst [vmem:[#allocation2 + $0x160] sm:$0xff] %v5737
      %5788 = vst [vmem:[#allocation2 + $0x168] sm:$0xff] %v5738
      %5789 = vst [vmem:[#allocation2 + $0x170] sm:$0xff] %v5739
      %5790 = vst [vmem:[#allocation2 + $0x178] sm:$0xff] %v5740
      %5791 = vst [vmem:[#allocation2 + $0x180] sm:$0xff] %v5741
      %5792 = vst [vmem:[#allocation2 + $0x188] sm:$0xff] %v5742
      %v5793 = vld [vmem:[#allocation2] sm:$0xff]
      %v5794 = vld [vmem:[#allocation2 + $0x8] sm:$0xff]
      %v5795 = vld [vmem:[#allocation2 + $0x10] sm:$0xff]
      %v5796 = vld [vmem:[#allocation2 + $0x18] sm:$0xff]
      %v5797 = vld [vmem:[#allocation2 + $0x20] sm:$0xff]
      %v5798 = vld [vmem:[#allocation2 + $0x28] sm:$0xff]
      %v5799 = vld [vmem:[#allocation2 + $0x30] sm:$0xff]
      %v5800 = vld [vmem:[#allocation2 + $0x38] sm:$0xff]
      %v5801 = vld [vmem:[#allocation2 + $0x40] sm:$0xff]
      %v5802 = vld [vmem:[#allocation2 + $0x48] sm:$0xff]
      %v5803 = vld [vmem:[#allocation2 + $0x50] sm:$0xff]
      %v5804 = vld [vmem:[#allocation2 + $0x58] sm:$0xff]
      %v5805 = vld [vmem:[#allocation2 + $0x60] sm:$0xff]
      %v5806 = vld [vmem:[#allocation2 + $0x68] sm:$0xff]
      %v5807 = vld [vmem:[#allocation2 + $0x70] sm:$0xff]
      %v5808 = vld [vmem:[#allocation2 + $0x78] sm:$0xff]
      %v5809 = vld [vmem:[#allocation2 + $0x80] sm:$0xff]
      %v5810 = vld [vmem:[#allocation2 + $0x88] sm:$0xff]
      %v5811 = vld [vmem:[#allocation2 + $0x90] sm:$0xff]
      %v5812 = vld [vmem:[#allocation2 + $0x98] sm:$0xff]
      %v5813 = vld [vmem:[#allocation2 + $0xa0] sm:$0xff]
      %v5814 = vld [vmem:[#allocation2 + $0xa8] sm:$0xff]
      %v5815 = vld [vmem:[#allocation2 + $0xb0] sm:$0xff]
      %v5816 = vld [vmem:[#allocation2 + $0xb8] sm:$0xff]
      %v5817 = vld [vmem:[#allocation2 + $0xc0] sm:$0xff]
      %v5818 = vld [vmem:[#allocation2 + $0xc8] sm:$0xff]
      %v5819 = vld [vmem:[#allocation2 + $0xd0] sm:$0xff]
      %v5820 = vld [vmem:[#allocation2 + $0xd8] sm:$0xff]
      %v5821 = vld [vmem:[#allocation2 + $0xe0] sm:$0xff]
      %v5822 = vld [vmem:[#allocation2 + $0xe8] sm:$0xff]
      %v5823 = vld [vmem:[#allocation2 + $0xf0] sm:$0xff]
      %v5824 = vld [vmem:[#allocation2 + $0xf8] sm:$0xff]
      %v5825 = vld [vmem:[#allocation2 + $0x100] sm:$0xff]
      %v5826 = vld [vmem:[#allocation2 + $0x108] sm:$0xff]
      %v5827 = vld [vmem:[#allocation2 + $0x110] sm:$0xff]
      %v5828 = vld [vmem:[#allocation2 + $0x118] sm:$0xff]
      %v5829 = vld [vmem:[#allocation2 + $0x120] sm:$0xff]
      %v5830 = vld [vmem:[#allocation2 + $0x128] sm:$0xff]
      %v5831 = vld [vmem:[#allocation2 + $0x130] sm:$0xff]
      %v5832 = vld [vmem:[#allocation2 + $0x138] sm:$0xff]
      %v5833 = vld [vmem:[#allocation2 + $0x140] sm:$0xff]
      %v5834 = vld [vmem:[#allocation2 + $0x148] sm:$0xff]
      %v5835 = vld [vmem:[#allocation2 + $0x150] sm:$0xff]
      %v5836 = vld [vmem:[#allocation2 + $0x158] sm:$0xff]
      %v5837 = vld [vmem:[#allocation2 + $0x160] sm:$0xff]
      %v5838 = vld [vmem:[#allocation2 + $0x168] sm:$0xff]
      %v5839 = vld [vmem:[#allocation2 + $0x170] sm:$0xff]
      %v5840 = vld [vmem:[#allocation2 + $0x178] sm:$0xff]
      %v5841 = vld [vmem:[#allocation2 + $0x180] sm:$0xff]
      %v5842 = vld [vmem:[#allocation2 + $0x188] sm:$0xff]
      %v5843 = vmax.f32 %v5793, 0.0
      %v5844 = vmax.f32 %v5794, 0.0
      %v5845 = vmax.f32 %v5795, 0.0
      %v5846 = vmax.f32 %v5796, 0.0
      %v5847 = vmax.f32 %v5797, 0.0
      %v5848 = vmax.f32 %v5798, 0.0
      %v5849 = vmax.f32 %v5799, 0.0
      %v5850 = vmax.f32 %v5800, 0.0
      %v5851 = vmax.f32 %v5801, 0.0
      %v5852 = vmax.f32 %v5802, 0.0
      %v5853 = vmax.f32 %v5803, 0.0
      %v5854 = vmax.f32 %v5804, 0.0
      %v5855 = vmax.f32 %v5805, 0.0
      %v5856 = vmax.f32 %v5806, 0.0
      %v5857 = vmax.f32 %v5807, 0.0
      %v5858 = vmax.f32 %v5808, 0.0
      %v5859 = vmax.f32 %v5809, 0.0
      %v5860 = vmax.f32 %v5810, 0.0
      %v5861 = vmax.f32 %v5811, 0.0
      %v5862 = vmax.f32 %v5812, 0.0
      %v5863 = vmax.f32 %v5813, 0.0
      %v5864 = vmax.f32 %v5814, 0.0
      %v5865 = vmax.f32 %v5815, 0.0
      %v5866 = vmax.f32 %v5816, 0.0
      %v5867 = vmax.f32 %v5817, 0.0
      %v5868 = vmax.f32 %v5818, 0.0
      %v5869 = vmax.f32 %v5819, 0.0
      %v5870 = vmax.f32 %v5820, 0.0
      %v5871 = vmax.f32 %v5821, 0.0
      %v5872 = vmax.f32 %v5822, 0.0
      %v5873 = vmax.f32 %v5823, 0.0
      %v5874 = vmax.f32 %v5824, 0.0
      %v5875 = vmax.f32 %v5825, 0.0
      %v5876 = vmax.f32 %v5826, 0.0
      %v5877 = vmax.f32 %v5827, 0.0
      %v5878 = vmax.f32 %v5828, 0.0
      %v5879 = vmax.f32 %v5829, 0.0
      %v5880 = vmax.f32 %v5830, 0.0
      %v5881 = vmax.f32 %v5831, 0.0
      %v5882 = vmax.f32 %v5832, 0.0
      %v5883 = vmax.f32 %v5833, 0.0
      %v5884 = vmax.f32 %v5834, 0.0
      %v5885 = vmax.f32 %v5835, 0.0
      %v5886 = vmax.f32 %v5836, 0.0
      %v5887 = vmax.f32 %v5837, 0.0
      %v5888 = vmax.f32 %v5838, 0.0
      %v5889 = vmax.f32 %v5839, 0.0
      %v5890 = vmax.f32 %v5840, 0.0
      %v5891 = vmax.f32 %v5841, 0.0
      %v5892 = vmax.f32 %v5842, 0.0
      %5893 = vst [vmem:[%s170] sm:$0xff] %v5843
      %5894 = vst [vmem:[%s170 + $0x8] sm:$0xff] %v5844
      %5895 = vst [vmem:[%s170 + $0x10] sm:$0xff] %v5845
      %5896 = vst [vmem:[%s170 + $0x18] sm:$0xff] %v5846
      %5897 = vst [vmem:[%s170 + $0x20] sm:$0xff] %v5847
      %5898 = vst [vmem:[%s170 + $0x28] sm:$0xff] %v5848
      %5899 = vst [vmem:[%s170 + $0x30] sm:$0xff] %v5849
      %5900 = vst [vmem:[%s170 + $0x38] sm:$0xff] %v5850
      %5901 = vst [vmem:[%s170 + $0x40] sm:$0xff] %v5851
      %5902 = vst [vmem:[%s170 + $0x48] sm:$0xff] %v5852
      %5903 = vst [vmem:[%s170 + $0x50] sm:$0xff] %v5853
      %5904 = vst [vmem:[%s170 + $0x58] sm:$0xff] %v5854
      %5905 = vst [vmem:[%s170 + $0x60] sm:$0xff] %v5855
      %5906 = vst [vmem:[%s170 + $0x68] sm:$0xff] %v5856
      %5907 = vst [vmem:[%s170 + $0x70] sm:$0xff] %v5857
      %5908 = vst [vmem:[%s170 + $0x78] sm:$0xff] %v5858
      %5909 = vst [vmem:[%s170 + $0x80] sm:$0xff] %v5859
      %5910 = vst [vmem:[%s170 + $0x88] sm:$0xff] %v5860
      %5911 = vst [vmem:[%s170 + $0x90] sm:$0xff] %v5861
      %5912 = vst [vmem:[%s170 + $0x98] sm:$0xff] %v5862
      %5913 = vst [vmem:[%s170 + $0xa0] sm:$0xff] %v5863
      %5914 = vst [vmem:[%s170 + $0xa8] sm:$0xff] %v5864
      %5915 = vst [vmem:[%s170 + $0xb0] sm:$0xff] %v5865
      %5916 = vst [vmem:[%s170 + $0xb8] sm:$0xff] %v5866
      %5917 = vst [vmem:[%s170 + $0xc0] sm:$0xff] %v5867
      %5918 = vst [vmem:[%s170 + $0xc8] sm:$0xff] %v5868
      %5919 = vst [vmem:[%s170 + $0xd0] sm:$0xff] %v5869
      %5920 = vst [vmem:[%s170 + $0xd8] sm:$0xff] %v5870
      %5921 = vst [vmem:[%s170 + $0xe0] sm:$0xff] %v5871
      %5922 = vst [vmem:[%s170 + $0xe8] sm:$0xff] %v5872
      %5923 = vst [vmem:[%s170 + $0xf0] sm:$0xff] %v5873
      %5924 = vst [vmem:[%s170 + $0xf8] sm:$0xff] %v5874
      %5925 = vst [vmem:[%s170 + $0x100] sm:$0xff] %v5875
      %5926 = vst [vmem:[%s170 + $0x108] sm:$0xff] %v5876
      %5927 = vst [vmem:[%s170 + $0x110] sm:$0xff] %v5877
      %5928 = vst [vmem:[%s170 + $0x118] sm:$0xff] %v5878
      %5929 = vst [vmem:[%s170 + $0x120] sm:$0xff] %v5879
      %5930 = vst [vmem:[%s170 + $0x128] sm:$0xff] %v5880
      %5931 = vst [vmem:[%s170 + $0x130] sm:$0xff] %v5881
      %5932 = vst [vmem:[%s170 + $0x138] sm:$0xff] %v5882
      %5933 = vst [vmem:[%s170 + $0x140] sm:$0xff] %v5883
      %5934 = vst [vmem:[%s170 + $0x148] sm:$0xff] %v5884
      %5935 = vst [vmem:[%s170 + $0x150] sm:$0xff] %v5885
      %5936 = vst [vmem:[%s170 + $0x158] sm:$0xff] %v5886
      %5937 = vst [vmem:[%s170 + $0x160] sm:$0xff] %v5887
      %5938 = vst [vmem:[%s170 + $0x168] sm:$0xff] %v5888
      %5939 = vst [vmem:[%s170 + $0x170] sm:$0xff] %v5889
      %5940 = vst [vmem:[%s170 + $0x178] sm:$0xff] %v5890
      %5941 = vst [vmem:[%s170 + $0x180] sm:$0xff] %v5891
      %5942 = vst [vmem:[%s170 + $0x188] sm:$0xff] %v5892
      %p5943 = scmp.lt.s32.totalorder %s14, 1
      %s5944 = scalar_select %p5943, %s14, 1
      %s5945 = smul.addr %s5944, 50
      %s5946 = smul.addr %s5945, 8
      %s5947 = scalar_lea.vmem %s3, %s5946
      // Predicated region
      $region33: #{simple_net_forward.3} parent=31 // pred_check
        %p5948 = pneg %p100
      $region34: #{simple_net_forward.3} parent=31 // pred_check_branch
        %5950 = sbr.rel (%p5948) target = $region36
      $region35: #{simple_net_forward.3} parent=31 // pred_region
        _
      $region36: #{simple_net_forward.3} parent=31 // pred_fallthru
        _
    $region32: #{simple_net_forward.3} parent=5 // pred_fallthru
      _
    %p5951 = scmp.le.s32.totalorder 2, %s9
    // Predicated region
    $region37: #{simple_net_forward.3} parent=5 // pred_check
      %p5952 = pneg %p5951
    $region38: #{simple_net_forward.3} parent=5 // pred_check_branch
      %5954 = sbr.rel (%p5952) target = $region40
    $region39: #{simple_net_forward.3} parent=5 // pred_region
      %s5955 = ssub.s32 %s9, 2
      // Predicated region
      $region41: #{simple_net_forward.3} parent=39 // pred_check
        %p5956 = pneg %p106
      $region42: #{simple_net_forward.3} parent=39 // pred_check_branch
        %5958 = sbr.rel (%p5956) target = $region44
      $region43: #{simple_net_forward.3} parent=39 // pred_region
        %p5959 = scmp.lt.s32.totalorder %s15, 1
        %s5960 = scalar_select %p5959, %s15, 1
        %s5961 = smul.addr %s5960, 50
        %s5962 = smul.addr %s5961, 8
        %s5963 = scalar_lea.vmem %s3, %s5962
      $region44: #{simple_net_forward.3} parent=39 // pred_fallthru
        _
    $region40: #{simple_net_forward.3} parent=5 // pred_fallthru
      _
  $region6: #{simple_net_forward.3} parent=0 // loop_footer
    %s13 = sadd.s32 1, %s9
  $region7: #{simple_net_forward.3} parent=0 // loop_footer_branch
    %8 = sbr.rel target = $region3
  $region8: #{simple_net_forward.3} parent=0 // loop_exit
    _

// kernel: simple_net_forward.4
$region0: #{simple_net_forward.4}
  #allocation0 [shape = 'u32[]', space=smem, size = 0x4, offset = 0x4, fixed_abs, tag = 'smem constant byte address 0x4 - core index']
  #allocation1 [shape = 'u32[144,128]{1,0:T(1,128)}', space=vmem, size = 0x12000, scoped, tag = 'internal scratch']
  #allocation2 [shape = 'f32[32,128]{1,0:T(8,128)}', space=vmem, size = 0x4000, scoped, tag = 'scratch operand']
  %s0 = inlined_call_operand.vmem [shape: bf16[2,512,256], index: 0, kind: input, shape index: {}]
  %s1 = inlined_call_operand.vmem [shape: bf16[256,128], index: 1, kind: input, shape index: {}]
  %s2 = inlined_call_operand.vmem [shape: f32[1,128], index: 2, kind: input, shape index: {}]
  %s3 = inlined_call_operand.vmem [shape: f32[2,32,128], index: 3, kind: output, shape index: {}]
  %s4 = sld [smem:[#allocation0]]
  $region45: #{simple_net_forward.4} parent=0
    _
  %s6 = ssub.s32 1, %s4
  %s7 = scalar_select 0, %s6, %s4
  loop: start=0, step=1, limit=4
  $region2: #{simple_net_forward.4} parent=0 // loop_pre_header
    _
  $region3: #{simple_net_forward.4} parent=0 // loop_header
    %s9 = sphi 0, %s13
    %p10 = scmp.ge.s32.totalorder %s9, 4
    %s19 = sphi 0, %s21
    %s22 = sphi 0, %s19
    %s23 = sphi 0, %s22
    %s39 = sphi 0, %s23
    %s43 = sphi 0, %s43
    %s45 = sphi 0, %s43
    %s46 = sphi 0, %s45
    %s60 = sphi 0, %s46
    %s64 = sphi 0, %s64
    %s66 = sphi 0, %s64
    %s67 = sphi 0, %s66
    %s81 = sphi 0, %s67
    %s87 = sphi 0, %s89
    %s90 = sphi 0, %s87
    %s91 = sphi 0, %s90
    %s107 = sphi 0, %s91
  $region4: #{simple_net_forward.4} parent=0 // loop_header_branch
    %12 = sbr.rel (%p10) target = $region8
  $region5: #{simple_net_forward.4} parent=0 // loop_body
    %s14 = ssub.s32 %s9, 1
    %s15 = ssub.s32 %s9, 2
    %s16 = sadd.s32 %s9, 1
    %s17 = ssub.s32 %s9, %s16
    %p18 = scmp.eq.s32.totalorder %s17, 0
    %s20 = sadd.s32 %s19, 1
    %s21 = scalar_select %p18, %s19, %s20
    %p24 = pneg %p18
    %p25 = scmp.eq.s32.totalorder %s9, 1
    %p26 = por %p24, %p25
    %p27 = scmp.ne.s32.totalorder %s19, %s22
    %p28 = scmp.eq.s32.totalorder %s9, 0
    %p29 = por %p27, %p28
    %p30 = scmp.ne.s32.totalorder %s19, %s22
    %p31 = scmp.eq.s32.totalorder %s14, 1
    %p32 = por %p30, %p31
    %p33 = scmp.ne.s32.totalorder %s22, %s23
    %p34 = scmp.eq.s32.totalorder %s14, 0
    %p35 = por %p33, %p34
    %p36 = scmp.ne.s32.totalorder %s22, %s23
    %p37 = scmp.eq.s32.totalorder %s15, 1
    %p38 = por %p36, %p37
    %p40 = scmp.ne.s32.totalorder %s23, %s39
    %p41 = scmp.eq.s32.totalorder %s15, 0
    %p42 = por %p40, %p41
    %s44 = sadd.s32 %s43, 1
    %p47 = scmp.eq.s32.totalorder %s9, 1
    %p48 = scmp.ne.s32.totalorder %s43, %s45
    %p49 = scmp.eq.s32.totalorder %s9, 0
    %p50 = por %p48, %p49
    %p51 = scmp.ne.s32.totalorder %s43, %s45
    %p52 = scmp.eq.s32.totalorder %s14, 1
    %p53 = por %p51, %p52
    %p54 = scmp.ne.s32.totalorder %s45, %s46
    %p55 = scmp.eq.s32.totalorder %s14, 0
    %p56 = por %p54, %p55
    %p57 = scmp.ne.s32.totalorder %s45, %s46
    %p58 = scmp.eq.s32.totalorder %s15, 1
    %p59 = por %p57, %p58
    %p61 = scmp.ne.s32.totalorder %s46, %s60
    %p62 = scmp.eq.s32.totalorder %s15, 0
    %p63 = por %p61, %p62
    %s65 = sadd.s32 %s64, 1
    %p68 = scmp.eq.s32.totalorder %s9, 1
    %p69 = scmp.ne.s32.totalorder %s64, %s66
    %p70 = scmp.eq.s32.totalorder %s9, 0
    %p71 = por %p69, %p70
    %p72 = scmp.ne.s32.totalorder %s64, %s66
    %p73 = scmp.eq.s32.totalorder %s14, 1
    %p74 = por %p72, %p73
    %p75 = scmp.ne.s32.totalorder %s66, %s67
    %p76 = scmp.eq.s32.totalorder %s14, 0
    %p77 = por %p75, %p76
    %p78 = scmp.ne.s32.totalorder %s66, %s67
    %p79 = scmp.eq.s32.totalorder %s15, 1
    %p80 = por %p78, %p79
    %p82 = scmp.ne.s32.totalorder %s67, %s81
    %p83 = scmp.eq.s32.totalorder %s15, 0
    %p84 = por %p82, %p83
    %s85 = ssub.s32 %s9, %s16
    %p86 = scmp.eq.s32.totalorder %s85, 0
    %s88 = sadd.s32 %s87, 1
    %s89 = scalar_select %p86, %s87, %s88
    %p92 = pneg %p86
    %p93 = scmp.eq.s32.totalorder %s9, 1
    %p94 = por %p92, %p93
    %p95 = scmp.ne.s32.totalorder %s87, %s90
    %p96 = scmp.eq.s32.totalorder %s9, 0
    %p97 = por %p95, %p96
    %p98 = scmp.ne.s32.totalorder %s87, %s90
    %p99 = scmp.eq.s32.totalorder %s14, 1
    %p100 = por %p98, %p99
    %p101 = scmp.ne.s32.totalorder %s90, %s91
    %p102 = scmp.eq.s32.totalorder %s14, 0
    %p103 = por %p101, %p102
    %p104 = scmp.ne.s32.totalorder %s90, %s91
    %p105 = scmp.eq.s32.totalorder %s15, 1
    %p106 = por %p104, %p105
    %p108 = scmp.ne.s32.totalorder %s91, %s107
    %p109 = scmp.eq.s32.totalorder %s15, 0
    %p110 = por %p108, %p109
    %p111 = scmp.le.s32.totalorder 1, %s9
    %p112 = scmp.lt.s32.totalorder %s9, 3
    %p113 = pnand %p111, %p112
    %p114 = pneg %p113
    // Predicated region
    $region9: #{simple_net_forward.4} parent=5 // pred_check
      _
    $region10: #{simple_net_forward.4} parent=5 // pred_check_branch
      %116 = sbr.rel (%p113) target = $region12
    $region11: #{simple_net_forward.4} parent=5 // pred_region
      %s117 = ssub.s32 %s9, 1
      // Predicated region
      $region13: #{simple_net_forward.4} parent=11 // pred_check
        %p118 = pneg %p56
      $region14: #{simple_net_forward.4} parent=11 // pred_check_branch
        %120 = sbr.rel (%p118) target = $region16
      $region15: #{simple_net_forward.4} parent=11 // pred_region
        _
      $region16: #{simple_net_forward.4} parent=11 // pred_fallthru
        _
      // Predicated region
      $region17: #{simple_net_forward.4} parent=11 // pred_check
        %p121 = pneg %p77
      $region18: #{simple_net_forward.4} parent=11 // pred_check_branch
        %123 = sbr.rel (%p121) target = $region20
      $region19: #{simple_net_forward.4} parent=11 // pred_region
        _
      $region20: #{simple_net_forward.4} parent=11 // pred_fallthru
        _
    $region12: #{simple_net_forward.4} parent=5 // pred_fallthru
      _
    %p124 = scmp.lt.s32.totalorder %s9, 2
    // Predicated region
    $region21: #{simple_net_forward.4} parent=5 // pred_check
      %p125 = pneg %p124
    $region22: #{simple_net_forward.4} parent=5 // pred_check_branch
      %127 = sbr.rel (%p125) target = $region24
    $region23: #{simple_net_forward.4} parent=5 // pred_region
      // Predicated region
      $region25: #{simple_net_forward.4} parent=23 // pred_check
        %p128 = pneg %p29
      $region26: #{simple_net_forward.4} parent=23 // pred_check_branch
        %130 = sbr.rel (%p128) target = $region28
      $region27: #{simple_net_forward.4} parent=23 // pred_region
        %p131 = scmp.lt.s32.totalorder %s9, 1
        %s132 = scalar_select %p131, %s9, 1
        %s133 = smul.addr %s132, 128
        %s134 = smul.addr %s133, 4
        %s135 = scalar_lea.vmem %s0, %s134
      $region28: #{simple_net_forward.4} parent=23 // pred_fallthru
        _
    $region24: #{simple_net_forward.4} parent=5 // pred_fallthru
      _
    %p136 = scmp.le.s32.totalorder 1, %s9
    %p137 = scmp.lt.s32.totalorder %s9, 3
    %p138 = pnand %p136, %p137
    %p139 = pneg %p138
    // Predicated region
    $region29: #{simple_net_forward.4} parent=5 // pred_check
      _
    $region30: #{simple_net_forward.4} parent=5 // pred_check_branch
      %141 = sbr.rel (%p138) target = $region32
    $region31: #{simple_net_forward.4} parent=5 // pred_region
      %s142 = ssub.s32 %s9, 1
      %p143 = scmp.lt.s32.totalorder %s14, 1
      %s144 = scalar_select %p143, %s14, 1
      %s145 = smul.addr %s144, 128
      %s146 = smul.addr %s145, 4
      %s147 = scalar_lea.vmem %s0, %s146
      %p148 = pneg %p35
      %p149 = pneg %p32
      %p150 = pneg %p56
      %p151 = pneg %p53
      %p152 = pneg %p77
      %p153 = pneg %p74
      %p154 = pneg %p103
      %p155 = pneg %p100
      %p156 = scmp.lt.s32.totalorder %s14, 1
      %s157 = scalar_select %p156, %s14, 1
      %s158 = smul.addr %s157, 4
      %s159 = smul.addr %s158, 8
      %s160 = scalar_lea.vmem %s3, %s159
      %p161 = scmp.lt.s32.totalorder %s14, 1
      %s162 = scalar_select %p161, %s14, 1
      %s163 = smul.addr %s162, 128
      %s164 = smul.addr %s163, 4
      %s165 = scalar_lea.vmem %s0, %s164
      %p166 = scmp.lt.s32.totalorder %s14, 1
      %s167 = scalar_select %p166, %s14, 1
      %s168 = smul.addr %s167, 4
      %s169 = smul.addr %s168, 8
      %s170 = scalar_lea.vmem %s3, %s169
      %v172 = vld [vmem:[%s1] sm:$0xf]
      %v173 = vld [vmem:[%s1 + $0x4] sm:$0xf]
      %v174 = vld [vmem:[%s1 + $0x8] sm:$0xf]
      %v175 = vld [vmem:[%s1 + $0xc] sm:$0xf]
      %v176 = vld [vmem:[%s1 + $0x10] sm:$0xf]
      %v177 = vld [vmem:[%s1 + $0x14] sm:$0xf]
      %v178 = vld [vmem:[%s1 + $0x18] sm:$0xf]
      %v179 = vld [vmem:[%s1 + $0x1c] sm:$0xf]
      %v180 = vld [vmem:[%s1 + $0x20] sm:$0xf]
      %v181 = vld [vmem:[%s1 + $0x24] sm:$0xf]
      %v182 = vld [vmem:[%s1 + $0x28] sm:$0xf]
      %v183 = vld [vmem:[%s1 + $0x2c] sm:$0xf]
      %v184 = vld [vmem:[%s1 + $0x30] sm:$0xf]
      %v185 = vld [vmem:[%s1 + $0x34] sm:$0xf]
      %v186 = vld [vmem:[%s1 + $0x38] sm:$0xf]
      %v187 = vld [vmem:[%s1 + $0x3c] sm:$0xf]
      %v188 = vld [vmem:[%s1 + $0x40] sm:$0xf]
      %v189 = vld [vmem:[%s1 + $0x44] sm:$0xf]
      %v190 = vld [vmem:[%s1 + $0x48] sm:$0xf]
      %v191 = vld [vmem:[%s1 + $0x4c] sm:$0xf]
      %v192 = vld [vmem:[%s1 + $0x50] sm:$0xf]
      %v193 = vld [vmem:[%s1 + $0x54] sm:$0xf]
      %v194 = vld [vmem:[%s1 + $0x58] sm:$0xf]
      %v195 = vld [vmem:[%s1 + $0x5c] sm:$0xf]
      %v196 = vld [vmem:[%s1 + $0x60] sm:$0xf]
      %v197 = vld [vmem:[%s1 + $0x64] sm:$0xf]
      %v198 = vld [vmem:[%s1 + $0x68] sm:$0xf]
      %v199 = vld [vmem:[%s1 + $0x6c] sm:$0xf]
      %v200 = vld [vmem:[%s1 + $0x70] sm:$0xf]
      %v201 = vld [vmem:[%s1 + $0x74] sm:$0xf]
      %v202 = vld [vmem:[%s1 + $0x78] sm:$0xf]
      %v203 = vld [vmem:[%s1 + $0x7c] sm:$0xf]
      %v204 = vld [vmem:[%s2] sm:$0x1]
      %v205 = vld [vmem:[%s165] sm:$0xff]
      %v206 = vld [vmem:[%s165 + $0x8] sm:$0xff]
      %v207 = vld [vmem:[%s165 + $0x10] sm:$0xff]
      %v208 = vld [vmem:[%s165 + $0x18] sm:$0xff]
      %v210 = vlaneseq
      %v211 = vshrl.u32 %v210, 7
      %v212 = vsub.s32 0, %v211
      %v213 = vrot.slane %v204, %v212
      %v219 = vunpack.c.l.b16 %v205
      %v220 = vunpack.c.h.b16 %v205
      %v221 = vunpack.c.l.b16 %v206
      %v222 = vunpack.c.h.b16 %v206
      %v223 = vunpack.c.l.b16 %v207
      %v224 = vunpack.c.h.b16 %v207
      %v225 = vunpack.c.l.b16 %v208
      %v226 = vunpack.c.h.b16 %v208
      %v227 = vpack.c.b16 %v221, %v219
      %v228 = vpack.c.b16 %v222, %v220
      %v229 = vpack.c.b16 %v225, %v223
      %v230 = vpack.c.b16 %v226, %v224
      %v267 = vunpack.c.l.b16 %v172
      %v268 = vunpack.c.l.b16 %v173
      %v269 = vunpack.c.l.b16 %v174
      %v270 = vunpack.c.l.b16 %v175
      %v271 = vunpack.c.l.b16 %v176
      %v272 = vunpack.c.l.b16 %v177
      %v273 = vunpack.c.l.b16 %v178
      %v274 = vunpack.c.l.b16 %v179
      %v275 = vunpack.c.l.b16 %v180
      %v276 = vunpack.c.l.b16 %v181
      %v277 = vunpack.c.l.b16 %v182
      %v278 = vunpack.c.l.b16 %v183
      %v279 = vunpack.c.l.b16 %v184
      %v280 = vunpack.c.l.b16 %v185
      %v281 = vunpack.c.l.b16 %v186
      %v282 = vunpack.c.l.b16 %v187
      %v283 = vunpack.c.l.b16 %v188
      %v284 = vunpack.c.l.b16 %v189
      %v285 = vunpack.c.l.b16 %v190
      %v286 = vunpack.c.l.b16 %v191
      %v287 = vunpack.c.l.b16 %v192
      %v288 = vunpack.c.l.b16 %v193
      %v289 = vunpack.c.l.b16 %v194
      %v290 = vunpack.c.l.b16 %v195
      %v291 = vunpack.c.l.b16 %v196
      %v292 = vunpack.c.l.b16 %v197
      %v293 = vunpack.c.l.b16 %v198
      %v294 = vunpack.c.l.b16 %v199
      %v295 = vunpack.c.l.b16 %v200
      %v296 = vunpack.c.l.b16 %v201
      %v297 = vunpack.c.l.b16 %v202
      %v298 = vunpack.c.l.b16 %v203
      %v299 = vpack.c.b16 %v268, %v267
      %v300 = vpack.c.b16 %v270, %v269
      %v301 = vpack.c.b16 %v272, %v271
      %v302 = vpack.c.b16 %v274, %v273
      %v303 = vpack.c.b16 %v276, %v275
      %v304 = vpack.c.b16 %v278, %v277
      %v305 = vpack.c.b16 %v280, %v279
      %v306 = vpack.c.b16 %v282, %v281
      %v307 = vpack.c.b16 %v284, %v283
      %v308 = vpack.c.b16 %v286, %v285
      %v309 = vpack.c.b16 %v288, %v287
      %v310 = vpack.c.b16 %v290, %v289
      %v311 = vpack.c.b16 %v292, %v291
      %v312 = vpack.c.b16 %v294, %v293
      %v313 = vpack.c.b16 %v296, %v295
      %v314 = vpack.c.b16 %v298, %v297
      %331 = vmatprep.subr.bf16.mxu0 0
      %332 = vmatpush1.bf16.msra.mxu0 %v299
      %333 = vmatprep.subr.bf16.mxu0 0
      %334 = vmatpush1.bf16.msra.mxu0 %v300
      %335 = vmatprep.subr.bf16.mxu0 0
      %336 = vmatpush1.bf16.msra.mxu0 %v301
      %337 = vmatprep.subr.bf16.mxu0 0
      %338 = vmatpush1.bf16.msra.mxu0 %v302
      %339 = vmatprep.subr.bf16.mxu0 0
      %340 = vmatpush1.bf16.msra.mxu0 %v303
      %341 = vmatprep.subr.bf16.mxu0 0
      %342 = vmatpush1.bf16.msra.mxu0 %v304
      %343 = vmatprep.subr.bf16.mxu0 0
      %344 = vmatpush1.bf16.msra.mxu0 %v305
      %345 = vmatprep.subr.bf16.mxu0 0
      %346 = vmatpush1.bf16.msra.mxu0 %v306
      %347 = vmatprep.subr.bf16.mxu0 0
      %348 = vmatpush1.bf16.msra.mxu0 %v307
      %349 = vmatprep.subr.bf16.mxu0 0
      %350 = vmatpush1.bf16.msra.mxu0 %v308
      %351 = vmatprep.subr.bf16.mxu0 0
      %352 = vmatpush1.bf16.msra.mxu0 %v309
      %353 = vmatprep.subr.bf16.mxu0 0
      %354 = vmatpush1.bf16.msra.mxu0 %v310
      %355 = vmatprep.subr.bf16.mxu0 0
      %356 = vmatpush1.bf16.msra.mxu0 %v311
      %357 = vmatprep.subr.bf16.mxu0 0
      %358 = vmatpush1.bf16.msra.mxu0 %v312
      %359 = vmatprep.subr.bf16.mxu0 0
      %360 = vmatpush1.bf16.msra.mxu0 %v313
      %361 = vmatprep.subr.bf16.mxu0 0
      %362 = vmatpush1.bf16.msra.mxu0 %v314
      %363 = vmatprep.mubr.bf16.mxu0 %v228
      %364 = vmatmul.mubr.bf16.gmra.mrb[0].mxu0 %v227
      %v365 = vpop.f32.mrb[0].mxu0
      %v366 = vadd.f32 %v213, %v365
      %v367 = vpop.f32.mrb[0].mxu0
      %v368 = vpop.f32.mrb[0].mxu0
      %v369 = vadd.f32 %v213, %v368
      %v370 = vpop.f32.mrb[0].mxu0
      %371 = vmatprep.mubr.bf16.mxu0 %v230
      %372 = vmatmul.mubr.bf16.gmra.mrb[0].mxu0 %v229
      %v373 = vpop.f32.mrb[0].mxu0
      %v374 = vadd.f32 %v213, %v373
      %v375 = vpop.f32.mrb[0].mxu0
      %v376 = vpop.f32.mrb[0].mxu0
      %v377 = vadd.f32 %v213, %v376
      %v378 = vpop.f32.mrb[0].mxu0
      %379 = vdwg.mxu0
      %380 = vst [vmem:[#allocation2] sm:$0xff] %v366
      %381 = vst [vmem:[#allocation2 + $0x8] sm:$0xff] %v369
      %382 = vst [vmem:[#allocation2 + $0x10] sm:$0xff] %v374
      %383 = vst [vmem:[#allocation2 + $0x18] sm:$0xff] %v377
      %v384 = vld [vmem:[%s165 + $0x20] sm:$0xff]
      %v385 = vld [vmem:[%s165 + $0x28] sm:$0xff]
      %v386 = vld [vmem:[%s165 + $0x30] sm:$0xff]
      %v387 = vld [vmem:[%s165 + $0x38] sm:$0xff]
      %v392 = vunpack.c.l.b16 %v384
      %v393 = vunpack.c.h.b16 %v384
      %v394 = vunpack.c.l.b16 %v385
      %v395 = vunpack.c.h.b16 %v385
      %v396 = vunpack.c.l.b16 %v386
      %v397 = vunpack.c.h.b16 %v386
      %v398 = vunpack.c.l.b16 %v387
      %v399 = vunpack.c.h.b16 %v387
      %v400 = vpack.c.b16 %v394, %v392
      %v401 = vpack.c.b16 %v395, %v393
      %v402 = vpack.c.b16 %v398, %v396
      %v403 = vpack.c.b16 %v399, %v397
      %408 = vmatprep.subr.bf16.mxu0 0
      %409 = vmatpush1.bf16.msra.mxu0 %v299
      %410 = vmatprep.subr.bf16.mxu0 0
      %411 = vmatpush1.bf16.msra.mxu0 %v300
      %412 = vmatprep.subr.bf16.mxu0 0
      %413 = vmatpush1.bf16.msra.mxu0 %v301
      %414 = vmatprep.subr.bf16.mxu0 0
      %415 = vmatpush1.bf16.msra.mxu0 %v302
      %416 = vmatprep.subr.bf16.mxu0 0
      %417 = vmatpush1.bf16.msra.mxu0 %v303
      %418 = vmatprep.subr.bf16.mxu0 0
      %419 = vmatpush1.bf16.msra.mxu0 %v304
      %420 = vmatprep.subr.bf16.mxu0 0
      %421 = vmatpush1.bf16.msra.mxu0 %v305
      %422 = vmatprep.subr.bf16.mxu0 0
      %423 = vmatpush1.bf16.msra.mxu0 %v306
      %424 = vmatprep.subr.bf16.mxu0 0
      %425 = vmatpush1.bf16.msra.mxu0 %v307
      %426 = vmatprep.subr.bf16.mxu0 0
      %427 = vmatpush1.bf16.msra.mxu0 %v308
      %428 = vmatprep.subr.bf16.mxu0 0
      %429 = vmatpush1.bf16.msra.mxu0 %v309
      %430 = vmatprep.subr.bf16.mxu0 0
      %431 = vmatpush1.bf16.msra.mxu0 %v310
      %432 = vmatprep.subr.bf16.mxu0 0
      %433 = vmatpush1.bf16.msra.mxu0 %v311
      %434 = vmatprep.subr.bf16.mxu0 0
      %435 = vmatpush1.bf16.msra.mxu0 %v312
      %436 = vmatprep.subr.bf16.mxu0 0
      %437 = vmatpush1.bf16.msra.mxu0 %v313
      %438 = vmatprep.subr.bf16.mxu0 0
      %439 = vmatpush1.bf16.msra.mxu0 %v314
      %440 = vmatprep.mubr.bf16.mxu0 %v401
      %441 = vmatmul.mubr.bf16.gmra.mrb[0].mxu0 %v400
      %v442 = vpop.f32.mrb[0].mxu0
      %v443 = vadd.f32 %v213, %v442
      %v444 = vpop.f32.mrb[0].mxu0
      %v445 = vpop.f32.mrb[0].mxu0
      %v446 = vadd.f32 %v213, %v445
      %v447 = vpop.f32.mrb[0].mxu0
      %448 = vmatprep.mubr.bf16.mxu0 %v403
      %449 = vmatmul.mubr.bf16.gmra.mrb[0].mxu0 %v402
      %v450 = vpop.f32.mrb[0].mxu0
      %v451 = vadd.f32 %v213, %v450
      %v452 = vpop.f32.mrb[0].mxu0
      %v453 = vpop.f32.mrb[0].mxu0
      %v454 = vadd.f32 %v213, %v453
      %v455 = vpop.f32.mrb[0].mxu0
      %456 = vdwg.mxu0
      %v457 = vld [vmem:[#allocation2] sm:$0xff]
      %v458 = vld [vmem:[#allocation2 + $0x8] sm:$0xff]
      %v459 = vld [vmem:[#allocation2 + $0x10] sm:$0xff]
      %v460 = vld [vmem:[#allocation2 + $0x18] sm:$0xff]
      %v461 = vmax.f32 %v457, %v443
      %v462 = vmax.f32 %v458, %v446
      %v463 = vmax.f32 %v459, %v451
      %v464 = vmax.f32 %v460, %v454
      %465 = vst [vmem:[#allocation2] sm:$0xff] %v461
      %466 = vst [vmem:[#allocation2 + $0x8] sm:$0xff] %v462
      %467 = vst [vmem:[#allocation2 + $0x10] sm:$0xff] %v463
      %468 = vst [vmem:[#allocation2 + $0x18] sm:$0xff] %v464
      %v469 = vld [vmem:[%s165 + $0x40] sm:$0xff]
      %v470 = vld [vmem:[%s165 + $0x48] sm:$0xff]
      %v471 = vld [vmem:[%s165 + $0x50] sm:$0xff]
      %v472 = vld [vmem:[%s165 + $0x58] sm:$0xff]
      %v477 = vunpack.c.l.b16 %v469
      %v478 = vunpack.c.h.b16 %v469
      %v479 = vunpack.c.l.b16 %v470
      %v480 = vunpack.c.h.b16 %v470
      %v481 = vunpack.c.l.b16 %v471
      %v482 = vunpack.c.h.b16 %v471
      %v483 = vunpack.c.l.b16 %v472
      %v484 = vunpack.c.h.b16 %v472
      %v485 = vpack.c.b16 %v479, %v477
      %v486 = vpack.c.b16 %v480, %v478
      %v487 = vpack.c.b16 %v483, %v481
      %v488 = vpack.c.b16 %v484, %v482
      %493 = vmatprep.subr.bf16.mxu0 0
      %494 = vmatpush1.bf16.msra.mxu0 %v299
      %495 = vmatprep.subr.bf16.mxu0 0
      %496 = vmatpush1.bf16.msra.mxu0 %v300
      %497 = vmatprep.subr.bf16.mxu0 0
      %498 = vmatpush1.bf16.msra.mxu0 %v301
      %499 = vmatprep.subr.bf16.mxu0 0
      %500 = vmatpush1.bf16.msra.mxu0 %v302
      %501 = vmatprep.subr.bf16.mxu0 0
      %502 = vmatpush1.bf16.msra.mxu0 %v303
      %503 = vmatprep.subr.bf16.mxu0 0
      %504 = vmatpush1.bf16.msra.mxu0 %v304
      %505 = vmatprep.subr.bf16.mxu0 0
      %506 = vmatpush1.bf16.msra.mxu0 %v305
      %507 = vmatprep.subr.bf16.mxu0 0
      %508 = vmatpush1.bf16.msra.mxu0 %v306
      %509 = vmatprep.subr.bf16.mxu0 0
      %510 = vmatpush1.bf16.msra.mxu0 %v307
      %511 = vmatprep.subr.bf16.mxu0 0
      %512 = vmatpush1.bf16.msra.mxu0 %v308
      %513 = vmatprep.subr.bf16.mxu0 0
      %514 = vmatpush1.bf16.msra.mxu0 %v309
      %515 = vmatprep.subr.bf16.mxu0 0
      %516 = vmatpush1.bf16.msra.mxu0 %v310
      %517 = vmatprep.subr.bf16.mxu0 0
      %518 = vmatpush1.bf16.msra.mxu0 %v311
      %519 = vmatprep.subr.bf16.mxu0 0
      %520 = vmatpush1.bf16.msra.mxu0 %v312
      %521 = vmatprep.subr.bf16.mxu0 0
      %522 = vmatpush1.bf16.msra.mxu0 %v313
      %523 = vmatprep.subr.bf16.mxu0 0
      %524 = vmatpush1.bf16.msra.mxu0 %v314
      %525 = vmatprep.mubr.bf16.mxu0 %v486
      %526 = vmatmul.mubr.bf16.gmra.mrb[0].mxu0 %v485
      %v527 = vpop.f32.mrb[0].mxu0
      %v528 = vadd.f32 %v213, %v527
      %v529 = vpop.f32.mrb[0].mxu0
      %v530 = vpop.f32.mrb[0].mxu0
      %v531 = vadd.f32 %v213, %v530
      %v532 = vpop.f32.mrb[0].mxu0
      %533 = vmatprep.mubr.bf16.mxu0 %v488
      %534 = vmatmul.mubr.bf16.gmra.mrb[0].mxu0 %v487
      %v535 = vpop.f32.mrb[0].mxu0
      %v536 = vadd.f32 %v213, %v535
      %v537 = vpop.f32.mrb[0].mxu0
      %v538 = vpop.f32.mrb[0].mxu0
      %v539 = vadd.f32 %v213, %v538
      %v540 = vpop.f32.mrb[0].mxu0
      %541 = vdwg.mxu0
      %v542 = vld [vmem:[#allocation2] sm:$0xff]
      %v543 = vld [vmem:[#allocation2 + $0x8] sm:$0xff]
      %v544 = vld [vmem:[#allocation2 + $0x10] sm:$0xff]
      %v545 = vld [vmem:[#allocation2 + $0x18] sm:$0xff]
      %v546 = vmax.f32 %v542, %v528
      %v547 = vmax.f32 %v543, %v531
      %v548 = vmax.f32 %v544, %v536
      %v549 = vmax.f32 %v545, %v539
      %550 = vst [vmem:[#allocation2] sm:$0xff] %v546
      %551 = vst [vmem:[#allocation2 + $0x8] sm:$0xff] %v547
      %552 = vst [vmem:[#allocation2 + $0x10] sm:$0xff] %v548
      %553 = vst [vmem:[#allocation2 + $0x18] sm:$0xff] %v549
      %v554 = vld [vmem:[%s165 + $0x60] sm:$0xff]
      %v555 = vld [vmem:[%s165 + $0x68] sm:$0xff]
      %v556 = vld [vmem:[%s165 + $0x70] sm:$0xff]
      %v557 = vld [vmem:[%s165 + $0x78] sm:$0xff]
      %v562 = vunpack.c.l.b16 %v554
      %v563 = vunpack.c.h.b16 %v554
      %v564 = vunpack.c.l.b16 %v555
      %v565 = vunpack.c.h.b16 %v555
      %v566 = vunpack.c.l.b16 %v556
      %v567 = vunpack.c.h.b16 %v556
      %v568 = vunpack.c.l.b16 %v557
      %v569 = vunpack.c.h.b16 %v557
      %v570 = vpack.c.b16 %v564, %v562
      %v571 = vpack.c.b16 %v565, %v563
      %v572 = vpack.c.b16 %v568, %v566
      %v573 = vpack.c.b16 %v569, %v567
      %578 = vmatprep.subr.bf16.mxu0 0
      %579 = vmatpush1.bf16.msra.mxu0 %v299
      %580 = vmatprep.subr.bf16.mxu0 0
      %581 = vmatpush1.bf16.msra.mxu0 %v300
      %582 = vmatprep.subr.bf16.mxu0 0
      %583 = vmatpush1.bf16.msra.mxu0 %v301
      %584 = vmatprep.subr.bf16.mxu0 0
      %585 = vmatpush1.bf16.msra.mxu0 %v302
      %586 = vmatprep.subr.bf16.mxu0 0
      %587 = vmatpush1.bf16.msra.mxu0 %v303
      %588 = vmatprep.subr.bf16.mxu0 0
      %589 = vmatpush1.bf16.msra.mxu0 %v304
      %590 = vmatprep.subr.bf16.mxu0 0
      %591 = vmatpush1.bf16.msra.mxu0 %v305
      %592 = vmatprep.subr.bf16.mxu0 0
      %593 = vmatpush1.bf16.msra.mxu0 %v306
      %594 = vmatprep.subr.bf16.mxu0 0
      %595 = vmatpush1.bf16.msra.mxu0 %v307
      %596 = vmatprep.subr.bf16.mxu0 0
      %597 = vmatpush1.bf16.msra.mxu0 %v308
      %598 = vmatprep.subr.bf16.mxu0 0
      %599 = vmatpush1.bf16.msra.mxu0 %v309
      %600 = vmatprep.subr.bf16.mxu0 0
      %601 = vmatpush1.bf16.msra.mxu0 %v310
      %602 = vmatprep.subr.bf16.mxu0 0
      %603 = vmatpush1.bf16.msra.mxu0 %v311
      %604 = vmatprep.subr.bf16.mxu0 0
      %605 = vmatpush1.bf16.msra.mxu0 %v312
      %606 = vmatprep.subr.bf16.mxu0 0
      %607 = vmatpush1.bf16.msra.mxu0 %v313
      %608 = vmatprep.subr.bf16.mxu0 0
      %609 = vmatpush1.bf16.msra.mxu0 %v314
      %610 = vmatprep.mubr.bf16.mxu0 %v571
      %611 = vmatmul.mubr.bf16.gmra.mrb[0].mxu0 %v570
      %v612 = vpop.f32.mrb[0].mxu0
      %v613 = vadd.f32 %v213, %v612
      %v614 = vpop.f32.mrb[0].mxu0
      %v615 = vpop.f32.mrb[0].mxu0
      %v616 = vadd.f32 %v213, %v615
      %v617 = vpop.f32.mrb[0].mxu0
      %618 = vmatprep.mubr.bf16.mxu0 %v573
      %619 = vmatmul.mubr.bf16.gmra.mrb[0].mxu0 %v572
      %v620 = vpop.f32.mrb[0].mxu0
      %v621 = vadd.f32 %v213, %v620
      %v622 = vpop.f32.mrb[0].mxu0
      %v623 = vpop.f32.mrb[0].mxu0
      %v624 = vadd.f32 %v213, %v623
      %v625 = vpop.f32.mrb[0].mxu0
      %626 = vdwg.mxu0
      %v627 = vld [vmem:[#allocation2] sm:$0xff]
      %v628 = vld [vmem:[#allocation2 + $0x8] sm:$0xff]
      %v629 = vld [vmem:[#allocation2 + $0x10] sm:$0xff]
      %v630 = vld [vmem:[#allocation2 + $0x18] sm:$0xff]
      %v631 = vmax.f32 %v627, %v613
      %v632 = vmax.f32 %v628, %v616
      %v633 = vmax.f32 %v629, %v621
      %v634 = vmax.f32 %v630, %v624
      %635 = vst [vmem:[#allocation2] sm:$0xff] %v631
      %636 = vst [vmem:[#allocation2 + $0x8] sm:$0xff] %v632
      %637 = vst [vmem:[#allocation2 + $0x10] sm:$0xff] %v633
      %638 = vst [vmem:[#allocation2 + $0x18] sm:$0xff] %v634
      %v639 = vld [vmem:[%s165 + $0x80] sm:$0xff]
      %v640 = vld [vmem:[%s165 + $0x88] sm:$0xff]
      %v641 = vld [vmem:[%s165 + $0x90] sm:$0xff]
      %v642 = vld [vmem:[%s165 + $0x98] sm:$0xff]
      %v647 = vunpack.c.l.b16 %v639
      %v648 = vunpack.c.h.b16 %v639
      %v649 = vunpack.c.l.b16 %v640
      %v650 = vunpack.c.h.b16 %v640
      %v651 = vunpack.c.l.b16 %v641
      %v652 = vunpack.c.h.b16 %v641
      %v653 = vunpack.c.l.b16 %v642
      %v654 = vunpack.c.h.b16 %v642
      %v655 = vpack.c.b16 %v649, %v647
      %v656 = vpack.c.b16 %v650, %v648
      %v657 = vpack.c.b16 %v653, %v651
      %v658 = vpack.c.b16 %v654, %v652
      %663 = vmatprep.subr.bf16.mxu0 0
      %664 = vmatpush1.bf16.msra.mxu0 %v299
      %665 = vmatprep.subr.bf16.mxu0 0
      %666 = vmatpush1.bf16.msra.mxu0 %v300
      %667 = vmatprep.subr.bf16.mxu0 0
      %668 = vmatpush1.bf16.msra.mxu0 %v301
      %669 = vmatprep.subr.bf16.mxu0 0
      %670 = vmatpush1.bf16.msra.mxu0 %v302
      %671 = vmatprep.subr.bf16.mxu0 0
      %672 = vmatpush1.bf16.msra.mxu0 %v303
      %673 = vmatprep.subr.bf16.mxu0 0
      %674 = vmatpush1.bf16.msra.mxu0 %v304
      %675 = vmatprep.subr.bf16.mxu0 0
      %676 = vmatpush1.bf16.msra.mxu0 %v305
      %677 = vmatprep.subr.bf16.mxu0 0
      %678 = vmatpush1.bf16.msra.mxu0 %v306
      %679 = vmatprep.subr.bf16.mxu0 0
      %680 = vmatpush1.bf16.msra.mxu0 %v307
      %681 = vmatprep.subr.bf16.mxu0 0
      %682 = vmatpush1.bf16.msra.mxu0 %v308
      %683 = vmatprep.subr.bf16.mxu0 0
      %684 = vmatpush1.bf16.msra.mxu0 %v309
      %685 = vmatprep.subr.bf16.mxu0 0
      %686 = vmatpush1.bf16.msra.mxu0 %v310
      %687 = vmatprep.subr.bf16.mxu0 0
      %688 = vmatpush1.bf16.msra.mxu0 %v311
      %689 = vmatprep.subr.bf16.mxu0 0
      %690 = vmatpush1.bf16.msra.mxu0 %v312
      %691 = vmatprep.subr.bf16.mxu0 0
      %692 = vmatpush1.bf16.msra.mxu0 %v313
      %693 = vmatprep.subr.bf16.mxu0 0
      %694 = vmatpush1.bf16.msra.mxu0 %v314
      %695 = vmatprep.mubr.bf16.mxu0 %v656
      %696 = vmatmul.mubr.bf16.gmra.mrb[0].mxu0 %v655
      %v697 = vpop.f32.mrb[0].mxu0
      %v698 = vadd.f32 %v213, %v697
      %v699 = vpop.f32.mrb[0].mxu0
      %v700 = vpop.f32.mrb[0].mxu0
      %v701 = vadd.f32 %v213, %v700
      %v702 = vpop.f32.mrb[0].mxu0
      %703 = vmatprep.mubr.bf16.mxu0 %v658
      %704 = vmatmul.mubr.bf16.gmra.mrb[0].mxu0 %v657
      %v705 = vpop.f32.mrb[0].mxu0
      %v706 = vadd.f32 %v213, %v705
      %v707 = vpop.f32.mrb[0].mxu0
      %v708 = vpop.f32.mrb[0].mxu0
      %v709 = vadd.f32 %v213, %v708
      %v710 = vpop.f32.mrb[0].mxu0
      %711 = vdwg.mxu0
      %v712 = vld [vmem:[#allocation2] sm:$0xff]
      %v713 = vld [vmem:[#allocation2 + $0x8] sm:$0xff]
      %v714 = vld [vmem:[#allocation2 + $0x10] sm:$0xff]
      %v715 = vld [vmem:[#allocation2 + $0x18] sm:$0xff]
      %v716 = vmax.f32 %v712, %v698
      %v717 = vmax.f32 %v713, %v701
      %v718 = vmax.f32 %v714, %v706
      %v719 = vmax.f32 %v715, %v709
      %720 = vst [vmem:[#allocation2] sm:$0xff] %v716
      %721 = vst [vmem:[#allocation2 + $0x8] sm:$0xff] %v717
      %722 = vst [vmem:[#allocation2 + $0x10] sm:$0xff] %v718
      %723 = vst [vmem:[#allocation2 + $0x18] sm:$0xff] %v719
      %v724 = vld [vmem:[%s165 + $0xa0] sm:$0xff]
      %v725 = vld [vmem:[%s165 + $0xa8] sm:$0xff]
      %v726 = vld [vmem:[%s165 + $0xb0] sm:$0xff]
      %v727 = vld [vmem:[%s165 + $0xb8] sm:$0xff]
      %v732 = vunpack.c.l.b16 %v724
      %v733 = vunpack.c.h.b16 %v724
      %v734 = vunpack.c.l.b16 %v725
      %v735 = vunpack.c.h.b16 %v725
      %v736 = vunpack.c.l.b16 %v726
      %v737 = vunpack.c.h.b16 %v726
      %v738 = vunpack.c.l.b16 %v727
      %v739 = vunpack.c.h.b16 %v727
      %v740 = vpack.c.b16 %v734, %v732
      %v741 = vpack.c.b16 %v735, %v733
      %v742 = vpack.c.b16 %v738, %v736
      %v743 = vpack.c.b16 %v739, %v737
      %748 = vmatprep.subr.bf16.mxu0 0
      %749 = vmatpush1.bf16.msra.mxu0 %v299
      %750 = vmatprep.subr.bf16.mxu0 0
      %751 = vmatpush1.bf16.msra.mxu0 %v300
      %752 = vmatprep.subr.bf16.mxu0 0
      %753 = vmatpush1.bf16.msra.mxu0 %v301
      %754 = vmatprep.subr.bf16.mxu0 0
      %755 = vmatpush1.bf16.msra.mxu0 %v302
      %756 = vmatprep.subr.bf16.mxu0 0
      %757 = vmatpush1.bf16.msra.mxu0 %v303
      %758 = vmatprep.subr.bf16.mxu0 0
      %759 = vmatpush1.bf16.msra.mxu0 %v304
      %760 = vmatprep.subr.bf16.mxu0 0
      %761 = vmatpush1.bf16.msra.mxu0 %v305
      %762 = vmatprep.subr.bf16.mxu0 0
      %763 = vmatpush1.bf16.msra.mxu0 %v306
      %764 = vmatprep.subr.bf16.mxu0 0
      %765 = vmatpush1.bf16.msra.mxu0 %v307
      %766 = vmatprep.subr.bf16.mxu0 0
      %767 = vmatpush1.bf16.msra.mxu0 %v308
      %768 = vmatprep.subr.bf16.mxu0 0
      %769 = vmatpush1.bf16.msra.mxu0 %v309
      %770 = vmatprep.subr.bf16.mxu0 0
      %771 = vmatpush1.bf16.msra.mxu0 %v310
      %772 = vmatprep.subr.bf16.mxu0 0
      %773 = vmatpush1.bf16.msra.mxu0 %v311
      %774 = vmatprep.subr.bf16.mxu0 0
      %775 = vmatpush1.bf16.msra.mxu0 %v312
      %776 = vmatprep.subr.bf16.mxu0 0
      %777 = vmatpush1.bf16.msra.mxu0 %v313
      %778 = vmatprep.subr.bf16.mxu0 0
      %779 = vmatpush1.bf16.msra.mxu0 %v314
      %780 = vmatprep.mubr.bf16.mxu0 %v741
      %781 = vmatmul.mubr.bf16.gmra.mrb[0].mxu0 %v740
      %v782 = vpop.f32.mrb[0].mxu0
      %v783 = vadd.f32 %v213, %v782
      %v784 = vpop.f32.mrb[0].mxu0
      %v785 = vpop.f32.mrb[0].mxu0
      %v786 = vadd.f32 %v213, %v785
      %v787 = vpop.f32.mrb[0].mxu0
      %788 = vmatprep.mubr.bf16.mxu0 %v743
      %789 = vmatmul.mubr.bf16.gmra.mrb[0].mxu0 %v742
      %v790 = vpop.f32.mrb[0].mxu0
      %v791 = vadd.f32 %v213, %v790
      %v792 = vpop.f32.mrb[0].mxu0
      %v793 = vpop.f32.mrb[0].mxu0
      %v794 = vadd.f32 %v213, %v793
      %v795 = vpop.f32.mrb[0].mxu0
      %796 = vdwg.mxu0
      %v797 = vld [vmem:[#allocation2] sm:$0xff]
      %v798 = vld [vmem:[#allocation2 + $0x8] sm:$0xff]
      %v799 = vld [vmem:[#allocation2 + $0x10] sm:$0xff]
      %v800 = vld [vmem:[#allocation2 + $0x18] sm:$0xff]
      %v801 = vmax.f32 %v797, %v783
      %v802 = vmax.f32 %v798, %v786
      %v803 = vmax.f32 %v799, %v791
      %v804 = vmax.f32 %v800, %v794
      %805 = vst [vmem:[#allocation2] sm:$0xff] %v801
      %806 = vst [vmem:[#allocation2 + $0x8] sm:$0xff] %v802
      %807 = vst [vmem:[#allocation2 + $0x10] sm:$0xff] %v803
      %808 = vst [vmem:[#allocation2 + $0x18] sm:$0xff] %v804
      %v809 = vld [vmem:[%s165 + $0xc0] sm:$0xff]
      %v810 = vld [vmem:[%s165 + $0xc8] sm:$0xff]
      %v811 = vld [vmem:[%s165 + $0xd0] sm:$0xff]
      %v812 = vld [vmem:[%s165 + $0xd8] sm:$0xff]
      %v817 = vunpack.c.l.b16 %v809
      %v818 = vunpack.c.h.b16 %v809
      %v819 = vunpack.c.l.b16 %v810
      %v820 = vunpack.c.h.b16 %v810
      %v821 = vunpack.c.l.b16 %v811
      %v822 = vunpack.c.h.b16 %v811
      %v823 = vunpack.c.l.b16 %v812
      %v824 = vunpack.c.h.b16 %v812
      %v825 = vpack.c.b16 %v819, %v817
      %v826 = vpack.c.b16 %v820, %v818
      %v827 = vpack.c.b16 %v823, %v821
      %v828 = vpack.c.b16 %v824, %v822
      %833 = vmatprep.subr.bf16.mxu0 0
      %834 = vmatpush1.bf16.msra.mxu0 %v299
      %835 = vmatprep.subr.bf16.mxu0 0
      %836 = vmatpush1.bf16.msra.mxu0 %v300
      %837 = vmatprep.subr.bf16.mxu0 0
      %838 = vmatpush1.bf16.msra.mxu0 %v301
      %839 = vmatprep.subr.bf16.mxu0 0
      %840 = vmatpush1.bf16.msra.mxu0 %v302
      %841 = vmatprep.subr.bf16.mxu0 0
      %842 = vmatpush1.bf16.msra.mxu0 %v303
      %843 = vmatprep.subr.bf16.mxu0 0
      %844 = vmatpush1.bf16.msra.mxu0 %v304
      %845 = vmatprep.subr.bf16.mxu0 0
      %846 = vmatpush1.bf16.msra.mxu0 %v305
      %847 = vmatprep.subr.bf16.mxu0 0
      %848 = vmatpush1.bf16.msra.mxu0 %v306
      %849 = vmatprep.subr.bf16.mxu0 0
      %850 = vmatpush1.bf16.msra.mxu0 %v307
      %851 = vmatprep.subr.bf16.mxu0 0
      %852 = vmatpush1.bf16.msra.mxu0 %v308
      %853 = vmatprep.subr.bf16.mxu0 0
      %854 = vmatpush1.bf16.msra.mxu0 %v309
      %855 = vmatprep.subr.bf16.mxu0 0
      %856 = vmatpush1.bf16.msra.mxu0 %v310
      %857 = vmatprep.subr.bf16.mxu0 0
      %858 = vmatpush1.bf16.msra.mxu0 %v311
      %859 = vmatprep.subr.bf16.mxu0 0
      %860 = vmatpush1.bf16.msra.mxu0 %v312
      %861 = vmatprep.subr.bf16.mxu0 0
      %862 = vmatpush1.bf16.msra.mxu0 %v313
      %863 = vmatprep.subr.bf16.mxu0 0
      %864 = vmatpush1.bf16.msra.mxu0 %v314
      %865 = vmatprep.mubr.bf16.mxu0 %v826
      %866 = vmatmul.mubr.bf16.gmra.mrb[0].mxu0 %v825
      %v867 = vpop.f32.mrb[0].mxu0
      %v868 = vadd.f32 %v213, %v867
      %v869 = vpop.f32.mrb[0].mxu0
      %v870 = vpop.f32.mrb[0].mxu0
      %v871 = vadd.f32 %v213, %v870
      %v872 = vpop.f32.mrb[0].mxu0
      %873 = vmatprep.mubr.bf16.mxu0 %v828
      %874 = vmatmul.mubr.bf16.gmra.mrb[0].mxu0 %v827
      %v875 = vpop.f32.mrb[0].mxu0
      %v876 = vadd.f32 %v213, %v875
      %v877 = vpop.f32.mrb[0].mxu0
      %v878 = vpop.f32.mrb[0].mxu0
      %v879 = vadd.f32 %v213, %v878
      %v880 = vpop.f32.mrb[0].mxu0
      %881 = vdwg.mxu0
      %v882 = vld [vmem:[#allocation2] sm:$0xff]
      %v883 = vld [vmem:[#allocation2 + $0x8] sm:$0xff]
      %v884 = vld [vmem:[#allocation2 + $0x10] sm:$0xff]
      %v885 = vld [vmem:[#allocation2 + $0x18] sm:$0xff]
      %v886 = vmax.f32 %v882, %v868
      %v887 = vmax.f32 %v883, %v871
      %v888 = vmax.f32 %v884, %v876
      %v889 = vmax.f32 %v885, %v879
      %890 = vst [vmem:[#allocation2] sm:$0xff] %v886
      %891 = vst [vmem:[#allocation2 + $0x8] sm:$0xff] %v887
      %892 = vst [vmem:[#allocation2 + $0x10] sm:$0xff] %v888
      %893 = vst [vmem:[#allocation2 + $0x18] sm:$0xff] %v889
      %v894 = vld [vmem:[%s165 + $0xe0] sm:$0xff]
      %v895 = vld [vmem:[%s165 + $0xe8] sm:$0xff]
      %v896 = vld [vmem:[%s165 + $0xf0] sm:$0xff]
      %v897 = vld [vmem:[%s165 + $0xf8] sm:$0xff]
      %v902 = vunpack.c.l.b16 %v894
      %v903 = vunpack.c.h.b16 %v894
      %v904 = vunpack.c.l.b16 %v895
      %v905 = vunpack.c.h.b16 %v895
      %v906 = vunpack.c.l.b16 %v896
      %v907 = vunpack.c.h.b16 %v896
      %v908 = vunpack.c.l.b16 %v897
      %v909 = vunpack.c.h.b16 %v897
      %v910 = vpack.c.b16 %v904, %v902
      %v911 = vpack.c.b16 %v905, %v903
      %v912 = vpack.c.b16 %v908, %v906
      %v913 = vpack.c.b16 %v909, %v907
      %918 = vmatprep.subr.bf16.mxu0 0
      %919 = vmatpush1.bf16.msra.mxu0 %v299
      %920 = vmatprep.subr.bf16.mxu0 0
      %921 = vmatpush1.bf16.msra.mxu0 %v300
      %922 = vmatprep.subr.bf16.mxu0 0
      %923 = vmatpush1.bf16.msra.mxu0 %v301
      %924 = vmatprep.subr.bf16.mxu0 0
      %925 = vmatpush1.bf16.msra.mxu0 %v302
      %926 = vmatprep.subr.bf16.mxu0 0
      %927 = vmatpush1.bf16.msra.mxu0 %v303
      %928 = vmatprep.subr.bf16.mxu0 0
      %929 = vmatpush1.bf16.msra.mxu0 %v304
      %930 = vmatprep.subr.bf16.mxu0 0
      %931 = vmatpush1.bf16.msra.mxu0 %v305
      %932 = vmatprep.subr.bf16.mxu0 0
      %933 = vmatpush1.bf16.msra.mxu0 %v306
      %934 = vmatprep.subr.bf16.mxu0 0
      %935 = vmatpush1.bf16.msra.mxu0 %v307
      %936 = vmatprep.subr.bf16.mxu0 0
      %937 = vmatpush1.bf16.msra.mxu0 %v308
      %938 = vmatprep.subr.bf16.mxu0 0
      %939 = vmatpush1.bf16.msra.mxu0 %v309
      %940 = vmatprep.subr.bf16.mxu0 0
      %941 = vmatpush1.bf16.msra.mxu0 %v310
      %942 = vmatprep.subr.bf16.mxu0 0
      %943 = vmatpush1.bf16.msra.mxu0 %v311
      %944 = vmatprep.subr.bf16.mxu0 0
      %945 = vmatpush1.bf16.msra.mxu0 %v312
      %946 = vmatprep.subr.bf16.mxu0 0
      %947 = vmatpush1.bf16.msra.mxu0 %v313
      %948 = vmatprep.subr.bf16.mxu0 0
      %949 = vmatpush1.bf16.msra.mxu0 %v314
      %950 = vmatprep.mubr.bf16.mxu0 %v911
      %951 = vmatmul.mubr.bf16.gmra.mrb[0].mxu0 %v910
      %v952 = vpop.f32.mrb[0].mxu0
      %v953 = vadd.f32 %v213, %v952
      %v954 = vpop.f32.mrb[0].mxu0
      %v955 = vpop.f32.mrb[0].mxu0
      %v956 = vadd.f32 %v213, %v955
      %v957 = vpop.f32.mrb[0].mxu0
      %958 = vmatprep.mubr.bf16.mxu0 %v913
      %959 = vmatmul.mubr.bf16.gmra.mrb[0].mxu0 %v912
      %v960 = vpop.f32.mrb[0].mxu0
      %v961 = vadd.f32 %v213, %v960
      %v962 = vpop.f32.mrb[0].mxu0
      %v963 = vpop.f32.mrb[0].mxu0
      %v964 = vadd.f32 %v213, %v963
      %v965 = vpop.f32.mrb[0].mxu0
      %966 = vdwg.mxu0
      %v967 = vld [vmem:[#allocation2] sm:$0xff]
      %v968 = vld [vmem:[#allocation2 + $0x8] sm:$0xff]
      %v969 = vld [vmem:[#allocation2 + $0x10] sm:$0xff]
      %v970 = vld [vmem:[#allocation2 + $0x18] sm:$0xff]
      %v971 = vmax.f32 %v967, %v953
      %v972 = vmax.f32 %v968, %v956
      %v973 = vmax.f32 %v969, %v961
      %v974 = vmax.f32 %v970, %v964
      %975 = vst [vmem:[#allocation2] sm:$0xff] %v971
      %976 = vst [vmem:[#allocation2 + $0x8] sm:$0xff] %v972
      %977 = vst [vmem:[#allocation2 + $0x10] sm:$0xff] %v973
      %978 = vst [vmem:[#allocation2 + $0x18] sm:$0xff] %v974
      %v979 = vld [vmem:[%s165 + $0x100] sm:$0xff]
      %v980 = vld [vmem:[%s165 + $0x108] sm:$0xff]
      %v981 = vld [vmem:[%s165 + $0x110] sm:$0xff]
      %v982 = vld [vmem:[%s165 + $0x118] sm:$0xff]
      %v987 = vunpack.c.l.b16 %v979
      %v988 = vunpack.c.h.b16 %v979
      %v989 = vunpack.c.l.b16 %v980
      %v990 = vunpack.c.h.b16 %v980
      %v991 = vunpack.c.l.b16 %v981
      %v992 = vunpack.c.h.b16 %v981
      %v993 = vunpack.c.l.b16 %v982
      %v994 = vunpack.c.h.b16 %v982
      %v995 = vpack.c.b16 %v989, %v987
      %v996 = vpack.c.b16 %v990, %v988
      %v997 = vpack.c.b16 %v993, %v991
      %v998 = vpack.c.b16 %v994, %v992
      %1003 = vmatprep.subr.bf16.mxu0 0
      %1004 = vmatpush1.bf16.msra.mxu0 %v299
      %1005 = vmatprep.subr.bf16.mxu0 0
      %1006 = vmatpush1.bf16.msra.mxu0 %v300
      %1007 = vmatprep.subr.bf16.mxu0 0
      %1008 = vmatpush1.bf16.msra.mxu0 %v301
      %1009 = vmatprep.subr.bf16.mxu0 0
      %1010 = vmatpush1.bf16.msra.mxu0 %v302
      %1011 = vmatprep.subr.bf16.mxu0 0
      %1012 = vmatpush1.bf16.msra.mxu0 %v303
      %1013 = vmatprep.subr.bf16.mxu0 0
      %1014 = vmatpush1.bf16.msra.mxu0 %v304
      %1015 = vmatprep.subr.bf16.mxu0 0
      %1016 = vmatpush1.bf16.msra.mxu0 %v305
      %1017 = vmatprep.subr.bf16.mxu0 0
      %1018 = vmatpush1.bf16.msra.mxu0 %v306
      %1019 = vmatprep.subr.bf16.mxu0 0
      %1020 = vmatpush1.bf16.msra.mxu0 %v307
      %1021 = vmatprep.subr.bf16.mxu0 0
      %1022 = vmatpush1.bf16.msra.mxu0 %v308
      %1023 = vmatprep.subr.bf16.mxu0 0
      %1024 = vmatpush1.bf16.msra.mxu0 %v309
      %1025 = vmatprep.subr.bf16.mxu0 0
      %1026 = vmatpush1.bf16.msra.mxu0 %v310
      %1027 = vmatprep.subr.bf16.mxu0 0
      %1028 = vmatpush1.bf16.msra.mxu0 %v311
      %1029 = vmatprep.subr.bf16.mxu0 0
      %1030 = vmatpush1.bf16.msra.mxu0 %v312
      %1031 = vmatprep.subr.bf16.mxu0 0
      %1032 = vmatpush1.bf16.msra.mxu0 %v313
      %1033 = vmatprep.subr.bf16.mxu0 0
      %1034 = vmatpush1.bf16.msra.mxu0 %v314
      %1035 = vmatprep.mubr.bf16.mxu0 %v996
      %1036 = vmatmul.mubr.bf16.gmra.mrb[0].mxu0 %v995
      %v1037 = vpop.f32.mrb[0].mxu0
      %v1038 = vadd.f32 %v213, %v1037
      %v1039 = vpop.f32.mrb[0].mxu0
      %v1040 = vpop.f32.mrb[0].mxu0
      %v1041 = vadd.f32 %v213, %v1040
      %v1042 = vpop.f32.mrb[0].mxu0
      %1043 = vmatprep.mubr.bf16.mxu0 %v998
      %1044 = vmatmul.mubr.bf16.gmra.mrb[0].mxu0 %v997
      %v1045 = vpop.f32.mrb[0].mxu0
      %v1046 = vadd.f32 %v213, %v1045
      %v1047 = vpop.f32.mrb[0].mxu0
      %v1048 = vpop.f32.mrb[0].mxu0
      %v1049 = vadd.f32 %v213, %v1048
      %v1050 = vpop.f32.mrb[0].mxu0
      %1051 = vdwg.mxu0
      %v1052 = vld [vmem:[#allocation2] sm:$0xff]
      %v1053 = vld [vmem:[#allocation2 + $0x8] sm:$0xff]
      %v1054 = vld [vmem:[#allocation2 + $0x10] sm:$0xff]
      %v1055 = vld [vmem:[#allocation2 + $0x18] sm:$0xff]
      %v1056 = vmax.f32 %v1052, %v1038
      %v1057 = vmax.f32 %v1053, %v1041
      %v1058 = vmax.f32 %v1054, %v1046
      %v1059 = vmax.f32 %v1055, %v1049
      %1060 = vst [vmem:[#allocation2] sm:$0xff] %v1056
      %1061 = vst [vmem:[#allocation2 + $0x8] sm:$0xff] %v1057
      %1062 = vst [vmem:[#allocation2 + $0x10] sm:$0xff] %v1058
      %1063 = vst [vmem:[#allocation2 + $0x18] sm:$0xff] %v1059
      %v1064 = vld [vmem:[%s165 + $0x120] sm:$0xff]
      %v1065 = vld [vmem:[%s165 + $0x128] sm:$0xff]
      %v1066 = vld [vmem:[%s165 + $0x130] sm:$0xff]
      %v1067 = vld [vmem:[%s165 + $0x138] sm:$0xff]
      %v1072 = vunpack.c.l.b16 %v1064
      %v1073 = vunpack.c.h.b16 %v1064
      %v1074 = vunpack.c.l.b16 %v1065
      %v1075 = vunpack.c.h.b16 %v1065
      %v1076 = vunpack.c.l.b16 %v1066
      %v1077 = vunpack.c.h.b16 %v1066
      %v1078 = vunpack.c.l.b16 %v1067
      %v1079 = vunpack.c.h.b16 %v1067
      %v1080 = vpack.c.b16 %v1074, %v1072
      %v1081 = vpack.c.b16 %v1075, %v1073
      %v1082 = vpack.c.b16 %v1078, %v1076
      %v1083 = vpack.c.b16 %v1079, %v1077
      %1088 = vmatprep.subr.bf16.mxu0 0
      %1089 = vmatpush1.bf16.msra.mxu0 %v299
      %1090 = vmatprep.subr.bf16.mxu0 0
      %1091 = vmatpush1.bf16.msra.mxu0 %v300
      %1092 = vmatprep.subr.bf16.mxu0 0
      %1093 = vmatpush1.bf16.msra.mxu0 %v301
      %1094 = vmatprep.subr.bf16.mxu0 0
      %1095 = vmatpush1.bf16.msra.mxu0 %v302
      %1096 = vmatprep.subr.bf16.mxu0 0
      %1097 = vmatpush1.bf16.msra.mxu0 %v303
      %1098 = vmatprep.subr.bf16.mxu0 0
      %1099 = vmatpush1.bf16.msra.mxu0 %v304
      %1100 = vmatprep.subr.bf16.mxu0 0
      %1101 = vmatpush1.bf16.msra.mxu0 %v305
      %1102 = vmatprep.subr.bf16.mxu0 0
      %1103 = vmatpush1.bf16.msra.mxu0 %v306
      %1104 = vmatprep.subr.bf16.mxu0 0
      %1105 = vmatpush1.bf16.msra.mxu0 %v307
      %1106 = vmatprep.subr.bf16.mxu0 0
      %1107 = vmatpush1.bf16.msra.mxu0 %v308
      %1108 = vmatprep.subr.bf16.mxu0 0
      %1109 = vmatpush1.bf16.msra.mxu0 %v309
      %1110 = vmatprep.subr.bf16.mxu0 0
      %1111 = vmatpush1.bf16.msra.mxu0 %v310
      %1112 = vmatprep.subr.bf16.mxu0 0
      %1113 = vmatpush1.bf16.msra.mxu0 %v311
      %1114 = vmatprep.subr.bf16.mxu0 0
      %1115 = vmatpush1.bf16.msra.mxu0 %v312
      %1116 = vmatprep.subr.bf16.mxu0 0
      %1117 = vmatpush1.bf16.msra.mxu0 %v313
      %1118 = vmatprep.subr.bf16.mxu0 0
      %1119 = vmatpush1.bf16.msra.mxu0 %v314
      %1120 = vmatprep.mubr.bf16.mxu0 %v1081
      %1121 = vmatmul.mubr.bf16.gmra.mrb[0].mxu0 %v1080
      %v1122 = vpop.f32.mrb[0].mxu0
      %v1123 = vadd.f32 %v213, %v1122
      %v1124 = vpop.f32.mrb[0].mxu0
      %v1125 = vpop.f32.mrb[0].mxu0
      %v1126 = vadd.f32 %v213, %v1125
      %v1127 = vpop.f32.mrb[0].mxu0
      %1128 = vmatprep.mubr.bf16.mxu0 %v1083
      %1129 = vmatmul.mubr.bf16.gmra.mrb[0].mxu0 %v1082
      %v1130 = vpop.f32.mrb[0].mxu0
      %v1131 = vadd.f32 %v213, %v1130
      %v1132 = vpop.f32.mrb[0].mxu0
      %v1133 = vpop.f32.mrb[0].mxu0
      %v1134 = vadd.f32 %v213, %v1133
      %v1135 = vpop.f32.mrb[0].mxu0
      %1136 = vdwg.mxu0
      %v1137 = vld [vmem:[#allocation2] sm:$0xff]
      %v1138 = vld [vmem:[#allocation2 + $0x8] sm:$0xff]
      %v1139 = vld [vmem:[#allocation2 + $0x10] sm:$0xff]
      %v1140 = vld [vmem:[#allocation2 + $0x18] sm:$0xff]
      %v1141 = vmax.f32 %v1137, %v1123
      %v1142 = vmax.f32 %v1138, %v1126
      %v1143 = vmax.f32 %v1139, %v1131
      %v1144 = vmax.f32 %v1140, %v1134
      %1145 = vst [vmem:[#allocation2] sm:$0xff] %v1141
      %1146 = vst [vmem:[#allocation2 + $0x8] sm:$0xff] %v1142
      %1147 = vst [vmem:[#allocation2 + $0x10] sm:$0xff] %v1143
      %1148 = vst [vmem:[#allocation2 + $0x18] sm:$0xff] %v1144
      %v1149 = vld [vmem:[%s165 + $0x140] sm:$0xff]
      %v1150 = vld [vmem:[%s165 + $0x148] sm:$0xff]
      %v1151 = vld [vmem:[%s165 + $0x150] sm:$0xff]
      %v1152 = vld [vmem:[%s165 + $0x158] sm:$0xff]
      %v1157 = vunpack.c.l.b16 %v1149
      %v1158 = vunpack.c.h.b16 %v1149
      %v1159 = vunpack.c.l.b16 %v1150
      %v1160 = vunpack.c.h.b16 %v1150
      %v1161 = vunpack.c.l.b16 %v1151
      %v1162 = vunpack.c.h.b16 %v1151
      %v1163 = vunpack.c.l.b16 %v1152
      %v1164 = vunpack.c.h.b16 %v1152
      %v1165 = vpack.c.b16 %v1159, %v1157
      %v1166 = vpack.c.b16 %v1160, %v1158
      %v1167 = vpack.c.b16 %v1163, %v1161
      %v1168 = vpack.c.b16 %v1164, %v1162
      %1173 = vmatprep.subr.bf16.mxu0 0
      %1174 = vmatpush1.bf16.msra.mxu0 %v299
      %1175 = vmatprep.subr.bf16.mxu0 0
      %1176 = vmatpush1.bf16.msra.mxu0 %v300
      %1177 = vmatprep.subr.bf16.mxu0 0
      %1178 = vmatpush1.bf16.msra.mxu0 %v301
      %1179 = vmatprep.subr.bf16.mxu0 0
      %1180 = vmatpush1.bf16.msra.mxu0 %v302
      %1181 = vmatprep.subr.bf16.mxu0 0
      %1182 = vmatpush1.bf16.msra.mxu0 %v303
      %1183 = vmatprep.subr.bf16.mxu0 0
      %1184 = vmatpush1.bf16.msra.mxu0 %v304
      %1185 = vmatprep.subr.bf16.mxu0 0
      %1186 = vmatpush1.bf16.msra.mxu0 %v305
      %1187 = vmatprep.subr.bf16.mxu0 0
      %1188 = vmatpush1.bf16.msra.mxu0 %v306
      %1189 = vmatprep.subr.bf16.mxu0 0
      %1190 = vmatpush1.bf16.msra.mxu0 %v307
      %1191 = vmatprep.subr.bf16.mxu0 0
      %1192 = vmatpush1.bf16.msra.mxu0 %v308
      %1193 = vmatprep.subr.bf16.mxu0 0
      %1194 = vmatpush1.bf16.msra.mxu0 %v309
      %1195 = vmatprep.subr.bf16.mxu0 0
      %1196 = vmatpush1.bf16.msra.mxu0 %v310
      %1197 = vmatprep.subr.bf16.mxu0 0
      %1198 = vmatpush1.bf16.msra.mxu0 %v311
      %1199 = vmatprep.subr.bf16.mxu0 0
      %1200 = vmatpush1.bf16.msra.mxu0 %v312
      %1201 = vmatprep.subr.bf16.mxu0 0
      %1202 = vmatpush1.bf16.msra.mxu0 %v313
      %1203 = vmatprep.subr.bf16.mxu0 0
      %1204 = vmatpush1.bf16.msra.mxu0 %v314
      %1205 = vmatprep.mubr.bf16.mxu0 %v1166
      %1206 = vmatmul.mubr.bf16.gmra.mrb[0].mxu0 %v1165
      %v1207 = vpop.f32.mrb[0].mxu0
      %v1208 = vadd.f32 %v213, %v1207
      %v1209 = vpop.f32.mrb[0].mxu0
      %v1210 = vpop.f32.mrb[0].mxu0
      %v1211 = vadd.f32 %v213, %v1210
      %v1212 = vpop.f32.mrb[0].mxu0
      %1213 = vmatprep.mubr.bf16.mxu0 %v1168
      %1214 = vmatmul.mubr.bf16.gmra.mrb[0].mxu0 %v1167
      %v1215 = vpop.f32.mrb[0].mxu0
      %v1216 = vadd.f32 %v213, %v1215
      %v1217 = vpop.f32.mrb[0].mxu0
      %v1218 = vpop.f32.mrb[0].mxu0
      %v1219 = vadd.f32 %v213, %v1218
      %v1220 = vpop.f32.mrb[0].mxu0
      %1221 = vdwg.mxu0
      %v1222 = vld [vmem:[#allocation2] sm:$0xff]
      %v1223 = vld [vmem:[#allocation2 + $0x8] sm:$0xff]
      %v1224 = vld [vmem:[#allocation2 + $0x10] sm:$0xff]
      %v1225 = vld [vmem:[#allocation2 + $0x18] sm:$0xff]
      %v1226 = vmax.f32 %v1222, %v1208
      %v1227 = vmax.f32 %v1223, %v1211
      %v1228 = vmax.f32 %v1224, %v1216
      %v1229 = vmax.f32 %v1225, %v1219
      %1230 = vst [vmem:[#allocation2] sm:$0xff] %v1226
      %1231 = vst [vmem:[#allocation2 + $0x8] sm:$0xff] %v1227
      %1232 = vst [vmem:[#allocation2 + $0x10] sm:$0xff] %v1228
      %1233 = vst [vmem:[#allocation2 + $0x18] sm:$0xff] %v1229
      %v1234 = vld [vmem:[%s165 + $0x160] sm:$0xff]
      %v1235 = vld [vmem:[%s165 + $0x168] sm:$0xff]
      %v1236 = vld [vmem:[%s165 + $0x170] sm:$0xff]
      %v1237 = vld [vmem:[%s165 + $0x178] sm:$0xff]
      %v1242 = vunpack.c.l.b16 %v1234
      %v1243 = vunpack.c.h.b16 %v1234
      %v1244 = vunpack.c.l.b16 %v1235
      %v1245 = vunpack.c.h.b16 %v1235
      %v1246 = vunpack.c.l.b16 %v1236
      %v1247 = vunpack.c.h.b16 %v1236
      %v1248 = vunpack.c.l.b16 %v1237
      %v1249 = vunpack.c.h.b16 %v1237
      %v1250 = vpack.c.b16 %v1244, %v1242
      %v1251 = vpack.c.b16 %v1245, %v1243
      %v1252 = vpack.c.b16 %v1248, %v1246
      %v1253 = vpack.c.b16 %v1249, %v1247
      %1258 = vmatprep.subr.bf16.mxu0 0
      %1259 = vmatpush1.bf16.msra.mxu0 %v299
      %1260 = vmatprep.subr.bf16.mxu0 0
      %1261 = vmatpush1.bf16.msra.mxu0 %v300
      %1262 = vmatprep.subr.bf16.mxu0 0
      %1263 = vmatpush1.bf16.msra.mxu0 %v301
      %1264 = vmatprep.subr.bf16.mxu0 0
      %1265 = vmatpush1.bf16.msra.mxu0 %v302
      %1266 = vmatprep.subr.bf16.mxu0 0
      %1267 = vmatpush1.bf16.msra.mxu0 %v303
      %1268 = vmatprep.subr.bf16.mxu0 0
      %1269 = vmatpush1.bf16.msra.mxu0 %v304
      %1270 = vmatprep.subr.bf16.mxu0 0
      %1271 = vmatpush1.bf16.msra.mxu0 %v305
      %1272 = vmatprep.subr.bf16.mxu0 0
      %1273 = vmatpush1.bf16.msra.mxu0 %v306
      %1274 = vmatprep.subr.bf16.mxu0 0
      %1275 = vmatpush1.bf16.msra.mxu0 %v307
      %1276 = vmatprep.subr.bf16.mxu0 0
      %1277 = vmatpush1.bf16.msra.mxu0 %v308
      %1278 = vmatprep.subr.bf16.mxu0 0
      %1279 = vmatpush1.bf16.msra.mxu0 %v309
      %1280 = vmatprep.subr.bf16.mxu0 0
      %1281 = vmatpush1.bf16.msra.mxu0 %v310
      %1282 = vmatprep.subr.bf16.mxu0 0
      %1283 = vmatpush1.bf16.msra.mxu0 %v311
      %1284 = vmatprep.subr.bf16.mxu0 0
      %1285 = vmatpush1.bf16.msra.mxu0 %v312
      %1286 = vmatprep.subr.bf16.mxu0 0
      %1287 = vmatpush1.bf16.msra.mxu0 %v313
      %1288 = vmatprep.subr.bf16.mxu0 0
      %1289 = vmatpush1.bf16.msra.mxu0 %v314
      %1290 = vmatprep.mubr.bf16.mxu0 %v1251
      %1291 = vmatmul.mubr.bf16.gmra.mrb[0].mxu0 %v1250
      %v1292 = vpop.f32.mrb[0].mxu0
      %v1293 = vadd.f32 %v213, %v1292
      %v1294 = vpop.f32.mrb[0].mxu0
      %v1295 = vpop.f32.mrb[0].mxu0
      %v1296 = vadd.f32 %v213, %v1295
      %v1297 = vpop.f32.mrb[0].mxu0
      %1298 = vmatprep.mubr.bf16.mxu0 %v1253
      %1299 = vmatmul.mubr.bf16.gmra.mrb[0].mxu0 %v1252
      %v1300 = vpop.f32.mrb[0].mxu0
      %v1301 = vadd.f32 %v213, %v1300
      %v1302 = vpop.f32.mrb[0].mxu0
      %v1303 = vpop.f32.mrb[0].mxu0
      %v1304 = vadd.f32 %v213, %v1303
      %v1305 = vpop.f32.mrb[0].mxu0
      %1306 = vdwg.mxu0
      %v1307 = vld [vmem:[#allocation2] sm:$0xff]
      %v1308 = vld [vmem:[#allocation2 + $0x8] sm:$0xff]
      %v1309 = vld [vmem:[#allocation2 + $0x10] sm:$0xff]
      %v1310 = vld [vmem:[#allocation2 + $0x18] sm:$0xff]
      %v1311 = vmax.f32 %v1307, %v1293
      %v1312 = vmax.f32 %v1308, %v1296
      %v1313 = vmax.f32 %v1309, %v1301
      %v1314 = vmax.f32 %v1310, %v1304
      %1315 = vst [vmem:[#allocation2] sm:$0xff] %v1311
      %1316 = vst [vmem:[#allocation2 + $0x8] sm:$0xff] %v1312
      %1317 = vst [vmem:[#allocation2 + $0x10] sm:$0xff] %v1313
      %1318 = vst [vmem:[#allocation2 + $0x18] sm:$0xff] %v1314
      %v1319 = vld [vmem:[%s165 + $0x180] sm:$0xff]
      %v1320 = vld [vmem:[%s165 + $0x188] sm:$0xff]
      %v1321 = vld [vmem:[%s165 + $0x190] sm:$0xff]
      %v1322 = vld [vmem:[%s165 + $0x198] sm:$0xff]
      %v1327 = vunpack.c.l.b16 %v1319
      %v1328 = vunpack.c.h.b16 %v1319
      %v1329 = vunpack.c.l.b16 %v1320
      %v1330 = vunpack.c.h.b16 %v1320
      %v1331 = vunpack.c.l.b16 %v1321
      %v1332 = vunpack.c.h.b16 %v1321
      %v1333 = vunpack.c.l.b16 %v1322
      %v1334 = vunpack.c.h.b16 %v1322
      %v1335 = vpack.c.b16 %v1329, %v1327
      %v1336 = vpack.c.b16 %v1330, %v1328
      %v1337 = vpack.c.b16 %v1333, %v1331
      %v1338 = vpack.c.b16 %v1334, %v1332
      %1343 = vmatprep.subr.bf16.mxu0 0
      %1344 = vmatpush1.bf16.msra.mxu0 %v299
      %1345 = vmatprep.subr.bf16.mxu0 0
      %1346 = vmatpush1.bf16.msra.mxu0 %v300
      %1347 = vmatprep.subr.bf16.mxu0 0
      %1348 = vmatpush1.bf16.msra.mxu0 %v301
      %1349 = vmatprep.subr.bf16.mxu0 0
      %1350 = vmatpush1.bf16.msra.mxu0 %v302
      %1351 = vmatprep.subr.bf16.mxu0 0
      %1352 = vmatpush1.bf16.msra.mxu0 %v303
      %1353 = vmatprep.subr.bf16.mxu0 0
      %1354 = vmatpush1.bf16.msra.mxu0 %v304
      %1355 = vmatprep.subr.bf16.mxu0 0
      %1356 = vmatpush1.bf16.msra.mxu0 %v305
      %1357 = vmatprep.subr.bf16.mxu0 0
      %1358 = vmatpush1.bf16.msra.mxu0 %v306
      %1359 = vmatprep.subr.bf16.mxu0 0
      %1360 = vmatpush1.bf16.msra.mxu0 %v307
      %1361 = vmatprep.subr.bf16.mxu0 0
      %1362 = vmatpush1.bf16.msra.mxu0 %v308
      %1363 = vmatprep.subr.bf16.mxu0 0
      %1364 = vmatpush1.bf16.msra.mxu0 %v309
      %1365 = vmatprep.subr.bf16.mxu0 0
      %1366 = vmatpush1.bf16.msra.mxu0 %v310
      %1367 = vmatprep.subr.bf16.mxu0 0
      %1368 = vmatpush1.bf16.msra.mxu0 %v311
      %1369 = vmatprep.subr.bf16.mxu0 0
      %1370 = vmatpush1.bf16.msra.mxu0 %v312
      %1371 = vmatprep.subr.bf16.mxu0 0
      %1372 = vmatpush1.bf16.msra.mxu0 %v313
      %1373 = vmatprep.subr.bf16.mxu0 0
      %1374 = vmatpush1.bf16.msra.mxu0 %v314
      %1375 = vmatprep.mubr.bf16.mxu0 %v1336
      %1376 = vmatmul.mubr.bf16.gmra.mrb[0].mxu0 %v1335
      %v1377 = vpop.f32.mrb[0].mxu0
      %v1378 = vadd.f32 %v213, %v1377
      %v1379 = vpop.f32.mrb[0].mxu0
      %v1380 = vpop.f32.mrb[0].mxu0
      %v1381 = vadd.f32 %v213, %v1380
      %v1382 = vpop.f32.mrb[0].mxu0
      %1383 = vmatprep.mubr.bf16.mxu0 %v1338
      %1384 = vmatmul.mubr.bf16.gmra.mrb[0].mxu0 %v1337
      %v1385 = vpop.f32.mrb[0].mxu0
      %v1386 = vadd.f32 %v213, %v1385
      %v1387 = vpop.f32.mrb[0].mxu0
      %v1388 = vpop.f32.mrb[0].mxu0
      %v1389 = vadd.f32 %v213, %v1388
      %v1390 = vpop.f32.mrb[0].mxu0
      %1391 = vdwg.mxu0
      %v1392 = vld [vmem:[#allocation2] sm:$0xff]
      %v1393 = vld [vmem:[#allocation2 + $0x8] sm:$0xff]
      %v1394 = vld [vmem:[#allocation2 + $0x10] sm:$0xff]
      %v1395 = vld [vmem:[#allocation2 + $0x18] sm:$0xff]
      %v1396 = vmax.f32 %v1392, %v1378
      %v1397 = vmax.f32 %v1393, %v1381
      %v1398 = vmax.f32 %v1394, %v1386
      %v1399 = vmax.f32 %v1395, %v1389
      %1400 = vst [vmem:[#allocation2] sm:$0xff] %v1396
      %1401 = vst [vmem:[#allocation2 + $0x8] sm:$0xff] %v1397
      %1402 = vst [vmem:[#allocation2 + $0x10] sm:$0xff] %v1398
      %1403 = vst [vmem:[#allocation2 + $0x18] sm:$0xff] %v1399
      %v1404 = vld [vmem:[%s165 + $0x1a0] sm:$0xff]
      %v1405 = vld [vmem:[%s165 + $0x1a8] sm:$0xff]
      %v1406 = vld [vmem:[%s165 + $0x1b0] sm:$0xff]
      %v1407 = vld [vmem:[%s165 + $0x1b8] sm:$0xff]
      %v1412 = vunpack.c.l.b16 %v1404
      %v1413 = vunpack.c.h.b16 %v1404
      %v1414 = vunpack.c.l.b16 %v1405
      %v1415 = vunpack.c.h.b16 %v1405
      %v1416 = vunpack.c.l.b16 %v1406
      %v1417 = vunpack.c.h.b16 %v1406
      %v1418 = vunpack.c.l.b16 %v1407
      %v1419 = vunpack.c.h.b16 %v1407
      %v1420 = vpack.c.b16 %v1414, %v1412
      %v1421 = vpack.c.b16 %v1415, %v1413
      %v1422 = vpack.c.b16 %v1418, %v1416
      %v1423 = vpack.c.b16 %v1419, %v1417
      %1428 = vmatprep.subr.bf16.mxu0 0
      %1429 = vmatpush1.bf16.msra.mxu0 %v299
      %1430 = vmatprep.subr.bf16.mxu0 0
      %1431 = vmatpush1.bf16.msra.mxu0 %v300
      %1432 = vmatprep.subr.bf16.mxu0 0
      %1433 = vmatpush1.bf16.msra.mxu0 %v301
      %1434 = vmatprep.subr.bf16.mxu0 0
      %1435 = vmatpush1.bf16.msra.mxu0 %v302
      %1436 = vmatprep.subr.bf16.mxu0 0
      %1437 = vmatpush1.bf16.msra.mxu0 %v303
      %1438 = vmatprep.subr.bf16.mxu0 0
      %1439 = vmatpush1.bf16.msra.mxu0 %v304
      %1440 = vmatprep.subr.bf16.mxu0 0
      %1441 = vmatpush1.bf16.msra.mxu0 %v305
      %1442 = vmatprep.subr.bf16.mxu0 0
      %1443 = vmatpush1.bf16.msra.mxu0 %v306
      %1444 = vmatprep.subr.bf16.mxu0 0
      %1445 = vmatpush1.bf16.msra.mxu0 %v307
      %1446 = vmatprep.subr.bf16.mxu0 0
      %1447 = vmatpush1.bf16.msra.mxu0 %v308
      %1448 = vmatprep.subr.bf16.mxu0 0
      %1449 = vmatpush1.bf16.msra.mxu0 %v309
      %1450 = vmatprep.subr.bf16.mxu0 0
      %1451 = vmatpush1.bf16.msra.mxu0 %v310
      %1452 = vmatprep.subr.bf16.mxu0 0
      %1453 = vmatpush1.bf16.msra.mxu0 %v311
      %1454 = vmatprep.subr.bf16.mxu0 0
      %1455 = vmatpush1.bf16.msra.mxu0 %v312
      %1456 = vmatprep.subr.bf16.mxu0 0
      %1457 = vmatpush1.bf16.msra.mxu0 %v313
      %1458 = vmatprep.subr.bf16.mxu0 0
      %1459 = vmatpush1.bf16.msra.mxu0 %v314
      %1460 = vmatprep.mubr.bf16.mxu0 %v1421
      %1461 = vmatmul.mubr.bf16.gmra.mrb[0].mxu0 %v1420
      %v1462 = vpop.f32.mrb[0].mxu0
      %v1463 = vadd.f32 %v213, %v1462
      %v1464 = vpop.f32.mrb[0].mxu0
      %v1465 = vpop.f32.mrb[0].mxu0
      %v1466 = vadd.f32 %v213, %v1465
      %v1467 = vpop.f32.mrb[0].mxu0
      %1468 = vmatprep.mubr.bf16.mxu0 %v1423
      %1469 = vmatmul.mubr.bf16.gmra.mrb[0].mxu0 %v1422
      %v1470 = vpop.f32.mrb[0].mxu0
      %v1471 = vadd.f32 %v213, %v1470
      %v1472 = vpop.f32.mrb[0].mxu0
      %v1473 = vpop.f32.mrb[0].mxu0
      %v1474 = vadd.f32 %v213, %v1473
      %v1475 = vpop.f32.mrb[0].mxu0
      %1476 = vdwg.mxu0
      %v1477 = vld [vmem:[#allocation2] sm:$0xff]
      %v1478 = vld [vmem:[#allocation2 + $0x8] sm:$0xff]
      %v1479 = vld [vmem:[#allocation2 + $0x10] sm:$0xff]
      %v1480 = vld [vmem:[#allocation2 + $0x18] sm:$0xff]
      %v1481 = vmax.f32 %v1477, %v1463
      %v1482 = vmax.f32 %v1478, %v1466
      %v1483 = vmax.f32 %v1479, %v1471
      %v1484 = vmax.f32 %v1480, %v1474
      %1485 = vst [vmem:[#allocation2] sm:$0xff] %v1481
      %1486 = vst [vmem:[#allocation2 + $0x8] sm:$0xff] %v1482
      %1487 = vst [vmem:[#allocation2 + $0x10] sm:$0xff] %v1483
      %1488 = vst [vmem:[#allocation2 + $0x18] sm:$0xff] %v1484
      %v1489 = vld [vmem:[%s165 + $0x1c0] sm:$0xff]
      %v1490 = vld [vmem:[%s165 + $0x1c8] sm:$0xff]
      %v1491 = vld [vmem:[%s165 + $0x1d0] sm:$0xff]
      %v1492 = vld [vmem:[%s165 + $0x1d8] sm:$0xff]
      %v1497 = vunpack.c.l.b16 %v1489
      %v1498 = vunpack.c.h.b16 %v1489
      %v1499 = vunpack.c.l.b16 %v1490
      %v1500 = vunpack.c.h.b16 %v1490
      %v1501 = vunpack.c.l.b16 %v1491
      %v1502 = vunpack.c.h.b16 %v1491
      %v1503 = vunpack.c.l.b16 %v1492
      %v1504 = vunpack.c.h.b16 %v1492
      %v1505 = vpack.c.b16 %v1499, %v1497
      %v1506 = vpack.c.b16 %v1500, %v1498
      %v1507 = vpack.c.b16 %v1503, %v1501
      %v1508 = vpack.c.b16 %v1504, %v1502
      %1513 = vmatprep.subr.bf16.mxu0 0
      %1514 = vmatpush1.bf16.msra.mxu0 %v299
      %1515 = vmatprep.subr.bf16.mxu0 0
      %1516 = vmatpush1.bf16.msra.mxu0 %v300
      %1517 = vmatprep.subr.bf16.mxu0 0
      %1518 = vmatpush1.bf16.msra.mxu0 %v301
      %1519 = vmatprep.subr.bf16.mxu0 0
      %1520 = vmatpush1.bf16.msra.mxu0 %v302
      %1521 = vmatprep.subr.bf16.mxu0 0
      %1522 = vmatpush1.bf16.msra.mxu0 %v303
      %1523 = vmatprep.subr.bf16.mxu0 0
      %1524 = vmatpush1.bf16.msra.mxu0 %v304
      %1525 = vmatprep.subr.bf16.mxu0 0
      %1526 = vmatpush1.bf16.msra.mxu0 %v305
      %1527 = vmatprep.subr.bf16.mxu0 0
      %1528 = vmatpush1.bf16.msra.mxu0 %v306
      %1529 = vmatprep.subr.bf16.mxu0 0
      %1530 = vmatpush1.bf16.msra.mxu0 %v307
      %1531 = vmatprep.subr.bf16.mxu0 0
      %1532 = vmatpush1.bf16.msra.mxu0 %v308
      %1533 = vmatprep.subr.bf16.mxu0 0
      %1534 = vmatpush1.bf16.msra.mxu0 %v309
      %1535 = vmatprep.subr.bf16.mxu0 0
      %1536 = vmatpush1.bf16.msra.mxu0 %v310
      %1537 = vmatprep.subr.bf16.mxu0 0
      %1538 = vmatpush1.bf16.msra.mxu0 %v311
      %1539 = vmatprep.subr.bf16.mxu0 0
      %1540 = vmatpush1.bf16.msra.mxu0 %v312
      %1541 = vmatprep.subr.bf16.mxu0 0
      %1542 = vmatpush1.bf16.msra.mxu0 %v313
      %1543 = vmatprep.subr.bf16.mxu0 0
      %1544 = vmatpush1.bf16.msra.mxu0 %v314
      %1545 = vmatprep.mubr.bf16.mxu0 %v1506
      %1546 = vmatmul.mubr.bf16.gmra.mrb[0].mxu0 %v1505
      %v1547 = vpop.f32.mrb[0].mxu0
      %v1548 = vadd.f32 %v213, %v1547
      %v1549 = vpop.f32.mrb[0].mxu0
      %v1550 = vpop.f32.mrb[0].mxu0
      %v1551 = vadd.f32 %v213, %v1550
      %v1552 = vpop.f32.mrb[0].mxu0
      %1553 = vmatprep.mubr.bf16.mxu0 %v1508
      %1554 = vmatmul.mubr.bf16.gmra.mrb[0].mxu0 %v1507
      %v1555 = vpop.f32.mrb[0].mxu0
      %v1556 = vadd.f32 %v213, %v1555
      %v1557 = vpop.f32.mrb[0].mxu0
      %v1558 = vpop.f32.mrb[0].mxu0
      %v1559 = vadd.f32 %v213, %v1558
      %v1560 = vpop.f32.mrb[0].mxu0
      %1561 = vdwg.mxu0
      %v1562 = vld [vmem:[#allocation2] sm:$0xff]
      %v1563 = vld [vmem:[#allocation2 + $0x8] sm:$0xff]
      %v1564 = vld [vmem:[#allocation2 + $0x10] sm:$0xff]
      %v1565 = vld [vmem:[#allocation2 + $0x18] sm:$0xff]
      %v1566 = vmax.f32 %v1562, %v1548
      %v1567 = vmax.f32 %v1563, %v1551
      %v1568 = vmax.f32 %v1564, %v1556
      %v1569 = vmax.f32 %v1565, %v1559
      %1570 = vst [vmem:[#allocation2] sm:$0xff] %v1566
      %1571 = vst [vmem:[#allocation2 + $0x8] sm:$0xff] %v1567
      %1572 = vst [vmem:[#allocation2 + $0x10] sm:$0xff] %v1568
      %1573 = vst [vmem:[#allocation2 + $0x18] sm:$0xff] %v1569
      %v1574 = vld [vmem:[%s165 + $0x1e0] sm:$0xff]
      %v1575 = vld [vmem:[%s165 + $0x1e8] sm:$0xff]
      %v1576 = vld [vmem:[%s165 + $0x1f0] sm:$0xff]
      %v1577 = vld [vmem:[%s165 + $0x1f8] sm:$0xff]
      %v1582 = vunpack.c.l.b16 %v1574
      %v1583 = vunpack.c.h.b16 %v1574
      %v1584 = vunpack.c.l.b16 %v1575
      %v1585 = vunpack.c.h.b16 %v1575
      %v1586 = vunpack.c.l.b16 %v1576
      %v1587 = vunpack.c.h.b16 %v1576
      %v1588 = vunpack.c.l.b16 %v1577
      %v1589 = vunpack.c.h.b16 %v1577
      %v1590 = vpack.c.b16 %v1584, %v1582
      %v1591 = vpack.c.b16 %v1585, %v1583
      %v1592 = vpack.c.b16 %v1588, %v1586
      %v1593 = vpack.c.b16 %v1589, %v1587
      %1598 = vmatprep.subr.bf16.mxu0 0
      %1599 = vmatpush1.bf16.msra.mxu0 %v299
      %1600 = vmatprep.subr.bf16.mxu0 0
      %1601 = vmatpush1.bf16.msra.mxu0 %v300
      %1602 = vmatprep.subr.bf16.mxu0 0
      %1603 = vmatpush1.bf16.msra.mxu0 %v301
      %1604 = vmatprep.subr.bf16.mxu0 0
      %1605 = vmatpush1.bf16.msra.mxu0 %v302
      %1606 = vmatprep.subr.bf16.mxu0 0
      %1607 = vmatpush1.bf16.msra.mxu0 %v303
      %1608 = vmatprep.subr.bf16.mxu0 0
      %1609 = vmatpush1.bf16.msra.mxu0 %v304
      %1610 = vmatprep.subr.bf16.mxu0 0
      %1611 = vmatpush1.bf16.msra.mxu0 %v305
      %1612 = vmatprep.subr.bf16.mxu0 0
      %1613 = vmatpush1.bf16.msra.mxu0 %v306
      %1614 = vmatprep.subr.bf16.mxu0 0
      %1615 = vmatpush1.bf16.msra.mxu0 %v307
      %1616 = vmatprep.subr.bf16.mxu0 0
      %1617 = vmatpush1.bf16.msra.mxu0 %v308
      %1618 = vmatprep.subr.bf16.mxu0 0
      %1619 = vmatpush1.bf16.msra.mxu0 %v309
      %1620 = vmatprep.subr.bf16.mxu0 0
      %1621 = vmatpush1.bf16.msra.mxu0 %v310
      %1622 = vmatprep.subr.bf16.mxu0 0
      %1623 = vmatpush1.bf16.msra.mxu0 %v311
      %1624 = vmatprep.subr.bf16.mxu0 0
      %1625 = vmatpush1.bf16.msra.mxu0 %v312
      %1626 = vmatprep.subr.bf16.mxu0 0
      %1627 = vmatpush1.bf16.msra.mxu0 %v313
      %1628 = vmatprep.subr.bf16.mxu0 0
      %1629 = vmatpush1.bf16.msra.mxu0 %v314
      %1630 = vmatprep.mubr.bf16.mxu0 %v1591
      %1631 = vmatmul.mubr.bf16.gmra.mrb[0].mxu0 %v1590
      %v1632 = vpop.f32.mrb[0].mxu0
      %v1633 = vadd.f32 %v213, %v1632
      %v1634 = vpop.f32.mrb[0].mxu0
      %v1635 = vpop.f32.mrb[0].mxu0
      %v1636 = vadd.f32 %v213, %v1635
      %v1637 = vpop.f32.mrb[0].mxu0
      %1638 = vmatprep.mubr.bf16.mxu0 %v1593
      %1639 = vmatmul.mubr.bf16.gmra.mrb[0].mxu0 %v1592
      %v1640 = vpop.f32.mrb[0].mxu0
      %v1641 = vadd.f32 %v213, %v1640
      %v1642 = vpop.f32.mrb[0].mxu0
      %v1643 = vpop.f32.mrb[0].mxu0
      %v1644 = vadd.f32 %v213, %v1643
      %v1645 = vpop.f32.mrb[0].mxu0
      %1646 = vdwg.mxu0
      %v1647 = vld [vmem:[#allocation2] sm:$0xff]
      %v1648 = vld [vmem:[#allocation2 + $0x8] sm:$0xff]
      %v1649 = vld [vmem:[#allocation2 + $0x10] sm:$0xff]
      %v1650 = vld [vmem:[#allocation2 + $0x18] sm:$0xff]
      %v1651 = vmax.f32 %v1647, %v1633
      %v1652 = vmax.f32 %v1648, %v1636
      %v1653 = vmax.f32 %v1649, %v1641
      %v1654 = vmax.f32 %v1650, %v1644
      %1655 = vst [vmem:[#allocation2] sm:$0xff] %v1651
      %1656 = vst [vmem:[#allocation2 + $0x8] sm:$0xff] %v1652
      %1657 = vst [vmem:[#allocation2 + $0x10] sm:$0xff] %v1653
      %1658 = vst [vmem:[#allocation2 + $0x18] sm:$0xff] %v1654
      %v1659 = vld [vmem:[#allocation2] sm:$0xff]
      %v1660 = vld [vmem:[#allocation2 + $0x8] sm:$0xff]
      %v1661 = vld [vmem:[#allocation2 + $0x10] sm:$0xff]
      %v1662 = vld [vmem:[#allocation2 + $0x18] sm:$0xff]
      %v1663 = vmax.f32 %v1659, 0.0
      %v1664 = vmax.f32 %v1660, 0.0
      %v1665 = vmax.f32 %v1661, 0.0
      %v1666 = vmax.f32 %v1662, 0.0
      %1667 = vst [vmem:[%s170] sm:$0xff] %v1663
      %1668 = vst [vmem:[%s170 + $0x8] sm:$0xff] %v1664
      %1669 = vst [vmem:[%s170 + $0x10] sm:$0xff] %v1665
      %1670 = vst [vmem:[%s170 + $0x18] sm:$0xff] %v1666
      %p1671 = scmp.lt.s32.totalorder %s14, 1
      %s1672 = scalar_select %p1671, %s14, 1
      %s1673 = smul.addr %s1672, 4
      %s1674 = smul.addr %s1673, 8
      %s1675 = scalar_lea.vmem %s3, %s1674
      // Predicated region
      $region33: #{simple_net_forward.4} parent=31 // pred_check
        %p1676 = pneg %p100
      $region34: #{simple_net_forward.4} parent=31 // pred_check_branch
        %1678 = sbr.rel (%p1676) target = $region36
      $region35: #{simple_net_forward.4} parent=31 // pred_region
        _
      $region36: #{simple_net_forward.4} parent=31 // pred_fallthru
        _
    $region32: #{simple_net_forward.4} parent=5 // pred_fallthru
      _
    %p1679 = scmp.le.s32.totalorder 2, %s9
    // Predicated region
    $region37: #{simple_net_forward.4} parent=5 // pred_check
      %p1680 = pneg %p1679
    $region38: #{simple_net_forward.4} parent=5 // pred_check_branch
      %1682 = sbr.rel (%p1680) target = $region40
    $region39: #{simple_net_forward.4} parent=5 // pred_region
      %s1683 = ssub.s32 %s9, 2
      // Predicated region
      $region41: #{simple_net_forward.4} parent=39 // pred_check
        %p1684 = pneg %p106
      $region42: #{simple_net_forward.4} parent=39 // pred_check_branch
        %1686 = sbr.rel (%p1684) target = $region44
      $region43: #{simple_net_forward.4} parent=39 // pred_region
        %p1687 = scmp.lt.s32.totalorder %s15, 1
        %s1688 = scalar_select %p1687, %s15, 1
        %s1689 = smul.addr %s1688, 4
        %s1690 = smul.addr %s1689, 8
        %s1691 = scalar_lea.vmem %s3, %s1690
      $region44: #{simple_net_forward.4} parent=39 // pred_fallthru
        _
    $region40: #{simple_net_forward.4} parent=5 // pred_fallthru
      _
  $region6: #{simple_net_forward.4} parent=0 // loop_footer
    %s13 = sadd.s32 1, %s9
  $region7: #{simple_net_forward.4} parent=0 // loop_footer_branch
    %8 = sbr.rel target = $region3
  $region8: #{simple_net_forward.4} parent=0 // loop_exit
    _

// kernel: simple_net_forward.5
$region0: #{simple_net_forward.5}
  #allocation0 [shape = 'u32[]', space=smem, size = 0x4, offset = 0x4, fixed_abs, tag = 'smem constant byte address 0x4 - core index']
  #allocation1 [shape = 'u32[144,128]{1,0:T(1,128)}', space=vmem, size = 0x12000, scoped, tag = 'internal scratch']
  %s0 = inlined_call_operand.vmem [shape: bf16[2,500], index: 0, kind: input, shape index: {}]
  %s1 = inlined_call_operand.vmem [shape: bf16[500,128], index: 1, kind: input, shape index: {}]
  %s2 = inlined_call_operand.vmem [shape: f32[1,128], index: 2, kind: input, shape index: {}]
  %s3 = inlined_call_operand.vmem [shape: bf16[128,128], index: 3, kind: input, shape index: {}]
  %s4 = inlined_call_operand.vmem [shape: f32[1,128], index: 4, kind: input, shape index: {}]
  %s5 = inlined_call_operand.hbm [shape: f32[2,128], index: 5, kind: output, shape index: {}]
  %s6 = sld [smem:[#allocation0]]
  $region30: #{simple_net_forward.5} parent=0
    _
  %s8 = ssub.s32 1, %s6
  %s9 = scalar_select 0, %s8, %s6
  $region1: #{simple_net_forward.5} parent=0
    #allocation2 [shape = 'u8[1024]{0}', space=vmem, size = 0x400, scoped, tag = 'output window, operand 0, single buffered']
    #allocation3 [shape = 's32[1]{0}', space=sflag, size = 0x4, scoped, tag = 'scoped memory for simple_net_forward.5']
    %10 = vsyncpa [#allocation3], 0
    // Predicated region
    $region2: #{simple_net_forward.5} parent=1 // pred_check
      _
    $region3: #{simple_net_forward.5} parent=1 // pred_check_branch
      %12 = sbr.rel (0) target = $region5
    $region4: #{simple_net_forward.5} parent=1 // pred_region
      _
    $region5: #{simple_net_forward.5} parent=1 // pred_fallthru
      _
    // Predicated region
    $region6: #{simple_net_forward.5} parent=1 // pred_check
      _
    $region7: #{simple_net_forward.5} parent=1 // pred_check_branch
      %14 = sbr.rel (0) target = $region9
    $region8: #{simple_net_forward.5} parent=1 // pred_region
      _
    $region9: #{simple_net_forward.5} parent=1 // pred_fallthru
      _
    // Predicated region
    $region10: #{simple_net_forward.5} parent=1 // pred_check
      _
    $region11: #{simple_net_forward.5} parent=1 // pred_check_branch
      %16 = sbr.rel (0) target = $region13
    $region12: #{simple_net_forward.5} parent=1 // pred_region
      _
    $region13: #{simple_net_forward.5} parent=1 // pred_fallthru
      _
    // Predicated region
    $region14: #{simple_net_forward.5} parent=1 // pred_check
      _
    $region15: #{simple_net_forward.5} parent=1 // pred_check_branch
      %18 = sbr.rel (0) target = $region17
    $region16: #{simple_net_forward.5} parent=1 // pred_region
      _
    $region17: #{simple_net_forward.5} parent=1 // pred_fallthru
      _
    // Predicated region
    $region18: #{simple_net_forward.5} parent=1 // pred_check
      _
    $region19: #{simple_net_forward.5} parent=1 // pred_check_branch
      %20 = sbr.rel (0) target = $region21
    $region20: #{simple_net_forward.5} parent=1 // pred_region
      _
    $region21: #{simple_net_forward.5} parent=1 // pred_fallthru
      _
    %v22 = vld [vmem:[%s0] sm:$0xf]
    %v23 = vld [vmem:[%s1] sm:$0xf]
    %v24 = vld [vmem:[%s1 + $0x4] sm:$0xf]
    %v25 = vld [vmem:[%s1 + $0x8] sm:$0xf]
    %v26 = vld [vmem:[%s1 + $0xc] sm:$0xf]
    %v27 = vld [vmem:[%s1 + $0x10] sm:$0xf]
    %v28 = vld [vmem:[%s1 + $0x14] sm:$0xf]
    %v29 = vld [vmem:[%s1 + $0x18] sm:$0xf]
    %v30 = vld [vmem:[%s1 + $0x1c] sm:$0xf]
    %v31 = vld [vmem:[%s1 + $0x20] sm:$0xf]
    %v32 = vld [vmem:[%s1 + $0x24] sm:$0xf]
    %v33 = vld [vmem:[%s1 + $0x28] sm:$0xf]
    %v34 = vld [vmem:[%s1 + $0x2c] sm:$0xf]
    %v35 = vld [vmem:[%s1 + $0x30] sm:$0xf]
    %v36 = vld [vmem:[%s1 + $0x34] sm:$0xf]
    %v37 = vld [vmem:[%s1 + $0x38] sm:$0xf]
    %v38 = vld [vmem:[%s1 + $0x3c] sm:$0xf]
    %v39 = vld [vmem:[%s1 + $0x40] sm:$0xf]
    %v40 = vld [vmem:[%s1 + $0x44] sm:$0xf]
    %v41 = vld [vmem:[%s1 + $0x48] sm:$0xf]
    %v42 = vld [vmem:[%s1 + $0x4c] sm:$0xf]
    %v43 = vld [vmem:[%s1 + $0x50] sm:$0xf]
    %v44 = vld [vmem:[%s1 + $0x54] sm:$0xf]
    %v45 = vld [vmem:[%s1 + $0x58] sm:$0xf]
    %v46 = vld [vmem:[%s1 + $0x5c] sm:$0xf]
    %v47 = vld [vmem:[%s1 + $0x60] sm:$0xf]
    %v48 = vld [vmem:[%s1 + $0x64] sm:$0xf]
    %v49 = vld [vmem:[%s1 + $0x68] sm:$0xf]
    %v50 = vld [vmem:[%s1 + $0x6c] sm:$0xf]
    %v51 = vld [vmem:[%s1 + $0x70] sm:$0xf]
    %v52 = vld [vmem:[%s1 + $0x74] sm:$0xf]
    %v53 = vld [vmem:[%s1 + $0x78] sm:$0xf]
    %v54 = vld [vmem:[%s1 + $0x7c] sm:$0xf]
    %v55 = vld [vmem:[%s1 + $0x80] sm:$0xf]
    %v56 = vld [vmem:[%s1 + $0x84] sm:$0xf]
    %v57 = vld [vmem:[%s1 + $0x88] sm:$0xf]
    %v58 = vld [vmem:[%s1 + $0x8c] sm:$0xf]
    %v59 = vld [vmem:[%s1 + $0x90] sm:$0xf]
    %v60 = vld [vmem:[%s1 + $0x94] sm:$0xf]
    %v61 = vld [vmem:[%s1 + $0x98] sm:$0xf]
    %v62 = vld [vmem:[%s1 + $0x9c] sm:$0xf]
    %v63 = vld [vmem:[%s1 + $0xa0] sm:$0xf]
    %v64 = vld [vmem:[%s1 + $0xa4] sm:$0xf]
    %v65 = vld [vmem:[%s1 + $0xa8] sm:$0xf]
    %v66 = vld [vmem:[%s1 + $0xac] sm:$0xf]
    %v67 = vld [vmem:[%s1 + $0xb0] sm:$0xf]
    %v68 = vld [vmem:[%s1 + $0xb4] sm:$0xf]
    %v69 = vld [vmem:[%s1 + $0xb8] sm:$0xf]
    %v70 = vld [vmem:[%s1 + $0xbc] sm:$0xf]
    %v71 = vld [vmem:[%s1 + $0xc0] sm:$0xf]
    %v72 = vld [vmem:[%s1 + $0xc4] sm:$0xf]
    %v73 = vld [vmem:[%s1 + $0xc8] sm:$0xf]
    %v74 = vld [vmem:[%s1 + $0xcc] sm:$0xf]
    %v75 = vld [vmem:[%s1 + $0xd0] sm:$0xf]
    %v76 = vld [vmem:[%s1 + $0xd4] sm:$0xf]
    %v77 = vld [vmem:[%s1 + $0xd8] sm:$0xf]
    %v78 = vld [vmem:[%s1 + $0xdc] sm:$0xf]
    %v79 = vld [vmem:[%s1 + $0xe0] sm:$0xf]
    %v80 = vld [vmem:[%s1 + $0xe4] sm:$0xf]
    %v81 = vld [vmem:[%s1 + $0xe8] sm:$0xf]
    %v82 = vld [vmem:[%s1 + $0xec] sm:$0xf]
    %v83 = vld [vmem:[%s1 + $0xf0] sm:$0xf]
    %v84 = vld [vmem:[%s1 + $0xf4] sm:$0xf]
    %v85 = vld [vmem:[%s1 + $0xf8] sm:$0x3]
    %v86 = vld [vmem:[%s2] sm:$0x1]
    %v88 = vlaneseq
    %v89 = vshrl.u32 %v88, 7
    %v90 = vsub.s32 0, %v89
    %v91 = vrot.slane %v86, %v90
    %v95 = vunpack.c.l.s4 1966171168
    %v96 = vunpack.c.0.s8 %v95
    %v97 = vlaneseq
    %v98 = vshrl.u32 %v97, 7
    %v99 = vsub.s32 %v96, %v98
    %v100 = vrot.slane %v22, %v99
    %v101 = vcombine.high %v100, %v100
    %v103 = vunpack.c.l.s4 1966171168
    %v104 = vunpack.c.0.s8 %v103
    %v105 = vlaneseq
    %v106 = vshrl.u32 %v105, 7
    %v107 = vsub.s32 %v104, %v106
    %v108 = vrot.slane %v100, %v107
    %v110 = vunpack.c.l.s4 1966171168
    %v111 = vunpack.c.0.s8 %v110
    %v112 = vlaneseq
    %v113 = vshrl.u32 %v112, 7
    %v114 = vsub.s32 %v111, %v113
    %v115 = vrot.slane %v101, %v114
    %v116 = vcombine.high %v108, %v108
    %v117 = vcombine.high %v115, %v115
    %v184 = vunpack.c.l.b16 %v23
    %v185 = vunpack.c.l.b16 %v24
    %v186 = vunpack.c.l.b16 %v25
    %v187 = vunpack.c.l.b16 %v26
    %v188 = vunpack.c.l.b16 %v27
    %v189 = vunpack.c.l.b16 %v28
    %v190 = vunpack.c.l.b16 %v29
    %v191 = vunpack.c.l.b16 %v30
    %v192 = vunpack.c.l.b16 %v31
    %v193 = vunpack.c.l.b16 %v32
    %v194 = vunpack.c.l.b16 %v33
    %v195 = vunpack.c.l.b16 %v34
    %v196 = vunpack.c.l.b16 %v35
    %v197 = vunpack.c.l.b16 %v36
    %v198 = vunpack.c.l.b16 %v37
    %v199 = vunpack.c.l.b16 %v38
    %v200 = vunpack.c.l.b16 %v39
    %v201 = vunpack.c.l.b16 %v40
    %v202 = vunpack.c.l.b16 %v41
    %v203 = vunpack.c.l.b16 %v42
    %v204 = vunpack.c.l.b16 %v43
    %v205 = vunpack.c.l.b16 %v44
    %v206 = vunpack.c.l.b16 %v45
    %v207 = vunpack.c.l.b16 %v46
    %v208 = vunpack.c.l.b16 %v47
    %v209 = vunpack.c.l.b16 %v48
    %v210 = vunpack.c.l.b16 %v49
    %v211 = vunpack.c.l.b16 %v50
    %v212 = vunpack.c.l.b16 %v51
    %v213 = vunpack.c.l.b16 %v52
    %v214 = vunpack.c.l.b16 %v53
    %v215 = vunpack.c.l.b16 %v54
    %v216 = vunpack.c.l.b16 %v55
    %v217 = vunpack.c.l.b16 %v56
    %v218 = vunpack.c.l.b16 %v57
    %v219 = vunpack.c.l.b16 %v58
    %v220 = vunpack.c.l.b16 %v59
    %v221 = vunpack.c.l.b16 %v60
    %v222 = vunpack.c.l.b16 %v61
    %v223 = vunpack.c.l.b16 %v62
    %v224 = vunpack.c.l.b16 %v63
    %v225 = vunpack.c.l.b16 %v64
    %v226 = vunpack.c.l.b16 %v65
    %v227 = vunpack.c.l.b16 %v66
    %v228 = vunpack.c.l.b16 %v67
    %v229 = vunpack.c.l.b16 %v68
    %v230 = vunpack.c.l.b16 %v69
    %v231 = vunpack.c.l.b16 %v70
    %v232 = vunpack.c.l.b16 %v71
    %v233 = vunpack.c.l.b16 %v72
    %v234 = vunpack.c.l.b16 %v73
    %v235 = vunpack.c.l.b16 %v74
    %v236 = vunpack.c.l.b16 %v75
    %v237 = vunpack.c.l.b16 %v76
    %v238 = vunpack.c.l.b16 %v77
    %v239 = vunpack.c.l.b16 %v78
    %v240 = vunpack.c.l.b16 %v79
    %v241 = vunpack.c.l.b16 %v80
    %v242 = vunpack.c.l.b16 %v81
    %v243 = vunpack.c.l.b16 %v82
    %v244 = vunpack.c.l.b16 %v83
    %v245 = vunpack.c.l.b16 %v84
    %v246 = vunpack.c.l.b16 %v85
    %v247 = vpack.c.b16 %v185, %v184
    %v248 = vpack.c.b16 %v187, %v186
    %v249 = vpack.c.b16 %v189, %v188
    %v250 = vpack.c.b16 %v191, %v190
    %v251 = vpack.c.b16 %v193, %v192
    %v252 = vpack.c.b16 %v195, %v194
    %v253 = vpack.c.b16 %v197, %v196
    %v254 = vpack.c.b16 %v199, %v198
    %v255 = vpack.c.b16 %v201, %v200
    %v256 = vpack.c.b16 %v203, %v202
    %v257 = vpack.c.b16 %v205, %v204
    %v258 = vpack.c.b16 %v207, %v206
    %v259 = vpack.c.b16 %v209, %v208
    %v260 = vpack.c.b16 %v211, %v210
    %v261 = vpack.c.b16 %v213, %v212
    %v262 = vpack.c.b16 %v215, %v214
    %v263 = vpack.c.b16 %v217, %v216
    %v264 = vpack.c.b16 %v219, %v218
    %v265 = vpack.c.b16 %v221, %v220
    %v266 = vpack.c.b16 %v223, %v222
    %v267 = vpack.c.b16 %v225, %v224
    %v268 = vpack.c.b16 %v227, %v226
    %v269 = vpack.c.b16 %v229, %v228
    %v270 = vpack.c.b16 %v231, %v230
    %v271 = vpack.c.b16 %v233, %v232
    %v272 = vpack.c.b16 %v235, %v234
    %v273 = vpack.c.b16 %v237, %v236
    %v274 = vpack.c.b16 %v239, %v238
    %v275 = vpack.c.b16 %v241, %v240
    %v276 = vpack.c.b16 %v243, %v242
    %v277 = vpack.c.b16 %v245, %v244
    %v278 = vpack.c.b16 %v246, %v246
    %vm310 = vcmask 949248
    %v312 = vsel %vm310, %v117, 0
    %vm314 = vcmask 1041408
    %v316 = vsel %vm314, %v278, 0
    %318 = vmatprep.subr.bf16.mxu0 0
    %319 = vmatpush1.bf16.msra.mxu0 %v247
    %320 = vmatprep.subr.bf16.mxu0 0
    %321 = vmatpush1.bf16.msra.mxu0 %v248
    %322 = vmatprep.subr.bf16.mxu0 0
    %323 = vmatpush1.bf16.msra.mxu0 %v249
    %324 = vmatprep.subr.bf16.mxu0 0
    %325 = vmatpush1.bf16.msra.mxu0 %v250
    %326 = vmatprep.subr.bf16.mxu0 0
    %327 = vmatpush1.bf16.msra.mxu0 %v251
    %328 = vmatprep.subr.bf16.mxu0 0
    %329 = vmatpush1.bf16.msra.mxu0 %v252
    %330 = vmatprep.subr.bf16.mxu0 0
    %331 = vmatpush1.bf16.msra.mxu0 %v253
    %332 = vmatprep.subr.bf16.mxu0 0
    %333 = vmatpush1.bf16.msra.mxu0 %v254
    %334 = vmatprep.subr.bf16.mxu0 0
    %335 = vmatpush1.bf16.msra.mxu0 %v255
    %336 = vmatprep.subr.bf16.mxu0 0
    %337 = vmatpush1.bf16.msra.mxu0 %v256
    %338 = vmatprep.subr.bf16.mxu0 0
    %339 = vmatpush1.bf16.msra.mxu0 %v257
    %340 = vmatprep.subr.bf16.mxu0 0
    %341 = vmatpush1.bf16.msra.mxu0 %v258
    %342 = vmatprep.subr.bf16.mxu0 0
    %343 = vmatpush1.bf16.msra.mxu0 %v259
    %344 = vmatprep.subr.bf16.mxu0 0
    %345 = vmatpush1.bf16.msra.mxu0 %v260
    %346 = vmatprep.subr.bf16.mxu0 0
    %347 = vmatpush1.bf16.msra.mxu0 %v261
    %348 = vmatprep.subr.bf16.mxu0 0
    %349 = vmatpush1.bf16.msra.mxu0 %v262
    %350 = vmatprep.mubr.bf16.mxu0 %v115
    %351 = vmatmul.mubr.bf16.gmra.mrb[0].mxu0 %v108
    %v352 = vpop.f32.mrb[0].mxu0
    %v353 = vadd.f32 %v91, %v352
    %v354 = vpop.f32.mrb[0].mxu0
    %v355 = vpop.f32.mrb[0].mxu0
    %v356 = vpop.f32.mrb[0].mxu0
    %357 = vdwg.mxu0
    %358 = vmatprep.subr.bf16.mxu0 0
    %359 = vmatpush1.bf16.msra.mxu0 %v263
    %360 = vmatprep.subr.bf16.mxu0 0
    %361 = vmatpush1.bf16.msra.mxu0 %v264
    %362 = vmatprep.subr.bf16.mxu0 0
    %363 = vmatpush1.bf16.msra.mxu0 %v265
    %364 = vmatprep.subr.bf16.mxu0 0
    %365 = vmatpush1.bf16.msra.mxu0 %v266
    %366 = vmatprep.subr.bf16.mxu0 0
    %367 = vmatpush1.bf16.msra.mxu0 %v267
    %368 = vmatprep.subr.bf16.mxu0 0
    %369 = vmatpush1.bf16.msra.mxu0 %v268
    %370 = vmatprep.subr.bf16.mxu0 0
    %371 = vmatpush1.bf16.msra.mxu0 %v269
    %372 = vmatprep.subr.bf16.mxu0 0
    %373 = vmatpush1.bf16.msra.mxu0 %v270
    %374 = vmatprep.subr.bf16.mxu0 0
    %375 = vmatpush1.bf16.msra.mxu0 %v271
    %376 = vmatprep.subr.bf16.mxu0 0
    %377 = vmatpush1.bf16.msra.mxu0 %v272
    %378 = vmatprep.subr.bf16.mxu0 0
    %379 = vmatpush1.bf16.msra.mxu0 %v273
    %380 = vmatprep.subr.bf16.mxu0 0
    %381 = vmatpush1.bf16.msra.mxu0 %v274
    %382 = vmatprep.subr.bf16.mxu0 0
    %383 = vmatpush1.bf16.msra.mxu0 %v275
    %384 = vmatprep.subr.bf16.mxu0 0
    %385 = vmatpush1.bf16.msra.mxu0 %v276
    %386 = vmatprep.subr.bf16.mxu0 0
    %387 = vmatpush1.bf16.msra.mxu0 %v277
    %388 = vmatprep.subr.bf16.mxu0 0
    %389 = vmatpush1.bf16.msra.mxu0 %v316
    %390 = vmatprep.mubr.bf16.mxu0 %v312
    %391 = vmatmul.mubr.bf16.gmra.mrb[0].mxu0 %v116
    %v392 = vpop.f32.mrb[0].mxu0
    %v393 = vadd.f32 %v353, %v392
    %v394 = vpop.f32.mrb[0].mxu0
    %v395 = vpop.f32.mrb[0].mxu0
    %v396 = vpop.f32.mrb[0].mxu0
    %397 = vdwg.mxu0
    %v398 = vpack.c.bf16 %v393, %v393
    %v399 = vld [vmem:[%s3] sm:$0xf]
    %v400 = vld [vmem:[%s3 + $0x4] sm:$0xf]
    %v401 = vld [vmem:[%s3 + $0x8] sm:$0xf]
    %v402 = vld [vmem:[%s3 + $0xc] sm:$0xf]
    %v403 = vld [vmem:[%s3 + $0x10] sm:$0xf]
    %v404 = vld [vmem:[%s3 + $0x14] sm:$0xf]
    %v405 = vld [vmem:[%s3 + $0x18] sm:$0xf]
    %v406 = vld [vmem:[%s3 + $0x1c] sm:$0xf]
    %v407 = vld [vmem:[%s3 + $0x20] sm:$0xf]
    %v408 = vld [vmem:[%s3 + $0x24] sm:$0xf]
    %v409 = vld [vmem:[%s3 + $0x28] sm:$0xf]
    %v410 = vld [vmem:[%s3 + $0x2c] sm:$0xf]
    %v411 = vld [vmem:[%s3 + $0x30] sm:$0xf]
    %v412 = vld [vmem:[%s3 + $0x34] sm:$0xf]
    %v413 = vld [vmem:[%s3 + $0x38] sm:$0xf]
    %v414 = vld [vmem:[%s3 + $0x3c] sm:$0xf]
    %v415 = vld [vmem:[%s4] sm:$0x1]
    %v417 = vlaneseq
    %v418 = vshrl.u32 %v417, 7
    %v419 = vsub.s32 0, %v418
    %v420 = vrot.slane %v415, %v419
    %v438 = vunpack.c.l.b16 %v399
    %v439 = vunpack.c.l.b16 %v400
    %v440 = vunpack.c.l.b16 %v401
    %v441 = vunpack.c.l.b16 %v402
    %v442 = vunpack.c.l.b16 %v403
    %v443 = vunpack.c.l.b16 %v404
    %v444 = vunpack.c.l.b16 %v405
    %v445 = vunpack.c.l.b16 %v406
    %v446 = vunpack.c.l.b16 %v407
    %v447 = vunpack.c.l.b16 %v408
    %v448 = vunpack.c.l.b16 %v409
    %v449 = vunpack.c.l.b16 %v410
    %v450 = vunpack.c.l.b16 %v411
    %v451 = vunpack.c.l.b16 %v412
    %v452 = vunpack.c.l.b16 %v413
    %v453 = vunpack.c.l.b16 %v414
    %v454 = vpack.c.b16 %v439, %v438
    %v455 = vpack.c.b16 %v441, %v440
    %v456 = vpack.c.b16 %v443, %v442
    %v457 = vpack.c.b16 %v445, %v444
    %v458 = vpack.c.b16 %v447, %v446
    %v459 = vpack.c.b16 %v449, %v448
    %v460 = vpack.c.b16 %v451, %v450
    %v461 = vpack.c.b16 %v453, %v452
    %470 = vmatprep.subr.bf16.mxu0 0
    %471 = vmatpush1.bf16.msra.mxu0 %v454
    %472 = vmatprep.subr.bf16.mxu0 0
    %473 = vmatpush1.bf16.msra.mxu0 %v455
    %474 = vmatprep.subr.bf16.mxu0 0
    %475 = vmatpush1.bf16.msra.mxu0 %v456
    %476 = vmatprep.subr.bf16.mxu0 0
    %477 = vmatpush1.bf16.msra.mxu0 %v457
    %478 = vmatprep.subr.bf16.mxu0 0
    %479 = vmatpush1.bf16.msra.mxu0 %v458
    %480 = vmatprep.subr.bf16.mxu0 0
    %481 = vmatpush1.bf16.msra.mxu0 %v459
    %482 = vmatprep.subr.bf16.mxu0 0
    %483 = vmatpush1.bf16.msra.mxu0 %v460
    %484 = vmatprep.subr.bf16.mxu0 0
    %485 = vmatpush1.bf16.msra.mxu0 %v461
    %486 = vmatprep.subr.bf16.mxu0 0
    %487 = vmatpush1.bf16.msra.mxu0 0
    %488 = vmatprep.subr.bf16.mxu0 0
    %489 = vmatpush1.bf16.msra.mxu0 0
    %490 = vmatprep.subr.bf16.mxu0 0
    %491 = vmatpush1.bf16.msra.mxu0 0
    %492 = vmatprep.subr.bf16.mxu0 0
    %493 = vmatpush1.bf16.msra.mxu0 0
    %494 = vmatprep.subr.bf16.mxu0 0
    %495 = vmatpush1.bf16.msra.mxu0 0
    %496 = vmatprep.subr.bf16.mxu0 0
    %497 = vmatpush1.bf16.msra.mxu0 0
    %498 = vmatprep.subr.bf16.mxu0 0
    %499 = vmatpush1.bf16.msra.mxu0 0
    %500 = vmatprep.subr.bf16.mxu0 0
    %501 = vmatpush1.bf16.msra.mxu0 0
    %502 = vmatprep.mubr.bf16.mxu0 0
    %503 = vmatmul.mubr.bf16.gmra.mrb[0].mxu0 %v398
    %v504 = vpop.f32.mrb[0].mxu0
    %v505 = vadd.f32 %v420, %v504
    %v506 = vpop.f32.mrb[0].mxu0
    %v507 = vpop.f32.mrb[0].mxu0
    %v508 = vpop.f32.mrb[0].mxu0
    %509 = vdwg.mxu0
    %510 = vst [vmem:[#allocation2] sm:$0x3] %v505
    // Predicated region
    $region22: #{simple_net_forward.5} parent=1 // pred_check
      _
    $region23: #{simple_net_forward.5} parent=1 // pred_check_branch
      %512 = sbr.rel (0) target = $region25
    $region24: #{simple_net_forward.5} parent=1 // pred_region
      %s514 = ssub.s32 32, 32
      %515 = vsyncadd [#allocation3], %s514
      %s517 = sshll.u32 [#allocation2], 4
      %s518 = int_to_ptr.vmem [resolvable:$true] %s517
      %520 = dma.vmem_to_hbm [thread:$0]  %s518, 32, %s5, [#allocation3]
    $region25: #{simple_net_forward.5} parent=1 // pred_fallthru
      _
    // Predicated region
    $region26: #{simple_net_forward.5} parent=1 // pred_check
      _
    $region27: #{simple_net_forward.5} parent=1 // pred_check_branch
      %522 = sbr.rel (0) target = $region29
    $region28: #{simple_net_forward.5} parent=1 // pred_region
      %523 = dma.done [#allocation3], 32
    $region29: #{simple_net_forward.5} parent=1 // pred_fallthru
      _
    %524 = vsyncpa [#allocation3], 1

</llo_original>
